<compile_context>
chip_gen: v7x
topology: tpu7x:2x2x1
jax: 0.10.0
libtpu: 0.0.40
codegen_flags: <defaults>
</compile_context>

<pallas_src>
import functools
import math
from types import SimpleNamespace

import numpy as np
import jax
import jax.numpy as jnp
from jax.experimental import pallas as pl
from jax.experimental.pallas import tpu as pltpu

MARK_DIM = 4  # freq='h', embed='timeF' -> 4 time features

# Matmul-operand dtype for the MXU (accumulation stays f32).  jnp.float32 for exact parity.
MXU_DTYPE = jnp.bfloat16

# Compat shim for the Mosaic compiler-params class name.
_CompilerParams = getattr(pltpu, "CompilerParams", getattr(pltpu, "TPUCompilerParams", None))


def _mosaic_params(*semantics):
    if _CompilerParams is None:
        return None
    return _CompilerParams(dimension_semantics=tuple(semantics))


# -------------------------------------------------------------------- tiling helpers
_ROW_TILES = (512, 256, 128, 64, 32, 16, 8)            # sublane axis
_COL_TILES = (4096, 2048, 1024, 512, 256, 128)         # lane axis
_K_TILES = (2048, 1024, 512, 256, 128)
_FF_TILES = (4096, 2048, 1024, 512, 256, 128)
# Conservative cap on the double-buffered per-step working set; fits comfortably inside
# v7x's 32 MiB scoped-VMEM default (128 MiB physical on v5e/v6e, 64 MiB on v7x).
_VMEM_TILE_BUDGET = 16 * 1024 * 1024


def _pick(dim, candidates):
    for c in candidates:
        if dim >= c and dim % c == 0:
            return c
    return dim  # fall back to the full dimension (always legal)


def _pick_linear_tiles(R, N, K, in_itemsize):
    tm = _pick(R, _ROW_TILES)
    tn = _pick(N, _COL_TILES)
    tk = _pick(K, _K_TILES)

    def need(tm_, tn_, tk_):
        # double-buffered bf16/f32 inputs + resident f32 accumulator block + bias
        return 2 * (tm_ * tk_ + tk_ * tn_) * in_itemsize + 2 * tm_ * tn_ * 4 + 2 * tn_ * 4

    while need(tm, tn, tk) > _VMEM_TILE_BUDGET:
        if tn > 256 and N % (tn // 2) == 0:
            tn //= 2
        elif tk > 256 and K % (tk // 2) == 0:
            tk //= 2
        elif tm > 64 and R % (tm // 2) == 0:
            tm //= 2
        else:
            break
    return tm, tn, tk


def _pick_ff_tile(F, D, tm, in_itemsize):
    tf = _pick(F, _FF_TILES)

    def need(tf_):
        return (2 * (tm * D + D * tf_ + tf_ * D) * in_itemsize
                + tm * tf_ * 4 + 2 * tm * D * 4)

    while need(tf) > _VMEM_TILE_BUDGET and tf > 256 and F % (tf // 2) == 0:
        tf //= 2
    return tf


# ------------------------------------------------------------------- in-kernel activations
def _erf_approx(x):
    # Abramowitz & Stegun 7.1.26 (|abs err| < 1.5e-7); exp/mul/add only (clean Mosaic lowering).
    p = 0.3275911
    a1, a2, a3, a4, a5 = 0.254829592, -0.284496736, 1.421413741, -1.453152027, 1.061405429
    ax = jnp.abs(x)
    t = 1.0 / (1.0 + p * ax)
    poly = ((((a5 * t + a4) * t + a3) * t + a2) * t + a1) * t
    y = 1.0 - poly * jnp.exp(-ax * ax)
    return jnp.where(x >= 0, y, -y)


def _act(x, activation):
    # elementwise math kept in f32 (v5e has no bf16 VPU/EUP)
    if activation == "relu":
        return jnp.maximum(x, 0.0)
    return 0.5 * x * (1.0 + _erf_approx(x * (1.0 / math.sqrt(2.0))))


# -------------------------------------------------------------- stacked / tiled matmul kernels
# Grid = (M, R/tm, N/tn, K/tk); the K axis MUST stay trailing + "arbitrary" (the output block
# index is constant over k so the f32 accumulator block stays resident) -- do not reorder.
def _matmul_kernel(x_ref, w_ref, o_ref):
    @pl.when(pl.program_id(3) == 0)
    def _():
        o_ref[...] = jnp.zeros_like(o_ref)

    o_ref[...] += jnp.dot(x_ref[...], w_ref[...], preferred_element_type=jnp.float32)


def _matmul_bias_kernel(x_ref, w_ref, b_ref, o_ref):
    @pl.when(pl.program_id(3) == 0)
    def _():
        o_ref[...] = jnp.broadcast_to(b_ref[...], o_ref.shape)

    o_ref[...] += jnp.dot(x_ref[...], w_ref[...], preferred_element_type=jnp.float32)


def _batched_linear(x3, w3, b3):
    """x3: (M, R, K) @ w3: (M, K, N) [+ b3: (M, 1, N)] -> (M, R, N) float32."""
    M, R, K = x3.shape
    N = w3.shape[-1]
    xc = x3.astype(MXU_DTYPE)
    wc = w3.astype(MXU_DTYPE)
    tm, tn, tk = _pick_linear_tiles(R, N, K, jnp.dtype(MXU_DTYPE).itemsize)
    grid = (M, R // tm, N // tn, K // tk)
    x_spec = pl.BlockSpec((None, tm, tk), lambda m, i, j, k: (m, i, k))
    w_spec = pl.BlockSpec((None, tk, tn), lambda m, i, j, k: (m, k, j))
    o_spec = pl.BlockSpec((None, tm, tn), lambda m, i, j, k: (m, i, j))
    params = _mosaic_params("parallel", "parallel", "parallel", "arbitrary")
    if b3 is None:
        return pl.pallas_call(
            _matmul_kernel,
            grid=grid,
            in_specs=[x_spec, w_spec],
            out_specs=o_spec,
            out_shape=jax.ShapeDtypeStruct((M, R, N), jnp.float32),
            compiler_params=params,
        )(xc, wc)
    b_spec = pl.BlockSpec((None, 1, tn), lambda m, i, j, k: (m, 0, j))
    return pl.pallas_call(
        _matmul_bias_kernel,
        grid=grid,
        in_specs=[x_spec, w_spec, b_spec],
        out_specs=o_spec,
        out_shape=jax.ShapeDtypeStruct((M, R, N), jnp.float32),
        compiler_params=params,
    )(xc, wc, b3)


def pallas_linear(x, w, b=None):
    """x: (..., K) @ w: (K, N) [+ b: (N,)] -- one weight shared over all leading dims."""
    orig = x.shape
    K = orig[-1]
    N = w.shape[-1]
    R = int(np.prod(orig[:-1]))
    out = _batched_linear(x.reshape(1, R, K), w.reshape(1, K, N),
                          None if b is None else b.reshape(1, 1, N))
    return out.reshape(orig[:-1] + (N,))


def pallas_linear_stacked(x, w, b=None):
    """x: (M, ..., K) @ w: (M, K, N) [+ b: (M, N)] -- per-learner weights, one launch."""
    orig = x.shape
    M, K = orig[0], orig[-1]
    N = w.shape[-1]
    R = int(np.prod(orig[1:-1]))
    out = _batched_linear(x.reshape(M, R, K), w,
                          None if b is None else b.reshape(M, 1, N))
    return out.reshape(orig[:-1] + (N,))


# -------------------------------------------------------------------- fused FFN kernel
def _ffn_kernel(x_ref, w1_ref, w2_ref, o_ref, *, activation):
    @pl.when(pl.program_id(2) == 0)
    def _():
        o_ref[...] = jnp.zeros_like(o_ref)

    y = jnp.dot(x_ref[...], w1_ref[...], preferred_element_type=jnp.float32)
    y = _act(y, activation)                      # f32 elementwise
    o_ref[...] += jnp.dot(y.astype(w2_ref.dtype), w2_ref[...],
                          preferred_element_type=jnp.float32)


def pallas_ffn_stacked(x, w1, w2, activation):
    """conv1(k=1) -> activation -> conv2(k=1), fused; d_ff intermediate stays in VMEM.
    d_ff is tiled on a trailing "arbitrary" axis so large d_ff stays inside v7x VMEM."""
    orig = x.shape
    M, D = orig[0], orig[-1]
    F = w1.shape[-1]
    Dout = w2.shape[-1]
    R = int(np.prod(orig[1:-1]))
    isz = jnp.dtype(MXU_DTYPE).itemsize
    tm = _pick(R, _ROW_TILES)
    tf = _pick_ff_tile(F, D, tm, isz)
    grid = (M, R // tm, F // tf)
    out = pl.pallas_call(
        functools.partial(_ffn_kernel, activation=activation),
        grid=grid,
        in_specs=[
            pl.BlockSpec((None, tm, D), lambda m, i, f: (m, i, 0)),
            pl.BlockSpec((None, D, tf), lambda m, i, f: (m, 0, f)),
            pl.BlockSpec((None, tf, Dout), lambda m, i, f: (m, f, 0)),
        ],
        out_specs=pl.BlockSpec((None, tm, Dout), lambda m, i, f: (m, i, 0)),
        out_shape=jax.ShapeDtypeStruct((M, R, Dout), jnp.float32),
        compiler_params=_mosaic_params("parallel", "parallel", "arbitrary"),
    )(x.reshape(M, R, D).astype(MXU_DTYPE), w1.astype(MXU_DTYPE), w2.astype(MXU_DTYPE))
    return out.reshape(orig[:-1] + (Dout,))


# -------------------------------------------------------------------- series decomposition
@functools.lru_cache(maxsize=None)
def _moving_avg_matrix(L, ksize):
    # trend[t] = (1/k) * sum_{j=-pad..pad} x[clip(t+j, 0, L-1)]  (edge-replicate padding).
    # Matches torch series_decomp for odd ksize.
    # TODO(synk): for production seq_len switch to a sliding-window/cumsum formulation
    # (dense (L,L) is O(L^2) work and would eventually stress v7x scoped VMEM).
    pad = (ksize - 1) // 2
    A = np.zeros((L, L), np.float32)
    for t in range(L):
        for j in range(-pad, pad + 1):
            s = min(max(t + j, 0), L - 1)
            A[t, s] += 1.0 / ksize
    return A


def _decomp_kernel(x_ref, a_ref, seas_ref, trend_ref):
    X = x_ref[...]                                                   # (L, N*C)
    tr = jnp.dot(a_ref[...], X, preferred_element_type=jnp.float32)  # one wide matmul
    trend_ref[...] = tr
    seas_ref[...] = X - tr


def series_decomp_pallas(x, ksize, residual=None):
    """series_decomp(x [+ residual]); x: (..., L, C).  One wide A@X matmul over all
    leading (learner/batch) dims -- no per-batch unrolled matmuls."""
    if residual is not None:
        x = x + residual                     # tiny; fused by XLA with the transpose below
    lead = x.shape[:-2]
    L, C = x.shape[-2], x.shape[-1]
    N = int(np.prod(lead)) if lead else 1
    W = N * C
    x2 = jnp.transpose(x.reshape(N, L, C), (1, 0, 2)).reshape(L, W)
    A = _moving_avg_matrix(L, ksize)
    full = pl.BlockSpec((L, W), lambda i: (0, 0))
    a_spec = pl.BlockSpec((L, L), lambda i: (0, 0))
    seas2, trend2 = pl.pallas_call(
        _decomp_kernel,
        grid=(1,),
        in_specs=[full, a_spec],
        out_specs=[full, full],
        out_shape=[jax.ShapeDtypeStruct((L, W), jnp.float32)] * 2,
    )(x2, A)

    def back(y):
        return jnp.transpose(y.reshape(L, N, C), (1, 0, 2)).reshape(lead + (L, C))

    return back(seas2), back(trend2)


# -------------------------------------------------------------------- circular conv-3 helpers
def circular_taps(x):
    """(..., L, C) -> (..., L, 3C): [x[t-1], x[t], x[t+1]] on the lane axis (circular in t).
    The rolls/concat are tiny and left to XLA (per review); the conv itself becomes ONE matmul.
    NOTE: tap order must match the [w_prev; w_cur; w_next] row order used at init time."""
    return jnp.concatenate(
        [jnp.roll(x, 1, axis=-2), x, jnp.roll(x, -1, axis=-2)], axis=-1)


def data_embedding_pallas(p, x, x_mark):
    """DataEmbedding_wo_pos: circular conv-3 token embedding + time-feature linear,
    fused into a single matmul against the pre-concatenated (3*Cin + mark, D) weight."""
    xc = jnp.concatenate([circular_taps(x), x_mark], axis=-1)
    return pallas_linear(xc, p["w"])


# -------------------------------------------------------------------- my_Layernorm kernel
def _mylayernorm_kernel(x_ref, w_ref, b_ref, o_ref):
    x = x_ref[...]                      # (M*B, L, D)
    w = w_ref[...]                      # (M*B, 1, D)
    b = b_ref[...]
    mu = jnp.mean(x, axis=-1, keepdims=True)
    var = jnp.mean(jnp.square(x - mu), axis=-1, keepdims=True)
    x_hat = (x - mu) * jax.lax.rsqrt(var + 1e-5) * w + b
    o_ref[...] = x_hat - jnp.mean(x_hat, axis=1, keepdims=True)


def my_layernorm_pallas(x, w, b):
    """x: (M, B, L, D); w, b: (M, D) per-learner LayerNorm params.  One launch for all
    learners and batch elements."""
    M, B, L, D = x.shape
    xf = x.reshape(M * B, L, D)
    wf = jnp.broadcast_to(w[:, None, None, :], (M, B, 1, D)).reshape(M * B, 1, D)
    bf = jnp.broadcast_to(b[:, None, None, :], (M, B, 1, D)).reshape(M * B, 1, D)
    full = pl.BlockSpec((M * B, L, D), lambda i: (0, 0, 0))
    wspec = pl.BlockSpec((M * B, 1, D), lambda i: (0, 0, 0))
    out = pl.pallas_call(
        _mylayernorm_kernel,
        grid=(1,),
        in_specs=[full, wspec, wspec],
        out_specs=full,
        out_shape=jax.ShapeDtypeStruct((M * B, L, D), jnp.float32),
    )(xf, wf, bf)
    return out.reshape(M, B, L, D)


# -------------------------------------------------------------------- URT ensemble kernel
def _ensemble_kernel(dec_ref, urt_ref, o_ref):
    M = dec_ref.shape[0]
    acc = dec_ref[0] * urt_ref[0]
    for m in range(1, M):
        acc = acc + dec_ref[m] * urt_ref[m]
    o_ref[...] = acc


def ensemble_pallas(dec_out, urt_out):
    """fin_out[b,t,i] = sum_j dec_out[j,b,t,i] * urt_out[j,i]."""
    M, B, T, C = dec_out.shape
    R = B * T
    dec2 = dec_out.reshape(M, R, C)
    urt2 = urt_out.reshape(M, 1, C)
    out = pl.pallas_call(
        _ensemble_kernel,
        grid=(1,),
        in_specs=[
            pl.BlockSpec((M, R, C), lambda i: (0, 0, 0)),
            pl.BlockSpec((M, 1, C), lambda i: (0, 0, 0)),
        ],
        out_specs=pl.BlockSpec((R, C), lambda i: (0, 0)),
        out_shape=jax.ShapeDtypeStruct((R, C), jnp.float32),
    )(dec2, urt2)
    return out.reshape(B, T, C)


# ------------------------------------------------------------------- plain-JAX building blocks
# TODO(synk): FFT and the data-dependent top-k gather have no clean Pallas equivalent; the
# AutoCorrelation scoring/aggregation stays in plain JAX (XLA FFT + gather).
def _time_delay_agg_inference(values, corr, factor):
    B, H, E, L = values.shape
    top_k = int(factor * math.log(L))
    mean_value = jnp.mean(jnp.mean(corr, axis=1), axis=1)           # (B, L)
    weights, delay = jax.lax.top_k(mean_value, top_k)               # (B, top_k)
    tmp_corr = jax.nn.softmax(weights, axis=-1)
    init_index = jnp.arange(L, dtype=jnp.int32)
    tmp_values = jnp.concatenate([values, values], axis=-1)
    delays_agg = jnp.zeros_like(values)
    for i in range(top_k):
        tmp_delay = init_index[None, :] + delay[:, i][:, None]      # (B, L)
        idx = jnp.broadcast_to(tmp_delay[:, None, None, :], (B, H, E, L))
        pattern = jnp.take_along_axis(tmp_values, idx, axis=-1)
        delays_agg = delays_agg + pattern * tmp_corr[:, i][:, None, None, None]
    return delays_agg


def auto_correlation(q, k, v, factor):
    B, L, H, E = q.shape
    S = k.shape[1]
    if L > S:
        zpad = jnp.zeros((B, L - S, H, E), q.dtype)
        v = jnp.concatenate([v, zpad], axis=1)
        k = jnp.concatenate([k, zpad], axis=1)
    else:
        v = v[:, :L]
        k = k[:, :L]
    qp = jnp.transpose(q, (0, 2, 3, 1))   # (B, H, E, L)
    kp = jnp.transpose(k, (0, 2, 3, 1))
    vp = jnp.transpose(v, (0, 2, 3, 1))
    q_fft = jnp.fft.rfft(qp, axis=-1)
    k_fft = jnp.fft.rfft(kp, axis=-1)
    corr = jnp.fft.irfft(q_fft * jnp.conj(k_fft), n=L, axis=-1)
    out = _time_delay_agg_inference(vp, corr, factor)
    return jnp.transpose(out, (0, 3, 1, 2))  # (B, L, H, E)


def auto_correlation_layer(p, queries, keys, values, n_heads, factor, *, is_self):
    """All tensors carry a leading learner axis M; projections are stacked pallas_calls."""
    M, B, L, D = queries.shape
    S = keys.shape[2]
    if is_self:
        qkv = pallas_linear_stacked(queries, p["wqkv"], p["bqkv"])   # fused Q|K|V projection
        q, k, v = qkv[..., :D], qkv[..., D:2 * D], qkv[..., 2 * D:]
    else:
        q = pallas_linear_stacked(queries, p["wq"], p["bq"])
        kv = pallas_linear_stacked(keys, p["wkv"], p["bkv"])         # fused K|V projection
        k, v = kv[..., :D], kv[..., D:]
    E = D // n_heads
    q = q.reshape(M * B, L, n_heads, E)
    k = k.reshape(M * B, S, n_heads, E)
    v = v.reshape(M * B, S, n_heads, E)
    out = auto_correlation(q, k, v, factor).reshape(M, B, L, D)
    return pallas_linear_stacked(out, p["wo"], p["bo"])


def encoder_layer(p, x, cfg):
    new_x = auto_correlation_layer(p["attn"], x, x, x, cfg.n_heads, cfg.factor, is_self=True)
    x, _ = series_decomp_pallas(new_x, cfg.moving_avg, residual=x)
    y = pallas_ffn_stacked(x, p["conv1_w"], p["conv2_w"], cfg.activation)
    res, _ = series_decomp_pallas(y, cfg.moving_avg, residual=x)
    return res


def run_encoder(p, x, cfg):
    x = jnp.broadcast_to(x[None], (cfg.n_learner,) + x.shape)   # share embedding across learners
    for lp in p["layers"]:
        x = encoder_layer(lp, x, cfg)
    return my_layernorm_pallas(x, p["norm_w"], p["norm_b"])


def decoder_layer(p, x, cross, cfg):
    a1 = auto_correlation_layer(p["self_attn"], x, x, x, cfg.n_heads, cfg.factor, is_self=True)
    x, trend1 = series_decomp_pallas(a1, cfg.moving_avg, residual=x)
    a2 = auto_correlation_layer(p["cross_attn"], x, cross, cross, cfg.n_heads, cfg.factor,
                                is_self=False)
    x, trend2 = series_decomp_pallas(a2, cfg.moving_avg, residual=x)
    y = pallas_ffn_stacked(x, p["conv1_w"], p["conv2_w"], cfg.activation)
    x, trend3 = series_decomp_pallas(y, cfg.moving_avg, residual=x)
    residual_trend = trend1 + trend2 + trend3
    # Conv1d(k=3, circular, bias=False): concatenated-taps block -> ONE stacked matmul.
    residual_trend = pallas_linear_stacked(circular_taps(residual_trend), p["trend_proj_w"])
    return x, residual_trend


def run_decoder(p, x, cross, trend, cfg):
    M = cfg.n_learner
    x = jnp.broadcast_to(x[None], (M,) + x.shape)
    trend = jnp.broadcast_to(trend[None], (M,) + trend.shape)
    for lp in p["layers"]:
        x, residual_trend = decoder_layer(lp, x, cross, cfg)
        trend = trend + residual_trend
    x = my_layernorm_pallas(x, p["norm_w"], p["norm_b"])
    x = pallas_linear_stacked(x, p["proj_w"], p["proj_b"])
    return x, trend


def urt_head(p, cat_proto, temp=1.0):
    # cat_proto: (n_models, n_extractors=c_out, fea_dim=pred_len)
    M, n_ext, fea = cat_proto.shape
    q = cat_proto.reshape(M, n_ext * fea)
    q_emb = pallas_linear(q, p["wq"], p["bq"])           # (M, hid) -- single lane-dense step
    k_emb = pallas_linear(cat_proto, p["wk"], p["bk"])   # (M, n_ext, hid)
    dot = jnp.sum(q_emb[:, None, :] * k_emb, axis=-1)
    qn = jnp.sqrt(jnp.sum(q_emb * q_emb, axis=-1))[:, None]
    kn = jnp.sqrt(jnp.sum(k_emb * k_emb, axis=-1))
    raw = dot / jnp.maximum(qn * kn, 1e-8)               # cosine similarity
    return jax.nn.softmax(temp * raw, axis=1)


# ------------------------------------------------------------------------------- forward
def mantra_forward(params, cfg, x_enc, x_mark_enc, x_dec, x_mark_dec):
    mean = jnp.repeat(jnp.mean(x_enc, axis=1, keepdims=True), cfg.pred_len, axis=1)
    zeros = jnp.zeros((x_dec.shape[0], cfg.pred_len, x_dec.shape[2]), jnp.float32)
    seasonal_init, trend_init = series_decomp_pallas(x_enc, cfg.moving_avg)
    trend_init = jnp.concatenate([trend_init[:, -cfg.label_len:, :], mean], axis=1)
    seasonal_init = jnp.concatenate([seasonal_init[:, -cfg.label_len:, :], zeros], axis=1)

    eo = data_embedding_pallas(params["enc_emb"], x_enc, x_mark_enc)          # (B, L, D)
    enc_out = run_encoder(params["enc"], eo, cfg)                             # (M, B, L, D)

    dec_emb = data_embedding_pallas(params["dec_emb"], seasonal_init, x_mark_dec)
    seasonal_part, trend_part = run_decoder(params["dec"], dec_emb, enc_out, trend_init, cfg)
    dec_out = trend_part + seasonal_part                  # (M, B, label+pred, c_out)

    dec_out2 = dec_out[:, :, -cfg.pred_len:, :]
    dec_out2 = jnp.mean(dec_out2, axis=1)                 # (M, pred_len, c_out)
    # reproduce torch's .reshape (NOT a transpose) exactly -- intentional parity, don't "fix".
    dec_out2 = dec_out2.reshape(dec_out2.shape[0], dec_out2.shape[2], dec_out2.shape[1])

    scores = [urt_head(hp, dec_out2) for hp in params["urt"]]
    urt_out = jnp.stack(scores, axis=-1)[:, :, 0]         # (M, c_out)

    fin_out = ensemble_pallas(dec_out, urt_out)           # (B, label+pred, c_out)
    return fin_out[:, -cfg.pred_len:, :]


# -------------------------------------------------------------------------- parameter init
def _uniform(key, shape, bound):
    return jax.random.uniform(key, shape, jnp.float32, -bound, bound)


def init_linear(key, fan_in, fan_out, bias=True):
    kw, kb = jax.random.split(key)
    bound = 1.0 / math.sqrt(fan_in)
    w = _uniform(kw, (fan_in, fan_out), bound)
    b = _uniform(kb, (fan_out,), bound) if bias else None
    return w, b


def _stack_dicts(ds):
    return {k: jnp.stack([d[k] for d in ds], axis=0) for k in ds[0]}


def init_embedding(key, c_in, d_model):
    k1, k2 = jax.random.split(key)
    # Row order [w_prev; w_cur; w_next] must match circular_taps().  If real torch Conv1d
    # weights ((out, in, 3) layout) are ever loaded, re-verify the tap order/reshape.
    val_w = init_linear(k1, 3 * c_in, d_model, bias=False)[0]
    time_w = init_linear(k2, MARK_DIM, d_model, bias=False)[0]
    return {"w": jnp.concatenate([val_w, time_w], axis=0)}   # (3*c_in + MARK_DIM, d_model)


def init_attn(key, d_model):
    ks = jax.random.split(key, 4)
    wq, bq = init_linear(ks[0], d_model, d_model)
    wk, bk = init_linear(ks[1], d_model, d_model)
    wv, bv = init_linear(ks[2], d_model, d_model)
    wo, bo = init_linear(ks[3], d_model, d_model)
    return dict(
        wq=wq, bq=bq, wo=wo, bo=bo,
        wqkv=jnp.concatenate([wq, wk, wv], axis=1),
        bqkv=jnp.concatenate([bq, bk, bv], axis=0),
        wkv=jnp.concatenate([wk, wv], axis=1),
        bkv=jnp.concatenate([bk, bv], axis=0),
    )


def init_encoders(key, cfg):
    """Per-learner encoder weights, stacked along a leading M axis per layer."""
    M = cfg.n_learner
    per = []
    for mk in jax.random.split(key, M):
        layers = []
        for lk in jax.random.split(mk, cfg.e_layers):
            k1, k2, k3 = jax.random.split(lk, 3)
            layers.append({
                "attn": init_attn(k1, cfg.d_model),
                "conv1_w": init_linear(k2, cfg.d_model, cfg.d_ff, bias=False)[0],
                "conv2_w": init_linear(k3, cfg.d_ff, cfg.d_model, bias=False)[0],
            })
        per.append(layers)
    stacked = []
    for l in range(cfg.e_layers):
        stacked.append({
            "attn": _stack_dicts([per[m][l]["attn"] for m in range(M)]),
            "conv1_w": jnp.stack([per[m][l]["conv1_w"] for m in range(M)]),
            "conv2_w": jnp.stack([per[m][l]["conv2_w"] for m in range(M)]),
        })
    return {"layers": stacked,
            "norm_w": jnp.ones((M, cfg.d_model), jnp.float32),
            "norm_b": jnp.zeros((M, cfg.d_model), jnp.float32)}


def init_decoders(key, cfg):
    M = cfg.n_learner
    per = []
    for mk in jax.random.split(key, M):
        lkeys = jax.random.split(mk, cfg.d_layers + 1)
        layers = []
        for lk in lkeys[:-1]:
            k1, k2, k3, k4, k5 = jax.random.split(lk, 5)
            layers.append({
                "self_attn": init_attn(k1, cfg.d_model),
                "cross_attn": init_attn(k2, cfg.d_model),
                "conv1_w": init_linear(k3, cfg.d_model, cfg.d_ff, bias=False)[0],
                "conv2_w": init_linear(k4, cfg.d_ff, cfg.d_model, bias=False)[0],
                # rows ordered [w_prev; w_cur; w_next] to match circular_taps()
                "trend_proj_w": init_linear(k5, 3 * cfg.d_model, cfg.c_out, bias=False)[0],
            })
        pw, pb = init_linear(lkeys[-1], cfg.d_model, cfg.c_out, bias=True)
        per.append({"layers": layers, "proj_w": pw, "proj_b": pb})
    stacked = []
    for l in range(cfg.d_layers):
        stacked.append({
            "self_attn": _stack_dicts([per[m]["layers"][l]["self_attn"] for m in range(M)]),
            "cross_attn": _stack_dicts([per[m]["layers"][l]["cross_attn"] for m in range(M)]),
            "conv1_w": jnp.stack([per[m]["layers"][l]["conv1_w"] for m in range(M)]),
            "conv2_w": jnp.stack([per[m]["layers"][l]["conv2_w"] for m in range(M)]),
            "trend_proj_w": jnp.stack([per[m]["layers"][l]["trend_proj_w"] for m in range(M)]),
        })
    return {"layers": stacked,
            "norm_w": jnp.ones((M, cfg.d_model), jnp.float32),
            "norm_b": jnp.zeros((M, cfg.d_model), jnp.float32),
            "proj_w": jnp.stack([p["proj_w"] for p in per]),
            "proj_b": jnp.stack([p["proj_b"] for p in per])}


def init_urt_head(key, cfg):
    k1, k2 = jax.random.split(key)
    wq, bq = init_linear(k1, cfg.pred_len * cfg.enc_in, cfg.urt_hid_dim)
    wk, bk = init_linear(k2, cfg.pred_len, cfg.urt_hid_dim)
    return dict(wq=wq, bq=bq, wk=wk, bk=bk)


def init_params(key, cfg):
    keys = jax.random.split(key, 5)
    return {
        "enc_emb": init_embedding(keys[0], cfg.enc_in, cfg.d_model),
        "dec_emb": init_embedding(keys[1], cfg.dec_in, cfg.d_model),
        "enc": init_encoders(keys[2], cfg),
        "dec": init_decoders(keys[3], cfg),
        "urt": [init_urt_head(k, cfg) for k in jax.random.split(keys[4], cfg.urt_heads)],
    }


# ----------------------------------------------------------------------------------- main
if __name__ == "__main__":
    cfg = SimpleNamespace(
        n_learner=2, seq_len=16, label_len=8, pred_len=8,
        enc_in=4, dec_in=4, c_out=4,
        d_model=32, n_heads=4, d_ff=32, e_layers=1, d_layers=1,
        moving_avg=5, factor=1, dropout=0.0,
        embed="timeF", freq="h", activation="gelu",
        output_attention=False, batch_size=2, urt_heads=1, urt_hid_dim=4096,
    )

    key = jax.random.PRNGKey(0)
    kp, k1, k2, k3, k4 = jax.random.split(key, 5)
    params = init_params(kp, cfg)

    B = cfg.batch_size
    x_enc = jax.random.normal(k1, (B, cfg.seq_len, cfg.enc_in), jnp.float32)
    x_mark_enc = jax.random.normal(k2, (B, cfg.seq_len, MARK_DIM), jnp.float32)
    x_dec = jax.random.normal(k3, (B, cfg.label_len + cfg.pred_len, cfg.dec_in), jnp.float32)
    x_mark_dec = jax.random.normal(k4, (B, cfg.label_len + cfg.pred_len, MARK_DIM), jnp.float32)

    fwd = jax.jit(lambda p, a, b, c, d: mantra_forward(p, cfg, a, b, c, d))
    out = fwd(params, x_enc, x_mark_enc, x_dec, x_mark_dec)
    jax.block_until_ready(out)
    assert out.shape == (B, cfg.pred_len, cfg.c_out)
    print("KERNEL_OK")
</pallas_src>

<mosaic_0001>
module attributes {stable_mosaic.version = 11 : i64} {
  func.func private @main(%arg0: i32) attributes {dimension_semantics = [#tpu.dimension_semantics<core_parallel>], iteration_bounds = array<i64: 2>, tpu.core_type = #tpu.core_type<sc_scalar_subcore>, window_params = []} {
    return
  }
}

module attributes {stable_mosaic.version = 11 : i64} {
  func.func private @main(%arg0: i32) attributes {dimension_semantics = [#tpu.dimension_semantics<core_parallel>], iteration_bounds = array<i64: 2>, tpu.core_type = #tpu.core_type<sc_scalar_subcore>, window_params = []} {
    return
  }
}

module attributes {stable_mosaic.version = 11 : i64} {
  func.func @_matmul_kernel(%arg0: i32, %arg1: i32, %arg2: i32, %arg3: i32, %arg4: memref<1x32x16xbf16, #tpu.memory_space<vmem>>, %arg5: memref<1x16x32xbf16, #tpu.memory_space<vmem>>, %arg6: memref<1x32x32xf32, #tpu.memory_space<vmem>>) attributes {dimension_semantics = [#tpu.dimension_semantics<parallel>, #tpu.dimension_semantics<parallel>, #tpu.dimension_semantics<parallel>, #tpu.dimension_semantics<arbitrary>], iteration_bounds = array<i64: 1, 1, 1, 1>, scalar_prefetch = 0 : i64, scratch_operands = 0 : i64, tpu.core_type = #tpu.core_type<tc>, window_params = [{transform_indices = @transform_0, window_bounds = array<i64: 1, 32, 16>}, {transform_indices = @transform_1, window_bounds = array<i64: 1, 16, 32>}, {transform_indices = @transform_2, window_bounds = array<i64: 1, 32, 32>}]} {
    %c0_i32 = arith.constant 0 : i32
    %0 = arith.cmpi eq, %arg3, %c0_i32 : i32
    %1 = arith.extui %0 : i1 to i32
    %c0_i32_0 = arith.constant 0 : i32
    %2 = arith.cmpi ne, %1, %c0_i32_0 : i32
    scf.if %2 {
      %cst_12 = arith.constant 0.000000e+00 : f32
      %14 = vector.broadcast %cst_12 : f32 to vector<32x32xf32>
      %c0_13 = arith.constant 0 : index
      %c0_14 = arith.constant 0 : index
      %c0_15 = arith.constant 0 : index
      %15 = vector.load %arg6[%c0_13, %c0_14, %c0_15] : memref<1x32x32xf32, #tpu.memory_space<vmem>>, vector<1x32x32xf32>
      %16 = vector.shape_cast %15 : vector<1x32x32xf32> to vector<32x32xf32>
      %17 = vector.shape_cast %14 : vector<32x32xf32> to vector<1x32x32xf32>
      tpu.vector_store %arg6[%c0_13, %c0_14, %c0_15], %17 {strides = array<i32>} : memref<1x32x32xf32, #tpu.memory_space<vmem>>, vector<1x32x32xf32>,
    } else {
    }
    %c0 = arith.constant 0 : index
    %c0_1 = arith.constant 0 : index
    %c0_2 = arith.constant 0 : index
    %3 = vector.load %arg6[%c0, %c0_1, %c0_2] : memref<1x32x32xf32, #tpu.memory_space<vmem>>, vector<1x32x32xf32>
    %4 = vector.shape_cast %3 : vector<1x32x32xf32> to vector<32x32xf32>
    %c0_3 = arith.constant 0 : index
    %c0_4 = arith.constant 0 : index
    %c0_5 = arith.constant 0 : index
    %5 = vector.load %arg4[%c0_3, %c0_4, %c0_5] : memref<1x32x16xbf16, #tpu.memory_space<vmem>>, vector<1x32x16xbf16>
    %6 = vector.shape_cast %5 : vector<1x32x16xbf16> to vector<32x16xbf16>
    %c0_6 = arith.constant 0 : index
    %c0_7 = arith.constant 0 : index
    %c0_8 = arith.constant 0 : index
    %7 = vector.load %arg5[%c0_6, %c0_7, %c0_8] : memref<1x16x32xbf16, #tpu.memory_space<vmem>>, vector<1x16x32xbf16>
    %8 = vector.shape_cast %7 : vector<1x16x32xbf16> to vector<16x32xbf16>
    %cst = arith.constant dense<0.000000e+00> : vector<32x32xf32>
    %9 = tpu.matmul %6, %8, %cst {dimension_numbers = #tpu.dot_dimension_numbers<[1], [0], [0], [1], [0, 0, 1, 1], [], []>} : vector<32x16xbf16>, vector<16x32xbf16>, vector<32x32xf32> -> vector<32x32xf32>
    %10 = arith.addf %4, %9 : vector<32x32xf32>
    %c0_9 = arith.constant 0 : index
    %c0_10 = arith.constant 0 : index
    %c0_11 = arith.constant 0 : index
    %11 = vector.load %arg6[%c0_9, %c0_10, %c0_11] : memref<1x32x32xf32, #tpu.memory_space<vmem>>, vector<1x32x32xf32>
    %12 = vector.shape_cast %11 : vector<1x32x32xf32> to vector<32x32xf32>
    %13 = vector.shape_cast %10 : vector<32x32xf32> to vector<1x32x32xf32>
    tpu.vector_store %arg6[%c0_9, %c0_10, %c0_11], %13 {strides = array<i32>} : memref<1x32x32xf32, #tpu.memory_space<vmem>>, vector<1x32x32xf32>,
    return
  }
  func.func @transform_0(%arg0: i32, %arg1: i32, %arg2: i32, %arg3: i32) -> (i32, i32, i32) {
    %c0_i32 = arith.constant 0 : i32
    return %arg0, %arg1, %arg3 : i32, i32, i32
  }
  func.func @transform_1(%arg0: i32, %arg1: i32, %arg2: i32, %arg3: i32) -> (i32, i32, i32) {
    %c0_i32 = arith.constant 0 : i32
    return %arg0, %arg3, %arg2 : i32, i32, i32
  }
  func.func @transform_2(%arg0: i32, %arg1: i32, %arg2: i32, %arg3: i32) -> (i32, i32, i32) {
    %c0_i32 = arith.constant 0 : i32
    return %arg0, %arg1, %arg2 : i32, i32, i32
  }
}

module attributes {stable_mosaic.version = 11 : i64} {
  func.func @_matmul_bias_kernel(%arg0: i32, %arg1: i32, %arg2: i32, %arg3: i32, %arg4: memref<1x32x32xbf16, #tpu.memory_space<vmem>>, %arg5: memref<1x32x96xbf16, #tpu.memory_space<vmem>>, %arg6: memref<1x1x96xf32, #tpu.memory_space<vmem>>, %arg7: memref<1x32x96xf32, #tpu.memory_space<vmem>>) attributes {dimension_semantics = [#tpu.dimension_semantics<parallel>, #tpu.dimension_semantics<parallel>, #tpu.dimension_semantics<parallel>, #tpu.dimension_semantics<arbitrary>], iteration_bounds = array<i64: 2, 1, 1, 1>, scalar_prefetch = 0 : i64, scratch_operands = 0 : i64, tpu.core_type = #tpu.core_type<tc>, window_params = [{transform_indices = @transform_0, window_bounds = array<i64: 1, 32, 32>}, {transform_indices = @transform_1, window_bounds = array<i64: 1, 32, 96>}, {transform_indices = @transform_2, window_bounds = array<i64: 1, 1, 96>}, {transform_indices = @transform_3, window_bounds = array<i64: 1, 32, 96>}]} {
    %c0_i32 = arith.constant 0 : i32
    %0 = arith.cmpi eq, %arg3, %c0_i32 : i32
    %1 = arith.extui %0 : i1 to i32
    %c0_i32_0 = arith.constant 0 : i32
    %2 = arith.cmpi ne, %1, %c0_i32_0 : i32
    scf.if %2 {
      %c0_12 = arith.constant 0 : index
      %c0_13 = arith.constant 0 : index
      %c0_14 = arith.constant 0 : index
      %14 = vector.load %arg6[%c0_12, %c0_13, %c0_14] : memref<1x1x96xf32, #tpu.memory_space<vmem>>, vector<1x1x96xf32>
      %15 = vector.shape_cast %14 : vector<1x1x96xf32> to vector<1x96xf32>
      %16 = vector.shape_cast %15 : vector<1x96xf32> to vector<1x96xf32>
      %17 = vector.broadcast %16 : vector<1x96xf32> to vector<32x96xf32>
      %c0_15 = arith.constant 0 : index
      %c0_16 = arith.constant 0 : index
      %c0_17 = arith.constant 0 : index
      %18 = vector.load %arg7[%c0_15, %c0_16, %c0_17] : memref<1x32x96xf32, #tpu.memory_space<vmem>>, vector<1x32x96xf32>
      %19 = vector.shape_cast %18 : vector<1x32x96xf32> to vector<32x96xf32>
      %20 = vector.shape_cast %17 : vector<32x96xf32> to vector<1x32x96xf32>
      tpu.vector_store %arg7[%c0_15, %c0_16, %c0_17], %20 {strides = array<i32>} : memref<1x32x96xf32, #tpu.memory_space<vmem>>, vector<1x32x96xf32>,
    } else {
    }
    %c0 = arith.constant 0 : index
    %c0_1 = arith.constant 0 : index
    %c0_2 = arith.constant 0 : index
    %3 = vector.load %arg7[%c0, %c0_1, %c0_2] : memref<1x32x96xf32, #tpu.memory_space<vmem>>, vector<1x32x96xf32>
    %4 = vector.shape_cast %3 : vector<1x32x96xf32> to vector<32x96xf32>
    %c0_3 = arith.constant 0 : index
    %c0_4 = arith.constant 0 : index
    %c0_5 = arith.constant 0 : index
    %5 = vector.load %arg4[%c0_3, %c0_4, %c0_5] : memref<1x32x32xbf16, #tpu.memory_space<vmem>>, vector<1x32x32xbf16>
    %6 = vector.shape_cast %5 : vector<1x32x32xbf16> to vector<32x32xbf16>
    %c0_6 = arith.constant 0 : index
    %c0_7 = arith.constant 0 : index
    %c0_8 = arith.constant 0 : index
    %7 = vector.load %arg5[%c0_6, %c0_7, %c0_8] : memref<1x32x96xbf16, #tpu.memory_space<vmem>>, vector<1x32x96xbf16>
    %8 = vector.shape_cast %7 : vector<1x32x96xbf16> to vector<32x96xbf16>
    %cst = arith.constant dense<0.000000e+00> : vector<32x96xf32>
    %9 = tpu.matmul %6, %8, %cst {dimension_numbers = #tpu.dot_dimension_numbers<[1], [0], [0], [1], [0, 0, 1, 1], [], []>} : vector<32x32xbf16>, vector<32x96xbf16>, vector<32x96xf32> -> vector<32x96xf32>
    %10 = arith.addf %4, %9 : vector<32x96xf32>
    %c0_9 = arith.constant 0 : index
    %c0_10 = arith.constant 0 : index
    %c0_11 = arith.constant 0 : index
    %11 = vector.load %arg7[%c0_9, %c0_10, %c0_11] : memref<1x32x96xf32, #tpu.memory_space<vmem>>, vector<1x32x96xf32>
    %12 = vector.shape_cast %11 : vector<1x32x96xf32> to vector<32x96xf32>
    %13 = vector.shape_cast %10 : vector<32x96xf32> to vector<1x32x96xf32>
    tpu.vector_store %arg7[%c0_9, %c0_10, %c0_11], %13 {strides = array<i32>} : memref<1x32x96xf32, #tpu.memory_space<vmem>>, vector<1x32x96xf32>,
    return
  }
  func.func @transform_0(%arg0: i32, %arg1: i32, %arg2: i32, %arg3: i32) -> (i32, i32, i32) {
    %c0_i32 = arith.constant 0 : i32
    return %arg0, %arg1, %arg3 : i32, i32, i32
  }
  func.func @transform_1(%arg0: i32, %arg1: i32, %arg2: i32, %arg3: i32) -> (i32, i32, i32) {
    %c0_i32 = arith.constant 0 : i32
    return %arg0, %arg3, %arg2 : i32, i32, i32
  }
  func.func @transform_2(%arg0: i32, %arg1: i32, %arg2: i32, %arg3: i32) -> (i32, i32, i32) {
    %c0_i32 = arith.constant 0 : i32
    %c0_i32_0 = arith.constant 0 : i32
    return %arg0, %c0_i32, %arg2 : i32, i32, i32
  }
  func.func @transform_3(%arg0: i32, %arg1: i32, %arg2: i32, %arg3: i32) -> (i32, i32, i32) {
    %c0_i32 = arith.constant 0 : i32
    return %arg0, %arg1, %arg2 : i32, i32, i32
  }
}

module attributes {stable_mosaic.version = 11 : i64} {
  func.func @_decomp_kernel(%arg0: i32, %arg1: memref<16x8xf32, #tpu.memory_space<vmem>>, %arg2: memref<16x16xf32, #tpu.memory_space<vmem>>, %arg3: memref<16x8xf32, #tpu.memory_space<vmem>>, %arg4: memref<16x8xf32, #tpu.memory_space<vmem>>) attributes {dimension_semantics = [#tpu.dimension_semantics<arbitrary>], iteration_bounds = array<i64: 1>, scalar_prefetch = 0 : i64, scratch_operands = 0 : i64, tpu.core_type = #tpu.core_type<tc>, window_params = [{pipeline_mode = #tpu.pipeline_mode<synchronous>, transform_indices = @transform_0, window_bounds = array<i64: 16, 8>}, {pipeline_mode = #tpu.pipeline_mode<synchronous>, transform_indices = @transform_1, window_bounds = array<i64: 16, 16>}, {pipeline_mode = #tpu.pipeline_mode<synchronous>, transform_indices = @transform_2, window_bounds = array<i64: 16, 8>}, {pipeline_mode = #tpu.pipeline_mode<synchronous>, transform_indices = @transform_3, window_bounds = array<i64: 16, 8>}]} {
    %c0 = arith.constant 0 : index
    %c0_0 = arith.constant 0 : index
    %0 = vector.load %arg1[%c0, %c0_0] : memref<16x8xf32, #tpu.memory_space<vmem>>, vector<16x8xf32>
    %c0_1 = arith.constant 0 : index
    %c0_2 = arith.constant 0 : index
    %1 = vector.load %arg2[%c0_1, %c0_2] : memref<16x16xf32, #tpu.memory_space<vmem>>, vector<16x16xf32>
    %cst = arith.constant dense<0.000000e+00> : vector<16x8xf32>
    %2 = tpu.matmul %1, %0, %cst {dimension_numbers = #tpu.dot_dimension_numbers<[1], [0], [0], [1], [0, 0, 1, 1], [], []>} : vector<16x16xf32>, vector<16x8xf32>, vector<16x8xf32> -> vector<16x8xf32>
    %c0_3 = arith.constant 0 : index
    %c0_4 = arith.constant 0 : index
    %3 = vector.load %arg4[%c0_3, %c0_4] : memref<16x8xf32, #tpu.memory_space<vmem>>, vector<16x8xf32>
    tpu.vector_store %arg4[%c0_3, %c0_4], %2 {strides = array<i32>} : memref<16x8xf32, #tpu.memory_space<vmem>>, vector<16x8xf32>,
    %4 = arith.subf %0, %2 : vector<16x8xf32>
    %c0_5 = arith.constant 0 : index
    %c0_6 = arith.constant 0 : index
    %5 = vector.load %arg3[%c0_5, %c0_6] : memref<16x8xf32, #tpu.memory_space<vmem>>, vector<16x8xf32>
    tpu.vector_store %arg3[%c0_5, %c0_6], %4 {strides = array<i32>} : memref<16x8xf32, #tpu.memory_space<vmem>>, vector<16x8xf32>,
    return
  }
  func.func @transform_0(%arg0: i32) -> (i32, i32) {
    %c0_i32 = arith.constant 0 : i32
    %c0_i32_0 = arith.constant 0 : i32
    %c0_i32_1 = arith.constant 0 : i32
    return %c0_i32, %c0_i32_0 : i32, i32
  }
  func.func @transform_1(%arg0: i32) -> (i32, i32) {
    %c0_i32 = arith.constant 0 : i32
    %c0_i32_0 = arith.constant 0 : i32
    %c0_i32_1 = arith.constant 0 : i32
    return %c0_i32, %c0_i32_0 : i32, i32
  }
  func.func @transform_2(%arg0: i32) -> (i32, i32) {
    %c0_i32 = arith.constant 0 : i32
    %c0_i32_0 = arith.constant 0 : i32
    %c0_i32_1 = arith.constant 0 : i32
    return %c0_i32, %c0_i32_0 : i32, i32
  }
  func.func @transform_3(%arg0: i32) -> (i32, i32) {
    %c0_i32 = arith.constant 0 : i32
    %c0_i32_0 = arith.constant 0 : i32
    %c0_i32_1 = arith.constant 0 : i32
    return %c0_i32, %c0_i32_0 : i32, i32
  }
}

module attributes {stable_mosaic.version = 11 : i64} {
  func.func @_decomp_kernel(%arg0: i32, %arg1: memref<16x128xf32, #tpu.memory_space<vmem>>, %arg2: memref<16x16xf32, #tpu.memory_space<vmem>>, %arg3: memref<16x128xf32, #tpu.memory_space<vmem>>, %arg4: memref<16x128xf32, #tpu.memory_space<vmem>>) attributes {dimension_semantics = [#tpu.dimension_semantics<arbitrary>], iteration_bounds = array<i64: 1>, scalar_prefetch = 0 : i64, scratch_operands = 0 : i64, tpu.core_type = #tpu.core_type<tc>, window_params = [{pipeline_mode = #tpu.pipeline_mode<synchronous>, transform_indices = @transform_0, window_bounds = array<i64: 16, 128>}, {pipeline_mode = #tpu.pipeline_mode<synchronous>, transform_indices = @transform_1, window_bounds = array<i64: 16, 16>}, {pipeline_mode = #tpu.pipeline_mode<synchronous>, transform_indices = @transform_2, window_bounds = array<i64: 16, 128>}, {pipeline_mode = #tpu.pipeline_mode<synchronous>, transform_indices = @transform_3, window_bounds = array<i64: 16, 128>}]} {
    %c0 = arith.constant 0 : index
    %c0_0 = arith.constant 0 : index
    %0 = vector.load %arg1[%c0, %c0_0] : memref<16x128xf32, #tpu.memory_space<vmem>>, vector<16x128xf32>
    %c0_1 = arith.constant 0 : index
    %c0_2 = arith.constant 0 : index
    %1 = vector.load %arg2[%c0_1, %c0_2] : memref<16x16xf32, #tpu.memory_space<vmem>>, vector<16x16xf32>
    %cst = arith.constant dense<0.000000e+00> : vector<16x128xf32>
    %2 = tpu.matmul %1, %0, %cst {dimension_numbers = #tpu.dot_dimension_numbers<[1], [0], [0], [1], [0, 0, 1, 1], [], []>} : vector<16x16xf32>, vector<16x128xf32>, vector<16x128xf32> -> vector<16x128xf32>
    %c0_3 = arith.constant 0 : index
    %c0_4 = arith.constant 0 : index
    %3 = vector.load %arg4[%c0_3, %c0_4] : memref<16x128xf32, #tpu.memory_space<vmem>>, vector<16x128xf32>
    tpu.vector_store %arg4[%c0_3, %c0_4], %2 {strides = array<i32>} : memref<16x128xf32, #tpu.memory_space<vmem>>, vector<16x128xf32>,
    %4 = arith.subf %0, %2 : vector<16x128xf32>
    %c0_5 = arith.constant 0 : index
    %c0_6 = arith.constant 0 : index
    %5 = vector.load %arg3[%c0_5, %c0_6] : memref<16x128xf32, #tpu.memory_space<vmem>>, vector<16x128xf32>
    tpu.vector_store %arg3[%c0_5, %c0_6], %4 {strides = array<i32>} : memref<16x128xf32, #tpu.memory_space<vmem>>, vector<16x128xf32>,
    return
  }
  func.func @transform_0(%arg0: i32) -> (i32, i32) {
    %c0_i32 = arith.constant 0 : i32
    %c0_i32_0 = arith.constant 0 : i32
    %c0_i32_1 = arith.constant 0 : i32
    return %c0_i32, %c0_i32_0 : i32, i32
  }
  func.func @transform_1(%arg0: i32) -> (i32, i32) {
    %c0_i32 = arith.constant 0 : i32
    %c0_i32_0 = arith.constant 0 : i32
    %c0_i32_1 = arith.constant 0 : i32
    return %c0_i32, %c0_i32_0 : i32, i32
  }
  func.func @transform_2(%arg0: i32) -> (i32, i32) {
    %c0_i32 = arith.constant 0 : i32
    %c0_i32_0 = arith.constant 0 : i32
    %c0_i32_1 = arith.constant 0 : i32
    return %c0_i32, %c0_i32_0 : i32, i32
  }
  func.func @transform_3(%arg0: i32) -> (i32, i32) {
    %c0_i32 = arith.constant 0 : i32
    %c0_i32_0 = arith.constant 0 : i32
    %c0_i32_1 = arith.constant 0 : i32
    return %c0_i32, %c0_i32_0 : i32, i32
  }
}

module attributes {stable_mosaic.version = 11 : i64} {
  func.func @_matmul_bias_kernel(%arg0: i32, %arg1: i32, %arg2: i32, %arg3: i32, %arg4: memref<1x32x32xbf16, #tpu.memory_space<vmem>>, %arg5: memref<1x32x32xbf16, #tpu.memory_space<vmem>>, %arg6: memref<1x1x32xf32, #tpu.memory_space<vmem>>, %arg7: memref<1x32x32xf32, #tpu.memory_space<vmem>>) attributes {dimension_semantics = [#tpu.dimension_semantics<parallel>, #tpu.dimension_semantics<parallel>, #tpu.dimension_semantics<parallel>, #tpu.dimension_semantics<arbitrary>], iteration_bounds = array<i64: 2, 1, 1, 1>, scalar_prefetch = 0 : i64, scratch_operands = 0 : i64, tpu.core_type = #tpu.core_type<tc>, window_params = [{transform_indices = @transform_0, window_bounds = array<i64: 1, 32, 32>}, {transform_indices = @transform_1, window_bounds = array<i64: 1, 32, 32>}, {transform_indices = @transform_2, window_bounds = array<i64: 1, 1, 32>}, {transform_indices = @transform_3, window_bounds = array<i64: 1, 32, 32>}]} {
    %c0_i32 = arith.constant 0 : i32
    %0 = arith.cmpi eq, %arg3, %c0_i32 : i32
    %1 = arith.extui %0 : i1 to i32
    %c0_i32_0 = arith.constant 0 : i32
    %2 = arith.cmpi ne, %1, %c0_i32_0 : i32
    scf.if %2 {
      %c0_12 = arith.constant 0 : index
      %c0_13 = arith.constant 0 : index
      %c0_14 = arith.constant 0 : index
      %14 = vector.load %arg6[%c0_12, %c0_13, %c0_14] : memref<1x1x32xf32, #tpu.memory_space<vmem>>, vector<1x1x32xf32>
      %15 = vector.shape_cast %14 : vector<1x1x32xf32> to vector<1x32xf32>
      %16 = vector.shape_cast %15 : vector<1x32xf32> to vector<1x32xf32>
      %17 = vector.broadcast %16 : vector<1x32xf32> to vector<32x32xf32>
      %c0_15 = arith.constant 0 : index
      %c0_16 = arith.constant 0 : index
      %c0_17 = arith.constant 0 : index
      %18 = vector.load %arg7[%c0_15, %c0_16, %c0_17] : memref<1x32x32xf32, #tpu.memory_space<vmem>>, vector<1x32x32xf32>
      %19 = vector.shape_cast %18 : vector<1x32x32xf32> to vector<32x32xf32>
      %20 = vector.shape_cast %17 : vector<32x32xf32> to vector<1x32x32xf32>
      tpu.vector_store %arg7[%c0_15, %c0_16, %c0_17], %20 {strides = array<i32>} : memref<1x32x32xf32, #tpu.memory_space<vmem>>, vector<1x32x32xf32>,
    } else {
    }
    %c0 = arith.constant 0 : index
    %c0_1 = arith.constant 0 : index
    %c0_2 = arith.constant 0 : index
    %3 = vector.load %arg7[%c0, %c0_1, %c0_2] : memref<1x32x32xf32, #tpu.memory_space<vmem>>, vector<1x32x32xf32>
    %4 = vector.shape_cast %3 : vector<1x32x32xf32> to vector<32x32xf32>
    %c0_3 = arith.constant 0 : index
    %c0_4 = arith.constant 0 : index
    %c0_5 = arith.constant 0 : index
    %5 = vector.load %arg4[%c0_3, %c0_4, %c0_5] : memref<1x32x32xbf16, #tpu.memory_space<vmem>>, vector<1x32x32xbf16>
    %6 = vector.shape_cast %5 : vector<1x32x32xbf16> to vector<32x32xbf16>
    %c0_6 = arith.constant 0 : index
    %c0_7 = arith.constant 0 : index
    %c0_8 = arith.constant 0 : index
    %7 = vector.load %arg5[%c0_6, %c0_7, %c0_8] : memref<1x32x32xbf16, #tpu.memory_space<vmem>>, vector<1x32x32xbf16>
    %8 = vector.shape_cast %7 : vector<1x32x32xbf16> to vector<32x32xbf16>
    %cst = arith.constant dense<0.000000e+00> : vector<32x32xf32>
    %9 = tpu.matmul %6, %8, %cst {dimension_numbers = #tpu.dot_dimension_numbers<[1], [0], [0], [1], [0, 0, 1, 1], [], []>} : vector<32x32xbf16>, vector<32x32xbf16>, vector<32x32xf32> -> vector<32x32xf32>
    %10 = arith.addf %4, %9 : vector<32x32xf32>
    %c0_9 = arith.constant 0 : index
    %c0_10 = arith.constant 0 : index
    %c0_11 = arith.constant 0 : index
    %11 = vector.load %arg7[%c0_9, %c0_10, %c0_11] : memref<1x32x32xf32, #tpu.memory_space<vmem>>, vector<1x32x32xf32>
    %12 = vector.shape_cast %11 : vector<1x32x32xf32> to vector<32x32xf32>
    %13 = vector.shape_cast %10 : vector<32x32xf32> to vector<1x32x32xf32>
    tpu.vector_store %arg7[%c0_9, %c0_10, %c0_11], %13 {strides = array<i32>} : memref<1x32x32xf32, #tpu.memory_space<vmem>>, vector<1x32x32xf32>,
    return
  }
  func.func @transform_0(%arg0: i32, %arg1: i32, %arg2: i32, %arg3: i32) -> (i32, i32, i32) {
    %c0_i32 = arith.constant 0 : i32
    return %arg0, %arg1, %arg3 : i32, i32, i32
  }
  func.func @transform_1(%arg0: i32, %arg1: i32, %arg2: i32, %arg3: i32) -> (i32, i32, i32) {
    %c0_i32 = arith.constant 0 : i32
    return %arg0, %arg3, %arg2 : i32, i32, i32
  }
  func.func @transform_2(%arg0: i32, %arg1: i32, %arg2: i32, %arg3: i32) -> (i32, i32, i32) {
    %c0_i32 = arith.constant 0 : i32
    %c0_i32_0 = arith.constant 0 : i32
    return %arg0, %c0_i32, %arg2 : i32, i32, i32
  }
  func.func @transform_3(%arg0: i32, %arg1: i32, %arg2: i32, %arg3: i32) -> (i32, i32, i32) {
    %c0_i32 = arith.constant 0 : i32
    return %arg0, %arg1, %arg2 : i32, i32, i32
  }
}

module attributes {stable_mosaic.version = 11 : i64} {
  func.func @_ffn_kernel(%arg0: i32, %arg1: i32, %arg2: i32, %arg3: memref<1x32x32xbf16, #tpu.memory_space<vmem>>, %arg4: memref<1x32x32xbf16, #tpu.memory_space<vmem>>, %arg5: memref<1x32x32xbf16, #tpu.memory_space<vmem>>, %arg6: memref<1x32x32xf32, #tpu.memory_space<vmem>>) attributes {dimension_semantics = [#tpu.dimension_semantics<parallel>, #tpu.dimension_semantics<parallel>, #tpu.dimension_semantics<arbitrary>], iteration_bounds = array<i64: 2, 1, 1>, scalar_prefetch = 0 : i64, scratch_operands = 0 : i64, tpu.core_type = #tpu.core_type<tc>, window_params = [{transform_indices = @transform_0, window_bounds = array<i64: 1, 32, 32>}, {transform_indices = @transform_1, window_bounds = array<i64: 1, 32, 32>}, {transform_indices = @transform_2, window_bounds = array<i64: 1, 32, 32>}, {transform_indices = @transform_3, window_bounds = array<i64: 1, 32, 32>}]} {
    %c0_i32 = arith.constant 0 : i32
    %0 = arith.cmpi eq, %arg2, %c0_i32 : i32
    %1 = arith.extui %0 : i1 to i32
    %c0_i32_0 = arith.constant 0 : i32
    %2 = arith.cmpi ne, %1, %c0_i32_0 : i32
    scf.if %2 {
      %cst_31 = arith.constant 0.000000e+00 : f32
      %58 = vector.broadcast %cst_31 : f32 to vector<32x32xf32>
      %c0_32 = arith.constant 0 : index
      %c0_33 = arith.constant 0 : index
      %c0_34 = arith.constant 0 : index
      %59 = vector.load %arg6[%c0_32, %c0_33, %c0_34] : memref<1x32x32xf32, #tpu.memory_space<vmem>>, vector<1x32x32xf32>
      %60 = vector.shape_cast %59 : vector<1x32x32xf32> to vector<32x32xf32>
      %61 = vector.shape_cast %58 : vector<32x32xf32> to vector<1x32x32xf32>
      tpu.vector_store %arg6[%c0_32, %c0_33, %c0_34], %61 {strides = array<i32>} : memref<1x32x32xf32, #tpu.memory_space<vmem>>, vector<1x32x32xf32>,
    } else {
    }
    %c0 = arith.constant 0 : index
    %c0_1 = arith.constant 0 : index
    %c0_2 = arith.constant 0 : index
    %3 = vector.load %arg3[%c0, %c0_1, %c0_2] : memref<1x32x32xbf16, #tpu.memory_space<vmem>>, vector<1x32x32xbf16>
    %4 = vector.shape_cast %3 : vector<1x32x32xbf16> to vector<32x32xbf16>
    %c0_3 = arith.constant 0 : index
    %c0_4 = arith.constant 0 : index
    %c0_5 = arith.constant 0 : index
    %5 = vector.load %arg4[%c0_3, %c0_4, %c0_5] : memref<1x32x32xbf16, #tpu.memory_space<vmem>>, vector<1x32x32xbf16>
    %6 = vector.shape_cast %5 : vector<1x32x32xbf16> to vector<32x32xbf16>
    %cst = arith.constant dense<0.000000e+00> : vector<32x32xf32>
    %7 = tpu.matmul %4, %6, %cst {dimension_numbers = #tpu.dot_dimension_numbers<[1], [0], [0], [1], [0, 0, 1, 1], [], []>} : vector<32x32xbf16>, vector<32x32xbf16>, vector<32x32xf32> -> vector<32x32xf32>
    %cst_6 = arith.constant 5.000000e-01 : f32
    %8 = vector.broadcast %cst_6 : f32 to vector<32x32xf32>
    %9 = arith.mulf %8, %7 : vector<32x32xf32>
    %cst_7 = arith.constant 0.707106769 : f32
    %10 = vector.broadcast %cst_7 : f32 to vector<32x32xf32>
    %11 = arith.mulf %7, %10 : vector<32x32xf32>
    %12 = math.absf %11 : vector<32x32xf32>
    %cst_8 = arith.constant 0.327591091 : f32
    %13 = vector.broadcast %cst_8 : f32 to vector<32x32xf32>
    %14 = arith.mulf %13, %12 : vector<32x32xf32>
    %cst_9 = arith.constant 1.000000e+00 : f32
    %15 = vector.broadcast %cst_9 : f32 to vector<32x32xf32>
    %16 = arith.addf %15, %14 : vector<32x32xf32>
    %cst_10 = arith.constant 1.000000e+00 : f32
    %17 = vector.broadcast %cst_10 : f32 to vector<32x32xf32>
    %18 = arith.divf %17, %16 : vector<32x32xf32>
    %cst_11 = arith.constant 1.06140542 : f32
    %19 = vector.broadcast %cst_11 : f32 to vector<32x32xf32>
    %20 = arith.mulf %19, %18 : vector<32x32xf32>
    %cst_12 = arith.constant -1.45315206 : f32
    %21 = vector.broadcast %cst_12 : f32 to vector<32x32xf32>
    %22 = arith.addf %20, %21 : vector<32x32xf32>
    %23 = arith.mulf %22, %18 : vector<32x32xf32>
    %cst_13 = arith.constant 1.42141378 : f32
    %24 = vector.broadcast %cst_13 : f32 to vector<32x32xf32>
    %25 = arith.addf %23, %24 : vector<32x32xf32>
    %26 = arith.mulf %25, %18 : vector<32x32xf32>
    %cst_14 = arith.constant -0.284496725 : f32
    %27 = vector.broadcast %cst_14 : f32 to vector<32x32xf32>
    %28 = arith.addf %26, %27 : vector<32x32xf32>
    %29 = arith.mulf %28, %18 : vector<32x32xf32>
    %cst_15 = arith.constant 0.254829586 : f32
    %30 = vector.broadcast %cst_15 : f32 to vector<32x32xf32>
    %31 = arith.addf %29, %30 : vector<32x32xf32>
    %32 = arith.mulf %31, %18 : vector<32x32xf32>
    %cst_16 = arith.constant 0.000000e+00 : f32
    %33 = vector.broadcast %cst_16 : f32 to vector<32x32xf32>
    %34 = arith.subf %33, %12 : vector<32x32xf32>
    %35 = arith.mulf %34, %12 : vector<32x32xf32>
    %36 = math.exp %35 : vector<32x32xf32>
    %37 = arith.mulf %32, %36 : vector<32x32xf32>
    %cst_17 = arith.constant 1.000000e+00 : f32
    %38 = vector.broadcast %cst_17 : f32 to vector<32x32xf32>
    %39 = arith.subf %38, %37 : vector<32x32xf32>
    %cst_18 = arith.constant 0.000000e+00 : f32
    %40 = vector.broadcast %cst_18 : f32 to vector<32x32xf32>
    %41 = arith.cmpf oge, %11, %40 : vector<32x32xf32>
    %cst_19 = arith.constant 0.000000e+00 : f32
    %42 = vector.broadcast %cst_19 : f32 to vector<32x32xf32>
    %43 = arith.subf %42, %39 : vector<32x32xf32>
    %44 = arith.select %41, %39, %43 : vector<32x32xi1>, vector<32x32xf32>
    %cst_20 = arith.constant 1.000000e+00 : f32
    %45 = vector.broadcast %cst_20 : f32 to vector<32x32xf32>
    %46 = arith.addf %45, %44 : vector<32x32xf32>
    %47 = arith.mulf %9, %46 : vector<32x32xf32>
    %c0_21 = arith.constant 0 : index
    %c0_22 = arith.constant 0 : index
    %c0_23 = arith.constant 0 : index
    %48 = vector.load %arg6[%c0_21, %c0_22, %c0_23] : memref<1x32x32xf32, #tpu.memory_space<vmem>>, vector<1x32x32xf32>
    %49 = vector.shape_cast %48 : vector<1x32x32xf32> to vector<32x32xf32>
    %50 = arith.truncf %47 : vector<32x32xf32> to vector<32x32xbf16>
    %c0_24 = arith.constant 0 : index
    %c0_25 = arith.constant 0 : index
    %c0_26 = arith.constant 0 : index
    %51 = vector.load %arg5[%c0_24, %c0_25, %c0_26] : memref<1x32x32xbf16, #tpu.memory_space<vmem>>, vector<1x32x32xbf16>
    %52 = vector.shape_cast %51 : vector<1x32x32xbf16> to vector<32x32xbf16>
    %cst_27 = arith.constant dense<0.000000e+00> : vector<32x32xf32>
    %53 = tpu.matmul %50, %52, %cst_27 {dimension_numbers = #tpu.dot_dimension_numbers<[1], [0], [0], [1], [0, 0, 1, 1], [], []>} : vector<32x32xbf16>, vector<32x32xbf16>, vector<32x32xf32> -> vector<32x32xf32>
    %54 = arith.addf %49, %53 : vector<32x32xf32>
    %c0_28 = arith.constant 0 : index
    %c0_29 = arith.constant 0 : index
    %c0_30 = arith.constant 0 : index
    %55 = vector.load %arg6[%c0_28, %c0_29, %c0_30] : memref<1x32x32xf32, #tpu.memory_space<vmem>>, vector<1x32x32xf32>
    %56 = vector.shape_cast %55 : vector<1x32x32xf32> to vector<32x32xf32>
    %57 = vector.shape_cast %54 : vector<32x32xf32> to vector<1x32x32xf32>
    tpu.vector_store %arg6[%c0_28, %c0_29, %c0_30], %57 {strides = array<i32>} : memref<1x32x32xf32, #tpu.memory_space<vmem>>, vector<1x32x32xf32>,
    return
  }
  func.func @transform_0(%arg0: i32, %arg1: i32, %arg2: i32) -> (i32, i32, i32) {
    %c0_i32 = arith.constant 0 : i32
    %c0_i32_0 = arith.constant 0 : i32
    return %arg0, %arg1, %c0_i32 : i32, i32, i32
  }
  func.func @transform_1(%arg0: i32, %arg1: i32, %arg2: i32) -> (i32, i32, i32) {
    %c0_i32 = arith.constant 0 : i32
    %c0_i32_0 = arith.constant 0 : i32
    return %arg0, %c0_i32, %arg2 : i32, i32, i32
  }
  func.func @transform_2(%arg0: i32, %arg1: i32, %arg2: i32) -> (i32, i32, i32) {
    %c0_i32 = arith.constant 0 : i32
    %c0_i32_0 = arith.constant 0 : i32
    return %arg0, %arg2, %c0_i32 : i32, i32, i32
  }
  func.func @transform_3(%arg0: i32, %arg1: i32, %arg2: i32) -> (i32, i32, i32) {
    %c0_i32 = arith.constant 0 : i32
    %c0_i32_0 = arith.constant 0 : i32
    return %arg0, %arg1, %c0_i32 : i32, i32, i32
  }
}

module attributes {stable_mosaic.version = 11 : i64} {
  func.func @_mylayernorm_kernel(%arg0: i32, %arg1: memref<4x16x32xf32, #tpu.memory_space<vmem>>, %arg2: memref<4x1x32xf32, #tpu.memory_space<vmem>>, %arg3: memref<4x1x32xf32, #tpu.memory_space<vmem>>, %arg4: memref<4x16x32xf32, #tpu.memory_space<vmem>>) attributes {dimension_semantics = [#tpu.dimension_semantics<arbitrary>], iteration_bounds = array<i64: 1>, scalar_prefetch = 0 : i64, scratch_operands = 0 : i64, tpu.core_type = #tpu.core_type<tc>, window_params = [{pipeline_mode = #tpu.pipeline_mode<synchronous>, transform_indices = @transform_0, window_bounds = array<i64: 4, 16, 32>}, {pipeline_mode = #tpu.pipeline_mode<synchronous>, transform_indices = @transform_1, window_bounds = array<i64: 4, 1, 32>}, {pipeline_mode = #tpu.pipeline_mode<synchronous>, transform_indices = @transform_2, window_bounds = array<i64: 4, 1, 32>}, {pipeline_mode = #tpu.pipeline_mode<synchronous>, transform_indices = @transform_3, window_bounds = array<i64: 4, 16, 32>}]} {
    %c0 = arith.constant 0 : index
    %c0_0 = arith.constant 0 : index
    %c0_1 = arith.constant 0 : index
    %0 = vector.load %arg1[%c0, %c0_0, %c0_1] : memref<4x16x32xf32, #tpu.memory_space<vmem>>, vector<4x16x32xf32>
    %c0_2 = arith.constant 0 : index
    %c0_3 = arith.constant 0 : index
    %c0_4 = arith.constant 0 : index
    %1 = vector.load %arg2[%c0_2, %c0_3, %c0_4] : memref<4x1x32xf32, #tpu.memory_space<vmem>>, vector<4x1x32xf32>
    %c0_5 = arith.constant 0 : index
    %c0_6 = arith.constant 0 : index
    %c0_7 = arith.constant 0 : index
    %2 = vector.load %arg3[%c0_5, %c0_6, %c0_7] : memref<4x1x32xf32, #tpu.memory_space<vmem>>, vector<4x1x32xf32>
    %cst = arith.constant dense<0.000000e+00> : vector<4x16xf32>
    %3 = vector.multi_reduction <add>, %0, %cst [2] : vector<4x16x32xf32> to vector<4x16xf32>
    %4 = vector.shape_cast %3 : vector<4x16xf32> to vector<4x16x1xf32>
    %cst_8 = arith.constant 3.200000e+01 : f32
    %5 = vector.broadcast %cst_8 : f32 to vector<4x16x1xf32>
    %6 = arith.divf %4, %5 : vector<4x16x1xf32>
    %7 = vector.broadcast %6 : vector<4x16x1xf32> to vector<4x16x32xf32>
    %8 = arith.subf %0, %7 : vector<4x16x32xf32>
    %9 = arith.mulf %8, %8 : vector<4x16x32xf32>
    %cst_9 = arith.constant dense<0.000000e+00> : vector<4x16xf32>
    %10 = vector.multi_reduction <add>, %9, %cst_9 [2] : vector<4x16x32xf32> to vector<4x16xf32>
    %11 = vector.shape_cast %10 : vector<4x16xf32> to vector<4x16x1xf32>
    %cst_10 = arith.constant 3.200000e+01 : f32
    %12 = vector.broadcast %cst_10 : f32 to vector<4x16x1xf32>
    %13 = arith.divf %11, %12 : vector<4x16x1xf32>
    %14 = vector.broadcast %6 : vector<4x16x1xf32> to vector<4x16x32xf32>
    %15 = arith.subf %0, %14 : vector<4x16x32xf32>
    %cst_11 = arith.constant 9.99999974E-6 : f32
    %16 = vector.broadcast %cst_11 : f32 to vector<4x16x1xf32>
    %17 = arith.addf %13, %16 : vector<4x16x1xf32>
    %18 = math.rsqrt %17 : vector<4x16x1xf32>
    %19 = vector.broadcast %18 : vector<4x16x1xf32> to vector<4x16x32xf32>
    %20 = arith.mulf %15, %19 : vector<4x16x32xf32>
    %21 = vector.broadcast %1 : vector<4x1x32xf32> to vector<4x16x32xf32>
    %22 = arith.mulf %20, %21 : vector<4x16x32xf32>
    %23 = vector.broadcast %2 : vector<4x1x32xf32> to vector<4x16x32xf32>
    %24 = arith.addf %22, %23 : vector<4x16x32xf32>
    %cst_12 = arith.constant dense<0.000000e+00> : vector<4x32xf32>
    %25 = vector.multi_reduction <add>, %24, %cst_12 [1] : vector<4x16x32xf32> to vector<4x32xf32>
    %26 = vector.shape_cast %25 : vector<4x32xf32> to vector<4x1x32xf32>
    %cst_13 = arith.constant 1.600000e+01 : f32
    %27 = vector.broadcast %cst_13 : f32 to vector<4x1x32xf32>
    %28 = arith.divf %26, %27 : vector<4x1x32xf32>
    %29 = vector.broadcast %28 : vector<4x1x32xf32> to vector<4x16x32xf32>
    %30 = arith.subf %24, %29 : vector<4x16x32xf32>
    %c0_14 = arith.constant 0 : index
    %c0_15 = arith.constant 0 : index
    %c0_16 = arith.constant 0 : index
    %31 = vector.load %arg4[%c0_14, %c0_15, %c0_16] : memref<4x16x32xf32, #tpu.memory_space<vmem>>, vector<4x16x32xf32>
    tpu.vector_store %arg4[%c0_14, %c0_15, %c0_16], %30 {strides = array<i32>} : memref<4x16x32xf32, #tpu.memory_space<vmem>>, vector<4x16x32xf32>,
    return
  }
  func.func @transform_0(%arg0: i32) -> (i32, i32, i32) {
    %c0_i32 = arith.constant 0 : i32
    %c0_i32_0 = arith.constant 0 : i32
    %c0_i32_1 = arith.constant 0 : i32
    %c0_i32_2 = arith.constant 0 : i32
    return %c0_i32, %c0_i32_0, %c0_i32_1 : i32, i32, i32
  }
  func.func @transform_1(%arg0: i32) -> (i32, i32, i32) {
    %c0_i32 = arith.constant 0 : i32
    %c0_i32_0 = arith.constant 0 : i32
    %c0_i32_1 = arith.constant 0 : i32
    %c0_i32_2 = arith.constant 0 : i32
    return %c0_i32, %c0_i32_0, %c0_i32_1 : i32, i32, i32
  }
  func.func @transform_2(%arg0: i32) -> (i32, i32, i32) {
    %c0_i32 = arith.constant 0 : i32
    %c0_i32_0 = arith.constant 0 : i32
    %c0_i32_1 = arith.constant 0 : i32
    %c0_i32_2 = arith.constant 0 : i32
    return %c0_i32, %c0_i32_0, %c0_i32_1 : i32, i32, i32
  }
  func.func @transform_3(%arg0: i32) -> (i32, i32, i32) {
    %c0_i32 = arith.constant 0 : i32
    %c0_i32_0 = arith.constant 0 : i32
    %c0_i32_1 = arith.constant 0 : i32
    %c0_i32_2 = arith.constant 0 : i32
    return %c0_i32, %c0_i32_0, %c0_i32_1 : i32, i32, i32
  }
}

module attributes {stable_mosaic.version = 11 : i64} {
  func.func @_matmul_bias_kernel(%arg0: i32, %arg1: i32, %arg2: i32, %arg3: i32, %arg4: memref<1x32x32xbf16, #tpu.memory_space<vmem>>, %arg5: memref<1x32x64xbf16, #tpu.memory_space<vmem>>, %arg6: memref<1x1x64xf32, #tpu.memory_space<vmem>>, %arg7: memref<1x32x64xf32, #tpu.memory_space<vmem>>) attributes {dimension_semantics = [#tpu.dimension_semantics<parallel>, #tpu.dimension_semantics<parallel>, #tpu.dimension_semantics<parallel>, #tpu.dimension_semantics<arbitrary>], iteration_bounds = array<i64: 2, 1, 1, 1>, scalar_prefetch = 0 : i64, scratch_operands = 0 : i64, tpu.core_type = #tpu.core_type<tc>, window_params = [{transform_indices = @transform_0, window_bounds = array<i64: 1, 32, 32>}, {transform_indices = @transform_1, window_bounds = array<i64: 1, 32, 64>}, {transform_indices = @transform_2, window_bounds = array<i64: 1, 1, 64>}, {transform_indices = @transform_3, window_bounds = array<i64: 1, 32, 64>}]} {
    %c0_i32 = arith.constant 0 : i32
    %0 = arith.cmpi eq, %arg3, %c0_i32 : i32
    %1 = arith.extui %0 : i1 to i32
    %c0_i32_0 = arith.constant 0 : i32
    %2 = arith.cmpi ne, %1, %c0_i32_0 : i32
    scf.if %2 {
      %c0_12 = arith.constant 0 : index
      %c0_13 = arith.constant 0 : index
      %c0_14 = arith.constant 0 : index
      %14 = vector.load %arg6[%c0_12, %c0_13, %c0_14] : memref<1x1x64xf32, #tpu.memory_space<vmem>>, vector<1x1x64xf32>
      %15 = vector.shape_cast %14 : vector<1x1x64xf32> to vector<1x64xf32>
      %16 = vector.shape_cast %15 : vector<1x64xf32> to vector<1x64xf32>
      %17 = vector.broadcast %16 : vector<1x64xf32> to vector<32x64xf32>
      %c0_15 = arith.constant 0 : index
      %c0_16 = arith.constant 0 : index
      %c0_17 = arith.constant 0 : index
      %18 = vector.load %arg7[%c0_15, %c0_16, %c0_17] : memref<1x32x64xf32, #tpu.memory_space<vmem>>, vector<1x32x64xf32>
      %19 = vector.shape_cast %18 : vector<1x32x64xf32> to vector<32x64xf32>
      %20 = vector.shape_cast %17 : vector<32x64xf32> to vector<1x32x64xf32>
      tpu.vector_store %arg7[%c0_15, %c0_16, %c0_17], %20 {strides = array<i32>} : memref<1x32x64xf32, #tpu.memory_space<vmem>>, vector<1x32x64xf32>,
    } else {
    }
    %c0 = arith.constant 0 : index
    %c0_1 = arith.constant 0 : index
    %c0_2 = arith.constant 0 : index
    %3 = vector.load %arg7[%c0, %c0_1, %c0_2] : memref<1x32x64xf32, #tpu.memory_space<vmem>>, vector<1x32x64xf32>
    %4 = vector.shape_cast %3 : vector<1x32x64xf32> to vector<32x64xf32>
    %c0_3 = arith.constant 0 : index
    %c0_4 = arith.constant 0 : index
    %c0_5 = arith.constant 0 : index
    %5 = vector.load %arg4[%c0_3, %c0_4, %c0_5] : memref<1x32x32xbf16, #tpu.memory_space<vmem>>, vector<1x32x32xbf16>
    %6 = vector.shape_cast %5 : vector<1x32x32xbf16> to vector<32x32xbf16>
    %c0_6 = arith.constant 0 : index
    %c0_7 = arith.constant 0 : index
    %c0_8 = arith.constant 0 : index
    %7 = vector.load %arg5[%c0_6, %c0_7, %c0_8] : memref<1x32x64xbf16, #tpu.memory_space<vmem>>, vector<1x32x64xbf16>
    %8 = vector.shape_cast %7 : vector<1x32x64xbf16> to vector<32x64xbf16>
    %cst = arith.constant dense<0.000000e+00> : vector<32x64xf32>
    %9 = tpu.matmul %6, %8, %cst {dimension_numbers = #tpu.dot_dimension_numbers<[1], [0], [0], [1], [0, 0, 1, 1], [], []>} : vector<32x32xbf16>, vector<32x64xbf16>, vector<32x64xf32> -> vector<32x64xf32>
    %10 = arith.addf %4, %9 : vector<32x64xf32>
    %c0_9 = arith.constant 0 : index
    %c0_10 = arith.constant 0 : index
    %c0_11 = arith.constant 0 : index
    %11 = vector.load %arg7[%c0_9, %c0_10, %c0_11] : memref<1x32x64xf32, #tpu.memory_space<vmem>>, vector<1x32x64xf32>
    %12 = vector.shape_cast %11 : vector<1x32x64xf32> to vector<32x64xf32>
    %13 = vector.shape_cast %10 : vector<32x64xf32> to vector<1x32x64xf32>
    tpu.vector_store %arg7[%c0_9, %c0_10, %c0_11], %13 {strides = array<i32>} : memref<1x32x64xf32, #tpu.memory_space<vmem>>, vector<1x32x64xf32>,
    return
  }
  func.func @transform_0(%arg0: i32, %arg1: i32, %arg2: i32, %arg3: i32) -> (i32, i32, i32) {
    %c0_i32 = arith.constant 0 : i32
    return %arg0, %arg1, %arg3 : i32, i32, i32
  }
  func.func @transform_1(%arg0: i32, %arg1: i32, %arg2: i32, %arg3: i32) -> (i32, i32, i32) {
    %c0_i32 = arith.constant 0 : i32
    return %arg0, %arg3, %arg2 : i32, i32, i32
  }
  func.func @transform_2(%arg0: i32, %arg1: i32, %arg2: i32, %arg3: i32) -> (i32, i32, i32) {
    %c0_i32 = arith.constant 0 : i32
    %c0_i32_0 = arith.constant 0 : i32
    return %arg0, %c0_i32, %arg2 : i32, i32, i32
  }
  func.func @transform_3(%arg0: i32, %arg1: i32, %arg2: i32, %arg3: i32) -> (i32, i32, i32) {
    %c0_i32 = arith.constant 0 : i32
    return %arg0, %arg1, %arg2 : i32, i32, i32
  }
}

module attributes {stable_mosaic.version = 11 : i64} {
  func.func @_decomp_kernel(%arg0: i32, %arg1: memref<16x128xf32, #tpu.memory_space<vmem>>, %arg2: memref<16x16xf32, #tpu.memory_space<vmem>>, %arg3: memref<16x128xf32, #tpu.memory_space<vmem>>, %arg4: memref<16x128xf32, #tpu.memory_space<vmem>>) attributes {dimension_semantics = [#tpu.dimension_semantics<arbitrary>], iteration_bounds = array<i64: 1>, scalar_prefetch = 0 : i64, scratch_operands = 0 : i64, tpu.core_type = #tpu.core_type<tc>, window_params = [{pipeline_mode = #tpu.pipeline_mode<synchronous>, transform_indices = @transform_0, window_bounds = array<i64: 16, 128>}, {pipeline_mode = #tpu.pipeline_mode<synchronous>, transform_indices = @transform_1, window_bounds = array<i64: 16, 16>}, {pipeline_mode = #tpu.pipeline_mode<synchronous>, transform_indices = @transform_2, window_bounds = array<i64: 16, 128>}, {pipeline_mode = #tpu.pipeline_mode<synchronous>, transform_indices = @transform_3, window_bounds = array<i64: 16, 128>}]} {
    %c0 = arith.constant 0 : index
    %c0_0 = arith.constant 0 : index
    %0 = vector.load %arg1[%c0, %c0_0] : memref<16x128xf32, #tpu.memory_space<vmem>>, vector<16x128xf32>
    %c0_1 = arith.constant 0 : index
    %c0_2 = arith.constant 0 : index
    %1 = vector.load %arg2[%c0_1, %c0_2] : memref<16x16xf32, #tpu.memory_space<vmem>>, vector<16x16xf32>
    %cst = arith.constant dense<0.000000e+00> : vector<16x128xf32>
    %2 = tpu.matmul %1, %0, %cst {dimension_numbers = #tpu.dot_dimension_numbers<[1], [0], [0], [1], [0, 0, 1, 1], [], []>} : vector<16x16xf32>, vector<16x128xf32>, vector<16x128xf32> -> vector<16x128xf32>
    %c0_3 = arith.constant 0 : index
    %c0_4 = arith.constant 0 : index
    %3 = vector.load %arg4[%c0_3, %c0_4] : memref<16x128xf32, #tpu.memory_space<vmem>>, vector<16x128xf32>
    tpu.vector_store %arg4[%c0_3, %c0_4], %2 {strides = array<i32>} : memref<16x128xf32, #tpu.memory_space<vmem>>, vector<16x128xf32>,
    %4 = arith.subf %0, %2 : vector<16x128xf32>
    %c0_5 = arith.constant 0 : index
    %c0_6 = arith.constant 0 : index
    %5 = vector.load %arg3[%c0_5, %c0_6] : memref<16x128xf32, #tpu.memory_space<vmem>>, vector<16x128xf32>
    tpu.vector_store %arg3[%c0_5, %c0_6], %4 {strides = array<i32>} : memref<16x128xf32, #tpu.memory_space<vmem>>, vector<16x128xf32>,
    return
  }
  func.func @transform_0(%arg0: i32) -> (i32, i32) {
    %c0_i32 = arith.constant 0 : i32
    %c0_i32_0 = arith.constant 0 : i32
    %c0_i32_1 = arith.constant 0 : i32
    return %c0_i32, %c0_i32_0 : i32, i32
  }
  func.func @transform_1(%arg0: i32) -> (i32, i32) {
    %c0_i32 = arith.constant 0 : i32
    %c0_i32_0 = arith.constant 0 : i32
    %c0_i32_1 = arith.constant 0 : i32
    return %c0_i32, %c0_i32_0 : i32, i32
  }
  func.func @transform_2(%arg0: i32) -> (i32, i32) {
    %c0_i32 = arith.constant 0 : i32
    %c0_i32_0 = arith.constant 0 : i32
    %c0_i32_1 = arith.constant 0 : i32
    return %c0_i32, %c0_i32_0 : i32, i32
  }
  func.func @transform_3(%arg0: i32) -> (i32, i32) {
    %c0_i32 = arith.constant 0 : i32
    %c0_i32_0 = arith.constant 0 : i32
    %c0_i32_1 = arith.constant 0 : i32
    return %c0_i32, %c0_i32_0 : i32, i32
  }
}

module attributes {stable_mosaic.version = 11 : i64} {
  func.func @_matmul_bias_kernel(%arg0: i32, %arg1: i32, %arg2: i32, %arg3: i32, %arg4: memref<1x2x32xbf16, #tpu.memory_space<vmem>>, %arg5: memref<1x32x4096xbf16, #tpu.memory_space<vmem>>, %arg6: memref<1x1x4096xf32, #tpu.memory_space<vmem>>, %arg7: memref<1x2x4096xf32, #tpu.memory_space<vmem>>) attributes {dimension_semantics = [#tpu.dimension_semantics<parallel>, #tpu.dimension_semantics<parallel>, #tpu.dimension_semantics<parallel>, #tpu.dimension_semantics<arbitrary>], iteration_bounds = array<i64: 1, 1, 1, 1>, scalar_prefetch = 0 : i64, scratch_operands = 0 : i64, tpu.core_type = #tpu.core_type<tc>, window_params = [{transform_indices = @transform_0, window_bounds = array<i64: 1, 2, 32>}, {transform_indices = @transform_1, window_bounds = array<i64: 1, 32, 4096>}, {transform_indices = @transform_2, window_bounds = array<i64: 1, 1, 4096>}, {transform_indices = @transform_3, window_bounds = array<i64: 1, 2, 4096>}]} {
    %c0_i32 = arith.constant 0 : i32
    %0 = arith.cmpi eq, %arg3, %c0_i32 : i32
    %1 = arith.extui %0 : i1 to i32
    %c0_i32_0 = arith.constant 0 : i32
    %2 = arith.cmpi ne, %1, %c0_i32_0 : i32
    scf.if %2 {
      %c0_12 = arith.constant 0 : index
      %c0_13 = arith.constant 0 : index
      %c0_14 = arith.constant 0 : index
      %14 = vector.load %arg6[%c0_12, %c0_13, %c0_14] : memref<1x1x4096xf32, #tpu.memory_space<vmem>>, vector<1x1x4096xf32>
      %15 = vector.shape_cast %14 : vector<1x1x4096xf32> to vector<1x4096xf32>
      %16 = vector.shape_cast %15 : vector<1x4096xf32> to vector<1x4096xf32>
      %17 = vector.broadcast %16 : vector<1x4096xf32> to vector<2x4096xf32>
      %c0_15 = arith.constant 0 : index
      %c0_16 = arith.constant 0 : index
      %c0_17 = arith.constant 0 : index
      %18 = vector.load %arg7[%c0_15, %c0_16, %c0_17] : memref<1x2x4096xf32, #tpu.memory_space<vmem>>, vector<1x2x4096xf32>
      %19 = vector.shape_cast %18 : vector<1x2x4096xf32> to vector<2x4096xf32>
      %20 = vector.shape_cast %17 : vector<2x4096xf32> to vector<1x2x4096xf32>
      tpu.vector_store %arg7[%c0_15, %c0_16, %c0_17], %20 {strides = array<i32>} : memref<1x2x4096xf32, #tpu.memory_space<vmem>>, vector<1x2x4096xf32>,
    } else {
    }
    %c0 = arith.constant 0 : index
    %c0_1 = arith.constant 0 : index
    %c0_2 = arith.constant 0 : index
    %3 = vector.load %arg7[%c0, %c0_1, %c0_2] : memref<1x2x4096xf32, #tpu.memory_space<vmem>>, vector<1x2x4096xf32>
    %4 = vector.shape_cast %3 : vector<1x2x4096xf32> to vector<2x4096xf32>
    %c0_3 = arith.constant 0 : index
    %c0_4 = arith.constant 0 : index
    %c0_5 = arith.constant 0 : index
    %5 = vector.load %arg4[%c0_3, %c0_4, %c0_5] : memref<1x2x32xbf16, #tpu.memory_space<vmem>>, vector<1x2x32xbf16>
    %6 = vector.shape_cast %5 : vector<1x2x32xbf16> to vector<2x32xbf16>
    %c0_6 = arith.constant 0 : index
    %c0_7 = arith.constant 0 : index
    %c0_8 = arith.constant 0 : index
    %7 = vector.load %arg5[%c0_6, %c0_7, %c0_8] : memref<1x32x4096xbf16, #tpu.memory_space<vmem>>, vector<1x32x4096xbf16>
    %8 = vector.shape_cast %7 : vector<1x32x4096xbf16> to vector<32x4096xbf16>
    %cst = arith.constant dense<0.000000e+00> : vector<2x4096xf32>
    %9 = tpu.matmul %6, %8, %cst {dimension_numbers = #tpu.dot_dimension_numbers<[1], [0], [0], [1], [0, 0, 1, 1], [], []>} : vector<2x32xbf16>, vector<32x4096xbf16>, vector<2x4096xf32> -> vector<2x4096xf32>
    %10 = arith.addf %4, %9 : vector<2x4096xf32>
    %c0_9 = arith.constant 0 : index
    %c0_10 = arith.constant 0 : index
    %c0_11 = arith.constant 0 : index
    %11 = vector.load %arg7[%c0_9, %c0_10, %c0_11] : memref<1x2x4096xf32, #tpu.memory_space<vmem>>, vector<1x2x4096xf32>
    %12 = vector.shape_cast %11 : vector<1x2x4096xf32> to vector<2x4096xf32>
    %13 = vector.shape_cast %10 : vector<2x4096xf32> to vector<1x2x4096xf32>
    tpu.vector_store %arg7[%c0_9, %c0_10, %c0_11], %13 {strides = array<i32>} : memref<1x2x4096xf32, #tpu.memory_space<vmem>>, vector<1x2x4096xf32>,
    return
  }
  func.func @transform_0(%arg0: i32, %arg1: i32, %arg2: i32, %arg3: i32) -> (i32, i32, i32) {
    %c0_i32 = arith.constant 0 : i32
    return %arg0, %arg1, %arg3 : i32, i32, i32
  }
  func.func @transform_1(%arg0: i32, %arg1: i32, %arg2: i32, %arg3: i32) -> (i32, i32, i32) {
    %c0_i32 = arith.constant 0 : i32
    return %arg0, %arg3, %arg2 : i32, i32, i32
  }
  func.func @transform_2(%arg0: i32, %arg1: i32, %arg2: i32, %arg3: i32) -> (i32, i32, i32) {
    %c0_i32 = arith.constant 0 : i32
    %c0_i32_0 = arith.constant 0 : i32
    return %arg0, %c0_i32, %arg2 : i32, i32, i32
  }
  func.func @transform_3(%arg0: i32, %arg1: i32, %arg2: i32, %arg3: i32) -> (i32, i32, i32) {
    %c0_i32 = arith.constant 0 : i32
    return %arg0, %arg1, %arg2 : i32, i32, i32
  }
}

module attributes {stable_mosaic.version = 11 : i64} {
  func.func @_matmul_kernel(%arg0: i32, %arg1: i32, %arg2: i32, %arg3: i32, %arg4: memref<1x32x96xbf16, #tpu.memory_space<vmem>>, %arg5: memref<1x96x4xbf16, #tpu.memory_space<vmem>>, %arg6: memref<1x32x4xf32, #tpu.memory_space<vmem>>) attributes {dimension_semantics = [#tpu.dimension_semantics<parallel>, #tpu.dimension_semantics<parallel>, #tpu.dimension_semantics<parallel>, #tpu.dimension_semantics<arbitrary>], iteration_bounds = array<i64: 2, 1, 1, 1>, scalar_prefetch = 0 : i64, scratch_operands = 0 : i64, tpu.core_type = #tpu.core_type<tc>, window_params = [{transform_indices = @transform_0, window_bounds = array<i64: 1, 32, 96>}, {transform_indices = @transform_1, window_bounds = array<i64: 1, 96, 4>}, {transform_indices = @transform_2, window_bounds = array<i64: 1, 32, 4>}]} {
    %c0_i32 = arith.constant 0 : i32
    %0 = arith.cmpi eq, %arg3, %c0_i32 : i32
    %1 = arith.extui %0 : i1 to i32
    %c0_i32_0 = arith.constant 0 : i32
    %2 = arith.cmpi ne, %1, %c0_i32_0 : i32
    scf.if %2 {
      %cst_12 = arith.constant 0.000000e+00 : f32
      %14 = vector.broadcast %cst_12 : f32 to vector<32x4xf32>
      %c0_13 = arith.constant 0 : index
      %c0_14 = arith.constant 0 : index
      %c0_15 = arith.constant 0 : index
      %15 = vector.load %arg6[%c0_13, %c0_14, %c0_15] : memref<1x32x4xf32, #tpu.memory_space<vmem>>, vector<1x32x4xf32>
      %16 = vector.shape_cast %15 : vector<1x32x4xf32> to vector<32x4xf32>
      %17 = vector.shape_cast %14 : vector<32x4xf32> to vector<1x32x4xf32>
      tpu.vector_store %arg6[%c0_13, %c0_14, %c0_15], %17 {strides = array<i32>} : memref<1x32x4xf32, #tpu.memory_space<vmem>>, vector<1x32x4xf32>,
    } else {
    }
    %c0 = arith.constant 0 : index
    %c0_1 = arith.constant 0 : index
    %c0_2 = arith.constant 0 : index
    %3 = vector.load %arg6[%c0, %c0_1, %c0_2] : memref<1x32x4xf32, #tpu.memory_space<vmem>>, vector<1x32x4xf32>
    %4 = vector.shape_cast %3 : vector<1x32x4xf32> to vector<32x4xf32>
    %c0_3 = arith.constant 0 : index
    %c0_4 = arith.constant 0 : index
    %c0_5 = arith.constant 0 : index
    %5 = vector.load %arg4[%c0_3, %c0_4, %c0_5] : memref<1x32x96xbf16, #tpu.memory_space<vmem>>, vector<1x32x96xbf16>
    %6 = vector.shape_cast %5 : vector<1x32x96xbf16> to vector<32x96xbf16>
    %c0_6 = arith.constant 0 : index
    %c0_7 = arith.constant 0 : index
    %c0_8 = arith.constant 0 : index
    %7 = vector.load %arg5[%c0_6, %c0_7, %c0_8] : memref<1x96x4xbf16, #tpu.memory_space<vmem>>, vector<1x96x4xbf16>
    %8 = vector.shape_cast %7 : vector<1x96x4xbf16> to vector<96x4xbf16>
    %cst = arith.constant dense<0.000000e+00> : vector<32x4xf32>
    %9 = tpu.matmul %6, %8, %cst {dimension_numbers = #tpu.dot_dimension_numbers<[1], [0], [0], [1], [0, 0, 1, 1], [], []>} : vector<32x96xbf16>, vector<96x4xbf16>, vector<32x4xf32> -> vector<32x4xf32>
    %10 = arith.addf %4, %9 : vector<32x4xf32>
    %c0_9 = arith.constant 0 : index
    %c0_10 = arith.constant 0 : index
    %c0_11 = arith.constant 0 : index
    %11 = vector.load %arg6[%c0_9, %c0_10, %c0_11] : memref<1x32x4xf32, #tpu.memory_space<vmem>>, vector<1x32x4xf32>
    %12 = vector.shape_cast %11 : vector<1x32x4xf32> to vector<32x4xf32>
    %13 = vector.shape_cast %10 : vector<32x4xf32> to vector<1x32x4xf32>
    tpu.vector_store %arg6[%c0_9, %c0_10, %c0_11], %13 {strides = array<i32>} : memref<1x32x4xf32, #tpu.memory_space<vmem>>, vector<1x32x4xf32>,
    return
  }
  func.func @transform_0(%arg0: i32, %arg1: i32, %arg2: i32, %arg3: i32) -> (i32, i32, i32) {
    %c0_i32 = arith.constant 0 : i32
    return %arg0, %arg1, %arg3 : i32, i32, i32
  }
  func.func @transform_1(%arg0: i32, %arg1: i32, %arg2: i32, %arg3: i32) -> (i32, i32, i32) {
    %c0_i32 = arith.constant 0 : i32
    return %arg0, %arg3, %arg2 : i32, i32, i32
  }
  func.func @transform_2(%arg0: i32, %arg1: i32, %arg2: i32, %arg3: i32) -> (i32, i32, i32) {
    %c0_i32 = arith.constant 0 : i32
    return %arg0, %arg1, %arg2 : i32, i32, i32
  }
}

module attributes {stable_mosaic.version = 11 : i64} {
  func.func @_matmul_bias_kernel(%arg0: i32, %arg1: i32, %arg2: i32, %arg3: i32, %arg4: memref<1x32x32xbf16, #tpu.memory_space<vmem>>, %arg5: memref<1x32x4xbf16, #tpu.memory_space<vmem>>, %arg6: memref<1x1x4xf32, #tpu.memory_space<vmem>>, %arg7: memref<1x32x4xf32, #tpu.memory_space<vmem>>) attributes {dimension_semantics = [#tpu.dimension_semantics<parallel>, #tpu.dimension_semantics<parallel>, #tpu.dimension_semantics<parallel>, #tpu.dimension_semantics<arbitrary>], iteration_bounds = array<i64: 2, 1, 1, 1>, scalar_prefetch = 0 : i64, scratch_operands = 0 : i64, tpu.core_type = #tpu.core_type<tc>, window_params = [{transform_indices = @transform_0, window_bounds = array<i64: 1, 32, 32>}, {transform_indices = @transform_1, window_bounds = array<i64: 1, 32, 4>}, {transform_indices = @transform_2, window_bounds = array<i64: 1, 1, 4>}, {transform_indices = @transform_3, window_bounds = array<i64: 1, 32, 4>}]} {
    %c0_i32 = arith.constant 0 : i32
    %0 = arith.cmpi eq, %arg3, %c0_i32 : i32
    %1 = arith.extui %0 : i1 to i32
    %c0_i32_0 = arith.constant 0 : i32
    %2 = arith.cmpi ne, %1, %c0_i32_0 : i32
    scf.if %2 {
      %c0_12 = arith.constant 0 : index
      %c0_13 = arith.constant 0 : index
      %c0_14 = arith.constant 0 : index
      %14 = vector.load %arg6[%c0_12, %c0_13, %c0_14] : memref<1x1x4xf32, #tpu.memory_space<vmem>>, vector<1x1x4xf32>
      %15 = vector.shape_cast %14 : vector<1x1x4xf32> to vector<1x4xf32>
      %16 = vector.shape_cast %15 : vector<1x4xf32> to vector<1x4xf32>
      %17 = vector.broadcast %16 : vector<1x4xf32> to vector<32x4xf32>
      %c0_15 = arith.constant 0 : index
      %c0_16 = arith.constant 0 : index
      %c0_17 = arith.constant 0 : index
      %18 = vector.load %arg7[%c0_15, %c0_16, %c0_17] : memref<1x32x4xf32, #tpu.memory_space<vmem>>, vector<1x32x4xf32>
      %19 = vector.shape_cast %18 : vector<1x32x4xf32> to vector<32x4xf32>
      %20 = vector.shape_cast %17 : vector<32x4xf32> to vector<1x32x4xf32>
      tpu.vector_store %arg7[%c0_15, %c0_16, %c0_17], %20 {strides = array<i32>} : memref<1x32x4xf32, #tpu.memory_space<vmem>>, vector<1x32x4xf32>,
    } else {
    }
    %c0 = arith.constant 0 : index
    %c0_1 = arith.constant 0 : index
    %c0_2 = arith.constant 0 : index
    %3 = vector.load %arg7[%c0, %c0_1, %c0_2] : memref<1x32x4xf32, #tpu.memory_space<vmem>>, vector<1x32x4xf32>
    %4 = vector.shape_cast %3 : vector<1x32x4xf32> to vector<32x4xf32>
    %c0_3 = arith.constant 0 : index
    %c0_4 = arith.constant 0 : index
    %c0_5 = arith.constant 0 : index
    %5 = vector.load %arg4[%c0_3, %c0_4, %c0_5] : memref<1x32x32xbf16, #tpu.memory_space<vmem>>, vector<1x32x32xbf16>
    %6 = vector.shape_cast %5 : vector<1x32x32xbf16> to vector<32x32xbf16>
    %c0_6 = arith.constant 0 : index
    %c0_7 = arith.constant 0 : index
    %c0_8 = arith.constant 0 : index
    %7 = vector.load %arg5[%c0_6, %c0_7, %c0_8] : memref<1x32x4xbf16, #tpu.memory_space<vmem>>, vector<1x32x4xbf16>
    %8 = vector.shape_cast %7 : vector<1x32x4xbf16> to vector<32x4xbf16>
    %cst = arith.constant dense<0.000000e+00> : vector<32x4xf32>
    %9 = tpu.matmul %6, %8, %cst {dimension_numbers = #tpu.dot_dimension_numbers<[1], [0], [0], [1], [0, 0, 1, 1], [], []>} : vector<32x32xbf16>, vector<32x4xbf16>, vector<32x4xf32> -> vector<32x4xf32>
    %10 = arith.addf %4, %9 : vector<32x4xf32>
    %c0_9 = arith.constant 0 : index
    %c0_10 = arith.constant 0 : index
    %c0_11 = arith.constant 0 : index
    %11 = vector.load %arg7[%c0_9, %c0_10, %c0_11] : memref<1x32x4xf32, #tpu.memory_space<vmem>>, vector<1x32x4xf32>
    %12 = vector.shape_cast %11 : vector<1x32x4xf32> to vector<32x4xf32>
    %13 = vector.shape_cast %10 : vector<32x4xf32> to vector<1x32x4xf32>
    tpu.vector_store %arg7[%c0_9, %c0_10, %c0_11], %13 {strides = array<i32>} : memref<1x32x4xf32, #tpu.memory_space<vmem>>, vector<1x32x4xf32>,
    return
  }
  func.func @transform_0(%arg0: i32, %arg1: i32, %arg2: i32, %arg3: i32) -> (i32, i32, i32) {
    %c0_i32 = arith.constant 0 : i32
    return %arg0, %arg1, %arg3 : i32, i32, i32
  }
  func.func @transform_1(%arg0: i32, %arg1: i32, %arg2: i32, %arg3: i32) -> (i32, i32, i32) {
    %c0_i32 = arith.constant 0 : i32
    return %arg0, %arg3, %arg2 : i32, i32, i32
  }
  func.func @transform_2(%arg0: i32, %arg1: i32, %arg2: i32, %arg3: i32) -> (i32, i32, i32) {
    %c0_i32 = arith.constant 0 : i32
    %c0_i32_0 = arith.constant 0 : i32
    return %arg0, %c0_i32, %arg2 : i32, i32, i32
  }
  func.func @transform_3(%arg0: i32, %arg1: i32, %arg2: i32, %arg3: i32) -> (i32, i32, i32) {
    %c0_i32 = arith.constant 0 : i32
    return %arg0, %arg1, %arg2 : i32, i32, i32
  }
}

module attributes {stable_mosaic.version = 11 : i64} {
  func.func @_matmul_bias_kernel(%arg0: i32, %arg1: i32, %arg2: i32, %arg3: i32, %arg4: memref<1x8x8xbf16, #tpu.memory_space<vmem>>, %arg5: memref<1x8x4096xbf16, #tpu.memory_space<vmem>>, %arg6: memref<1x1x4096xf32, #tpu.memory_space<vmem>>, %arg7: memref<1x8x4096xf32, #tpu.memory_space<vmem>>) attributes {dimension_semantics = [#tpu.dimension_semantics<parallel>, #tpu.dimension_semantics<parallel>, #tpu.dimension_semantics<parallel>, #tpu.dimension_semantics<arbitrary>], iteration_bounds = array<i64: 1, 1, 1, 1>, scalar_prefetch = 0 : i64, scratch_operands = 0 : i64, tpu.core_type = #tpu.core_type<tc>, window_params = [{transform_indices = @transform_0, window_bounds = array<i64: 1, 8, 8>}, {transform_indices = @transform_1, window_bounds = array<i64: 1, 8, 4096>}, {transform_indices = @transform_2, window_bounds = array<i64: 1, 1, 4096>}, {transform_indices = @transform_3, window_bounds = array<i64: 1, 8, 4096>}]} {
    %c0_i32 = arith.constant 0 : i32
    %0 = arith.cmpi eq, %arg3, %c0_i32 : i32
    %1 = arith.extui %0 : i1 to i32
    %c0_i32_0 = arith.constant 0 : i32
    %2 = arith.cmpi ne, %1, %c0_i32_0 : i32
    scf.if %2 {
      %c0_12 = arith.constant 0 : index
      %c0_13 = arith.constant 0 : index
      %c0_14 = arith.constant 0 : index
      %14 = vector.load %arg6[%c0_12, %c0_13, %c0_14] : memref<1x1x4096xf32, #tpu.memory_space<vmem>>, vector<1x1x4096xf32>
      %15 = vector.shape_cast %14 : vector<1x1x4096xf32> to vector<1x4096xf32>
      %16 = vector.shape_cast %15 : vector<1x4096xf32> to vector<1x4096xf32>
      %17 = vector.broadcast %16 : vector<1x4096xf32> to vector<8x4096xf32>
      %c0_15 = arith.constant 0 : index
      %c0_16 = arith.constant 0 : index
      %c0_17 = arith.constant 0 : index
      %18 = vector.load %arg7[%c0_15, %c0_16, %c0_17] : memref<1x8x4096xf32, #tpu.memory_space<vmem>>, vector<1x8x4096xf32>
      %19 = vector.shape_cast %18 : vector<1x8x4096xf32> to vector<8x4096xf32>
      %20 = vector.shape_cast %17 : vector<8x4096xf32> to vector<1x8x4096xf32>
      tpu.vector_store %arg7[%c0_15, %c0_16, %c0_17], %20 {strides = array<i32>} : memref<1x8x4096xf32, #tpu.memory_space<vmem>>, vector<1x8x4096xf32>,
    } else {
    }
    %c0 = arith.constant 0 : index
    %c0_1 = arith.constant 0 : index
    %c0_2 = arith.constant 0 : index
    %3 = vector.load %arg7[%c0, %c0_1, %c0_2] : memref<1x8x4096xf32, #tpu.memory_space<vmem>>, vector<1x8x4096xf32>
    %4 = vector.shape_cast %3 : vector<1x8x4096xf32> to vector<8x4096xf32>
    %c0_3 = arith.constant 0 : index
    %c0_4 = arith.constant 0 : index
    %c0_5 = arith.constant 0 : index
    %5 = vector.load %arg4[%c0_3, %c0_4, %c0_5] : memref<1x8x8xbf16, #tpu.memory_space<vmem>>, vector<1x8x8xbf16>
    %6 = vector.shape_cast %5 : vector<1x8x8xbf16> to vector<8x8xbf16>
    %c0_6 = arith.constant 0 : index
    %c0_7 = arith.constant 0 : index
    %c0_8 = arith.constant 0 : index
    %7 = vector.load %arg5[%c0_6, %c0_7, %c0_8] : memref<1x8x4096xbf16, #tpu.memory_space<vmem>>, vector<1x8x4096xbf16>
    %8 = vector.shape_cast %7 : vector<1x8x4096xbf16> to vector<8x4096xbf16>
    %cst = arith.constant dense<0.000000e+00> : vector<8x4096xf32>
    %9 = tpu.matmul %6, %8, %cst {dimension_numbers = #tpu.dot_dimension_numbers<[1], [0], [0], [1], [0, 0, 1, 1], [], []>} : vector<8x8xbf16>, vector<8x4096xbf16>, vector<8x4096xf32> -> vector<8x4096xf32>
    %10 = arith.addf %4, %9 : vector<8x4096xf32>
    %c0_9 = arith.constant 0 : index
    %c0_10 = arith.constant 0 : index
    %c0_11 = arith.constant 0 : index
    %11 = vector.load %arg7[%c0_9, %c0_10, %c0_11] : memref<1x8x4096xf32, #tpu.memory_space<vmem>>, vector<1x8x4096xf32>
    %12 = vector.shape_cast %11 : vector<1x8x4096xf32> to vector<8x4096xf32>
    %13 = vector.shape_cast %10 : vector<8x4096xf32> to vector<1x8x4096xf32>
    tpu.vector_store %arg7[%c0_9, %c0_10, %c0_11], %13 {strides = array<i32>} : memref<1x8x4096xf32, #tpu.memory_space<vmem>>, vector<1x8x4096xf32>,
    return
  }
  func.func @transform_0(%arg0: i32, %arg1: i32, %arg2: i32, %arg3: i32) -> (i32, i32, i32) {
    %c0_i32 = arith.constant 0 : i32
    return %arg0, %arg1, %arg3 : i32, i32, i32
  }
  func.func @transform_1(%arg0: i32, %arg1: i32, %arg2: i32, %arg3: i32) -> (i32, i32, i32) {
    %c0_i32 = arith.constant 0 : i32
    return %arg0, %arg3, %arg2 : i32, i32, i32
  }
  func.func @transform_2(%arg0: i32, %arg1: i32, %arg2: i32, %arg3: i32) -> (i32, i32, i32) {
    %c0_i32 = arith.constant 0 : i32
    %c0_i32_0 = arith.constant 0 : i32
    return %arg0, %c0_i32, %arg2 : i32, i32, i32
  }
  func.func @transform_3(%arg0: i32, %arg1: i32, %arg2: i32, %arg3: i32) -> (i32, i32, i32) {
    %c0_i32 = arith.constant 0 : i32
    return %arg0, %arg1, %arg2 : i32, i32, i32
  }
}

module attributes {stable_mosaic.version = 11 : i64} {
  func.func @_ensemble_kernel(%arg0: i32, %arg1: memref<2x32x4xf32, #tpu.memory_space<vmem>>, %arg2: memref<2x1x4xf32, #tpu.memory_space<vmem>>, %arg3: memref<32x4xf32, #tpu.memory_space<vmem>>) attributes {dimension_semantics = [#tpu.dimension_semantics<arbitrary>], iteration_bounds = array<i64: 1>, scalar_prefetch = 0 : i64, scratch_operands = 0 : i64, tpu.core_type = #tpu.core_type<tc>, window_params = [{pipeline_mode = #tpu.pipeline_mode<synchronous>, transform_indices = @transform_0, window_bounds = array<i64: 2, 32, 4>}, {pipeline_mode = #tpu.pipeline_mode<synchronous>, transform_indices = @transform_1, window_bounds = array<i64: 2, 1, 4>}, {pipeline_mode = #tpu.pipeline_mode<synchronous>, transform_indices = @transform_2, window_bounds = array<i64: 32, 4>}]} {
    %c0 = arith.constant 0 : index
    %c0_0 = arith.constant 0 : index
    %c0_1 = arith.constant 0 : index
    %0 = vector.load %arg1[%c0, %c0_0, %c0_1] : memref<2x32x4xf32, #tpu.memory_space<vmem>>, vector<1x32x4xf32>
    %1 = vector.shape_cast %0 : vector<1x32x4xf32> to vector<32x4xf32>
    %c0_2 = arith.constant 0 : index
    %c0_3 = arith.constant 0 : index
    %c0_4 = arith.constant 0 : index
    %2 = vector.load %arg2[%c0_2, %c0_3, %c0_4] : memref<2x1x4xf32, #tpu.memory_space<vmem>>, vector<1x1x4xf32>
    %3 = vector.shape_cast %2 : vector<1x1x4xf32> to vector<1x4xf32>
    %4 = vector.broadcast %3 : vector<1x4xf32> to vector<32x4xf32>
    %5 = arith.mulf %1, %4 : vector<32x4xf32>
    %c1 = arith.constant 1 : index
    %c0_5 = arith.constant 0 : index
    %c0_6 = arith.constant 0 : index
    %6 = vector.load %arg1[%c1, %c0_5, %c0_6] : memref<2x32x4xf32, #tpu.memory_space<vmem>>, vector<1x32x4xf32>
    %7 = vector.shape_cast %6 : vector<1x32x4xf32> to vector<32x4xf32>
    %c1_7 = arith.constant 1 : index
    %c0_8 = arith.constant 0 : index
    %c0_9 = arith.constant 0 : index
    %8 = vector.load %arg2[%c1_7, %c0_8, %c0_9] : memref<2x1x4xf32, #tpu.memory_space<vmem>>, vector<1x1x4xf32>
    %9 = vector.shape_cast %8 : vector<1x1x4xf32> to vector<1x4xf32>
    %10 = vector.broadcast %9 : vector<1x4xf32> to vector<32x4xf32>
    %11 = arith.mulf %7, %10 : vector<32x4xf32>
    %12 = arith.addf %5, %11 : vector<32x4xf32>
    %c0_10 = arith.constant 0 : index
    %c0_11 = arith.constant 0 : index
    %13 = vector.load %arg3[%c0_10, %c0_11] : memref<32x4xf32, #tpu.memory_space<vmem>>, vector<32x4xf32>
    tpu.vector_store %arg3[%c0_10, %c0_11], %12 {strides = array<i32>} : memref<32x4xf32, #tpu.memory_space<vmem>>, vector<32x4xf32>,
    return
  }
  func.func @transform_0(%arg0: i32) -> (i32, i32, i32) {
    %c0_i32 = arith.constant 0 : i32
    %c0_i32_0 = arith.constant 0 : i32
    %c0_i32_1 = arith.constant 0 : i32
    %c0_i32_2 = arith.constant 0 : i32
    return %c0_i32, %c0_i32_0, %c0_i32_1 : i32, i32, i32
  }
  func.func @transform_1(%arg0: i32) -> (i32, i32, i32) {
    %c0_i32 = arith.constant 0 : i32
    %c0_i32_0 = arith.constant 0 : i32
    %c0_i32_1 = arith.constant 0 : i32
    %c0_i32_2 = arith.constant 0 : i32
    return %c0_i32, %c0_i32_0, %c0_i32_1 : i32, i32, i32
  }
  func.func @transform_2(%arg0: i32) -> (i32, i32) {
    %c0_i32 = arith.constant 0 : i32
    %c0_i32_0 = arith.constant 0 : i32
    %c0_i32_1 = arith.constant 0 : i32
    return %c0_i32, %c0_i32_0 : i32, i32
  }
}

</mosaic_0001>

<llo_original>
// kernel: _lambda_.30
$region0: #{_lambda_.30}
  #allocation0 [shape = 'u32[]', space=smem, size = 0x4, offset = 0x4, fixed_abs, tag = 'smem constant byte address 0x4 - core index']
  #allocation1 [shape = 'u32[144,128]{1,0:T(1,128)}', space=vmem, size = 0x12000, scoped, tag = 'internal scratch']
  %s0 = inlined_call_operand.vmem [shape: bf16[2,32,32], index: 0, kind: input, shape index: {}]
  %s1 = inlined_call_operand.vmem [shape: bf16[2,32,96], index: 1, kind: input, shape index: {}]
  %s2 = inlined_call_operand.vmem [shape: f32[2,1,96], index: 2, kind: input, shape index: {}]
  %s3 = inlined_call_operand.vmem [shape: f32[2,32,96], index: 3, kind: output, shape index: {}]
  %s4 = sld [smem:[#allocation0]]
  $region49: #{_lambda_.30} parent=0
    _
  %s6 = ssub.s32 1, %s4
  %s7 = scalar_select 0, %s6, %s4
  loop: start=0, step=1, limit=4
  $region2: #{_lambda_.30} parent=0 // loop_pre_header
    _
  $region3: #{_lambda_.30} parent=0 // loop_header
    %s9 = sphi 0, %s13
    %p10 = scmp.ge.s32.totalorder %s9, 4
    %s16 = sphi 0, %s42
    %s17 = sphi 0, %s38
    %s18 = sphi 0, %s34
    %s19 = sphi 0, %s30
    %s20 = sphi 0, %s16
    %s21 = sphi 0, %s17
    %s22 = sphi 0, %s18
    %s23 = sphi 0, %s19
    %s24 = sphi 0, %s20
    %s25 = sphi 0, %s21
    %s26 = sphi 0, %s22
    %s27 = sphi 0, %s23
    %s49 = sphi 0, %s51
    %s52 = sphi 0, %s49
    %s53 = sphi 0, %s52
    %s69 = sphi 0, %s53
    %s79 = sphi 0, %s81
    %s82 = sphi 0, %s79
    %s83 = sphi 0, %s82
    %s99 = sphi 0, %s83
    %s107 = sphi 0, %s109
    %s110 = sphi 0, %s107
    %s111 = sphi 0, %s110
    %s127 = sphi 0, %s111
    %s137 = sphi 0, %s139
    %s140 = sphi 0, %s137
    %s141 = sphi 0, %s140
    %s157 = sphi 0, %s141
  $region4: #{_lambda_.30} parent=0 // loop_header_branch
    %12 = sbr.rel (%p10) target = $region8
  $region5: #{_lambda_.30} parent=0 // loop_body
    %s14 = ssub.s32 %s9, 1
    %s15 = ssub.s32 %s9, 2
    %s28 = sadd.s32 1, %s19
    %p29 = scmp.ge.s32.totalorder %s28, 1
    %s30 = scalar_select %p29, 0, %s28
    %s31 = sadd.s32 1, %s18
    %s32 = scalar_select %p29, %s31, %s18
    %p33 = scmp.ge.s32.totalorder %s32, 1
    %s34 = scalar_select %p33, 0, %s32
    %s35 = sadd.s32 1, %s17
    %s36 = scalar_select %p33, %s35, %s17
    %p37 = scmp.ge.s32.totalorder %s36, 1
    %s38 = scalar_select %p37, 0, %s36
    %s39 = sadd.s32 1, %s16
    %s40 = scalar_select %p37, %s39, %s16
    %p41 = scmp.ge.s32.totalorder %s40, 2
    %s42 = scalar_select %p41, 0, %s40
    %s43 = ssub.s32 %s16, %s42
    %s44 = ssub.s32 %s17, %s38
    %s45 = sor.u32 %s43, %s44
    %s46 = ssub.s32 %s19, %s30
    %s47 = sor.u32 %s45, %s46
    %p48 = scmp.eq.s32.totalorder %s47, 0
    %s50 = sadd.s32 %s49, 1
    %s51 = scalar_select %p48, %s49, %s50
    %p54 = pneg %p48
    %p55 = scmp.eq.s32.totalorder %s9, 1
    %p56 = por %p54, %p55
    %p57 = scmp.ne.s32.totalorder %s49, %s52
    %p58 = scmp.eq.s32.totalorder %s9, 0
    %p59 = por %p57, %p58
    %p60 = scmp.ne.s32.totalorder %s49, %s52
    %p61 = scmp.eq.s32.totalorder %s14, 1
    %p62 = por %p60, %p61
    %p63 = scmp.ne.s32.totalorder %s52, %s53
    %p64 = scmp.eq.s32.totalorder %s14, 0
    %p65 = por %p63, %p64
    %p66 = scmp.ne.s32.totalorder %s52, %s53
    %p67 = scmp.eq.s32.totalorder %s15, 1
    %p68 = por %p66, %p67
    %p70 = scmp.ne.s32.totalorder %s53, %s69
    %p71 = scmp.eq.s32.totalorder %s15, 0
    %p72 = por %p70, %p71
    %s73 = ssub.s32 %s16, %s42
    %s74 = ssub.s32 %s19, %s30
    %s75 = sor.u32 %s73, %s74
    %s76 = ssub.s32 %s18, %s34
    %s77 = sor.u32 %s75, %s76
    %p78 = scmp.eq.s32.totalorder %s77, 0
    %s80 = sadd.s32 %s79, 1
    %s81 = scalar_select %p78, %s79, %s80
    %p84 = pneg %p78
    %p85 = scmp.eq.s32.totalorder %s9, 1
    %p86 = por %p84, %p85
    %p87 = scmp.ne.s32.totalorder %s79, %s82
    %p88 = scmp.eq.s32.totalorder %s9, 0
    %p89 = por %p87, %p88
    %p90 = scmp.ne.s32.totalorder %s79, %s82
    %p91 = scmp.eq.s32.totalorder %s14, 1
    %p92 = por %p90, %p91
    %p93 = scmp.ne.s32.totalorder %s82, %s83
    %p94 = scmp.eq.s32.totalorder %s14, 0
    %p95 = por %p93, %p94
    %p96 = scmp.ne.s32.totalorder %s82, %s83
    %p97 = scmp.eq.s32.totalorder %s15, 1
    %p98 = por %p96, %p97
    %p100 = scmp.ne.s32.totalorder %s83, %s99
    %p101 = scmp.eq.s32.totalorder %s15, 0
    %p102 = por %p100, %p101
    %s103 = ssub.s32 %s16, %s42
    %s104 = ssub.s32 %s18, %s34
    %s105 = sor.u32 %s103, %s104
    %p106 = scmp.eq.s32.totalorder %s105, 0
    %s108 = sadd.s32 %s107, 1
    %s109 = scalar_select %p106, %s107, %s108
    %p112 = pneg %p106
    %p113 = scmp.eq.s32.totalorder %s9, 1
    %p114 = por %p112, %p113
    %p115 = scmp.ne.s32.totalorder %s107, %s110
    %p116 = scmp.eq.s32.totalorder %s9, 0
    %p117 = por %p115, %p116
    %p118 = scmp.ne.s32.totalorder %s107, %s110
    %p119 = scmp.eq.s32.totalorder %s14, 1
    %p120 = por %p118, %p119
    %p121 = scmp.ne.s32.totalorder %s110, %s111
    %p122 = scmp.eq.s32.totalorder %s14, 0
    %p123 = por %p121, %p122
    %p124 = scmp.ne.s32.totalorder %s110, %s111
    %p125 = scmp.eq.s32.totalorder %s15, 1
    %p126 = por %p124, %p125
    %p128 = scmp.ne.s32.totalorder %s111, %s127
    %p129 = scmp.eq.s32.totalorder %s15, 0
    %p130 = por %p128, %p129
    %s131 = ssub.s32 %s16, %s42
    %s132 = ssub.s32 %s17, %s38
    %s133 = sor.u32 %s131, %s132
    %s134 = ssub.s32 %s18, %s34
    %s135 = sor.u32 %s133, %s134
    %p136 = scmp.eq.s32.totalorder %s135, 0
    %s138 = sadd.s32 %s137, 1
    %s139 = scalar_select %p136, %s137, %s138
    %p142 = pneg %p136
    %p143 = scmp.eq.s32.totalorder %s9, 1
    %p144 = por %p142, %p143
    %p145 = scmp.ne.s32.totalorder %s137, %s140
    %p146 = scmp.eq.s32.totalorder %s9, 0
    %p147 = por %p145, %p146
    %p148 = scmp.ne.s32.totalorder %s137, %s140
    %p149 = scmp.eq.s32.totalorder %s14, 1
    %p150 = por %p148, %p149
    %p151 = scmp.ne.s32.totalorder %s140, %s141
    %p152 = scmp.eq.s32.totalorder %s14, 0
    %p153 = por %p151, %p152
    %p154 = scmp.ne.s32.totalorder %s140, %s141
    %p155 = scmp.eq.s32.totalorder %s15, 1
    %p156 = por %p154, %p155
    %p158 = scmp.ne.s32.totalorder %s141, %s157
    %p159 = scmp.eq.s32.totalorder %s15, 0
    %p160 = por %p158, %p159
    %p161 = scmp.le.s32.totalorder 1, %s9
    %p162 = scmp.lt.s32.totalorder %s9, 3
    %p163 = pnand %p161, %p162
    %p164 = pneg %p163
    // Predicated region
    $region9: #{_lambda_.30} parent=5 // pred_check
      _
    $region10: #{_lambda_.30} parent=5 // pred_check_branch
      %166 = sbr.rel (%p163) target = $region12
    $region11: #{_lambda_.30} parent=5 // pred_region
      %s167 = ssub.s32 %s9, 1
    $region12: #{_lambda_.30} parent=5 // pred_fallthru
      _
    %p168 = scmp.lt.s32.totalorder %s9, 2
    // Predicated region
    $region13: #{_lambda_.30} parent=5 // pred_check
      %p169 = pneg %p168
    $region14: #{_lambda_.30} parent=5 // pred_check_branch
      %171 = sbr.rel (%p169) target = $region16
    $region15: #{_lambda_.30} parent=5 // pred_region
      // Predicated region
      $region17: #{_lambda_.30} parent=15 // pred_check
        %p172 = pneg %p59
      $region18: #{_lambda_.30} parent=15 // pred_check_branch
        %174 = sbr.rel (%p172) target = $region20
      $region19: #{_lambda_.30} parent=15 // pred_region
        %s175 = smul.u32 4, %s17
        %p176 = scmp.lt.s32.totalorder %s16, 1
        %s177 = scalar_select %p176, %s16, 1
        %p178 = scmp.lt.s32.totalorder %s175, 3
        %s179 = scalar_select %p178, %s175, 3
        %p180 = scmp.lt.s32.totalorder %s19, 0
        %s181 = scalar_select %p180, %s19, 0
        %s182 = sadd.s32 %s181, %s179
        %s183 = smul.addr %s177, 4
        %s184 = sadd.s32 %s182, %s183
        %s185 = smul.addr %s184, 4
        %s186 = scalar_lea.vmem %s0, %s185
        %s187 = smul.u32 4, %s17
      $region20: #{_lambda_.30} parent=15 // pred_fallthru
        _
      // Predicated region
      $region21: #{_lambda_.30} parent=15 // pred_check
        %p188 = pneg %p89
      $region22: #{_lambda_.30} parent=15 // pred_check_branch
        %190 = sbr.rel (%p188) target = $region24
      $region23: #{_lambda_.30} parent=15 // pred_region
        %s191 = smul.u32 4, %s19
        %p192 = scmp.lt.s32.totalorder %s16, 1
        %s193 = scalar_select %p192, %s16, 1
        %p194 = scmp.lt.s32.totalorder %s191, 3
        %s195 = scalar_select %p194, %s191, 3
        %p196 = scmp.lt.s32.totalorder %s18, 0
        %s197 = scalar_select %p196, %s18, 0
        %s198 = sadd.s32 %s197, %s195
        %s199 = smul.addr %s193, 4
        %s200 = sadd.s32 %s198, %s199
        %s201 = smul.addr %s200, 4
        %s202 = scalar_lea.vmem %s1, %s201
        %s203 = smul.u32 4, %s19
      $region24: #{_lambda_.30} parent=15 // pred_fallthru
        _
      // Predicated region
      $region25: #{_lambda_.30} parent=15 // pred_check
        %p204 = pneg %p117
      $region26: #{_lambda_.30} parent=15 // pred_check_branch
        %206 = sbr.rel (%p204) target = $region28
      $region27: #{_lambda_.30} parent=15 // pred_region
        %p207 = scmp.lt.s32.totalorder %s16, 1
        %s208 = scalar_select %p207, %s16, 1
        %p209 = scmp.lt.s32.totalorder %s18, 0
        %s210 = scalar_select %p209, %s18, 0
        %s211 = sadd.s32 %s210, %s208
        %s212 = scalar_lea.vmem %s2, %s211
      $region28: #{_lambda_.30} parent=15 // pred_fallthru
        _
    $region16: #{_lambda_.30} parent=5 // pred_fallthru
      _
    %p213 = scmp.le.s32.totalorder 1, %s9
    %p214 = scmp.lt.s32.totalorder %s9, 3
    %p215 = pnand %p213, %p214
    %p216 = pneg %p215
    // Predicated region
    $region29: #{_lambda_.30} parent=5 // pred_check
      _
    $region30: #{_lambda_.30} parent=5 // pred_check_branch
      %218 = sbr.rel (%p215) target = $region32
    $region31: #{_lambda_.30} parent=5 // pred_region
      %s219 = ssub.s32 %s9, 1
      %s220 = smul.u32 4, %s21
      %p221 = scmp.lt.s32.totalorder %s20, 1
      %s222 = scalar_select %p221, %s20, 1
      %p223 = scmp.lt.s32.totalorder %s220, 3
      %s224 = scalar_select %p223, %s220, 3
      %p225 = scmp.lt.s32.totalorder %s23, 0
      %s226 = scalar_select %p225, %s23, 0
      %s227 = sadd.s32 %s226, %s224
      %s228 = smul.addr %s222, 4
      %s229 = sadd.s32 %s227, %s228
      %s230 = smul.addr %s229, 4
      %s231 = scalar_lea.vmem %s0, %s230
      %p232 = pneg %p65
      %p233 = pneg %p62
      %s234 = smul.u32 4, %s23
      %p235 = scmp.lt.s32.totalorder %s20, 1
      %s236 = scalar_select %p235, %s20, 1
      %p237 = scmp.lt.s32.totalorder %s234, 3
      %s238 = scalar_select %p237, %s234, 3
      %p239 = scmp.lt.s32.totalorder %s22, 0
      %s240 = scalar_select %p239, %s22, 0
      %s241 = sadd.s32 %s240, %s238
      %s242 = smul.addr %s236, 4
      %s243 = sadd.s32 %s241, %s242
      %s244 = smul.addr %s243, 4
      %s245 = scalar_lea.vmem %s1, %s244
      %p246 = pneg %p95
      %p247 = pneg %p92
      %p248 = scmp.lt.s32.totalorder %s20, 1
      %s249 = scalar_select %p248, %s20, 1
      %p250 = scmp.lt.s32.totalorder %s22, 0
      %s251 = scalar_select %p250, %s22, 0
      %s252 = sadd.s32 %s251, %s249
      %s253 = scalar_lea.vmem %s2, %s252
      %p254 = pneg %p123
      %p255 = pneg %p120
      %p256 = pneg %p153
      %p257 = pneg %p150
      %s258 = smul.u32 4, %s21
      %p259 = scmp.lt.s32.totalorder %s20, 1
      %s260 = scalar_select %p259, %s20, 1
      %p261 = scmp.lt.s32.totalorder %s258, 3
      %s262 = scalar_select %p261, %s258, 3
      %p263 = scmp.lt.s32.totalorder %s22, 0
      %s264 = scalar_select %p263, %s22, 0
      %s265 = sadd.s32 %s264, %s262
      %s266 = smul.addr %s260, 4
      %s267 = sadd.s32 %s265, %s266
      %s268 = smul.addr %s267, 8
      %s269 = scalar_lea.vmem %s3, %s268
      %s270 = smul.u32 4, %s21
      %p271 = scmp.lt.s32.totalorder %s20, 1
      %s272 = scalar_select %p271, %s20, 1
      %p273 = scmp.lt.s32.totalorder %s270, 3
      %s274 = scalar_select %p273, %s270, 3
      %p275 = scmp.lt.s32.totalorder %s23, 0
      %s276 = scalar_select %p275, %s23, 0
      %s277 = sadd.s32 %s276, %s274
      %s278 = smul.addr %s272, 4
      %s279 = sadd.s32 %s277, %s278
      %s280 = smul.addr %s279, 4
      %s281 = scalar_lea.vmem %s0, %s280
      %s282 = smul.u32 4, %s21
      %s283 = smul.u32 4, %s23
      %p284 = scmp.lt.s32.totalorder %s20, 1
      %s285 = scalar_select %p284, %s20, 1
      %p286 = scmp.lt.s32.totalorder %s283, 3
      %s287 = scalar_select %p286, %s283, 3
      %p288 = scmp.lt.s32.totalorder %s22, 0
      %s289 = scalar_select %p288, %s22, 0
      %s290 = sadd.s32 %s289, %s287
      %s291 = smul.addr %s285, 4
      %s292 = sadd.s32 %s290, %s291
      %s293 = smul.addr %s292, 4
      %s294 = scalar_lea.vmem %s1, %s293
      %s295 = smul.u32 4, %s23
      %p296 = scmp.lt.s32.totalorder %s20, 1
      %s297 = scalar_select %p296, %s20, 1
      %p298 = scmp.lt.s32.totalorder %s22, 0
      %s299 = scalar_select %p298, %s22, 0
      %s300 = sadd.s32 %s299, %s297
      %s301 = scalar_lea.vmem %s2, %s300
      %s302 = smul.u32 4, %s21
      %p303 = scmp.lt.s32.totalorder %s20, 1
      %s304 = scalar_select %p303, %s20, 1
      %p305 = scmp.lt.s32.totalorder %s302, 3
      %s306 = scalar_select %p305, %s302, 3
      %p307 = scmp.lt.s32.totalorder %s22, 0
      %s308 = scalar_select %p307, %s22, 0
      %s309 = sadd.s32 %s308, %s306
      %s310 = smul.addr %s304, 4
      %s311 = sadd.s32 %s309, %s310
      %s312 = smul.addr %s311, 8
      %s313 = scalar_lea.vmem %s3, %s312
      %s314 = smul.u32 4, %s21
      %p316 = scmp.eq.s32.totalorder %s23, 0
      // Predicated region
      $region33: #{_lambda_.30} parent=31 // pred_check
        %p317 = pneg %p316
      $region34: #{_lambda_.30} parent=31 // pred_check_branch
        %319 = sbr.rel (%p317) target = $region36
      $region35: #{_lambda_.30} parent=31 // pred_region
        %v320 = vld [vmem:[%s301] sm:$0x1]
        %v322 = vlaneseq
        %v323 = vshrl.u32 %v322, 7
        %v324 = vsub.s32 0, %v323
        %v325 = vrot.slane %v320, %v324
        %vm327 = vcmask 785408
        %328 = vst.msk [vmem:[%s313] sm:$0xff] %vm327, %v325
        %329 = vst.msk [vmem:[%s313 + $0x8] sm:$0xff] %vm327, %v325
        %330 = vst.msk [vmem:[%s313 + $0x10] sm:$0xff] %vm327, %v325
        %331 = vst.msk [vmem:[%s313 + $0x18] sm:$0xff] %vm327, %v325
      $region36: #{_lambda_.30} parent=31 // pred_fallthru
        _
      %v332 = vld [vmem:[%s313] sm:$0xff]
      %v333 = vld [vmem:[%s313 + $0x8] sm:$0xff]
      %v334 = vld [vmem:[%s313 + $0x10] sm:$0xff]
      %v335 = vld [vmem:[%s313 + $0x18] sm:$0xff]
      %v336 = vld [vmem:[%s281] sm:$0xf]
      %v337 = vld [vmem:[%s281 + $0x4] sm:$0xf]
      %v338 = vld [vmem:[%s281 + $0x8] sm:$0xf]
      %v339 = vld [vmem:[%s281 + $0xc] sm:$0xf]
      %v340 = vld [vmem:[%s294] sm:$0xf]
      %v341 = vld [vmem:[%s294 + $0x4] sm:$0xf]
      %v342 = vld [vmem:[%s294 + $0x8] sm:$0xf]
      %v343 = vld [vmem:[%s294 + $0xc] sm:$0xf]
      %v348 = vunpack.c.l.b16 %v336
      %v349 = vunpack.c.l.b16 %v337
      %v350 = vunpack.c.l.b16 %v338
      %v351 = vunpack.c.l.b16 %v339
      %v352 = vpack.c.b16 %v349, %v348
      %v353 = vpack.c.b16 %v351, %v350
      %v358 = vunpack.c.l.b16 %v340
      %v359 = vunpack.c.l.b16 %v341
      %v360 = vunpack.c.l.b16 %v342
      %v361 = vunpack.c.l.b16 %v343
      %v362 = vpack.c.b16 %v359, %v358
      %v363 = vpack.c.b16 %v361, %v360
      %vm366 = vcmask 261120
      %v368 = vsel %vm366, %v352, 0
      %v371 = vsel %vm366, %v353, 0
      %373 = vmatprep.subr.bf16.mxu0 0
      %374 = vmatpush1.bf16.msra.mxu0 %v362
      %375 = vmatprep.subr.bf16.mxu0 0
      %376 = vmatpush1.bf16.msra.mxu0 %v363
      %377 = vmatprep.subr.bf16.mxu0 0
      %378 = vmatpush1.bf16.msra.mxu0 0
      %379 = vmatprep.subr.bf16.mxu0 0
      %380 = vmatpush1.bf16.msra.mxu0 0
      %381 = vmatprep.subr.bf16.mxu0 0
      %382 = vmatpush1.bf16.msra.mxu0 0
      %383 = vmatprep.subr.bf16.mxu0 0
      %384 = vmatpush1.bf16.msra.mxu0 0
      %385 = vmatprep.subr.bf16.mxu0 0
      %386 = vmatpush1.bf16.msra.mxu0 0
      %387 = vmatprep.subr.bf16.mxu0 0
      %388 = vmatpush1.bf16.msra.mxu0 0
      %389 = vmatprep.subr.bf16.mxu0 0
      %390 = vmatpush1.bf16.msra.mxu0 0
      %391 = vmatprep.subr.bf16.mxu0 0
      %392 = vmatpush1.bf16.msra.mxu0 0
      %393 = vmatprep.subr.bf16.mxu0 0
      %394 = vmatpush1.bf16.msra.mxu0 0
      %395 = vmatprep.subr.bf16.mxu0 0
      %396 = vmatpush1.bf16.msra.mxu0 0
      %397 = vmatprep.subr.bf16.mxu0 0
      %398 = vmatpush1.bf16.msra.mxu0 0
      %399 = vmatprep.subr.bf16.mxu0 0
      %400 = vmatpush1.bf16.msra.mxu0 0
      %401 = vmatprep.subr.bf16.mxu0 0
      %402 = vmatpush1.bf16.msra.mxu0 0
      %403 = vmatprep.subr.bf16.mxu0 0
      %404 = vmatpush1.bf16.msra.mxu0 0
      %405 = vmatprep.mubr.bf16.mxu0 0
      %406 = vmatmul.mubr.bf16.gmra.mrb[0].mxu0 %v368
      %v407 = vpop.f32.mrb[0].mxu0
      %v408 = vadd.f32 0.0, %v407
      %v409 = vpop.f32.mrb[0].mxu0
      %v410 = vpop.f32.mrb[0].mxu0
      %v411 = vadd.f32 0.0, %v410
      %v412 = vpop.f32.mrb[0].mxu0
      %413 = vmatprep.mubr.bf16.mxu0 0
      %414 = vmatmul.mubr.bf16.gmra.mrb[0].mxu0 %v371
      %v415 = vpop.f32.mrb[0].mxu0
      %v416 = vadd.f32 0.0, %v415
      %v417 = vpop.f32.mrb[0].mxu0
      %v418 = vpop.f32.mrb[0].mxu0
      %v419 = vadd.f32 0.0, %v418
      %v420 = vpop.f32.mrb[0].mxu0
      %421 = vdwg.mxu0
      %v422 = vadd.f32 %v332, %v408
      %v423 = vadd.f32 %v333, %v411
      %v424 = vadd.f32 %v334, %v416
      %v425 = vadd.f32 %v335, %v419
      %vm426 = vcmask 785408
      %427 = vst.msk [vmem:[%s313] sm:$0xff] %vm426, %v422
      %428 = vst.msk [vmem:[%s313 + $0x8] sm:$0xff] %vm426, %v423
      %429 = vst.msk [vmem:[%s313 + $0x10] sm:$0xff] %vm426, %v424
      %430 = vst.msk [vmem:[%s313 + $0x18] sm:$0xff] %vm426, %v425
      %s431 = smul.u32 4, %s21
      %p432 = scmp.lt.s32.totalorder %s20, 1
      %s433 = scalar_select %p432, %s20, 1
      %p434 = scmp.lt.s32.totalorder %s431, 3
      %s435 = scalar_select %p434, %s431, 3
      %p436 = scmp.lt.s32.totalorder %s22, 0
      %s437 = scalar_select %p436, %s22, 0
      %s438 = sadd.s32 %s437, %s435
      %s439 = smul.addr %s433, 4
      %s440 = sadd.s32 %s438, %s439
      %s441 = smul.addr %s440, 8
      %s442 = scalar_lea.vmem %s3, %s441
      // Predicated region
      $region37: #{_lambda_.30} parent=31 // pred_check
        %p443 = pneg %p150
      $region38: #{_lambda_.30} parent=31 // pred_check_branch
        %445 = sbr.rel (%p443) target = $region40
      $region39: #{_lambda_.30} parent=31 // pred_region
        %s446 = smul.u32 4, %s21
      $region40: #{_lambda_.30} parent=31 // pred_fallthru
        _
    $region32: #{_lambda_.30} parent=5 // pred_fallthru
      _
    %p447 = scmp.le.s32.totalorder 2, %s9
    // Predicated region
    $region41: #{_lambda_.30} parent=5 // pred_check
      %p448 = pneg %p447
    $region42: #{_lambda_.30} parent=5 // pred_check_branch
      %450 = sbr.rel (%p448) target = $region44
    $region43: #{_lambda_.30} parent=5 // pred_region
      %s451 = ssub.s32 %s9, 2
      // Predicated region
      $region45: #{_lambda_.30} parent=43 // pred_check
        %p452 = pneg %p156
      $region46: #{_lambda_.30} parent=43 // pred_check_branch
        %454 = sbr.rel (%p452) target = $region48
      $region47: #{_lambda_.30} parent=43 // pred_region
        %s455 = smul.u32 4, %s25
        %p456 = scmp.lt.s32.totalorder %s24, 1
        %s457 = scalar_select %p456, %s24, 1
        %p458 = scmp.lt.s32.totalorder %s455, 3
        %s459 = scalar_select %p458, %s455, 3
        %p460 = scmp.lt.s32.totalorder %s26, 0
        %s461 = scalar_select %p460, %s26, 0
        %s462 = sadd.s32 %s461, %s459
        %s463 = smul.addr %s457, 4
        %s464 = sadd.s32 %s462, %s463
        %s465 = smul.addr %s464, 8
        %s466 = scalar_lea.vmem %s3, %s465
      $region48: #{_lambda_.30} parent=43 // pred_fallthru
        _
    $region44: #{_lambda_.30} parent=5 // pred_fallthru
      _
  $region6: #{_lambda_.30} parent=0 // loop_footer
    %s13 = sadd.s32 1, %s9
  $region7: #{_lambda_.30} parent=0 // loop_footer_branch
    %8 = sbr.rel target = $region3
  $region8: #{_lambda_.30} parent=0 // loop_exit
    _

// kernel: _lambda_.29
$region0: #{_lambda_.29}
  #allocation0 [shape = 'u32[]', space=smem, size = 0x4, offset = 0x4, fixed_abs, tag = 'smem constant byte address 0x4 - core index']
  #allocation1 [shape = 'u32[144,128]{1,0:T(1,128)}', space=vmem, size = 0x12000, scoped, tag = 'internal scratch']
  %s0 = inlined_call_operand.vmem [shape: bf16[1,32,16], index: 0, kind: input, shape index: {}]
  %s1 = inlined_call_operand.vmem [shape: bf16[1,16,32], index: 1, kind: input, shape index: {}]
  %s2 = inlined_call_operand.vmem [shape: f32[1,32,32], index: 2, kind: output, shape index: {}]
  %s3 = sld [smem:[#allocation0]]
  $region22: #{_lambda_.29} parent=0
    _
  %s5 = ssub.s32 1, %s3
  %s6 = scalar_select 0, %s5, %s3
  // Predicated region
  $region2: #{_lambda_.29} parent=0 // pred_check
    _
  $region3: #{_lambda_.29} parent=0 // pred_check_branch
    %8 = sbr.rel (0) target = $region5
  $region4: #{_lambda_.29} parent=0 // pred_region
    _
  $region5: #{_lambda_.29} parent=0 // pred_fallthru
    _
  // Predicated region
  $region6: #{_lambda_.29} parent=0 // pred_check
    _
  $region7: #{_lambda_.29} parent=0 // pred_check_branch
    %10 = sbr.rel (0) target = $region9
  $region8: #{_lambda_.29} parent=0 // pred_region
    _
  $region9: #{_lambda_.29} parent=0 // pred_fallthru
    _
  %p12 = scmp.eq.s32.totalorder 0, 0
  // Predicated region
  $region10: #{_lambda_.29} parent=0 // pred_check
    %p13 = pneg %p12
  $region11: #{_lambda_.29} parent=0 // pred_check_branch
    %15 = sbr.rel (%p13) target = $region13
  $region12: #{_lambda_.29} parent=0 // pred_region
    %vm16 = vcmask 261120
    %17 = vst.msk [vmem:[%s2] sm:$0xff] %vm16, 0.0
    %18 = vst.msk [vmem:[%s2 + $0x8] sm:$0xff] %vm16, 0.0
    %19 = vst.msk [vmem:[%s2 + $0x10] sm:$0xff] %vm16, 0.0
    %20 = vst.msk [vmem:[%s2 + $0x18] sm:$0xff] %vm16, 0.0
  $region13: #{_lambda_.29} parent=0 // pred_fallthru
    _
  %v21 = vld [vmem:[%s2] sm:$0xff]
  %v22 = vld [vmem:[%s2 + $0x8] sm:$0xff]
  %v23 = vld [vmem:[%s2 + $0x10] sm:$0xff]
  %v24 = vld [vmem:[%s2 + $0x18] sm:$0xff]
  %v25 = vld [vmem:[%s0] sm:$0xf]
  %v26 = vld [vmem:[%s0 + $0x4] sm:$0xf]
  %v27 = vld [vmem:[%s0 + $0x8] sm:$0xf]
  %v28 = vld [vmem:[%s0 + $0xc] sm:$0xf]
  %v29 = vld [vmem:[%s1] sm:$0xf]
  %v30 = vld [vmem:[%s1 + $0x4] sm:$0xf]
  %v35 = vunpack.c.l.b16 %v25
  %v36 = vunpack.c.l.b16 %v26
  %v37 = vunpack.c.l.b16 %v27
  %v38 = vunpack.c.l.b16 %v28
  %v39 = vpack.c.b16 %v36, %v35
  %v40 = vpack.c.b16 %v38, %v37
  %v43 = vunpack.c.l.b16 %v29
  %v44 = vunpack.c.l.b16 %v30
  %v45 = vpack.c.b16 %v44, %v43
  %vm47 = vcmask 130048
  %v49 = vsel %vm47, %v39, 0
  %v52 = vsel %vm47, %v40, 0
  %54 = vmatprep.subr.bf16.mxu0 0
  %55 = vmatpush1.bf16.msra.mxu0 %v45
  %56 = vmatprep.subr.bf16.mxu0 0
  %57 = vmatpush1.bf16.msra.mxu0 0
  %58 = vmatprep.subr.bf16.mxu0 0
  %59 = vmatpush1.bf16.msra.mxu0 0
  %60 = vmatprep.subr.bf16.mxu0 0
  %61 = vmatpush1.bf16.msra.mxu0 0
  %62 = vmatprep.subr.bf16.mxu0 0
  %63 = vmatpush1.bf16.msra.mxu0 0
  %64 = vmatprep.subr.bf16.mxu0 0
  %65 = vmatpush1.bf16.msra.mxu0 0
  %66 = vmatprep.subr.bf16.mxu0 0
  %67 = vmatpush1.bf16.msra.mxu0 0
  %68 = vmatprep.subr.bf16.mxu0 0
  %69 = vmatpush1.bf16.msra.mxu0 0
  %70 = vmatprep.subr.bf16.mxu0 0
  %71 = vmatpush1.bf16.msra.mxu0 0
  %72 = vmatprep.subr.bf16.mxu0 0
  %73 = vmatpush1.bf16.msra.mxu0 0
  %74 = vmatprep.subr.bf16.mxu0 0
  %75 = vmatpush1.bf16.msra.mxu0 0
  %76 = vmatprep.subr.bf16.mxu0 0
  %77 = vmatpush1.bf16.msra.mxu0 0
  %78 = vmatprep.subr.bf16.mxu0 0
  %79 = vmatpush1.bf16.msra.mxu0 0
  %80 = vmatprep.subr.bf16.mxu0 0
  %81 = vmatpush1.bf16.msra.mxu0 0
  %82 = vmatprep.subr.bf16.mxu0 0
  %83 = vmatpush1.bf16.msra.mxu0 0
  %84 = vmatprep.subr.bf16.mxu0 0
  %85 = vmatpush1.bf16.msra.mxu0 0
  %86 = vmatprep.mubr.bf16.mxu0 0
  %87 = vmatmul.mubr.bf16.gmra.mrb[0].mxu0 %v49
  %v88 = vpop.f32.mrb[0].mxu0
  %v89 = vadd.f32 0.0, %v88
  %v90 = vpop.f32.mrb[0].mxu0
  %v91 = vpop.f32.mrb[0].mxu0
  %v92 = vadd.f32 0.0, %v91
  %v93 = vpop.f32.mrb[0].mxu0
  %94 = vmatprep.mubr.bf16.mxu0 0
  %95 = vmatmul.mubr.bf16.gmra.mrb[0].mxu0 %v52
  %v96 = vpop.f32.mrb[0].mxu0
  %v97 = vadd.f32 0.0, %v96
  %v98 = vpop.f32.mrb[0].mxu0
  %v99 = vpop.f32.mrb[0].mxu0
  %v100 = vadd.f32 0.0, %v99
  %v101 = vpop.f32.mrb[0].mxu0
  %102 = vdwg.mxu0
  %v103 = vadd.f32 %v21, %v89
  %v104 = vadd.f32 %v22, %v92
  %v105 = vadd.f32 %v23, %v97
  %v106 = vadd.f32 %v24, %v100
  %vm107 = vcmask 261120
  %108 = vst.msk [vmem:[%s2] sm:$0xff] %vm107, %v103
  %109 = vst.msk [vmem:[%s2 + $0x8] sm:$0xff] %vm107, %v104
  %110 = vst.msk [vmem:[%s2 + $0x10] sm:$0xff] %vm107, %v105
  %111 = vst.msk [vmem:[%s2 + $0x18] sm:$0xff] %vm107, %v106
  // Predicated region
  $region14: #{_lambda_.29} parent=0 // pred_check
    _
  $region15: #{_lambda_.29} parent=0 // pred_check_branch
    %113 = sbr.rel (0) target = $region17
  $region16: #{_lambda_.29} parent=0 // pred_region
    _
  $region17: #{_lambda_.29} parent=0 // pred_fallthru
    _
  // Predicated region
  $region18: #{_lambda_.29} parent=0 // pred_check
    _
  $region19: #{_lambda_.29} parent=0 // pred_check_branch
    %115 = sbr.rel (0) target = $region21
  $region20: #{_lambda_.29} parent=0 // pred_region
    _
  $region21: #{_lambda_.29} parent=0 // pred_fallthru
    _

// kernel: reverse.9
$region0: #{reverse.9}
  %s0 = inlined_call_operand.vmem [shape: f32[4,4,8,7], index: 0, kind: input, shape index: {}]
  %s1 = inlined_call_operand.vmem [shape: f32[4,4,8,7], index: 1, kind: output, shape index: {}]
  %v2 = vlaneseq
  %v3 = vsub.s32 6, %v2
  %4 = vset.pattern.permute.xlu0 %v3
  $region1: #{reverse.9} parent=0
    #allocation0 [shape = 'u8[65536]{0}', space=vmem, size = 0x10000, scoped, tag = 'operand span for operand 0']
    #allocation1 [shape = 'u8[65536]{0}', space=vmem, size = 0x10000, scoped, tag = 'operand span for operand 1']
    // Predicated region
    $region2: #{reverse.9} parent=1 // pred_check
      _
    $region3: #{reverse.9} parent=1 // pred_check_branch
      %6 = sbr.rel (0) target = $region5
    $region4: #{reverse.9} parent=1 // pred_region
      // Predicated region
      $region6: #{reverse.9} parent=4 // pred_check
        _
      $region7: #{reverse.9} parent=4 // pred_check_branch
        %8 = sbr.rel (0) target = $region9
      $region8: #{reverse.9} parent=4 // pred_region
        // Predicated region
        $region21: #{reverse.9} parent=8 // pred_check
          _
        $region22: #{reverse.9} parent=8 // pred_check_branch
          %53 = sbr.rel (0) target = $region24
        $region23: #{reverse.9} parent=8 // pred_region
          loop: start=0, step=1, limit=1
          $region25: #{reverse.9} parent=23 // loop_pre_header
            _
          $region26: #{reverse.9} parent=23 // loop_header
            %s55 = sphi 0, %s59
            %p56 = scmp.ge.s32.totalorder %s55, 1
            %s60 = sphi %s0, %s0
            %s61 = sphi [#allocation0], [#allocation0]
          $region27: #{reverse.9} parent=23 // loop_header_branch
            %58 = sbr.rel (%p56) target = $region31
          $region28: #{reverse.9} parent=23 // loop_body
            %v62 = vld [vmem:[%s60] sm:$0xff]
            %63 = vst [vmem:[%s61] sm:$0xff] %v62
            %v64 = vld [vmem:[%s60 + $0x8] sm:$0xff]
            %65 = vst [vmem:[%s61 + $0x8] sm:$0xff] %v64
            %v66 = vld [vmem:[%s60 + $0x10] sm:$0xff]
            %67 = vst [vmem:[%s61 + $0x10] sm:$0xff] %v66
            %v68 = vld [vmem:[%s60 + $0x18] sm:$0xff]
            %69 = vst [vmem:[%s61 + $0x18] sm:$0xff] %v68
            %v70 = vld [vmem:[%s60 + $0x20] sm:$0xff]
            %71 = vst [vmem:[%s61 + $0x20] sm:$0xff] %v70
            %v72 = vld [vmem:[%s60 + $0x28] sm:$0xff]
            %73 = vst [vmem:[%s61 + $0x28] sm:$0xff] %v72
            %v74 = vld [vmem:[%s60 + $0x30] sm:$0xff]
            %75 = vst [vmem:[%s61 + $0x30] sm:$0xff] %v74
            %v76 = vld [vmem:[%s60 + $0x38] sm:$0xff]
            %77 = vst [vmem:[%s61 + $0x38] sm:$0xff] %v76
            %v78 = vld [vmem:[%s60 + $0x40] sm:$0xff]
            %79 = vst [vmem:[%s61 + $0x40] sm:$0xff] %v78
            %v80 = vld [vmem:[%s60 + $0x48] sm:$0xff]
            %81 = vst [vmem:[%s61 + $0x48] sm:$0xff] %v80
            %v82 = vld [vmem:[%s60 + $0x50] sm:$0xff]
            %83 = vst [vmem:[%s61 + $0x50] sm:$0xff] %v82
            %v84 = vld [vmem:[%s60 + $0x58] sm:$0xff]
            %85 = vst [vmem:[%s61 + $0x58] sm:$0xff] %v84
            %v86 = vld [vmem:[%s60 + $0x60] sm:$0xff]
            %87 = vst [vmem:[%s61 + $0x60] sm:$0xff] %v86
            %v88 = vld [vmem:[%s60 + $0x68] sm:$0xff]
            %89 = vst [vmem:[%s61 + $0x68] sm:$0xff] %v88
            %v90 = vld [vmem:[%s60 + $0x70] sm:$0xff]
            %91 = vst [vmem:[%s61 + $0x70] sm:$0xff] %v90
            %v92 = vld [vmem:[%s60 + $0x78] sm:$0xff]
            %93 = vst [vmem:[%s61 + $0x78] sm:$0xff] %v92
          $region29: #{reverse.9} parent=23 // loop_footer
            %s59 = sadd.s32 1, %s55
          $region30: #{reverse.9} parent=23 // loop_footer_branch
            %54 = sbr.rel target = $region26
          $region31: #{reverse.9} parent=23 // loop_exit
            _
        $region24: #{reverse.9} parent=8 // pred_fallthru
          _
        // Predicated region
        $region32: #{reverse.9} parent=8 // pred_check
          _
        $region33: #{reverse.9} parent=8 // pred_check_branch
          %95 = sbr.rel target = $region35
        $region34: #{reverse.9} parent=8 // pred_region
          _
        $region35: #{reverse.9} parent=8 // pred_fallthru
          _
      $region9: #{reverse.9} parent=4 // pred_fallthru
        _
      // Predicated region
      $region10: #{reverse.9} parent=4 // pred_check
        _
      $region11: #{reverse.9} parent=4 // pred_check_branch
        %10 = sbr.rel target = $region13
      $region12: #{reverse.9} parent=4 // pred_region
        loop: start=0, step=1, limit=1
        $region14: #{reverse.9} parent=12 // loop_pre_header
          _
        $region15: #{reverse.9} parent=12 // loop_header
          %s13 = sphi 0, %s17
          %p14 = scmp.ge.s32.totalorder %s13, 1
          %s18 = sphi %s0, %s0
          %s19 = sphi [#allocation0], [#allocation0]
        $region16: #{reverse.9} parent=12 // loop_header_branch
          %16 = sbr.rel (%p14) target = $region20
        $region17: #{reverse.9} parent=12 // loop_body
          %v20 = vld [vmem:[%s18] sm:$0xff]
          %21 = vst [vmem:[%s19] sm:$0xff] %v20
          %v22 = vld [vmem:[%s18 + $0x8] sm:$0xff]
          %23 = vst [vmem:[%s19 + $0x8] sm:$0xff] %v22
          %v24 = vld [vmem:[%s18 + $0x10] sm:$0xff]
          %25 = vst [vmem:[%s19 + $0x10] sm:$0xff] %v24
          %v26 = vld [vmem:[%s18 + $0x18] sm:$0xff]
          %27 = vst [vmem:[%s19 + $0x18] sm:$0xff] %v26
          %v28 = vld [vmem:[%s18 + $0x20] sm:$0xff]
          %29 = vst [vmem:[%s19 + $0x20] sm:$0xff] %v28
          %v30 = vld [vmem:[%s18 + $0x28] sm:$0xff]
          %31 = vst [vmem:[%s19 + $0x28] sm:$0xff] %v30
          %v32 = vld [vmem:[%s18 + $0x30] sm:$0xff]
          %33 = vst [vmem:[%s19 + $0x30] sm:$0xff] %v32
          %v34 = vld [vmem:[%s18 + $0x38] sm:$0xff]
          %35 = vst [vmem:[%s19 + $0x38] sm:$0xff] %v34
          %v36 = vld [vmem:[%s18 + $0x40] sm:$0xff]
          %37 = vst [vmem:[%s19 + $0x40] sm:$0xff] %v36
          %v38 = vld [vmem:[%s18 + $0x48] sm:$0xff]
          %39 = vst [vmem:[%s19 + $0x48] sm:$0xff] %v38
          %v40 = vld [vmem:[%s18 + $0x50] sm:$0xff]
          %41 = vst [vmem:[%s19 + $0x50] sm:$0xff] %v40
          %v42 = vld [vmem:[%s18 + $0x58] sm:$0xff]
          %43 = vst [vmem:[%s19 + $0x58] sm:$0xff] %v42
          %v44 = vld [vmem:[%s18 + $0x60] sm:$0xff]
          %45 = vst [vmem:[%s19 + $0x60] sm:$0xff] %v44
          %v46 = vld [vmem:[%s18 + $0x68] sm:$0xff]
          %47 = vst [vmem:[%s19 + $0x68] sm:$0xff] %v46
          %v48 = vld [vmem:[%s18 + $0x70] sm:$0xff]
          %49 = vst [vmem:[%s19 + $0x70] sm:$0xff] %v48
          %v50 = vld [vmem:[%s18 + $0x78] sm:$0xff]
          %51 = vst [vmem:[%s19 + $0x78] sm:$0xff] %v50
        $region18: #{reverse.9} parent=12 // loop_footer
          %s17 = sadd.s32 1, %s13
        $region19: #{reverse.9} parent=12 // loop_footer_branch
          %12 = sbr.rel target = $region15
        $region20: #{reverse.9} parent=12 // loop_exit
          _
      $region13: #{reverse.9} parent=4 // pred_fallthru
        _
    $region5: #{reverse.9} parent=1 // pred_fallthru
      _
    %96 = vnop
    %v97 = vld [vmem:[#allocation0] sm:$0xff]
    %98 = vperm.xlu0 %4, %v97
    %v99 = vpop.permute.xlu0 %98
    %100 = vst [vmem:[#allocation1] sm:$0xff] %v99
    %s101 = scalar_lea.vmem [#allocation1], 8
    %s102 = scalar_lea.vmem [#allocation0], 8
    %v103 = vld [vmem:[%s102] sm:$0xff]
    %104 = vperm.xlu0 %4, %v103
    %v105 = vpop.permute.xlu0 %104
    %106 = vst [vmem:[%s101] sm:$0xff] %v105
    %s107 = scalar_lea.vmem [#allocation1], 16
    %s108 = scalar_lea.vmem [#allocation0], 16
    %v109 = vld [vmem:[%s108] sm:$0xff]
    %110 = vperm.xlu0 %4, %v109
    %v111 = vpop.permute.xlu0 %110
    %112 = vst [vmem:[%s107] sm:$0xff] %v111
    %s113 = scalar_lea.vmem [#allocation1], 24
    %s114 = scalar_lea.vmem [#allocation0], 24
    %v115 = vld [vmem:[%s114] sm:$0xff]
    %116 = vperm.xlu0 %4, %v115
    %v117 = vpop.permute.xlu0 %116
    %118 = vst [vmem:[%s113] sm:$0xff] %v117
    %s119 = scalar_lea.vmem [#allocation1], 32
    %s120 = scalar_lea.vmem [#allocation0], 32
    %v121 = vld [vmem:[%s120] sm:$0xff]
    %122 = vperm.xlu0 %4, %v121
    %v123 = vpop.permute.xlu0 %122
    %124 = vst [vmem:[%s119] sm:$0xff] %v123
    %s125 = scalar_lea.vmem [#allocation1], 40
    %s126 = scalar_lea.vmem [#allocation0], 40
    %v127 = vld [vmem:[%s126] sm:$0xff]
    %128 = vperm.xlu0 %4, %v127
    %v129 = vpop.permute.xlu0 %128
    %130 = vst [vmem:[%s125] sm:$0xff] %v129
    %s131 = scalar_lea.vmem [#allocation1], 48
    %s132 = scalar_lea.vmem [#allocation0], 48
    %v133 = vld [vmem:[%s132] sm:$0xff]
    %134 = vperm.xlu0 %4, %v133
    %v135 = vpop.permute.xlu0 %134
    %136 = vst [vmem:[%s131] sm:$0xff] %v135
    %s137 = scalar_lea.vmem [#allocation1], 56
    %s138 = scalar_lea.vmem [#allocation0], 56
    %v139 = vld [vmem:[%s138] sm:$0xff]
    %140 = vperm.xlu0 %4, %v139
    %v141 = vpop.permute.xlu0 %140
    %142 = vst [vmem:[%s137] sm:$0xff] %v141
    %s143 = scalar_lea.vmem [#allocation1], 64
    %s144 = scalar_lea.vmem [#allocation0], 64
    %v145 = vld [vmem:[%s144] sm:$0xff]
    %146 = vperm.xlu0 %4, %v145
    %v147 = vpop.permute.xlu0 %146
    %148 = vst [vmem:[%s143] sm:$0xff] %v147
    %s149 = scalar_lea.vmem [#allocation1], 72
    %s150 = scalar_lea.vmem [#allocation0], 72
    %v151 = vld [vmem:[%s150] sm:$0xff]
    %152 = vperm.xlu0 %4, %v151
    %v153 = vpop.permute.xlu0 %152
    %154 = vst [vmem:[%s149] sm:$0xff] %v153
    %s155 = scalar_lea.vmem [#allocation1], 80
    %s156 = scalar_lea.vmem [#allocation0], 80
    %v157 = vld [vmem:[%s156] sm:$0xff]
    %158 = vperm.xlu0 %4, %v157
    %v159 = vpop.permute.xlu0 %158
    %160 = vst [vmem:[%s155] sm:$0xff] %v159
    %s161 = scalar_lea.vmem [#allocation1], 88
    %s162 = scalar_lea.vmem [#allocation0], 88
    %v163 = vld [vmem:[%s162] sm:$0xff]
    %164 = vperm.xlu0 %4, %v163
    %v165 = vpop.permute.xlu0 %164
    %166 = vst [vmem:[%s161] sm:$0xff] %v165
    %s167 = scalar_lea.vmem [#allocation1], 96
    %s168 = scalar_lea.vmem [#allocation0], 96
    %v169 = vld [vmem:[%s168] sm:$0xff]
    %170 = vperm.xlu0 %4, %v169
    %v171 = vpop.permute.xlu0 %170
    %172 = vst [vmem:[%s167] sm:$0xff] %v171
    %s173 = scalar_lea.vmem [#allocation1], 104
    %s174 = scalar_lea.vmem [#allocation0], 104
    %v175 = vld [vmem:[%s174] sm:$0xff]
    %176 = vperm.xlu0 %4, %v175
    %v177 = vpop.permute.xlu0 %176
    %178 = vst [vmem:[%s173] sm:$0xff] %v177
    %s179 = scalar_lea.vmem [#allocation1], 112
    %s180 = scalar_lea.vmem [#allocation0], 112
    %v181 = vld [vmem:[%s180] sm:$0xff]
    %182 = vperm.xlu0 %4, %v181
    %v183 = vpop.permute.xlu0 %182
    %184 = vst [vmem:[%s179] sm:$0xff] %v183
    %s185 = scalar_lea.vmem [#allocation1], 120
    %s186 = scalar_lea.vmem [#allocation0], 120
    %v187 = vld [vmem:[%s186] sm:$0xff]
    %188 = vperm.xlu0 %4, %v187
    %v189 = vpop.permute.xlu0 %188
    %190 = vst [vmem:[%s185] sm:$0xff] %v189
    // Predicated region
    $region36: #{reverse.9} parent=1 // pred_check
      _
    $region37: #{reverse.9} parent=1 // pred_check_branch
      %192 = sbr.rel (0) target = $region39
    $region38: #{reverse.9} parent=1 // pred_region
      // Predicated region
      $region40: #{reverse.9} parent=38 // pred_check
        _
      $region41: #{reverse.9} parent=38 // pred_check_branch
        %194 = sbr.rel (0) target = $region43
      $region42: #{reverse.9} parent=38 // pred_region
        // Predicated region
        $region55: #{reverse.9} parent=42 // pred_check
          _
        $region56: #{reverse.9} parent=42 // pred_check_branch
          %239 = sbr.rel (0) target = $region58
        $region57: #{reverse.9} parent=42 // pred_region
          loop: start=0, step=1, limit=1
          $region59: #{reverse.9} parent=57 // loop_pre_header
            _
          $region60: #{reverse.9} parent=57 // loop_header
            %s241 = sphi 0, %s245
            %p242 = scmp.ge.s32.totalorder %s241, 1
            %s246 = sphi [#allocation1], [#allocation1]
            %s247 = sphi %s1, %s1
          $region61: #{reverse.9} parent=57 // loop_header_branch
            %244 = sbr.rel (%p242) target = $region65
          $region62: #{reverse.9} parent=57 // loop_body
            %v248 = vld [vmem:[%s246] sm:$0xff]
            %249 = vst [vmem:[%s247] sm:$0xff] %v248
            %v250 = vld [vmem:[%s246 + $0x8] sm:$0xff]
            %251 = vst [vmem:[%s247 + $0x8] sm:$0xff] %v250
            %v252 = vld [vmem:[%s246 + $0x10] sm:$0xff]
            %253 = vst [vmem:[%s247 + $0x10] sm:$0xff] %v252
            %v254 = vld [vmem:[%s246 + $0x18] sm:$0xff]
            %255 = vst [vmem:[%s247 + $0x18] sm:$0xff] %v254
            %v256 = vld [vmem:[%s246 + $0x20] sm:$0xff]
            %257 = vst [vmem:[%s247 + $0x20] sm:$0xff] %v256
            %v258 = vld [vmem:[%s246 + $0x28] sm:$0xff]
            %259 = vst [vmem:[%s247 + $0x28] sm:$0xff] %v258
            %v260 = vld [vmem:[%s246 + $0x30] sm:$0xff]
            %261 = vst [vmem:[%s247 + $0x30] sm:$0xff] %v260
            %v262 = vld [vmem:[%s246 + $0x38] sm:$0xff]
            %263 = vst [vmem:[%s247 + $0x38] sm:$0xff] %v262
            %v264 = vld [vmem:[%s246 + $0x40] sm:$0xff]
            %265 = vst [vmem:[%s247 + $0x40] sm:$0xff] %v264
            %v266 = vld [vmem:[%s246 + $0x48] sm:$0xff]
            %267 = vst [vmem:[%s247 + $0x48] sm:$0xff] %v266
            %v268 = vld [vmem:[%s246 + $0x50] sm:$0xff]
            %269 = vst [vmem:[%s247 + $0x50] sm:$0xff] %v268
            %v270 = vld [vmem:[%s246 + $0x58] sm:$0xff]
            %271 = vst [vmem:[%s247 + $0x58] sm:$0xff] %v270
            %v272 = vld [vmem:[%s246 + $0x60] sm:$0xff]
            %273 = vst [vmem:[%s247 + $0x60] sm:$0xff] %v272
            %v274 = vld [vmem:[%s246 + $0x68] sm:$0xff]
            %275 = vst [vmem:[%s247 + $0x68] sm:$0xff] %v274
            %v276 = vld [vmem:[%s246 + $0x70] sm:$0xff]
            %277 = vst [vmem:[%s247 + $0x70] sm:$0xff] %v276
            %v278 = vld [vmem:[%s246 + $0x78] sm:$0xff]
            %279 = vst [vmem:[%s247 + $0x78] sm:$0xff] %v278
          $region63: #{reverse.9} parent=57 // loop_footer
            %s245 = sadd.s32 1, %s241
          $region64: #{reverse.9} parent=57 // loop_footer_branch
            %240 = sbr.rel target = $region60
          $region65: #{reverse.9} parent=57 // loop_exit
            _
        $region58: #{reverse.9} parent=42 // pred_fallthru
          _
        // Predicated region
        $region66: #{reverse.9} parent=42 // pred_check
          _
        $region67: #{reverse.9} parent=42 // pred_check_branch
          %281 = sbr.rel target = $region69
        $region68: #{reverse.9} parent=42 // pred_region
          _
        $region69: #{reverse.9} parent=42 // pred_fallthru
          _
      $region43: #{reverse.9} parent=38 // pred_fallthru
        _
      // Predicated region
      $region44: #{reverse.9} parent=38 // pred_check
        _
      $region45: #{reverse.9} parent=38 // pred_check_branch
        %196 = sbr.rel target = $region47
      $region46: #{reverse.9} parent=38 // pred_region
        loop: start=0, step=1, limit=1
        $region48: #{reverse.9} parent=46 // loop_pre_header
          _
        $region49: #{reverse.9} parent=46 // loop_header
          %s199 = sphi 0, %s203
          %p200 = scmp.ge.s32.totalorder %s199, 1
          %s204 = sphi [#allocation1], [#allocation1]
          %s205 = sphi %s1, %s1
        $region50: #{reverse.9} parent=46 // loop_header_branch
          %202 = sbr.rel (%p200) target = $region54
        $region51: #{reverse.9} parent=46 // loop_body
          %v206 = vld [vmem:[%s204] sm:$0xff]
          %207 = vst [vmem:[%s205] sm:$0xff] %v206
          %v208 = vld [vmem:[%s204 + $0x8] sm:$0xff]
          %209 = vst [vmem:[%s205 + $0x8] sm:$0xff] %v208
          %v210 = vld [vmem:[%s204 + $0x10] sm:$0xff]
          %211 = vst [vmem:[%s205 + $0x10] sm:$0xff] %v210
          %v212 = vld [vmem:[%s204 + $0x18] sm:$0xff]
          %213 = vst [vmem:[%s205 + $0x18] sm:$0xff] %v212
          %v214 = vld [vmem:[%s204 + $0x20] sm:$0xff]
          %215 = vst [vmem:[%s205 + $0x20] sm:$0xff] %v214
          %v216 = vld [vmem:[%s204 + $0x28] sm:$0xff]
          %217 = vst [vmem:[%s205 + $0x28] sm:$0xff] %v216
          %v218 = vld [vmem:[%s204 + $0x30] sm:$0xff]
          %219 = vst [vmem:[%s205 + $0x30] sm:$0xff] %v218
          %v220 = vld [vmem:[%s204 + $0x38] sm:$0xff]
          %221 = vst [vmem:[%s205 + $0x38] sm:$0xff] %v220
          %v222 = vld [vmem:[%s204 + $0x40] sm:$0xff]
          %223 = vst [vmem:[%s205 + $0x40] sm:$0xff] %v222
          %v224 = vld [vmem:[%s204 + $0x48] sm:$0xff]
          %225 = vst [vmem:[%s205 + $0x48] sm:$0xff] %v224
          %v226 = vld [vmem:[%s204 + $0x50] sm:$0xff]
          %227 = vst [vmem:[%s205 + $0x50] sm:$0xff] %v226
          %v228 = vld [vmem:[%s204 + $0x58] sm:$0xff]
          %229 = vst [vmem:[%s205 + $0x58] sm:$0xff] %v228
          %v230 = vld [vmem:[%s204 + $0x60] sm:$0xff]
          %231 = vst [vmem:[%s205 + $0x60] sm:$0xff] %v230
          %v232 = vld [vmem:[%s204 + $0x68] sm:$0xff]
          %233 = vst [vmem:[%s205 + $0x68] sm:$0xff] %v232
          %v234 = vld [vmem:[%s204 + $0x70] sm:$0xff]
          %235 = vst [vmem:[%s205 + $0x70] sm:$0xff] %v234
          %v236 = vld [vmem:[%s204 + $0x78] sm:$0xff]
          %237 = vst [vmem:[%s205 + $0x78] sm:$0xff] %v236
        $region52: #{reverse.9} parent=46 // loop_footer
          %s203 = sadd.s32 1, %s199
        $region53: #{reverse.9} parent=46 // loop_footer_branch
          %198 = sbr.rel target = $region49
        $region54: #{reverse.9} parent=46 // loop_exit
          _
      $region47: #{reverse.9} parent=38 // pred_fallthru
        _
    $region39: #{reverse.9} parent=1 // pred_fallthru
      _
    %282 = vnop

// kernel: _lambda_.24
$region0: #{_lambda_.24}
  #allocation0 [shape = 'u32[]', space=smem, size = 0x4, offset = 0x4, fixed_abs, tag = 'smem constant byte address 0x4 - core index']
  #allocation1 [shape = 'u32[144,128]{1,0:T(1,128)}', space=vmem, size = 0x12000, scoped, tag = 'internal scratch']
  %s0 = inlined_call_operand.vmem [shape: f32[16,8], index: 0, kind: input, shape index: {}]
  %s1 = inlined_call_operand.vmem [shape: f32[16,16], index: 1, kind: input, shape index: {}]
  %s2 = inlined_call_operand.vmem [shape: f32[16,8], index: 2, kind: output, shape index: {0}]
  %s3 = inlined_call_operand.vmem [shape: f32[16,8], index: 3, kind: output, shape index: {1}]
  %4 = xla_tuple %s2, %s3
  %s5 = sld [smem:[#allocation0]]
  $region26: #{_lambda_.24} parent=0
    _
  %s7 = ssub.s32 1, %s5
  %s8 = scalar_select 0, %s7, %s5
  // Predicated region
  $region2: #{_lambda_.24} parent=0 // pred_check
    _
  $region3: #{_lambda_.24} parent=0 // pred_check_branch
    %10 = sbr.rel (0) target = $region5
  $region4: #{_lambda_.24} parent=0 // pred_region
    _
  $region5: #{_lambda_.24} parent=0 // pred_fallthru
    _
  // Predicated region
  $region6: #{_lambda_.24} parent=0 // pred_check
    _
  $region7: #{_lambda_.24} parent=0 // pred_check_branch
    %12 = sbr.rel (0) target = $region9
  $region8: #{_lambda_.24} parent=0 // pred_region
    _
  $region9: #{_lambda_.24} parent=0 // pred_fallthru
    _
  %v13 = vld [vmem:[%s0] sm:$0xff]
  %v14 = vld [vmem:[%s0 + $0x8] sm:$0xff]
  %v15 = vld [vmem:[%s1] sm:$0xff]
  %v16 = vld [vmem:[%s1 + $0x8] sm:$0xff]
  %vm17 = vcmask 130048
  %v19 = vsel %vm17, %v15, 0
  %v22 = vsel %vm17, %v16, 0
  %24 = vmatprep.subr.mxu0 0.0
  %25 = vmatpush1.msra.mxu0 %v13
  %26 = vmatprep.subr.mxu0 0.0
  %27 = vmatpush1.msra.mxu0 %v14
  %28 = vmatprep.subr.mxu0 0.0
  %29 = vmatpush1.msra.mxu0 0.0
  %30 = vmatprep.subr.mxu0 0.0
  %31 = vmatpush1.msra.mxu0 0.0
  %32 = vmatprep.subr.mxu0 0.0
  %33 = vmatpush1.msra.mxu0 0.0
  %34 = vmatprep.subr.mxu0 0.0
  %35 = vmatpush1.msra.mxu0 0.0
  %36 = vmatprep.subr.mxu0 0.0
  %37 = vmatpush1.msra.mxu0 0.0
  %38 = vmatprep.subr.mxu0 0.0
  %39 = vmatpush1.msra.mxu0 0.0
  %40 = vmatprep.subr.mxu0 0.0
  %41 = vmatpush1.msra.mxu0 0.0
  %42 = vmatprep.subr.mxu0 0.0
  %43 = vmatpush1.msra.mxu0 0.0
  %44 = vmatprep.subr.mxu0 0.0
  %45 = vmatpush1.msra.mxu0 0.0
  %46 = vmatprep.subr.mxu0 0.0
  %47 = vmatpush1.msra.mxu0 0.0
  %48 = vmatprep.subr.mxu0 0.0
  %49 = vmatpush1.msra.mxu0 0.0
  %50 = vmatprep.subr.mxu0 0.0
  %51 = vmatpush1.msra.mxu0 0.0
  %52 = vmatprep.subr.mxu0 0.0
  %53 = vmatpush1.msra.mxu0 0.0
  %54 = vmatprep.subr.mxu0 0.0
  %55 = vmatpush1.msra.mxu0 0.0
  %56 = vmatprep.subr.mxu0 0.0
  %57 = vmatpush1.msra.mxu0 0.0
  %58 = vmatprep.subr.mxu0 0.0
  %59 = vmatpush1.msra.mxu0 0.0
  %60 = vmatprep.subr.mxu0 0.0
  %61 = vmatpush1.msra.mxu0 0.0
  %62 = vmatprep.subr.mxu0 0.0
  %63 = vmatpush1.msra.mxu0 0.0
  %64 = vmatprep.subr.mxu0 0.0
  %65 = vmatpush1.msra.mxu0 0.0
  %66 = vmatprep.subr.mxu0 0.0
  %67 = vmatpush1.msra.mxu0 0.0
  %68 = vmatprep.subr.mxu0 0.0
  %69 = vmatpush1.msra.mxu0 0.0
  %70 = vmatprep.subr.mxu0 0.0
  %71 = vmatpush1.msra.mxu0 0.0
  %72 = vmatprep.subr.mxu0 0.0
  %73 = vmatpush1.msra.mxu0 0.0
  %74 = vmatprep.subr.mxu0 0.0
  %75 = vmatpush1.msra.mxu0 0.0
  %76 = vmatprep.subr.mxu0 0.0
  %77 = vmatpush1.msra.mxu0 0.0
  %78 = vmatprep.subr.mxu0 0.0
  %79 = vmatpush1.msra.mxu0 0.0
  %80 = vmatprep.subr.mxu0 0.0
  %81 = vmatpush1.msra.mxu0 0.0
  %82 = vmatprep.subr.mxu0 0.0
  %83 = vmatpush1.msra.mxu0 0.0
  %84 = vmatprep.subr.mxu0 0.0
  %85 = vmatpush1.msra.mxu0 0.0
  %86 = vmatprep.subr.mxu0 0.0
  %87 = vmatpush1.msra.mxu0 0.0
  %88 = vmatprep.mubr.f32.mxu0 0.0
  %89 = vmatmul.mubr.f32.gmra.mrb[0].mxu0 %v19
  %v90 = vpop.f32.mrb[0].mxu0
  %v91 = vadd.f32 0.0, %v90
  %v92 = vpop.f32.mrb[0].mxu0
  %93 = vmatprep.mubr.f32.mxu0 0.0
  %94 = vmatmul.mubr.f32.gmra.mrb[0].mxu0 %v22
  %v95 = vpop.f32.mrb[0].mxu0
  %v96 = vadd.f32 0.0, %v95
  %v97 = vpop.f32.mrb[0].mxu0
  %98 = vdwg.mxu0
  %vm99 = vcmask 64512
  %100 = vst.msk [vmem:[%s3] sm:$0xff] %vm99, %v91
  %101 = vst.msk [vmem:[%s3 + $0x8] sm:$0xff] %vm99, %v96
  %v102 = vsub.f32 %v13, %v91
  %v103 = vsub.f32 %v14, %v96
  %104 = vst.msk [vmem:[%s2] sm:$0xff] %vm99, %v102
  %105 = vst.msk [vmem:[%s2 + $0x8] sm:$0xff] %vm99, %v103
  // Predicated region
  $region10: #{_lambda_.24} parent=0 // pred_check
    _
  $region11: #{_lambda_.24} parent=0 // pred_check_branch
    %107 = sbr.rel (0) target = $region13
  $region12: #{_lambda_.24} parent=0 // pred_region
    _
  $region13: #{_lambda_.24} parent=0 // pred_fallthru
    _
  // Predicated region
  $region14: #{_lambda_.24} parent=0 // pred_check
    _
  $region15: #{_lambda_.24} parent=0 // pred_check_branch
    %109 = sbr.rel (0) target = $region17
  $region16: #{_lambda_.24} parent=0 // pred_region
    _
  $region17: #{_lambda_.24} parent=0 // pred_fallthru
    _
  // Predicated region
  $region18: #{_lambda_.24} parent=0 // pred_check
    _
  $region19: #{_lambda_.24} parent=0 // pred_check_branch
    %111 = sbr.rel (0) target = $region21
  $region20: #{_lambda_.24} parent=0 // pred_region
    _
  $region21: #{_lambda_.24} parent=0 // pred_fallthru
    _
  // Predicated region
  $region22: #{_lambda_.24} parent=0 // pred_check
    _
  $region23: #{_lambda_.24} parent=0 // pred_check_branch
    %113 = sbr.rel (0) target = $region25
  $region24: #{_lambda_.24} parent=0 // pred_region
    _
  $region25: #{_lambda_.24} parent=0 // pred_fallthru
    _

// kernel: _lambda_.32
$region0: #{_lambda_.32}
  #allocation0 [shape = 'u32[]', space=smem, size = 0x4, offset = 0x4, fixed_abs, tag = 'smem constant byte address 0x4 - core index']
  #allocation1 [shape = 'u32[144,128]{1,0:T(1,128)}', space=vmem, size = 0x12000, scoped, tag = 'internal scratch']
  %s0 = inlined_call_operand.vmem [shape: f32[16,128], index: 0, kind: input, shape index: {}]
  %s1 = inlined_call_operand.vmem [shape: f32[16,16], index: 1, kind: input, shape index: {}]
  %s2 = inlined_call_operand.vmem [shape: f32[16,128], index: 2, kind: output, shape index: {0}]
  %s3 = inlined_call_operand.hbm [shape: f32[16,128], index: 3, kind: output, shape index: {1}]
  %4 = xla_tuple %s2, %s3
  %s5 = sld [smem:[#allocation0]]
  $region26: #{_lambda_.32} parent=0
    _
  %s7 = ssub.s32 1, %s5
  %s8 = scalar_select 0, %s7, %s5
  $region1: #{_lambda_.32} parent=0
    #allocation2 [shape = 'u8[8192]{0}', space=vmem, size = 0x2000, scoped, tag = 'output window, operand 1, single buffered']
    #allocation3 [shape = 's32[1]{0}', space=sflag, size = 0x4, scoped, tag = 'scoped memory for _lambda_.32']
    %9 = vsyncpa [#allocation3], 0
    // Predicated region
    $region2: #{_lambda_.32} parent=1 // pred_check
      _
    $region3: #{_lambda_.32} parent=1 // pred_check_branch
      %11 = sbr.rel (0) target = $region5
    $region4: #{_lambda_.32} parent=1 // pred_region
      _
    $region5: #{_lambda_.32} parent=1 // pred_fallthru
      _
    // Predicated region
    $region6: #{_lambda_.32} parent=1 // pred_check
      _
    $region7: #{_lambda_.32} parent=1 // pred_check_branch
      %13 = sbr.rel (0) target = $region9
    $region8: #{_lambda_.32} parent=1 // pred_region
      _
    $region9: #{_lambda_.32} parent=1 // pred_fallthru
      _
    %v14 = vld [vmem:[%s0] sm:$0xff]
    %v15 = vld [vmem:[%s0 + $0x8] sm:$0xff]
    %v16 = vld [vmem:[%s1] sm:$0xff]
    %v17 = vld [vmem:[%s1 + $0x8] sm:$0xff]
    %vm18 = vcmask 130048
    %v20 = vsel %vm18, %v16, 0
    %v23 = vsel %vm18, %v17, 0
    %25 = vmatprep.subr.mxu0 0.0
    %26 = vmatpush1.msra.mxu0 %v14
    %27 = vmatprep.subr.mxu0 0.0
    %28 = vmatpush1.msra.mxu0 %v15
    %29 = vmatprep.subr.mxu0 0.0
    %30 = vmatpush1.msra.mxu0 0.0
    %31 = vmatprep.subr.mxu0 0.0
    %32 = vmatpush1.msra.mxu0 0.0
    %33 = vmatprep.subr.mxu0 0.0
    %34 = vmatpush1.msra.mxu0 0.0
    %35 = vmatprep.subr.mxu0 0.0
    %36 = vmatpush1.msra.mxu0 0.0
    %37 = vmatprep.subr.mxu0 0.0
    %38 = vmatpush1.msra.mxu0 0.0
    %39 = vmatprep.subr.mxu0 0.0
    %40 = vmatpush1.msra.mxu0 0.0
    %41 = vmatprep.subr.mxu0 0.0
    %42 = vmatpush1.msra.mxu0 0.0
    %43 = vmatprep.subr.mxu0 0.0
    %44 = vmatpush1.msra.mxu0 0.0
    %45 = vmatprep.subr.mxu0 0.0
    %46 = vmatpush1.msra.mxu0 0.0
    %47 = vmatprep.subr.mxu0 0.0
    %48 = vmatpush1.msra.mxu0 0.0
    %49 = vmatprep.subr.mxu0 0.0
    %50 = vmatpush1.msra.mxu0 0.0
    %51 = vmatprep.subr.mxu0 0.0
    %52 = vmatpush1.msra.mxu0 0.0
    %53 = vmatprep.subr.mxu0 0.0
    %54 = vmatpush1.msra.mxu0 0.0
    %55 = vmatprep.subr.mxu0 0.0
    %56 = vmatpush1.msra.mxu0 0.0
    %57 = vmatprep.subr.mxu0 0.0
    %58 = vmatpush1.msra.mxu0 0.0
    %59 = vmatprep.subr.mxu0 0.0
    %60 = vmatpush1.msra.mxu0 0.0
    %61 = vmatprep.subr.mxu0 0.0
    %62 = vmatpush1.msra.mxu0 0.0
    %63 = vmatprep.subr.mxu0 0.0
    %64 = vmatpush1.msra.mxu0 0.0
    %65 = vmatprep.subr.mxu0 0.0
    %66 = vmatpush1.msra.mxu0 0.0
    %67 = vmatprep.subr.mxu0 0.0
    %68 = vmatpush1.msra.mxu0 0.0
    %69 = vmatprep.subr.mxu0 0.0
    %70 = vmatpush1.msra.mxu0 0.0
    %71 = vmatprep.subr.mxu0 0.0
    %72 = vmatpush1.msra.mxu0 0.0
    %73 = vmatprep.subr.mxu0 0.0
    %74 = vmatpush1.msra.mxu0 0.0
    %75 = vmatprep.subr.mxu0 0.0
    %76 = vmatpush1.msra.mxu0 0.0
    %77 = vmatprep.subr.mxu0 0.0
    %78 = vmatpush1.msra.mxu0 0.0
    %79 = vmatprep.subr.mxu0 0.0
    %80 = vmatpush1.msra.mxu0 0.0
    %81 = vmatprep.subr.mxu0 0.0
    %82 = vmatpush1.msra.mxu0 0.0
    %83 = vmatprep.subr.mxu0 0.0
    %84 = vmatpush1.msra.mxu0 0.0
    %85 = vmatprep.subr.mxu0 0.0
    %86 = vmatpush1.msra.mxu0 0.0
    %87 = vmatprep.subr.mxu0 0.0
    %88 = vmatpush1.msra.mxu0 0.0
    %89 = vmatprep.mubr.f32.mxu0 0.0
    %90 = vmatmul.mubr.f32.gmra.mrb[0].mxu0 %v20
    %v91 = vpop.f32.mrb[0].mxu0
    %v92 = vadd.f32 0.0, %v91
    %v93 = vpop.f32.mrb[0].mxu0
    %94 = vmatprep.mubr.f32.mxu0 0.0
    %95 = vmatmul.mubr.f32.gmra.mrb[0].mxu0 %v23
    %v96 = vpop.f32.mrb[0].mxu0
    %v97 = vadd.f32 0.0, %v96
    %v98 = vpop.f32.mrb[0].mxu0
    %99 = vdwg.mxu0
    %100 = vst [vmem:[#allocation2] sm:$0xff] %v92
    %101 = vst [vmem:[#allocation2 + $0x8] sm:$0xff] %v97
    %v102 = vsub.f32 %v14, %v92
    %v103 = vsub.f32 %v15, %v97
    %104 = vst [vmem:[%s2] sm:$0xff] %v102
    %105 = vst [vmem:[%s2 + $0x8] sm:$0xff] %v103
    // Predicated region
    $region10: #{_lambda_.32} parent=1 // pred_check
      _
    $region11: #{_lambda_.32} parent=1 // pred_check_branch
      %107 = sbr.rel (0) target = $region13
    $region12: #{_lambda_.32} parent=1 // pred_region
      _
    $region13: #{_lambda_.32} parent=1 // pred_fallthru
      _
    // Predicated region
    $region14: #{_lambda_.32} parent=1 // pred_check
      _
    $region15: #{_lambda_.32} parent=1 // pred_check_branch
      %109 = sbr.rel (0) target = $region17
    $region16: #{_lambda_.32} parent=1 // pred_region
      %s111 = ssub.s32 256, 256
      %112 = vsyncadd [#allocation3], %s111
      %s113 = sshll.u32 [#allocation2], 4
      %s114 = int_to_ptr.vmem [resolvable:$true] %s113
      %119 = dma.vmem_to_hbm [thread:$0]  %s114, 256, %s3, [#allocation3], 128, 128, 8
    $region17: #{_lambda_.32} parent=1 // pred_fallthru
      _
    // Predicated region
    $region18: #{_lambda_.32} parent=1 // pred_check
      _
    $region19: #{_lambda_.32} parent=1 // pred_check_branch
      %121 = sbr.rel (0) target = $region21
    $region20: #{_lambda_.32} parent=1 // pred_region
      _
    $region21: #{_lambda_.32} parent=1 // pred_fallthru
      _
    // Predicated region
    $region22: #{_lambda_.32} parent=1 // pred_check
      _
    $region23: #{_lambda_.32} parent=1 // pred_check_branch
      %123 = sbr.rel (0) target = $region25
    $region24: #{_lambda_.32} parent=1 // pred_region
      %124 = dma.done [#allocation3], 256
    $region25: #{_lambda_.32} parent=1 // pred_fallthru
      _
    %125 = vsyncpa [#allocation3], 1

// kernel: _lambda_.31
$region0: #{_lambda_.31}
  #allocation0 [shape = 'u32[]', space=smem, size = 0x4, offset = 0x4, fixed_abs, tag = 'smem constant byte address 0x4 - core index']
  #allocation1 [shape = 'u32[144,128]{1,0:T(1,128)}', space=vmem, size = 0x12000, scoped, tag = 'internal scratch']
  %s0 = inlined_call_operand.vmem [shape: bf16[2,32,32], index: 0, kind: input, shape index: {}]
  %s1 = inlined_call_operand.vmem [shape: bf16[2,32,32], index: 1, kind: input, shape index: {}]
  %s2 = inlined_call_operand.vmem [shape: f32[2,1,32], index: 2, kind: input, shape index: {}]
  %s3 = inlined_call_operand.vmem [shape: f32[2,32,32], index: 3, kind: output, shape index: {}]
  %s4 = sld [smem:[#allocation0]]
  $region49: #{_lambda_.31} parent=0
    _
  %s6 = ssub.s32 1, %s4
  %s7 = scalar_select 0, %s6, %s4
  loop: start=0, step=1, limit=4
  $region2: #{_lambda_.31} parent=0 // loop_pre_header
    _
  $region3: #{_lambda_.31} parent=0 // loop_header
    %s9 = sphi 0, %s13
    %p10 = scmp.ge.s32.totalorder %s9, 4
    %s16 = sphi 0, %s42
    %s17 = sphi 0, %s38
    %s18 = sphi 0, %s34
    %s19 = sphi 0, %s30
    %s20 = sphi 0, %s16
    %s21 = sphi 0, %s17
    %s22 = sphi 0, %s18
    %s23 = sphi 0, %s19
    %s24 = sphi 0, %s20
    %s25 = sphi 0, %s21
    %s26 = sphi 0, %s22
    %s27 = sphi 0, %s23
    %s49 = sphi 0, %s51
    %s52 = sphi 0, %s49
    %s53 = sphi 0, %s52
    %s69 = sphi 0, %s53
    %s79 = sphi 0, %s81
    %s82 = sphi 0, %s79
    %s83 = sphi 0, %s82
    %s99 = sphi 0, %s83
    %s107 = sphi 0, %s109
    %s110 = sphi 0, %s107
    %s111 = sphi 0, %s110
    %s127 = sphi 0, %s111
    %s137 = sphi 0, %s139
    %s140 = sphi 0, %s137
    %s141 = sphi 0, %s140
    %s157 = sphi 0, %s141
  $region4: #{_lambda_.31} parent=0 // loop_header_branch
    %12 = sbr.rel (%p10) target = $region8
  $region5: #{_lambda_.31} parent=0 // loop_body
    %s14 = ssub.s32 %s9, 1
    %s15 = ssub.s32 %s9, 2
    %s28 = sadd.s32 1, %s19
    %p29 = scmp.ge.s32.totalorder %s28, 1
    %s30 = scalar_select %p29, 0, %s28
    %s31 = sadd.s32 1, %s18
    %s32 = scalar_select %p29, %s31, %s18
    %p33 = scmp.ge.s32.totalorder %s32, 1
    %s34 = scalar_select %p33, 0, %s32
    %s35 = sadd.s32 1, %s17
    %s36 = scalar_select %p33, %s35, %s17
    %p37 = scmp.ge.s32.totalorder %s36, 1
    %s38 = scalar_select %p37, 0, %s36
    %s39 = sadd.s32 1, %s16
    %s40 = scalar_select %p37, %s39, %s16
    %p41 = scmp.ge.s32.totalorder %s40, 2
    %s42 = scalar_select %p41, 0, %s40
    %s43 = ssub.s32 %s16, %s42
    %s44 = ssub.s32 %s17, %s38
    %s45 = sor.u32 %s43, %s44
    %s46 = ssub.s32 %s19, %s30
    %s47 = sor.u32 %s45, %s46
    %p48 = scmp.eq.s32.totalorder %s47, 0
    %s50 = sadd.s32 %s49, 1
    %s51 = scalar_select %p48, %s49, %s50
    %p54 = pneg %p48
    %p55 = scmp.eq.s32.totalorder %s9, 1
    %p56 = por %p54, %p55
    %p57 = scmp.ne.s32.totalorder %s49, %s52
    %p58 = scmp.eq.s32.totalorder %s9, 0
    %p59 = por %p57, %p58
    %p60 = scmp.ne.s32.totalorder %s49, %s52
    %p61 = scmp.eq.s32.totalorder %s14, 1
    %p62 = por %p60, %p61
    %p63 = scmp.ne.s32.totalorder %s52, %s53
    %p64 = scmp.eq.s32.totalorder %s14, 0
    %p65 = por %p63, %p64
    %p66 = scmp.ne.s32.totalorder %s52, %s53
    %p67 = scmp.eq.s32.totalorder %s15, 1
    %p68 = por %p66, %p67
    %p70 = scmp.ne.s32.totalorder %s53, %s69
    %p71 = scmp.eq.s32.totalorder %s15, 0
    %p72 = por %p70, %p71
    %s73 = ssub.s32 %s16, %s42
    %s74 = ssub.s32 %s19, %s30
    %s75 = sor.u32 %s73, %s74
    %s76 = ssub.s32 %s18, %s34
    %s77 = sor.u32 %s75, %s76
    %p78 = scmp.eq.s32.totalorder %s77, 0
    %s80 = sadd.s32 %s79, 1
    %s81 = scalar_select %p78, %s79, %s80
    %p84 = pneg %p78
    %p85 = scmp.eq.s32.totalorder %s9, 1
    %p86 = por %p84, %p85
    %p87 = scmp.ne.s32.totalorder %s79, %s82
    %p88 = scmp.eq.s32.totalorder %s9, 0
    %p89 = por %p87, %p88
    %p90 = scmp.ne.s32.totalorder %s79, %s82
    %p91 = scmp.eq.s32.totalorder %s14, 1
    %p92 = por %p90, %p91
    %p93 = scmp.ne.s32.totalorder %s82, %s83
    %p94 = scmp.eq.s32.totalorder %s14, 0
    %p95 = por %p93, %p94
    %p96 = scmp.ne.s32.totalorder %s82, %s83
    %p97 = scmp.eq.s32.totalorder %s15, 1
    %p98 = por %p96, %p97
    %p100 = scmp.ne.s32.totalorder %s83, %s99
    %p101 = scmp.eq.s32.totalorder %s15, 0
    %p102 = por %p100, %p101
    %s103 = ssub.s32 %s16, %s42
    %s104 = ssub.s32 %s18, %s34
    %s105 = sor.u32 %s103, %s104
    %p106 = scmp.eq.s32.totalorder %s105, 0
    %s108 = sadd.s32 %s107, 1
    %s109 = scalar_select %p106, %s107, %s108
    %p112 = pneg %p106
    %p113 = scmp.eq.s32.totalorder %s9, 1
    %p114 = por %p112, %p113
    %p115 = scmp.ne.s32.totalorder %s107, %s110
    %p116 = scmp.eq.s32.totalorder %s9, 0
    %p117 = por %p115, %p116
    %p118 = scmp.ne.s32.totalorder %s107, %s110
    %p119 = scmp.eq.s32.totalorder %s14, 1
    %p120 = por %p118, %p119
    %p121 = scmp.ne.s32.totalorder %s110, %s111
    %p122 = scmp.eq.s32.totalorder %s14, 0
    %p123 = por %p121, %p122
    %p124 = scmp.ne.s32.totalorder %s110, %s111
    %p125 = scmp.eq.s32.totalorder %s15, 1
    %p126 = por %p124, %p125
    %p128 = scmp.ne.s32.totalorder %s111, %s127
    %p129 = scmp.eq.s32.totalorder %s15, 0
    %p130 = por %p128, %p129
    %s131 = ssub.s32 %s16, %s42
    %s132 = ssub.s32 %s17, %s38
    %s133 = sor.u32 %s131, %s132
    %s134 = ssub.s32 %s18, %s34
    %s135 = sor.u32 %s133, %s134
    %p136 = scmp.eq.s32.totalorder %s135, 0
    %s138 = sadd.s32 %s137, 1
    %s139 = scalar_select %p136, %s137, %s138
    %p142 = pneg %p136
    %p143 = scmp.eq.s32.totalorder %s9, 1
    %p144 = por %p142, %p143
    %p145 = scmp.ne.s32.totalorder %s137, %s140
    %p146 = scmp.eq.s32.totalorder %s9, 0
    %p147 = por %p145, %p146
    %p148 = scmp.ne.s32.totalorder %s137, %s140
    %p149 = scmp.eq.s32.totalorder %s14, 1
    %p150 = por %p148, %p149
    %p151 = scmp.ne.s32.totalorder %s140, %s141
    %p152 = scmp.eq.s32.totalorder %s14, 0
    %p153 = por %p151, %p152
    %p154 = scmp.ne.s32.totalorder %s140, %s141
    %p155 = scmp.eq.s32.totalorder %s15, 1
    %p156 = por %p154, %p155
    %p158 = scmp.ne.s32.totalorder %s141, %s157
    %p159 = scmp.eq.s32.totalorder %s15, 0
    %p160 = por %p158, %p159
    %p161 = scmp.le.s32.totalorder 1, %s9
    %p162 = scmp.lt.s32.totalorder %s9, 3
    %p163 = pnand %p161, %p162
    %p164 = pneg %p163
    // Predicated region
    $region9: #{_lambda_.31} parent=5 // pred_check
      _
    $region10: #{_lambda_.31} parent=5 // pred_check_branch
      %166 = sbr.rel (%p163) target = $region12
    $region11: #{_lambda_.31} parent=5 // pred_region
      %s167 = ssub.s32 %s9, 1
    $region12: #{_lambda_.31} parent=5 // pred_fallthru
      _
    %p168 = scmp.lt.s32.totalorder %s9, 2
    // Predicated region
    $region13: #{_lambda_.31} parent=5 // pred_check
      %p169 = pneg %p168
    $region14: #{_lambda_.31} parent=5 // pred_check_branch
      %171 = sbr.rel (%p169) target = $region16
    $region15: #{_lambda_.31} parent=5 // pred_region
      // Predicated region
      $region17: #{_lambda_.31} parent=15 // pred_check
        %p172 = pneg %p59
      $region18: #{_lambda_.31} parent=15 // pred_check_branch
        %174 = sbr.rel (%p172) target = $region20
      $region19: #{_lambda_.31} parent=15 // pred_region
        %s175 = smul.u32 4, %s17
        %p176 = scmp.lt.s32.totalorder %s16, 1
        %s177 = scalar_select %p176, %s16, 1
        %p178 = scmp.lt.s32.totalorder %s175, 3
        %s179 = scalar_select %p178, %s175, 3
        %p180 = scmp.lt.s32.totalorder %s19, 0
        %s181 = scalar_select %p180, %s19, 0
        %s182 = sadd.s32 %s181, %s179
        %s183 = smul.addr %s177, 4
        %s184 = sadd.s32 %s182, %s183
        %s185 = smul.addr %s184, 4
        %s186 = scalar_lea.vmem %s0, %s185
        %s187 = smul.u32 4, %s17
      $region20: #{_lambda_.31} parent=15 // pred_fallthru
        _
      // Predicated region
      $region21: #{_lambda_.31} parent=15 // pred_check
        %p188 = pneg %p89
      $region22: #{_lambda_.31} parent=15 // pred_check_branch
        %190 = sbr.rel (%p188) target = $region24
      $region23: #{_lambda_.31} parent=15 // pred_region
        %s191 = smul.u32 4, %s19
        %p192 = scmp.lt.s32.totalorder %s16, 1
        %s193 = scalar_select %p192, %s16, 1
        %p194 = scmp.lt.s32.totalorder %s191, 3
        %s195 = scalar_select %p194, %s191, 3
        %p196 = scmp.lt.s32.totalorder %s18, 0
        %s197 = scalar_select %p196, %s18, 0
        %s198 = sadd.s32 %s197, %s195
        %s199 = smul.addr %s193, 4
        %s200 = sadd.s32 %s198, %s199
        %s201 = smul.addr %s200, 4
        %s202 = scalar_lea.vmem %s1, %s201
        %s203 = smul.u32 4, %s19
      $region24: #{_lambda_.31} parent=15 // pred_fallthru
        _
      // Predicated region
      $region25: #{_lambda_.31} parent=15 // pred_check
        %p204 = pneg %p117
      $region26: #{_lambda_.31} parent=15 // pred_check_branch
        %206 = sbr.rel (%p204) target = $region28
      $region27: #{_lambda_.31} parent=15 // pred_region
        %p207 = scmp.lt.s32.totalorder %s16, 1
        %s208 = scalar_select %p207, %s16, 1
        %p209 = scmp.lt.s32.totalorder %s18, 0
        %s210 = scalar_select %p209, %s18, 0
        %s211 = sadd.s32 %s210, %s208
        %s212 = scalar_lea.vmem %s2, %s211
      $region28: #{_lambda_.31} parent=15 // pred_fallthru
        _
    $region16: #{_lambda_.31} parent=5 // pred_fallthru
      _
    %p213 = scmp.le.s32.totalorder 1, %s9
    %p214 = scmp.lt.s32.totalorder %s9, 3
    %p215 = pnand %p213, %p214
    %p216 = pneg %p215
    // Predicated region
    $region29: #{_lambda_.31} parent=5 // pred_check
      _
    $region30: #{_lambda_.31} parent=5 // pred_check_branch
      %218 = sbr.rel (%p215) target = $region32
    $region31: #{_lambda_.31} parent=5 // pred_region
      %s219 = ssub.s32 %s9, 1
      %s220 = smul.u32 4, %s21
      %p221 = scmp.lt.s32.totalorder %s20, 1
      %s222 = scalar_select %p221, %s20, 1
      %p223 = scmp.lt.s32.totalorder %s220, 3
      %s224 = scalar_select %p223, %s220, 3
      %p225 = scmp.lt.s32.totalorder %s23, 0
      %s226 = scalar_select %p225, %s23, 0
      %s227 = sadd.s32 %s226, %s224
      %s228 = smul.addr %s222, 4
      %s229 = sadd.s32 %s227, %s228
      %s230 = smul.addr %s229, 4
      %s231 = scalar_lea.vmem %s0, %s230
      %p232 = pneg %p65
      %p233 = pneg %p62
      %s234 = smul.u32 4, %s23
      %p235 = scmp.lt.s32.totalorder %s20, 1
      %s236 = scalar_select %p235, %s20, 1
      %p237 = scmp.lt.s32.totalorder %s234, 3
      %s238 = scalar_select %p237, %s234, 3
      %p239 = scmp.lt.s32.totalorder %s22, 0
      %s240 = scalar_select %p239, %s22, 0
      %s241 = sadd.s32 %s240, %s238
      %s242 = smul.addr %s236, 4
      %s243 = sadd.s32 %s241, %s242
      %s244 = smul.addr %s243, 4
      %s245 = scalar_lea.vmem %s1, %s244
      %p246 = pneg %p95
      %p247 = pneg %p92
      %p248 = scmp.lt.s32.totalorder %s20, 1
      %s249 = scalar_select %p248, %s20, 1
      %p250 = scmp.lt.s32.totalorder %s22, 0
      %s251 = scalar_select %p250, %s22, 0
      %s252 = sadd.s32 %s251, %s249
      %s253 = scalar_lea.vmem %s2, %s252
      %p254 = pneg %p123
      %p255 = pneg %p120
      %p256 = pneg %p153
      %p257 = pneg %p150
      %s258 = smul.u32 4, %s21
      %p259 = scmp.lt.s32.totalorder %s20, 1
      %s260 = scalar_select %p259, %s20, 1
      %p261 = scmp.lt.s32.totalorder %s258, 3
      %s262 = scalar_select %p261, %s258, 3
      %p263 = scmp.lt.s32.totalorder %s22, 0
      %s264 = scalar_select %p263, %s22, 0
      %s265 = sadd.s32 %s264, %s262
      %s266 = smul.addr %s260, 4
      %s267 = sadd.s32 %s265, %s266
      %s268 = smul.addr %s267, 8
      %s269 = scalar_lea.vmem %s3, %s268
      %s270 = smul.u32 4, %s21
      %p271 = scmp.lt.s32.totalorder %s20, 1
      %s272 = scalar_select %p271, %s20, 1
      %p273 = scmp.lt.s32.totalorder %s270, 3
      %s274 = scalar_select %p273, %s270, 3
      %p275 = scmp.lt.s32.totalorder %s23, 0
      %s276 = scalar_select %p275, %s23, 0
      %s277 = sadd.s32 %s276, %s274
      %s278 = smul.addr %s272, 4
      %s279 = sadd.s32 %s277, %s278
      %s280 = smul.addr %s279, 4
      %s281 = scalar_lea.vmem %s0, %s280
      %s282 = smul.u32 4, %s21
      %s283 = smul.u32 4, %s23
      %p284 = scmp.lt.s32.totalorder %s20, 1
      %s285 = scalar_select %p284, %s20, 1
      %p286 = scmp.lt.s32.totalorder %s283, 3
      %s287 = scalar_select %p286, %s283, 3
      %p288 = scmp.lt.s32.totalorder %s22, 0
      %s289 = scalar_select %p288, %s22, 0
      %s290 = sadd.s32 %s289, %s287
      %s291 = smul.addr %s285, 4
      %s292 = sadd.s32 %s290, %s291
      %s293 = smul.addr %s292, 4
      %s294 = scalar_lea.vmem %s1, %s293
      %s295 = smul.u32 4, %s23
      %p296 = scmp.lt.s32.totalorder %s20, 1
      %s297 = scalar_select %p296, %s20, 1
      %p298 = scmp.lt.s32.totalorder %s22, 0
      %s299 = scalar_select %p298, %s22, 0
      %s300 = sadd.s32 %s299, %s297
      %s301 = scalar_lea.vmem %s2, %s300
      %s302 = smul.u32 4, %s21
      %p303 = scmp.lt.s32.totalorder %s20, 1
      %s304 = scalar_select %p303, %s20, 1
      %p305 = scmp.lt.s32.totalorder %s302, 3
      %s306 = scalar_select %p305, %s302, 3
      %p307 = scmp.lt.s32.totalorder %s22, 0
      %s308 = scalar_select %p307, %s22, 0
      %s309 = sadd.s32 %s308, %s306
      %s310 = smul.addr %s304, 4
      %s311 = sadd.s32 %s309, %s310
      %s312 = smul.addr %s311, 8
      %s313 = scalar_lea.vmem %s3, %s312
      %s314 = smul.u32 4, %s21
      %p316 = scmp.eq.s32.totalorder %s23, 0
      // Predicated region
      $region33: #{_lambda_.31} parent=31 // pred_check
        %p317 = pneg %p316
      $region34: #{_lambda_.31} parent=31 // pred_check_branch
        %319 = sbr.rel (%p317) target = $region36
      $region35: #{_lambda_.31} parent=31 // pred_region
        %v320 = vld [vmem:[%s301] sm:$0x1]
        %v322 = vlaneseq
        %v323 = vshrl.u32 %v322, 7
        %v324 = vsub.s32 0, %v323
        %v325 = vrot.slane %v320, %v324
        %vm327 = vcmask 261120
        %328 = vst.msk [vmem:[%s313] sm:$0xff] %vm327, %v325
        %329 = vst.msk [vmem:[%s313 + $0x8] sm:$0xff] %vm327, %v325
        %330 = vst.msk [vmem:[%s313 + $0x10] sm:$0xff] %vm327, %v325
        %331 = vst.msk [vmem:[%s313 + $0x18] sm:$0xff] %vm327, %v325
      $region36: #{_lambda_.31} parent=31 // pred_fallthru
        _
      %v332 = vld [vmem:[%s313] sm:$0xff]
      %v333 = vld [vmem:[%s313 + $0x8] sm:$0xff]
      %v334 = vld [vmem:[%s313 + $0x10] sm:$0xff]
      %v335 = vld [vmem:[%s313 + $0x18] sm:$0xff]
      %v336 = vld [vmem:[%s281] sm:$0xf]
      %v337 = vld [vmem:[%s281 + $0x4] sm:$0xf]
      %v338 = vld [vmem:[%s281 + $0x8] sm:$0xf]
      %v339 = vld [vmem:[%s281 + $0xc] sm:$0xf]
      %v340 = vld [vmem:[%s294] sm:$0xf]
      %v341 = vld [vmem:[%s294 + $0x4] sm:$0xf]
      %v342 = vld [vmem:[%s294 + $0x8] sm:$0xf]
      %v343 = vld [vmem:[%s294 + $0xc] sm:$0xf]
      %v348 = vunpack.c.l.b16 %v336
      %v349 = vunpack.c.l.b16 %v337
      %v350 = vunpack.c.l.b16 %v338
      %v351 = vunpack.c.l.b16 %v339
      %v352 = vpack.c.b16 %v349, %v348
      %v353 = vpack.c.b16 %v351, %v350
      %v358 = vunpack.c.l.b16 %v340
      %v359 = vunpack.c.l.b16 %v341
      %v360 = vunpack.c.l.b16 %v342
      %v361 = vunpack.c.l.b16 %v343
      %v362 = vpack.c.b16 %v359, %v358
      %v363 = vpack.c.b16 %v361, %v360
      %vm366 = vcmask 261120
      %v368 = vsel %vm366, %v352, 0
      %v371 = vsel %vm366, %v353, 0
      %373 = vmatprep.subr.bf16.mxu0 0
      %374 = vmatpush1.bf16.msra.mxu0 %v362
      %375 = vmatprep.subr.bf16.mxu0 0
      %376 = vmatpush1.bf16.msra.mxu0 %v363
      %377 = vmatprep.subr.bf16.mxu0 0
      %378 = vmatpush1.bf16.msra.mxu0 0
      %379 = vmatprep.subr.bf16.mxu0 0
      %380 = vmatpush1.bf16.msra.mxu0 0
      %381 = vmatprep.subr.bf16.mxu0 0
      %382 = vmatpush1.bf16.msra.mxu0 0
      %383 = vmatprep.subr.bf16.mxu0 0
      %384 = vmatpush1.bf16.msra.mxu0 0
      %385 = vmatprep.subr.bf16.mxu0 0
      %386 = vmatpush1.bf16.msra.mxu0 0
      %387 = vmatprep.subr.bf16.mxu0 0
      %388 = vmatpush1.bf16.msra.mxu0 0
      %389 = vmatprep.subr.bf16.mxu0 0
      %390 = vmatpush1.bf16.msra.mxu0 0
      %391 = vmatprep.subr.bf16.mxu0 0
      %392 = vmatpush1.bf16.msra.mxu0 0
      %393 = vmatprep.subr.bf16.mxu0 0
      %394 = vmatpush1.bf16.msra.mxu0 0
      %395 = vmatprep.subr.bf16.mxu0 0
      %396 = vmatpush1.bf16.msra.mxu0 0
      %397 = vmatprep.subr.bf16.mxu0 0
      %398 = vmatpush1.bf16.msra.mxu0 0
      %399 = vmatprep.subr.bf16.mxu0 0
      %400 = vmatpush1.bf16.msra.mxu0 0
      %401 = vmatprep.subr.bf16.mxu0 0
      %402 = vmatpush1.bf16.msra.mxu0 0
      %403 = vmatprep.subr.bf16.mxu0 0
      %404 = vmatpush1.bf16.msra.mxu0 0
      %405 = vmatprep.mubr.bf16.mxu0 0
      %406 = vmatmul.mubr.bf16.gmra.mrb[0].mxu0 %v368
      %v407 = vpop.f32.mrb[0].mxu0
      %v408 = vadd.f32 0.0, %v407
      %v409 = vpop.f32.mrb[0].mxu0
      %v410 = vpop.f32.mrb[0].mxu0
      %v411 = vadd.f32 0.0, %v410
      %v412 = vpop.f32.mrb[0].mxu0
      %413 = vmatprep.mubr.bf16.mxu0 0
      %414 = vmatmul.mubr.bf16.gmra.mrb[0].mxu0 %v371
      %v415 = vpop.f32.mrb[0].mxu0
      %v416 = vadd.f32 0.0, %v415
      %v417 = vpop.f32.mrb[0].mxu0
      %v418 = vpop.f32.mrb[0].mxu0
      %v419 = vadd.f32 0.0, %v418
      %v420 = vpop.f32.mrb[0].mxu0
      %421 = vdwg.mxu0
      %v422 = vadd.f32 %v332, %v408
      %v423 = vadd.f32 %v333, %v411
      %v424 = vadd.f32 %v334, %v416
      %v425 = vadd.f32 %v335, %v419
      %426 = vst.msk [vmem:[%s313] sm:$0xff] %vm366, %v422
      %427 = vst.msk [vmem:[%s313 + $0x8] sm:$0xff] %vm366, %v423
      %428 = vst.msk [vmem:[%s313 + $0x10] sm:$0xff] %vm366, %v424
      %429 = vst.msk [vmem:[%s313 + $0x18] sm:$0xff] %vm366, %v425
      %s430 = smul.u32 4, %s21
      %p431 = scmp.lt.s32.totalorder %s20, 1
      %s432 = scalar_select %p431, %s20, 1
      %p433 = scmp.lt.s32.totalorder %s430, 3
      %s434 = scalar_select %p433, %s430, 3
      %p435 = scmp.lt.s32.totalorder %s22, 0
      %s436 = scalar_select %p435, %s22, 0
      %s437 = sadd.s32 %s436, %s434
      %s438 = smul.addr %s432, 4
      %s439 = sadd.s32 %s437, %s438
      %s440 = smul.addr %s439, 8
      %s441 = scalar_lea.vmem %s3, %s440
      // Predicated region
      $region37: #{_lambda_.31} parent=31 // pred_check
        %p442 = pneg %p150
      $region38: #{_lambda_.31} parent=31 // pred_check_branch
        %444 = sbr.rel (%p442) target = $region40
      $region39: #{_lambda_.31} parent=31 // pred_region
        %s445 = smul.u32 4, %s21
      $region40: #{_lambda_.31} parent=31 // pred_fallthru
        _
    $region32: #{_lambda_.31} parent=5 // pred_fallthru
      _
    %p446 = scmp.le.s32.totalorder 2, %s9
    // Predicated region
    $region41: #{_lambda_.31} parent=5 // pred_check
      %p447 = pneg %p446
    $region42: #{_lambda_.31} parent=5 // pred_check_branch
      %449 = sbr.rel (%p447) target = $region44
    $region43: #{_lambda_.31} parent=5 // pred_region
      %s450 = ssub.s32 %s9, 2
      // Predicated region
      $region45: #{_lambda_.31} parent=43 // pred_check
        %p451 = pneg %p156
      $region46: #{_lambda_.31} parent=43 // pred_check_branch
        %453 = sbr.rel (%p451) target = $region48
      $region47: #{_lambda_.31} parent=43 // pred_region
        %s454 = smul.u32 4, %s25
        %p455 = scmp.lt.s32.totalorder %s24, 1
        %s456 = scalar_select %p455, %s24, 1
        %p457 = scmp.lt.s32.totalorder %s454, 3
        %s458 = scalar_select %p457, %s454, 3
        %p459 = scmp.lt.s32.totalorder %s26, 0
        %s460 = scalar_select %p459, %s26, 0
        %s461 = sadd.s32 %s460, %s458
        %s462 = smul.addr %s456, 4
        %s463 = sadd.s32 %s461, %s462
        %s464 = smul.addr %s463, 8
        %s465 = scalar_lea.vmem %s3, %s464
      $region48: #{_lambda_.31} parent=43 // pred_fallthru
        _
    $region44: #{_lambda_.31} parent=5 // pred_fallthru
      _
  $region6: #{_lambda_.31} parent=0 // loop_footer
    %s13 = sadd.s32 1, %s9
  $region7: #{_lambda_.31} parent=0 // loop_footer_branch
    %8 = sbr.rel target = $region3
  $region8: #{_lambda_.31} parent=0 // loop_exit
    _

// kernel: _lambda_.33
$region0: #{_lambda_.33}
  #allocation0 [shape = 'u32[]', space=smem, size = 0x4, offset = 0x4, fixed_abs, tag = 'smem constant byte address 0x4 - core index']
  #allocation1 [shape = 'u32[144,128]{1,0:T(1,128)}', space=vmem, size = 0x12000, scoped, tag = 'internal scratch']
  %s0 = inlined_call_operand.vmem [shape: bf16[2,32,32], index: 0, kind: input, shape index: {}]
  %s1 = inlined_call_operand.vmem [shape: bf16[2,32,32], index: 1, kind: input, shape index: {}]
  %s2 = inlined_call_operand.vmem [shape: bf16[2,32,32], index: 2, kind: input, shape index: {}]
  %s3 = inlined_call_operand.vmem [shape: f32[2,32,32], index: 3, kind: output, shape index: {}]
  %s4 = sld [smem:[#allocation0]]
  $region49: #{_lambda_.33} parent=0
    _
  %s6 = ssub.s32 1, %s4
  %s7 = scalar_select 0, %s6, %s4
  loop: start=0, step=1, limit=4
  $region2: #{_lambda_.33} parent=0 // loop_pre_header
    _
  $region3: #{_lambda_.33} parent=0 // loop_header
    %s9 = sphi 0, %s13
    %p10 = scmp.ge.s32.totalorder %s9, 4
    %s16 = sphi 0, %s35
    %s17 = sphi 0, %s31
    %s18 = sphi 0, %s27
    %s19 = sphi 0, %s16
    %s20 = sphi 0, %s17
    %s21 = sphi 0, %s18
    %s22 = sphi 0, %s19
    %s23 = sphi 0, %s20
    %s24 = sphi 0, %s21
    %s40 = sphi 0, %s42
    %s43 = sphi 0, %s40
    %s44 = sphi 0, %s43
    %s60 = sphi 0, %s44
    %s68 = sphi 0, %s70
    %s71 = sphi 0, %s68
    %s72 = sphi 0, %s71
    %s88 = sphi 0, %s72
    %s96 = sphi 0, %s98
    %s99 = sphi 0, %s96
    %s100 = sphi 0, %s99
    %s116 = sphi 0, %s100
    %s124 = sphi 0, %s126
    %s127 = sphi 0, %s124
    %s128 = sphi 0, %s127
    %s144 = sphi 0, %s128
  $region4: #{_lambda_.33} parent=0 // loop_header_branch
    %12 = sbr.rel (%p10) target = $region8
  $region5: #{_lambda_.33} parent=0 // loop_body
    %s14 = ssub.s32 %s9, 1
    %s15 = ssub.s32 %s9, 2
    %s25 = sadd.s32 1, %s18
    %p26 = scmp.ge.s32.totalorder %s25, 1
    %s27 = scalar_select %p26, 0, %s25
    %s28 = sadd.s32 1, %s17
    %s29 = scalar_select %p26, %s28, %s17
    %p30 = scmp.ge.s32.totalorder %s29, 1
    %s31 = scalar_select %p30, 0, %s29
    %s32 = sadd.s32 1, %s16
    %s33 = scalar_select %p30, %s32, %s16
    %p34 = scmp.ge.s32.totalorder %s33, 2
    %s35 = scalar_select %p34, 0, %s33
    %s36 = ssub.s32 %s16, %s35
    %s37 = ssub.s32 %s17, %s31
    %s38 = sor.u32 %s36, %s37
    %p39 = scmp.eq.s32.totalorder %s38, 0
    %s41 = sadd.s32 %s40, 1
    %s42 = scalar_select %p39, %s40, %s41
    %p45 = pneg %p39
    %p46 = scmp.eq.s32.totalorder %s9, 1
    %p47 = por %p45, %p46
    %p48 = scmp.ne.s32.totalorder %s40, %s43
    %p49 = scmp.eq.s32.totalorder %s9, 0
    %p50 = por %p48, %p49
    %p51 = scmp.ne.s32.totalorder %s40, %s43
    %p52 = scmp.eq.s32.totalorder %s14, 1
    %p53 = por %p51, %p52
    %p54 = scmp.ne.s32.totalorder %s43, %s44
    %p55 = scmp.eq.s32.totalorder %s14, 0
    %p56 = por %p54, %p55
    %p57 = scmp.ne.s32.totalorder %s43, %s44
    %p58 = scmp.eq.s32.totalorder %s15, 1
    %p59 = por %p57, %p58
    %p61 = scmp.ne.s32.totalorder %s44, %s60
    %p62 = scmp.eq.s32.totalorder %s15, 0
    %p63 = por %p61, %p62
    %s64 = ssub.s32 %s16, %s35
    %s65 = ssub.s32 %s18, %s27
    %s66 = sor.u32 %s64, %s65
    %p67 = scmp.eq.s32.totalorder %s66, 0
    %s69 = sadd.s32 %s68, 1
    %s70 = scalar_select %p67, %s68, %s69
    %p73 = pneg %p67
    %p74 = scmp.eq.s32.totalorder %s9, 1
    %p75 = por %p73, %p74
    %p76 = scmp.ne.s32.totalorder %s68, %s71
    %p77 = scmp.eq.s32.totalorder %s9, 0
    %p78 = por %p76, %p77
    %p79 = scmp.ne.s32.totalorder %s68, %s71
    %p80 = scmp.eq.s32.totalorder %s14, 1
    %p81 = por %p79, %p80
    %p82 = scmp.ne.s32.totalorder %s71, %s72
    %p83 = scmp.eq.s32.totalorder %s14, 0
    %p84 = por %p82, %p83
    %p85 = scmp.ne.s32.totalorder %s71, %s72
    %p86 = scmp.eq.s32.totalorder %s15, 1
    %p87 = por %p85, %p86
    %p89 = scmp.ne.s32.totalorder %s72, %s88
    %p90 = scmp.eq.s32.totalorder %s15, 0
    %p91 = por %p89, %p90
    %s92 = ssub.s32 %s16, %s35
    %s93 = ssub.s32 %s18, %s27
    %s94 = sor.u32 %s92, %s93
    %p95 = scmp.eq.s32.totalorder %s94, 0
    %s97 = sadd.s32 %s96, 1
    %s98 = scalar_select %p95, %s96, %s97
    %p101 = pneg %p95
    %p102 = scmp.eq.s32.totalorder %s9, 1
    %p103 = por %p101, %p102
    %p104 = scmp.ne.s32.totalorder %s96, %s99
    %p105 = scmp.eq.s32.totalorder %s9, 0
    %p106 = por %p104, %p105
    %p107 = scmp.ne.s32.totalorder %s96, %s99
    %p108 = scmp.eq.s32.totalorder %s14, 1
    %p109 = por %p107, %p108
    %p110 = scmp.ne.s32.totalorder %s99, %s100
    %p111 = scmp.eq.s32.totalorder %s14, 0
    %p112 = por %p110, %p111
    %p113 = scmp.ne.s32.totalorder %s99, %s100
    %p114 = scmp.eq.s32.totalorder %s15, 1
    %p115 = por %p113, %p114
    %p117 = scmp.ne.s32.totalorder %s100, %s116
    %p118 = scmp.eq.s32.totalorder %s15, 0
    %p119 = por %p117, %p118
    %s120 = ssub.s32 %s16, %s35
    %s121 = ssub.s32 %s17, %s31
    %s122 = sor.u32 %s120, %s121
    %p123 = scmp.eq.s32.totalorder %s122, 0
    %s125 = sadd.s32 %s124, 1
    %s126 = scalar_select %p123, %s124, %s125
    %p129 = pneg %p123
    %p130 = scmp.eq.s32.totalorder %s9, 1
    %p131 = por %p129, %p130
    %p132 = scmp.ne.s32.totalorder %s124, %s127
    %p133 = scmp.eq.s32.totalorder %s9, 0
    %p134 = por %p132, %p133
    %p135 = scmp.ne.s32.totalorder %s124, %s127
    %p136 = scmp.eq.s32.totalorder %s14, 1
    %p137 = por %p135, %p136
    %p138 = scmp.ne.s32.totalorder %s127, %s128
    %p139 = scmp.eq.s32.totalorder %s14, 0
    %p140 = por %p138, %p139
    %p141 = scmp.ne.s32.totalorder %s127, %s128
    %p142 = scmp.eq.s32.totalorder %s15, 1
    %p143 = por %p141, %p142
    %p145 = scmp.ne.s32.totalorder %s128, %s144
    %p146 = scmp.eq.s32.totalorder %s15, 0
    %p147 = por %p145, %p146
    %p148 = scmp.le.s32.totalorder 1, %s9
    %p149 = scmp.lt.s32.totalorder %s9, 3
    %p150 = pnand %p148, %p149
    %p151 = pneg %p150
    // Predicated region
    $region9: #{_lambda_.33} parent=5 // pred_check
      _
    $region10: #{_lambda_.33} parent=5 // pred_check_branch
      %153 = sbr.rel (%p150) target = $region12
    $region11: #{_lambda_.33} parent=5 // pred_region
      %s154 = ssub.s32 %s9, 1
    $region12: #{_lambda_.33} parent=5 // pred_fallthru
      _
    %p155 = scmp.lt.s32.totalorder %s9, 2
    // Predicated region
    $region13: #{_lambda_.33} parent=5 // pred_check
      %p156 = pneg %p155
    $region14: #{_lambda_.33} parent=5 // pred_check_branch
      %158 = sbr.rel (%p156) target = $region16
    $region15: #{_lambda_.33} parent=5 // pred_region
      // Predicated region
      $region17: #{_lambda_.33} parent=15 // pred_check
        %p159 = pneg %p50
      $region18: #{_lambda_.33} parent=15 // pred_check_branch
        %161 = sbr.rel (%p159) target = $region20
      $region19: #{_lambda_.33} parent=15 // pred_region
        %s162 = smul.u32 4, %s17
        %p163 = scmp.lt.s32.totalorder %s16, 1
        %s164 = scalar_select %p163, %s16, 1
        %p165 = scmp.lt.s32.totalorder %s162, 3
        %s166 = scalar_select %p165, %s162, 3
        %s167 = smul.addr %s164, 4
        %s168 = sadd.s32 %s166, %s167
        %s169 = smul.addr %s168, 4
        %s170 = scalar_lea.vmem %s0, %s169
        %s171 = smul.u32 4, %s17
      $region20: #{_lambda_.33} parent=15 // pred_fallthru
        _
      // Predicated region
      $region21: #{_lambda_.33} parent=15 // pred_check
        %p172 = pneg %p78
      $region22: #{_lambda_.33} parent=15 // pred_check_branch
        %174 = sbr.rel (%p172) target = $region24
      $region23: #{_lambda_.33} parent=15 // pred_region
        %p175 = scmp.lt.s32.totalorder %s16, 1
        %s176 = scalar_select %p175, %s16, 1
        %p177 = scmp.lt.s32.totalorder %s18, 0
        %s178 = scalar_select %p177, %s18, 0
        %s179 = smul.addr %s176, 4
        %s180 = sadd.s32 %s178, %s179
        %s181 = smul.addr %s180, 4
        %s182 = scalar_lea.vmem %s1, %s181
      $region24: #{_lambda_.33} parent=15 // pred_fallthru
        _
      // Predicated region
      $region25: #{_lambda_.33} parent=15 // pred_check
        %p183 = pneg %p106
      $region26: #{_lambda_.33} parent=15 // pred_check_branch
        %185 = sbr.rel (%p183) target = $region28
      $region27: #{_lambda_.33} parent=15 // pred_region
        %s186 = smul.u32 4, %s18
        %p187 = scmp.lt.s32.totalorder %s16, 1
        %s188 = scalar_select %p187, %s16, 1
        %p189 = scmp.lt.s32.totalorder %s186, 3
        %s190 = scalar_select %p189, %s186, 3
        %s191 = smul.addr %s188, 4
        %s192 = sadd.s32 %s190, %s191
        %s193 = smul.addr %s192, 4
        %s194 = scalar_lea.vmem %s2, %s193
        %s195 = smul.u32 4, %s18
      $region28: #{_lambda_.33} parent=15 // pred_fallthru
        _
    $region16: #{_lambda_.33} parent=5 // pred_fallthru
      _
    %p196 = scmp.le.s32.totalorder 1, %s9
    %p197 = scmp.lt.s32.totalorder %s9, 3
    %p198 = pnand %p196, %p197
    %p199 = pneg %p198
    // Predicated region
    $region29: #{_lambda_.33} parent=5 // pred_check
      _
    $region30: #{_lambda_.33} parent=5 // pred_check_branch
      %201 = sbr.rel (%p198) target = $region32
    $region31: #{_lambda_.33} parent=5 // pred_region
      %s202 = ssub.s32 %s9, 1
      %s203 = smul.u32 4, %s20
      %p204 = scmp.lt.s32.totalorder %s19, 1
      %s205 = scalar_select %p204, %s19, 1
      %p206 = scmp.lt.s32.totalorder %s203, 3
      %s207 = scalar_select %p206, %s203, 3
      %s208 = smul.addr %s205, 4
      %s209 = sadd.s32 %s207, %s208
      %s210 = smul.addr %s209, 4
      %s211 = scalar_lea.vmem %s0, %s210
      %p212 = pneg %p56
      %p213 = pneg %p53
      %p214 = scmp.lt.s32.totalorder %s19, 1
      %s215 = scalar_select %p214, %s19, 1
      %p216 = scmp.lt.s32.totalorder %s21, 0
      %s217 = scalar_select %p216, %s21, 0
      %s218 = smul.addr %s215, 4
      %s219 = sadd.s32 %s217, %s218
      %s220 = smul.addr %s219, 4
      %s221 = scalar_lea.vmem %s1, %s220
      %p222 = pneg %p84
      %p223 = pneg %p81
      %s224 = smul.u32 4, %s21
      %p225 = scmp.lt.s32.totalorder %s19, 1
      %s226 = scalar_select %p225, %s19, 1
      %p227 = scmp.lt.s32.totalorder %s224, 3
      %s228 = scalar_select %p227, %s224, 3
      %s229 = smul.addr %s226, 4
      %s230 = sadd.s32 %s228, %s229
      %s231 = smul.addr %s230, 4
      %s232 = scalar_lea.vmem %s2, %s231
      %p233 = pneg %p112
      %p234 = pneg %p109
      %p235 = pneg %p140
      %p236 = pneg %p137
      %s237 = smul.u32 4, %s20
      %p238 = scmp.lt.s32.totalorder %s19, 1
      %s239 = scalar_select %p238, %s19, 1
      %p240 = scmp.lt.s32.totalorder %s237, 3
      %s241 = scalar_select %p240, %s237, 3
      %s242 = smul.addr %s239, 4
      %s243 = sadd.s32 %s241, %s242
      %s244 = smul.addr %s243, 8
      %s245 = scalar_lea.vmem %s3, %s244
      %s246 = smul.u32 4, %s20
      %p247 = scmp.lt.s32.totalorder %s19, 1
      %s248 = scalar_select %p247, %s19, 1
      %p249 = scmp.lt.s32.totalorder %s246, 3
      %s250 = scalar_select %p249, %s246, 3
      %s251 = smul.addr %s248, 4
      %s252 = sadd.s32 %s250, %s251
      %s253 = smul.addr %s252, 4
      %s254 = scalar_lea.vmem %s0, %s253
      %s255 = smul.u32 4, %s20
      %p256 = scmp.lt.s32.totalorder %s19, 1
      %s257 = scalar_select %p256, %s19, 1
      %p258 = scmp.lt.s32.totalorder %s21, 0
      %s259 = scalar_select %p258, %s21, 0
      %s260 = smul.addr %s257, 4
      %s261 = sadd.s32 %s259, %s260
      %s262 = smul.addr %s261, 4
      %s263 = scalar_lea.vmem %s1, %s262
      %s264 = smul.u32 4, %s21
      %p265 = scmp.lt.s32.totalorder %s19, 1
      %s266 = scalar_select %p265, %s19, 1
      %p267 = scmp.lt.s32.totalorder %s264, 3
      %s268 = scalar_select %p267, %s264, 3
      %s269 = smul.addr %s266, 4
      %s270 = sadd.s32 %s268, %s269
      %s271 = smul.addr %s270, 4
      %s272 = scalar_lea.vmem %s2, %s271
      %s273 = smul.u32 4, %s21
      %s274 = smul.u32 4, %s20
      %p275 = scmp.lt.s32.totalorder %s19, 1
      %s276 = scalar_select %p275, %s19, 1
      %p277 = scmp.lt.s32.totalorder %s274, 3
      %s278 = scalar_select %p277, %s274, 3
      %s279 = smul.addr %s276, 4
      %s280 = sadd.s32 %s278, %s279
      %s281 = smul.addr %s280, 8
      %s282 = scalar_lea.vmem %s3, %s281
      %s283 = smul.u32 4, %s20
      %p285 = scmp.eq.s32.totalorder %s21, 0
      // Predicated region
      $region33: #{_lambda_.33} parent=31 // pred_check
        %p286 = pneg %p285
      $region34: #{_lambda_.33} parent=31 // pred_check_branch
        %288 = sbr.rel (%p286) target = $region36
      $region35: #{_lambda_.33} parent=31 // pred_region
        %vm289 = vcmask 261120
        %290 = vst.msk [vmem:[%s282] sm:$0xff] %vm289, 0.0
        %291 = vst.msk [vmem:[%s282 + $0x8] sm:$0xff] %vm289, 0.0
        %292 = vst.msk [vmem:[%s282 + $0x10] sm:$0xff] %vm289, 0.0
        %293 = vst.msk [vmem:[%s282 + $0x18] sm:$0xff] %vm289, 0.0
      $region36: #{_lambda_.33} parent=31 // pred_fallthru
        _
      %v294 = vld [vmem:[%s254] sm:$0xf]
      %v295 = vld [vmem:[%s254 + $0x4] sm:$0xf]
      %v296 = vld [vmem:[%s254 + $0x8] sm:$0xf]
      %v297 = vld [vmem:[%s254 + $0xc] sm:$0xf]
      %v298 = vld [vmem:[%s263] sm:$0xf]
      %v299 = vld [vmem:[%s263 + $0x4] sm:$0xf]
      %v300 = vld [vmem:[%s263 + $0x8] sm:$0xf]
      %v301 = vld [vmem:[%s263 + $0xc] sm:$0xf]
      %v306 = vunpack.c.l.b16 %v294
      %v307 = vunpack.c.l.b16 %v295
      %v308 = vunpack.c.l.b16 %v296
      %v309 = vunpack.c.l.b16 %v297
      %v310 = vpack.c.b16 %v307, %v306
      %v311 = vpack.c.b16 %v309, %v308
      %v316 = vunpack.c.l.b16 %v298
      %v317 = vunpack.c.l.b16 %v299
      %v318 = vunpack.c.l.b16 %v300
      %v319 = vunpack.c.l.b16 %v301
      %v320 = vpack.c.b16 %v317, %v316
      %v321 = vpack.c.b16 %v319, %v318
      %vm324 = vcmask 261120
      %v326 = vsel %vm324, %v310, 0
      %v329 = vsel %vm324, %v311, 0
      %331 = vmatprep.subr.bf16.mxu0 0
      %332 = vmatpush1.bf16.msra.mxu0 %v320
      %333 = vmatprep.subr.bf16.mxu0 0
      %334 = vmatpush1.bf16.msra.mxu0 %v321
      %335 = vmatprep.subr.bf16.mxu0 0
      %336 = vmatpush1.bf16.msra.mxu0 0
      %337 = vmatprep.subr.bf16.mxu0 0
      %338 = vmatpush1.bf16.msra.mxu0 0
      %339 = vmatprep.subr.bf16.mxu0 0
      %340 = vmatpush1.bf16.msra.mxu0 0
      %341 = vmatprep.subr.bf16.mxu0 0
      %342 = vmatpush1.bf16.msra.mxu0 0
      %343 = vmatprep.subr.bf16.mxu0 0
      %344 = vmatpush1.bf16.msra.mxu0 0
      %345 = vmatprep.subr.bf16.mxu0 0
      %346 = vmatpush1.bf16.msra.mxu0 0
      %347 = vmatprep.subr.bf16.mxu0 0
      %348 = vmatpush1.bf16.msra.mxu0 0
      %349 = vmatprep.subr.bf16.mxu0 0
      %350 = vmatpush1.bf16.msra.mxu0 0
      %351 = vmatprep.subr.bf16.mxu0 0
      %352 = vmatpush1.bf16.msra.mxu0 0
      %353 = vmatprep.subr.bf16.mxu0 0
      %354 = vmatpush1.bf16.msra.mxu0 0
      %355 = vmatprep.subr.bf16.mxu0 0
      %356 = vmatpush1.bf16.msra.mxu0 0
      %357 = vmatprep.subr.bf16.mxu0 0
      %358 = vmatpush1.bf16.msra.mxu0 0
      %359 = vmatprep.subr.bf16.mxu0 0
      %360 = vmatpush1.bf16.msra.mxu0 0
      %361 = vmatprep.subr.bf16.mxu0 0
      %362 = vmatpush1.bf16.msra.mxu0 0
      %363 = vmatprep.mubr.bf16.mxu0 0
      %364 = vmatmul.mubr.bf16.gmra.mrb[0].mxu0 %v326
      %v365 = vpop.f32.mrb[0].mxu0
      %v366 = vadd.f32 0.0, %v365
      %v367 = vpop.f32.mrb[0].mxu0
      %v368 = vpop.f32.mrb[0].mxu0
      %v369 = vadd.f32 0.0, %v368
      %v370 = vpop.f32.mrb[0].mxu0
      %371 = vmatprep.mubr.bf16.mxu0 0
      %372 = vmatmul.mubr.bf16.gmra.mrb[0].mxu0 %v329
      %v373 = vpop.f32.mrb[0].mxu0
      %v374 = vadd.f32 0.0, %v373
      %v375 = vpop.f32.mrb[0].mxu0
      %v376 = vpop.f32.mrb[0].mxu0
      %v377 = vadd.f32 0.0, %v376
      %v378 = vpop.f32.mrb[0].mxu0
      %379 = vdwg.mxu0
      %v380 = vmul.f32 %v366, 0.5
      %v381 = vmul.f32 %v369, 0.5
      %v382 = vmul.f32 %v374, 0.5
      %v383 = vmul.f32 %v377, 0.5
      %v384 = vmul.f32 %v366, 0.70710677
      %v385 = vmul.f32 %v369, 0.70710677
      %v386 = vmul.f32 %v374, 0.70710677
      %v387 = vmul.f32 %v377, 0.70710677
      %v388 = vand.u32 2147483647, %v384
      %v389 = vand.u32 2147483647, %v385
      %v390 = vand.u32 2147483647, %v386
      %v391 = vand.u32 2147483647, %v387
      %v392 = vmul.f32 %v388, 0.3275911
      %v393 = vmul.f32 %v389, 0.3275911
      %v394 = vmul.f32 %v390, 0.3275911
      %v395 = vmul.f32 %v391, 0.3275911
      %v396 = vadd.f32 %v392, 1.0
      %v397 = vadd.f32 %v393, 1.0
      %v398 = vadd.f32 %v394, 1.0
      %v399 = vadd.f32 %v395, 1.0
      %v400 = vrcp.pop %v396
      %v401 = vmul.f32 1.0, %v400
      %v402 = vrcp.pop %v397
      %v403 = vmul.f32 1.0, %v402
      %v404 = vrcp.pop %v398
      %v405 = vmul.f32 1.0, %v404
      %v406 = vrcp.pop %v399
      %v407 = vmul.f32 1.0, %v406
      %v408 = vmul.f32 %v401, 1.0614054
      %v409 = vmul.f32 %v403, 1.0614054
      %v410 = vmul.f32 %v405, 1.0614054
      %v411 = vmul.f32 %v407, 1.0614054
      %v412 = vadd.f32 %v408, -1.4531521
      %v413 = vadd.f32 %v409, -1.4531521
      %v414 = vadd.f32 %v410, -1.4531521
      %v415 = vadd.f32 %v411, -1.4531521
      %v416 = vmul.f32 %v412, %v401
      %v417 = vmul.f32 %v413, %v403
      %v418 = vmul.f32 %v414, %v405
      %v419 = vmul.f32 %v415, %v407
      %v420 = vadd.f32 %v416, 1.4214138
      %v421 = vadd.f32 %v417, 1.4214138
      %v422 = vadd.f32 %v418, 1.4214138
      %v423 = vadd.f32 %v419, 1.4214138
      %v424 = vmul.f32 %v420, %v401
      %v425 = vmul.f32 %v421, %v403
      %v426 = vmul.f32 %v422, %v405
      %v427 = vmul.f32 %v423, %v407
      %v428 = vadd.f32 %v424, -0.28449672
      %v429 = vadd.f32 %v425, -0.28449672
      %v430 = vadd.f32 %v426, -0.28449672
      %v431 = vadd.f32 %v427, -0.28449672
      %v432 = vmul.f32 %v428, %v401
      %v433 = vmul.f32 %v429, %v403
      %v434 = vmul.f32 %v430, %v405
      %v435 = vmul.f32 %v431, %v407
      %v436 = vadd.f32 %v432, 0.2548296
      %v437 = vadd.f32 %v433, 0.2548296
      %v438 = vadd.f32 %v434, 0.2548296
      %v439 = vadd.f32 %v435, 0.2548296
      %v440 = vmul.f32 %v436, %v401
      %v441 = vmul.f32 %v437, %v403
      %v442 = vmul.f32 %v438, %v405
      %v443 = vmul.f32 %v439, %v407
      %v444 = vsub.f32 0.0, %v388
      %v445 = vsub.f32 0.0, %v389
      %v446 = vsub.f32 0.0, %v390
      %v447 = vsub.f32 0.0, %v391
      %v448 = vmul.f32 %v444, %v388
      %v449 = vmul.f32 %v445, %v389
      %v450 = vmul.f32 %v446, %v390
      %v451 = vmul.f32 %v447, %v391
      %v452 = vmul.f32 %v448, 1.442695
      %v453 = vpow.pop %v452
      %v454 = vmul.f32 %v449, 1.442695
      %v455 = vpow.pop %v454
      %v456 = vmul.f32 %v450, 1.442695
      %v457 = vpow.pop %v456
      %v458 = vmul.f32 %v451, 1.442695
      %v459 = vpow.pop %v458
      %v460 = vmul.f32 %v440, %v453
      %v461 = vmul.f32 %v441, %v455
      %v462 = vmul.f32 %v442, %v457
      %v463 = vmul.f32 %v443, %v459
      %v464 = vsub.f32 1.0, %v460
      %v465 = vsub.f32 1.0, %v461
      %v466 = vsub.f32 1.0, %v462
      %v467 = vsub.f32 1.0, %v463
      %vm468 = vcmp.ge.f32.partialorder %v384, 0.0
      %vm469 = vcmp.ge.f32.partialorder %v385, 0.0
      %vm470 = vcmp.ge.f32.partialorder %v386, 0.0
      %vm471 = vcmp.ge.f32.partialorder %v387, 0.0
      %v472 = vsub.f32 0.0, %v464
      %v473 = vsub.f32 0.0, %v465
      %v474 = vsub.f32 0.0, %v466
      %v475 = vsub.f32 0.0, %v467
      %v476 = vsel %vm468, %v464, %v472
      %v477 = vsel %vm469, %v465, %v473
      %v478 = vsel %vm470, %v466, %v474
      %v479 = vsel %vm471, %v467, %v475
      %v480 = vadd.f32 %v476, 1.0
      %v481 = vadd.f32 %v477, 1.0
      %v482 = vadd.f32 %v478, 1.0
      %v483 = vadd.f32 %v479, 1.0
      %v484 = vmul.f32 %v380, %v480
      %v485 = vmul.f32 %v381, %v481
      %v486 = vmul.f32 %v382, %v482
      %v487 = vmul.f32 %v383, %v483
      %v488 = vld [vmem:[%s282] sm:$0xff]
      %v489 = vld [vmem:[%s282 + $0x8] sm:$0xff]
      %v490 = vld [vmem:[%s282 + $0x10] sm:$0xff]
      %v491 = vld [vmem:[%s282 + $0x18] sm:$0xff]
      %v492 = vpack.c.bf16 %v485, %v484
      %v493 = vpack.c.bf16 %v487, %v486
      %v494 = vld [vmem:[%s272] sm:$0xf]
      %v495 = vld [vmem:[%s272 + $0x4] sm:$0xf]
      %v496 = vld [vmem:[%s272 + $0x8] sm:$0xf]
      %v497 = vld [vmem:[%s272 + $0xc] sm:$0xf]
      %v502 = vunpack.c.l.b16 %v494
      %v503 = vunpack.c.l.b16 %v495
      %v504 = vunpack.c.l.b16 %v496
      %v505 = vunpack.c.l.b16 %v497
      %v506 = vpack.c.b16 %v503, %v502
      %v507 = vpack.c.b16 %v505, %v504
      %v511 = vsel %vm324, %v492, 0
      %v514 = vsel %vm324, %v493, 0
      %516 = vmatprep.subr.bf16.mxu0 0
      %517 = vmatpush1.bf16.msra.mxu0 %v506
      %518 = vmatprep.subr.bf16.mxu0 0
      %519 = vmatpush1.bf16.msra.mxu0 %v507
      %520 = vmatprep.subr.bf16.mxu0 0
      %521 = vmatpush1.bf16.msra.mxu0 0
      %522 = vmatprep.subr.bf16.mxu0 0
      %523 = vmatpush1.bf16.msra.mxu0 0
      %524 = vmatprep.subr.bf16.mxu0 0
      %525 = vmatpush1.bf16.msra.mxu0 0
      %526 = vmatprep.subr.bf16.mxu0 0
      %527 = vmatpush1.bf16.msra.mxu0 0
      %528 = vmatprep.subr.bf16.mxu0 0
      %529 = vmatpush1.bf16.msra.mxu0 0
      %530 = vmatprep.subr.bf16.mxu0 0
      %531 = vmatpush1.bf16.msra.mxu0 0
      %532 = vmatprep.subr.bf16.mxu0 0
      %533 = vmatpush1.bf16.msra.mxu0 0
      %534 = vmatprep.subr.bf16.mxu0 0
      %535 = vmatpush1.bf16.msra.mxu0 0
      %536 = vmatprep.subr.bf16.mxu0 0
      %537 = vmatpush1.bf16.msra.mxu0 0
      %538 = vmatprep.subr.bf16.mxu0 0
      %539 = vmatpush1.bf16.msra.mxu0 0
      %540 = vmatprep.subr.bf16.mxu0 0
      %541 = vmatpush1.bf16.msra.mxu0 0
      %542 = vmatprep.subr.bf16.mxu0 0
      %543 = vmatpush1.bf16.msra.mxu0 0
      %544 = vmatprep.subr.bf16.mxu0 0
      %545 = vmatpush1.bf16.msra.mxu0 0
      %546 = vmatprep.subr.bf16.mxu0 0
      %547 = vmatpush1.bf16.msra.mxu0 0
      %548 = vmatprep.mubr.bf16.mxu0 0
      %549 = vmatmul.mubr.bf16.gmra.mrb[0].mxu0 %v511
      %v550 = vpop.f32.mrb[0].mxu0
      %v551 = vadd.f32 0.0, %v550
      %v552 = vpop.f32.mrb[0].mxu0
      %v553 = vpop.f32.mrb[0].mxu0
      %v554 = vadd.f32 0.0, %v553
      %v555 = vpop.f32.mrb[0].mxu0
      %556 = vmatprep.mubr.bf16.mxu0 0
      %557 = vmatmul.mubr.bf16.gmra.mrb[0].mxu0 %v514
      %v558 = vpop.f32.mrb[0].mxu0
      %v559 = vadd.f32 0.0, %v558
      %v560 = vpop.f32.mrb[0].mxu0
      %v561 = vpop.f32.mrb[0].mxu0
      %v562 = vadd.f32 0.0, %v561
      %v563 = vpop.f32.mrb[0].mxu0
      %564 = vdwg.mxu0
      %v565 = vadd.f32 %v488, %v551
      %v566 = vadd.f32 %v489, %v554
      %v567 = vadd.f32 %v490, %v559
      %v568 = vadd.f32 %v491, %v562
      %569 = vst.msk [vmem:[%s282] sm:$0xff] %vm324, %v565
      %570 = vst.msk [vmem:[%s282 + $0x8] sm:$0xff] %vm324, %v566
      %571 = vst.msk [vmem:[%s282 + $0x10] sm:$0xff] %vm324, %v567
      %572 = vst.msk [vmem:[%s282 + $0x18] sm:$0xff] %vm324, %v568
      %s573 = smul.u32 4, %s20
      %p574 = scmp.lt.s32.totalorder %s19, 1
      %s575 = scalar_select %p574, %s19, 1
      %p576 = scmp.lt.s32.totalorder %s573, 3
      %s577 = scalar_select %p576, %s573, 3
      %s578 = smul.addr %s575, 4
      %s579 = sadd.s32 %s577, %s578
      %s580 = smul.addr %s579, 8
      %s581 = scalar_lea.vmem %s3, %s580
      // Predicated region
      $region37: #{_lambda_.33} parent=31 // pred_check
        %p582 = pneg %p137
      $region38: #{_lambda_.33} parent=31 // pred_check_branch
        %584 = sbr.rel (%p582) target = $region40
      $region39: #{_lambda_.33} parent=31 // pred_region
        %s585 = smul.u32 4, %s20
      $region40: #{_lambda_.33} parent=31 // pred_fallthru
        _
    $region32: #{_lambda_.33} parent=5 // pred_fallthru
      _
    %p586 = scmp.le.s32.totalorder 2, %s9
    // Predicated region
    $region41: #{_lambda_.33} parent=5 // pred_check
      %p587 = pneg %p586
    $region42: #{_lambda_.33} parent=5 // pred_check_branch
      %589 = sbr.rel (%p587) target = $region44
    $region43: #{_lambda_.33} parent=5 // pred_region
      %s590 = ssub.s32 %s9, 2
      // Predicated region
      $region45: #{_lambda_.33} parent=43 // pred_check
        %p591 = pneg %p143
      $region46: #{_lambda_.33} parent=43 // pred_check_branch
        %593 = sbr.rel (%p591) target = $region48
      $region47: #{_lambda_.33} parent=43 // pred_region
        %s594 = smul.u32 4, %s23
        %p595 = scmp.lt.s32.totalorder %s22, 1
        %s596 = scalar_select %p595, %s22, 1
        %p597 = scmp.lt.s32.totalorder %s594, 3
        %s598 = scalar_select %p597, %s594, 3
        %s599 = smul.addr %s596, 4
        %s600 = sadd.s32 %s598, %s599
        %s601 = smul.addr %s600, 8
        %s602 = scalar_lea.vmem %s3, %s601
      $region48: #{_lambda_.33} parent=43 // pred_fallthru
        _
    $region44: #{_lambda_.33} parent=5 // pred_fallthru
      _
  $region6: #{_lambda_.33} parent=0 // loop_footer
    %s13 = sadd.s32 1, %s9
  $region7: #{_lambda_.33} parent=0 // loop_footer_branch
    %8 = sbr.rel target = $region3
  $region8: #{_lambda_.33} parent=0 // loop_exit
    _

// kernel: _lambda_.35
$region0: #{_lambda_.35}
  #allocation0 [shape = 'u32[]', space=smem, size = 0x4, offset = 0x4, fixed_abs, tag = 'smem constant byte address 0x4 - core index']
  #allocation1 [shape = 'u32[144,128]{1,0:T(1,128)}', space=vmem, size = 0x12000, scoped, tag = 'internal scratch']
  %s0 = inlined_call_operand.vmem [shape: f32[4,16,32], index: 0, kind: input, shape index: {}]
  %s1 = inlined_call_operand.vmem [shape: f32[4,1,32], index: 1, kind: input, shape index: {}]
  %s2 = inlined_call_operand.vmem [shape: f32[4,1,32], index: 2, kind: input, shape index: {}]
  %s3 = inlined_call_operand.vmem [shape: f32[4,16,32], index: 3, kind: output, shape index: {}]
  %s4 = sld [smem:[#allocation0]]
  $region22: #{_lambda_.35} parent=0
    _
  %s6 = ssub.s32 1, %s4
  %s7 = scalar_select 0, %s6, %s4
  // Predicated region
  $region2: #{_lambda_.35} parent=0 // pred_check
    _
  $region3: #{_lambda_.35} parent=0 // pred_check_branch
    %9 = sbr.rel (0) target = $region5
  $region4: #{_lambda_.35} parent=0 // pred_region
    _
  $region5: #{_lambda_.35} parent=0 // pred_fallthru
    _
  // Predicated region
  $region6: #{_lambda_.35} parent=0 // pred_check
    _
  $region7: #{_lambda_.35} parent=0 // pred_check_branch
    %11 = sbr.rel (0) target = $region9
  $region8: #{_lambda_.35} parent=0 // pred_region
    _
  $region9: #{_lambda_.35} parent=0 // pred_fallthru
    _
  // Predicated region
  $region10: #{_lambda_.35} parent=0 // pred_check
    _
  $region11: #{_lambda_.35} parent=0 // pred_check_branch
    %13 = sbr.rel (0) target = $region13
  $region12: #{_lambda_.35} parent=0 // pred_region
    _
  $region13: #{_lambda_.35} parent=0 // pred_fallthru
    _
  %v14 = vld [vmem:[%s0] sm:$0xff]
  %v15 = vld [vmem:[%s0 + $0x8] sm:$0xff]
  %v16 = vld [vmem:[%s0 + $0x10] sm:$0xff]
  %v17 = vld [vmem:[%s0 + $0x18] sm:$0xff]
  %v18 = vld [vmem:[%s0 + $0x20] sm:$0xff]
  %v19 = vld [vmem:[%s0 + $0x28] sm:$0xff]
  %v20 = vld [vmem:[%s0 + $0x30] sm:$0xff]
  %v21 = vld [vmem:[%s0 + $0x38] sm:$0xff]
  %v22 = vld [vmem:[%s1] sm:$0x1]
  %v23 = vld [vmem:[%s1 + $0x1] sm:$0x1]
  %v24 = vld [vmem:[%s1 + $0x2] sm:$0x1]
  %v25 = vld [vmem:[%s1 + $0x3] sm:$0x1]
  %v26 = vld [vmem:[%s2] sm:$0x1]
  %v27 = vld [vmem:[%s2 + $0x1] sm:$0x1]
  %v28 = vld [vmem:[%s2 + $0x2] sm:$0x1]
  %v29 = vld [vmem:[%s2 + $0x3] sm:$0x1]
  %vm30 = vcmask 261120
  %v31 = vsel %vm30, %v14, 0.0
  %32 = vadd.xlane.f32.xlu0 %v31
  %v33 = vpop.xlane.xlu0 %32
  %v34 = vsel %vm30, %v15, 0.0
  %35 = vadd.xlane.f32.xlu0 %v34
  %v36 = vpop.xlane.xlu0 %35
  %v37 = vsel %vm30, %v16, 0.0
  %38 = vadd.xlane.f32.xlu0 %v37
  %v39 = vpop.xlane.xlu0 %38
  %v40 = vsel %vm30, %v17, 0.0
  %41 = vadd.xlane.f32.xlu0 %v40
  %v42 = vpop.xlane.xlu0 %41
  %v43 = vsel %vm30, %v18, 0.0
  %44 = vadd.xlane.f32.xlu0 %v43
  %v45 = vpop.xlane.xlu0 %44
  %v46 = vsel %vm30, %v19, 0.0
  %47 = vadd.xlane.f32.xlu0 %v46
  %v48 = vpop.xlane.xlu0 %47
  %v49 = vsel %vm30, %v20, 0.0
  %50 = vadd.xlane.f32.xlu0 %v49
  %v51 = vpop.xlane.xlu0 %50
  %v52 = vsel %vm30, %v21, 0.0
  %53 = vadd.xlane.f32.xlu0 %v52
  %v54 = vpop.xlane.xlu0 %53
  %v55 = vrcp.pop 32.0
  %v56 = vmul.f32 %v33, %v55
  %v57 = vmul.f32 %v36, %v55
  %v58 = vmul.f32 %v39, %v55
  %v59 = vmul.f32 %v42, %v55
  %v60 = vmul.f32 %v45, %v55
  %v61 = vmul.f32 %v48, %v55
  %v62 = vmul.f32 %v51, %v55
  %v63 = vmul.f32 %v54, %v55
  %v64 = vsub.f32 %v14, %v56
  %v65 = vsub.f32 %v15, %v57
  %v66 = vsub.f32 %v16, %v58
  %v67 = vsub.f32 %v17, %v59
  %v68 = vsub.f32 %v18, %v60
  %v69 = vsub.f32 %v19, %v61
  %v70 = vsub.f32 %v20, %v62
  %v71 = vsub.f32 %v21, %v63
  %v72 = vmul.f32 %v64, %v64
  %v73 = vmul.f32 %v65, %v65
  %v74 = vmul.f32 %v66, %v66
  %v75 = vmul.f32 %v67, %v67
  %v76 = vmul.f32 %v68, %v68
  %v77 = vmul.f32 %v69, %v69
  %v78 = vmul.f32 %v70, %v70
  %v79 = vmul.f32 %v71, %v71
  %v80 = vsel %vm30, %v72, 0.0
  %81 = vadd.xlane.f32.xlu0 %v80
  %v82 = vpop.xlane.xlu0 %81
  %v83 = vsel %vm30, %v73, 0.0
  %84 = vadd.xlane.f32.xlu0 %v83
  %v85 = vpop.xlane.xlu0 %84
  %v86 = vsel %vm30, %v74, 0.0
  %87 = vadd.xlane.f32.xlu0 %v86
  %v88 = vpop.xlane.xlu0 %87
  %v89 = vsel %vm30, %v75, 0.0
  %90 = vadd.xlane.f32.xlu0 %v89
  %v91 = vpop.xlane.xlu0 %90
  %v92 = vsel %vm30, %v76, 0.0
  %93 = vadd.xlane.f32.xlu0 %v92
  %v94 = vpop.xlane.xlu0 %93
  %v95 = vsel %vm30, %v77, 0.0
  %96 = vadd.xlane.f32.xlu0 %v95
  %v97 = vpop.xlane.xlu0 %96
  %v98 = vsel %vm30, %v78, 0.0
  %99 = vadd.xlane.f32.xlu0 %v98
  %v100 = vpop.xlane.xlu0 %99
  %v101 = vsel %vm30, %v79, 0.0
  %102 = vadd.xlane.f32.xlu0 %v101
  %v103 = vpop.xlane.xlu0 %102
  %v104 = vmul.f32 %v82, %v55
  %v105 = vmul.f32 %v85, %v55
  %v106 = vmul.f32 %v88, %v55
  %v107 = vmul.f32 %v91, %v55
  %v108 = vmul.f32 %v94, %v55
  %v109 = vmul.f32 %v97, %v55
  %v110 = vmul.f32 %v100, %v55
  %v111 = vmul.f32 %v103, %v55
  %v112 = vadd.f32 %v104, 1e-05
  %v113 = vadd.f32 %v105, 1e-05
  %v114 = vadd.f32 %v106, 1e-05
  %v115 = vadd.f32 %v107, 1e-05
  %v116 = vadd.f32 %v108, 1e-05
  %v117 = vadd.f32 %v109, 1e-05
  %v118 = vadd.f32 %v110, 1e-05
  %v119 = vadd.f32 %v111, 1e-05
  %v120 = vrsqrt.pop %v112
  %v121 = vrsqrt.pop %v113
  %v122 = vrsqrt.pop %v114
  %v123 = vrsqrt.pop %v115
  %v124 = vrsqrt.pop %v116
  %v125 = vrsqrt.pop %v117
  %v126 = vrsqrt.pop %v118
  %v127 = vrsqrt.pop %v119
  %v128 = vmul.f32 %v64, %v120
  %v129 = vmul.f32 %v65, %v121
  %v130 = vmul.f32 %v66, %v122
  %v131 = vmul.f32 %v67, %v123
  %v132 = vmul.f32 %v68, %v124
  %v133 = vmul.f32 %v69, %v125
  %v134 = vmul.f32 %v70, %v126
  %v135 = vmul.f32 %v71, %v127
  %v140 = vlaneseq
  %v141 = vshrl.u32 %v140, 7
  %v142 = vsub.s32 0, %v141
  %v143 = vrot.slane %v22, %v142
  %v144 = vlaneseq
  %v145 = vshrl.u32 %v144, 7
  %v146 = vsub.s32 0, %v145
  %v147 = vrot.slane %v23, %v146
  %v148 = vlaneseq
  %v149 = vshrl.u32 %v148, 7
  %v150 = vsub.s32 0, %v149
  %v151 = vrot.slane %v24, %v150
  %v152 = vlaneseq
  %v153 = vshrl.u32 %v152, 7
  %v154 = vsub.s32 0, %v153
  %v155 = vrot.slane %v25, %v154
  %v160 = vmul.f32 %v128, %v143
  %v161 = vmul.f32 %v129, %v143
  %v162 = vmul.f32 %v130, %v147
  %v163 = vmul.f32 %v131, %v147
  %v164 = vmul.f32 %v132, %v151
  %v165 = vmul.f32 %v133, %v151
  %v166 = vmul.f32 %v134, %v155
  %v167 = vmul.f32 %v135, %v155
  %v172 = vlaneseq
  %v173 = vshrl.u32 %v172, 7
  %v174 = vsub.s32 0, %v173
  %v175 = vrot.slane %v26, %v174
  %v176 = vlaneseq
  %v177 = vshrl.u32 %v176, 7
  %v178 = vsub.s32 0, %v177
  %v179 = vrot.slane %v27, %v178
  %v180 = vlaneseq
  %v181 = vshrl.u32 %v180, 7
  %v182 = vsub.s32 0, %v181
  %v183 = vrot.slane %v28, %v182
  %v184 = vlaneseq
  %v185 = vshrl.u32 %v184, 7
  %v186 = vsub.s32 0, %v185
  %v187 = vrot.slane %v29, %v186
  %v192 = vadd.f32 %v160, %v175
  %v193 = vadd.f32 %v161, %v175
  %v194 = vadd.f32 %v162, %v179
  %v195 = vadd.f32 %v163, %v179
  %v196 = vadd.f32 %v164, %v183
  %v197 = vadd.f32 %v165, %v183
  %v198 = vadd.f32 %v166, %v187
  %v199 = vadd.f32 %v167, %v187
  %v200 = vsel %vm30, %v192, 0.0
  %v201 = vsel %vm30, %v193, 0.0
  %v202 = vadd.f32 %v200, %v201
  %v203 = vrot.slane %v202, 4
  %v204 = vadd.f32 %v202, %v203
  %v205 = vrot.slane %v204, 2
  %v206 = vadd.f32 %v204, %v205
  %v207 = vrot.slane %v206, 1
  %v208 = vadd.f32 %v206, %v207
  %v209 = vsel %vm30, %v194, 0.0
  %v210 = vsel %vm30, %v195, 0.0
  %v211 = vadd.f32 %v209, %v210
  %v212 = vrot.slane %v211, 4
  %v213 = vadd.f32 %v211, %v212
  %v214 = vrot.slane %v213, 2
  %v215 = vadd.f32 %v213, %v214
  %v216 = vrot.slane %v215, 1
  %v217 = vadd.f32 %v215, %v216
  %v218 = vsel %vm30, %v196, 0.0
  %v219 = vsel %vm30, %v197, 0.0
  %v220 = vadd.f32 %v218, %v219
  %v221 = vrot.slane %v220, 4
  %v222 = vadd.f32 %v220, %v221
  %v223 = vrot.slane %v222, 2
  %v224 = vadd.f32 %v222, %v223
  %v225 = vrot.slane %v224, 1
  %v226 = vadd.f32 %v224, %v225
  %v227 = vsel %vm30, %v198, 0.0
  %v228 = vsel %vm30, %v199, 0.0
  %v229 = vadd.f32 %v227, %v228
  %v230 = vrot.slane %v229, 4
  %v231 = vadd.f32 %v229, %v230
  %v232 = vrot.slane %v231, 2
  %v233 = vadd.f32 %v231, %v232
  %v234 = vrot.slane %v233, 1
  %v235 = vadd.f32 %v233, %v234
  %v236 = vrcp.pop 16.0
  %v237 = vmul.f32 %v208, %v236
  %v238 = vmul.f32 %v217, %v236
  %v239 = vmul.f32 %v226, %v236
  %v240 = vmul.f32 %v235, %v236
  %v241 = vsub.f32 %v192, %v237
  %v242 = vsub.f32 %v193, %v237
  %v243 = vsub.f32 %v194, %v238
  %v244 = vsub.f32 %v195, %v238
  %v245 = vsub.f32 %v196, %v239
  %v246 = vsub.f32 %v197, %v239
  %v247 = vsub.f32 %v198, %v240
  %v248 = vsub.f32 %v199, %v240
  %249 = vst.msk [vmem:[%s3] sm:$0xff] %vm30, %v241
  %250 = vst.msk [vmem:[%s3 + $0x8] sm:$0xff] %vm30, %v242
  %251 = vst.msk [vmem:[%s3 + $0x10] sm:$0xff] %vm30, %v243
  %252 = vst.msk [vmem:[%s3 + $0x18] sm:$0xff] %vm30, %v244
  %253 = vst.msk [vmem:[%s3 + $0x20] sm:$0xff] %vm30, %v245
  %254 = vst.msk [vmem:[%s3 + $0x28] sm:$0xff] %vm30, %v246
  %255 = vst.msk [vmem:[%s3 + $0x30] sm:$0xff] %vm30, %v247
  %256 = vst.msk [vmem:[%s3 + $0x38] sm:$0xff] %vm30, %v248
  // Predicated region
  $region14: #{_lambda_.35} parent=0 // pred_check
    _
  $region15: #{_lambda_.35} parent=0 // pred_check_branch
    %258 = sbr.rel (0) target = $region17
  $region16: #{_lambda_.35} parent=0 // pred_region
    _
  $region17: #{_lambda_.35} parent=0 // pred_fallthru
    _
  // Predicated region
  $region18: #{_lambda_.35} parent=0 // pred_check
    _
  $region19: #{_lambda_.35} parent=0 // pred_check_branch
    %260 = sbr.rel (0) target = $region21
  $region20: #{_lambda_.35} parent=0 // pred_region
    _
  $region21: #{_lambda_.35} parent=0 // pred_fallthru
    _

// kernel: _lambda_.36
$region0: #{_lambda_.36}
  #allocation0 [shape = 'u32[]', space=smem, size = 0x4, offset = 0x4, fixed_abs, tag = 'smem constant byte address 0x4 - core index']
  #allocation1 [shape = 'u32[144,128]{1,0:T(1,128)}', space=vmem, size = 0x12000, scoped, tag = 'internal scratch']
  %s0 = inlined_call_operand.vmem [shape: bf16[2,32,32], index: 0, kind: input, shape index: {}]
  %s1 = inlined_call_operand.vmem [shape: bf16[2,32,64], index: 1, kind: input, shape index: {}]
  %s2 = inlined_call_operand.vmem [shape: f32[2,1,64], index: 2, kind: input, shape index: {}]
  %s3 = inlined_call_operand.vmem [shape: f32[2,32,64], index: 3, kind: output, shape index: {}]
  %s4 = sld [smem:[#allocation0]]
  $region49: #{_lambda_.36} parent=0
    _
  %s6 = ssub.s32 1, %s4
  %s7 = scalar_select 0, %s6, %s4
  loop: start=0, step=1, limit=4
  $region2: #{_lambda_.36} parent=0 // loop_pre_header
    _
  $region3: #{_lambda_.36} parent=0 // loop_header
    %s9 = sphi 0, %s13
    %p10 = scmp.ge.s32.totalorder %s9, 4
    %s16 = sphi 0, %s42
    %s17 = sphi 0, %s38
    %s18 = sphi 0, %s34
    %s19 = sphi 0, %s30
    %s20 = sphi 0, %s16
    %s21 = sphi 0, %s17
    %s22 = sphi 0, %s18
    %s23 = sphi 0, %s19
    %s24 = sphi 0, %s20
    %s25 = sphi 0, %s21
    %s26 = sphi 0, %s22
    %s27 = sphi 0, %s23
    %s49 = sphi 0, %s51
    %s52 = sphi 0, %s49
    %s53 = sphi 0, %s52
    %s69 = sphi 0, %s53
    %s79 = sphi 0, %s81
    %s82 = sphi 0, %s79
    %s83 = sphi 0, %s82
    %s99 = sphi 0, %s83
    %s107 = sphi 0, %s109
    %s110 = sphi 0, %s107
    %s111 = sphi 0, %s110
    %s127 = sphi 0, %s111
    %s137 = sphi 0, %s139
    %s140 = sphi 0, %s137
    %s141 = sphi 0, %s140
    %s157 = sphi 0, %s141
  $region4: #{_lambda_.36} parent=0 // loop_header_branch
    %12 = sbr.rel (%p10) target = $region8
  $region5: #{_lambda_.36} parent=0 // loop_body
    %s14 = ssub.s32 %s9, 1
    %s15 = ssub.s32 %s9, 2
    %s28 = sadd.s32 1, %s19
    %p29 = scmp.ge.s32.totalorder %s28, 1
    %s30 = scalar_select %p29, 0, %s28
    %s31 = sadd.s32 1, %s18
    %s32 = scalar_select %p29, %s31, %s18
    %p33 = scmp.ge.s32.totalorder %s32, 1
    %s34 = scalar_select %p33, 0, %s32
    %s35 = sadd.s32 1, %s17
    %s36 = scalar_select %p33, %s35, %s17
    %p37 = scmp.ge.s32.totalorder %s36, 1
    %s38 = scalar_select %p37, 0, %s36
    %s39 = sadd.s32 1, %s16
    %s40 = scalar_select %p37, %s39, %s16
    %p41 = scmp.ge.s32.totalorder %s40, 2
    %s42 = scalar_select %p41, 0, %s40
    %s43 = ssub.s32 %s16, %s42
    %s44 = ssub.s32 %s17, %s38
    %s45 = sor.u32 %s43, %s44
    %s46 = ssub.s32 %s19, %s30
    %s47 = sor.u32 %s45, %s46
    %p48 = scmp.eq.s32.totalorder %s47, 0
    %s50 = sadd.s32 %s49, 1
    %s51 = scalar_select %p48, %s49, %s50
    %p54 = pneg %p48
    %p55 = scmp.eq.s32.totalorder %s9, 1
    %p56 = por %p54, %p55
    %p57 = scmp.ne.s32.totalorder %s49, %s52
    %p58 = scmp.eq.s32.totalorder %s9, 0
    %p59 = por %p57, %p58
    %p60 = scmp.ne.s32.totalorder %s49, %s52
    %p61 = scmp.eq.s32.totalorder %s14, 1
    %p62 = por %p60, %p61
    %p63 = scmp.ne.s32.totalorder %s52, %s53
    %p64 = scmp.eq.s32.totalorder %s14, 0
    %p65 = por %p63, %p64
    %p66 = scmp.ne.s32.totalorder %s52, %s53
    %p67 = scmp.eq.s32.totalorder %s15, 1
    %p68 = por %p66, %p67
    %p70 = scmp.ne.s32.totalorder %s53, %s69
    %p71 = scmp.eq.s32.totalorder %s15, 0
    %p72 = por %p70, %p71
    %s73 = ssub.s32 %s16, %s42
    %s74 = ssub.s32 %s19, %s30
    %s75 = sor.u32 %s73, %s74
    %s76 = ssub.s32 %s18, %s34
    %s77 = sor.u32 %s75, %s76
    %p78 = scmp.eq.s32.totalorder %s77, 0
    %s80 = sadd.s32 %s79, 1
    %s81 = scalar_select %p78, %s79, %s80
    %p84 = pneg %p78
    %p85 = scmp.eq.s32.totalorder %s9, 1
    %p86 = por %p84, %p85
    %p87 = scmp.ne.s32.totalorder %s79, %s82
    %p88 = scmp.eq.s32.totalorder %s9, 0
    %p89 = por %p87, %p88
    %p90 = scmp.ne.s32.totalorder %s79, %s82
    %p91 = scmp.eq.s32.totalorder %s14, 1
    %p92 = por %p90, %p91
    %p93 = scmp.ne.s32.totalorder %s82, %s83
    %p94 = scmp.eq.s32.totalorder %s14, 0
    %p95 = por %p93, %p94
    %p96 = scmp.ne.s32.totalorder %s82, %s83
    %p97 = scmp.eq.s32.totalorder %s15, 1
    %p98 = por %p96, %p97
    %p100 = scmp.ne.s32.totalorder %s83, %s99
    %p101 = scmp.eq.s32.totalorder %s15, 0
    %p102 = por %p100, %p101
    %s103 = ssub.s32 %s16, %s42
    %s104 = ssub.s32 %s18, %s34
    %s105 = sor.u32 %s103, %s104
    %p106 = scmp.eq.s32.totalorder %s105, 0
    %s108 = sadd.s32 %s107, 1
    %s109 = scalar_select %p106, %s107, %s108
    %p112 = pneg %p106
    %p113 = scmp.eq.s32.totalorder %s9, 1
    %p114 = por %p112, %p113
    %p115 = scmp.ne.s32.totalorder %s107, %s110
    %p116 = scmp.eq.s32.totalorder %s9, 0
    %p117 = por %p115, %p116
    %p118 = scmp.ne.s32.totalorder %s107, %s110
    %p119 = scmp.eq.s32.totalorder %s14, 1
    %p120 = por %p118, %p119
    %p121 = scmp.ne.s32.totalorder %s110, %s111
    %p122 = scmp.eq.s32.totalorder %s14, 0
    %p123 = por %p121, %p122
    %p124 = scmp.ne.s32.totalorder %s110, %s111
    %p125 = scmp.eq.s32.totalorder %s15, 1
    %p126 = por %p124, %p125
    %p128 = scmp.ne.s32.totalorder %s111, %s127
    %p129 = scmp.eq.s32.totalorder %s15, 0
    %p130 = por %p128, %p129
    %s131 = ssub.s32 %s16, %s42
    %s132 = ssub.s32 %s17, %s38
    %s133 = sor.u32 %s131, %s132
    %s134 = ssub.s32 %s18, %s34
    %s135 = sor.u32 %s133, %s134
    %p136 = scmp.eq.s32.totalorder %s135, 0
    %s138 = sadd.s32 %s137, 1
    %s139 = scalar_select %p136, %s137, %s138
    %p142 = pneg %p136
    %p143 = scmp.eq.s32.totalorder %s9, 1
    %p144 = por %p142, %p143
    %p145 = scmp.ne.s32.totalorder %s137, %s140
    %p146 = scmp.eq.s32.totalorder %s9, 0
    %p147 = por %p145, %p146
    %p148 = scmp.ne.s32.totalorder %s137, %s140
    %p149 = scmp.eq.s32.totalorder %s14, 1
    %p150 = por %p148, %p149
    %p151 = scmp.ne.s32.totalorder %s140, %s141
    %p152 = scmp.eq.s32.totalorder %s14, 0
    %p153 = por %p151, %p152
    %p154 = scmp.ne.s32.totalorder %s140, %s141
    %p155 = scmp.eq.s32.totalorder %s15, 1
    %p156 = por %p154, %p155
    %p158 = scmp.ne.s32.totalorder %s141, %s157
    %p159 = scmp.eq.s32.totalorder %s15, 0
    %p160 = por %p158, %p159
    %p161 = scmp.le.s32.totalorder 1, %s9
    %p162 = scmp.lt.s32.totalorder %s9, 3
    %p163 = pnand %p161, %p162
    %p164 = pneg %p163
    // Predicated region
    $region9: #{_lambda_.36} parent=5 // pred_check
      _
    $region10: #{_lambda_.36} parent=5 // pred_check_branch
      %166 = sbr.rel (%p163) target = $region12
    $region11: #{_lambda_.36} parent=5 // pred_region
      %s167 = ssub.s32 %s9, 1
    $region12: #{_lambda_.36} parent=5 // pred_fallthru
      _
    %p168 = scmp.lt.s32.totalorder %s9, 2
    // Predicated region
    $region13: #{_lambda_.36} parent=5 // pred_check
      %p169 = pneg %p168
    $region14: #{_lambda_.36} parent=5 // pred_check_branch
      %171 = sbr.rel (%p169) target = $region16
    $region15: #{_lambda_.36} parent=5 // pred_region
      // Predicated region
      $region17: #{_lambda_.36} parent=15 // pred_check
        %p172 = pneg %p59
      $region18: #{_lambda_.36} parent=15 // pred_check_branch
        %174 = sbr.rel (%p172) target = $region20
      $region19: #{_lambda_.36} parent=15 // pred_region
        %s175 = smul.u32 4, %s17
        %p176 = scmp.lt.s32.totalorder %s16, 1
        %s177 = scalar_select %p176, %s16, 1
        %p178 = scmp.lt.s32.totalorder %s175, 3
        %s179 = scalar_select %p178, %s175, 3
        %p180 = scmp.lt.s32.totalorder %s19, 0
        %s181 = scalar_select %p180, %s19, 0
        %s182 = sadd.s32 %s181, %s179
        %s183 = smul.addr %s177, 4
        %s184 = sadd.s32 %s182, %s183
        %s185 = smul.addr %s184, 4
        %s186 = scalar_lea.vmem %s0, %s185
        %s187 = smul.u32 4, %s17
      $region20: #{_lambda_.36} parent=15 // pred_fallthru
        _
      // Predicated region
      $region21: #{_lambda_.36} parent=15 // pred_check
        %p188 = pneg %p89
      $region22: #{_lambda_.36} parent=15 // pred_check_branch
        %190 = sbr.rel (%p188) target = $region24
      $region23: #{_lambda_.36} parent=15 // pred_region
        %s191 = smul.u32 4, %s19
        %p192 = scmp.lt.s32.totalorder %s16, 1
        %s193 = scalar_select %p192, %s16, 1
        %p194 = scmp.lt.s32.totalorder %s191, 3
        %s195 = scalar_select %p194, %s191, 3
        %p196 = scmp.lt.s32.totalorder %s18, 0
        %s197 = scalar_select %p196, %s18, 0
        %s198 = sadd.s32 %s197, %s195
        %s199 = smul.addr %s193, 4
        %s200 = sadd.s32 %s198, %s199
        %s201 = smul.addr %s200, 4
        %s202 = scalar_lea.vmem %s1, %s201
        %s203 = smul.u32 4, %s19
      $region24: #{_lambda_.36} parent=15 // pred_fallthru
        _
      // Predicated region
      $region25: #{_lambda_.36} parent=15 // pred_check
        %p204 = pneg %p117
      $region26: #{_lambda_.36} parent=15 // pred_check_branch
        %206 = sbr.rel (%p204) target = $region28
      $region27: #{_lambda_.36} parent=15 // pred_region
        %p207 = scmp.lt.s32.totalorder %s16, 1
        %s208 = scalar_select %p207, %s16, 1
        %p209 = scmp.lt.s32.totalorder %s18, 0
        %s210 = scalar_select %p209, %s18, 0
        %s211 = sadd.s32 %s210, %s208
        %s212 = scalar_lea.vmem %s2, %s211
      $region28: #{_lambda_.36} parent=15 // pred_fallthru
        _
    $region16: #{_lambda_.36} parent=5 // pred_fallthru
      _
    %p213 = scmp.le.s32.totalorder 1, %s9
    %p214 = scmp.lt.s32.totalorder %s9, 3
    %p215 = pnand %p213, %p214
    %p216 = pneg %p215
    // Predicated region
    $region29: #{_lambda_.36} parent=5 // pred_check
      _
    $region30: #{_lambda_.36} parent=5 // pred_check_branch
      %218 = sbr.rel (%p215) target = $region32
    $region31: #{_lambda_.36} parent=5 // pred_region
      %s219 = ssub.s32 %s9, 1
      %s220 = smul.u32 4, %s21
      %p221 = scmp.lt.s32.totalorder %s20, 1
      %s222 = scalar_select %p221, %s20, 1
      %p223 = scmp.lt.s32.totalorder %s220, 3
      %s224 = scalar_select %p223, %s220, 3
      %p225 = scmp.lt.s32.totalorder %s23, 0
      %s226 = scalar_select %p225, %s23, 0
      %s227 = sadd.s32 %s226, %s224
      %s228 = smul.addr %s222, 4
      %s229 = sadd.s32 %s227, %s228
      %s230 = smul.addr %s229, 4
      %s231 = scalar_lea.vmem %s0, %s230
      %p232 = pneg %p65
      %p233 = pneg %p62
      %s234 = smul.u32 4, %s23
      %p235 = scmp.lt.s32.totalorder %s20, 1
      %s236 = scalar_select %p235, %s20, 1
      %p237 = scmp.lt.s32.totalorder %s234, 3
      %s238 = scalar_select %p237, %s234, 3
      %p239 = scmp.lt.s32.totalorder %s22, 0
      %s240 = scalar_select %p239, %s22, 0
      %s241 = sadd.s32 %s240, %s238
      %s242 = smul.addr %s236, 4
      %s243 = sadd.s32 %s241, %s242
      %s244 = smul.addr %s243, 4
      %s245 = scalar_lea.vmem %s1, %s244
      %p246 = pneg %p95
      %p247 = pneg %p92
      %p248 = scmp.lt.s32.totalorder %s20, 1
      %s249 = scalar_select %p248, %s20, 1
      %p250 = scmp.lt.s32.totalorder %s22, 0
      %s251 = scalar_select %p250, %s22, 0
      %s252 = sadd.s32 %s251, %s249
      %s253 = scalar_lea.vmem %s2, %s252
      %p254 = pneg %p123
      %p255 = pneg %p120
      %p256 = pneg %p153
      %p257 = pneg %p150
      %s258 = smul.u32 4, %s21
      %p259 = scmp.lt.s32.totalorder %s20, 1
      %s260 = scalar_select %p259, %s20, 1
      %p261 = scmp.lt.s32.totalorder %s258, 3
      %s262 = scalar_select %p261, %s258, 3
      %p263 = scmp.lt.s32.totalorder %s22, 0
      %s264 = scalar_select %p263, %s22, 0
      %s265 = sadd.s32 %s264, %s262
      %s266 = smul.addr %s260, 4
      %s267 = sadd.s32 %s265, %s266
      %s268 = smul.addr %s267, 8
      %s269 = scalar_lea.vmem %s3, %s268
      %s270 = smul.u32 4, %s21
      %p271 = scmp.lt.s32.totalorder %s20, 1
      %s272 = scalar_select %p271, %s20, 1
      %p273 = scmp.lt.s32.totalorder %s270, 3
      %s274 = scalar_select %p273, %s270, 3
      %p275 = scmp.lt.s32.totalorder %s23, 0
      %s276 = scalar_select %p275, %s23, 0
      %s277 = sadd.s32 %s276, %s274
      %s278 = smul.addr %s272, 4
      %s279 = sadd.s32 %s277, %s278
      %s280 = smul.addr %s279, 4
      %s281 = scalar_lea.vmem %s0, %s280
      %s282 = smul.u32 4, %s21
      %s283 = smul.u32 4, %s23
      %p284 = scmp.lt.s32.totalorder %s20, 1
      %s285 = scalar_select %p284, %s20, 1
      %p286 = scmp.lt.s32.totalorder %s283, 3
      %s287 = scalar_select %p286, %s283, 3
      %p288 = scmp.lt.s32.totalorder %s22, 0
      %s289 = scalar_select %p288, %s22, 0
      %s290 = sadd.s32 %s289, %s287
      %s291 = smul.addr %s285, 4
      %s292 = sadd.s32 %s290, %s291
      %s293 = smul.addr %s292, 4
      %s294 = scalar_lea.vmem %s1, %s293
      %s295 = smul.u32 4, %s23
      %p296 = scmp.lt.s32.totalorder %s20, 1
      %s297 = scalar_select %p296, %s20, 1
      %p298 = scmp.lt.s32.totalorder %s22, 0
      %s299 = scalar_select %p298, %s22, 0
      %s300 = sadd.s32 %s299, %s297
      %s301 = scalar_lea.vmem %s2, %s300
      %s302 = smul.u32 4, %s21
      %p303 = scmp.lt.s32.totalorder %s20, 1
      %s304 = scalar_select %p303, %s20, 1
      %p305 = scmp.lt.s32.totalorder %s302, 3
      %s306 = scalar_select %p305, %s302, 3
      %p307 = scmp.lt.s32.totalorder %s22, 0
      %s308 = scalar_select %p307, %s22, 0
      %s309 = sadd.s32 %s308, %s306
      %s310 = smul.addr %s304, 4
      %s311 = sadd.s32 %s309, %s310
      %s312 = smul.addr %s311, 8
      %s313 = scalar_lea.vmem %s3, %s312
      %s314 = smul.u32 4, %s21
      %p316 = scmp.eq.s32.totalorder %s23, 0
      // Predicated region
      $region33: #{_lambda_.36} parent=31 // pred_check
        %p317 = pneg %p316
      $region34: #{_lambda_.36} parent=31 // pred_check_branch
        %319 = sbr.rel (%p317) target = $region36
      $region35: #{_lambda_.36} parent=31 // pred_region
        %v320 = vld [vmem:[%s301] sm:$0x1]
        %v322 = vlaneseq
        %v323 = vshrl.u32 %v322, 7
        %v324 = vsub.s32 0, %v323
        %v325 = vrot.slane %v320, %v324
        %vm327 = vcmask 523264
        %328 = vst.msk [vmem:[%s313] sm:$0xff] %vm327, %v325
        %329 = vst.msk [vmem:[%s313 + $0x8] sm:$0xff] %vm327, %v325
        %330 = vst.msk [vmem:[%s313 + $0x10] sm:$0xff] %vm327, %v325
        %331 = vst.msk [vmem:[%s313 + $0x18] sm:$0xff] %vm327, %v325
      $region36: #{_lambda_.36} parent=31 // pred_fallthru
        _
      %v332 = vld [vmem:[%s313] sm:$0xff]
      %v333 = vld [vmem:[%s313 + $0x8] sm:$0xff]
      %v334 = vld [vmem:[%s313 + $0x10] sm:$0xff]
      %v335 = vld [vmem:[%s313 + $0x18] sm:$0xff]
      %v336 = vld [vmem:[%s281] sm:$0xf]
      %v337 = vld [vmem:[%s281 + $0x4] sm:$0xf]
      %v338 = vld [vmem:[%s281 + $0x8] sm:$0xf]
      %v339 = vld [vmem:[%s281 + $0xc] sm:$0xf]
      %v340 = vld [vmem:[%s294] sm:$0xf]
      %v341 = vld [vmem:[%s294 + $0x4] sm:$0xf]
      %v342 = vld [vmem:[%s294 + $0x8] sm:$0xf]
      %v343 = vld [vmem:[%s294 + $0xc] sm:$0xf]
      %v348 = vunpack.c.l.b16 %v336
      %v349 = vunpack.c.l.b16 %v337
      %v350 = vunpack.c.l.b16 %v338
      %v351 = vunpack.c.l.b16 %v339
      %v352 = vpack.c.b16 %v349, %v348
      %v353 = vpack.c.b16 %v351, %v350
      %v358 = vunpack.c.l.b16 %v340
      %v359 = vunpack.c.l.b16 %v341
      %v360 = vunpack.c.l.b16 %v342
      %v361 = vunpack.c.l.b16 %v343
      %v362 = vpack.c.b16 %v359, %v358
      %v363 = vpack.c.b16 %v361, %v360
      %vm366 = vcmask 261120
      %v368 = vsel %vm366, %v352, 0
      %v371 = vsel %vm366, %v353, 0
      %373 = vmatprep.subr.bf16.mxu0 0
      %374 = vmatpush1.bf16.msra.mxu0 %v362
      %375 = vmatprep.subr.bf16.mxu0 0
      %376 = vmatpush1.bf16.msra.mxu0 %v363
      %377 = vmatprep.subr.bf16.mxu0 0
      %378 = vmatpush1.bf16.msra.mxu0 0
      %379 = vmatprep.subr.bf16.mxu0 0
      %380 = vmatpush1.bf16.msra.mxu0 0
      %381 = vmatprep.subr.bf16.mxu0 0
      %382 = vmatpush1.bf16.msra.mxu0 0
      %383 = vmatprep.subr.bf16.mxu0 0
      %384 = vmatpush1.bf16.msra.mxu0 0
      %385 = vmatprep.subr.bf16.mxu0 0
      %386 = vmatpush1.bf16.msra.mxu0 0
      %387 = vmatprep.subr.bf16.mxu0 0
      %388 = vmatpush1.bf16.msra.mxu0 0
      %389 = vmatprep.subr.bf16.mxu0 0
      %390 = vmatpush1.bf16.msra.mxu0 0
      %391 = vmatprep.subr.bf16.mxu0 0
      %392 = vmatpush1.bf16.msra.mxu0 0
      %393 = vmatprep.subr.bf16.mxu0 0
      %394 = vmatpush1.bf16.msra.mxu0 0
      %395 = vmatprep.subr.bf16.mxu0 0
      %396 = vmatpush1.bf16.msra.mxu0 0
      %397 = vmatprep.subr.bf16.mxu0 0
      %398 = vmatpush1.bf16.msra.mxu0 0
      %399 = vmatprep.subr.bf16.mxu0 0
      %400 = vmatpush1.bf16.msra.mxu0 0
      %401 = vmatprep.subr.bf16.mxu0 0
      %402 = vmatpush1.bf16.msra.mxu0 0
      %403 = vmatprep.subr.bf16.mxu0 0
      %404 = vmatpush1.bf16.msra.mxu0 0
      %405 = vmatprep.mubr.bf16.mxu0 0
      %406 = vmatmul.mubr.bf16.gmra.mrb[0].mxu0 %v368
      %v407 = vpop.f32.mrb[0].mxu0
      %v408 = vadd.f32 0.0, %v407
      %v409 = vpop.f32.mrb[0].mxu0
      %v410 = vpop.f32.mrb[0].mxu0
      %v411 = vadd.f32 0.0, %v410
      %v412 = vpop.f32.mrb[0].mxu0
      %413 = vmatprep.mubr.bf16.mxu0 0
      %414 = vmatmul.mubr.bf16.gmra.mrb[0].mxu0 %v371
      %v415 = vpop.f32.mrb[0].mxu0
      %v416 = vadd.f32 0.0, %v415
      %v417 = vpop.f32.mrb[0].mxu0
      %v418 = vpop.f32.mrb[0].mxu0
      %v419 = vadd.f32 0.0, %v418
      %v420 = vpop.f32.mrb[0].mxu0
      %421 = vdwg.mxu0
      %v422 = vadd.f32 %v332, %v408
      %v423 = vadd.f32 %v333, %v411
      %v424 = vadd.f32 %v334, %v416
      %v425 = vadd.f32 %v335, %v419
      %vm426 = vcmask 523264
      %427 = vst.msk [vmem:[%s313] sm:$0xff] %vm426, %v422
      %428 = vst.msk [vmem:[%s313 + $0x8] sm:$0xff] %vm426, %v423
      %429 = vst.msk [vmem:[%s313 + $0x10] sm:$0xff] %vm426, %v424
      %430 = vst.msk [vmem:[%s313 + $0x18] sm:$0xff] %vm426, %v425
      %s431 = smul.u32 4, %s21
      %p432 = scmp.lt.s32.totalorder %s20, 1
      %s433 = scalar_select %p432, %s20, 1
      %p434 = scmp.lt.s32.totalorder %s431, 3
      %s435 = scalar_select %p434, %s431, 3
      %p436 = scmp.lt.s32.totalorder %s22, 0
      %s437 = scalar_select %p436, %s22, 0
      %s438 = sadd.s32 %s437, %s435
      %s439 = smul.addr %s433, 4
      %s440 = sadd.s32 %s438, %s439
      %s441 = smul.addr %s440, 8
      %s442 = scalar_lea.vmem %s3, %s441
      // Predicated region
      $region37: #{_lambda_.36} parent=31 // pred_check
        %p443 = pneg %p150
      $region38: #{_lambda_.36} parent=31 // pred_check_branch
        %445 = sbr.rel (%p443) target = $region40
      $region39: #{_lambda_.36} parent=31 // pred_region
        %s446 = smul.u32 4, %s21
      $region40: #{_lambda_.36} parent=31 // pred_fallthru
        _
    $region32: #{_lambda_.36} parent=5 // pred_fallthru
      _
    %p447 = scmp.le.s32.totalorder 2, %s9
    // Predicated region
    $region41: #{_lambda_.36} parent=5 // pred_check
      %p448 = pneg %p447
    $region42: #{_lambda_.36} parent=5 // pred_check_branch
      %450 = sbr.rel (%p448) target = $region44
    $region43: #{_lambda_.36} parent=5 // pred_region
      %s451 = ssub.s32 %s9, 2
      // Predicated region
      $region45: #{_lambda_.36} parent=43 // pred_check
        %p452 = pneg %p156
      $region46: #{_lambda_.36} parent=43 // pred_check_branch
        %454 = sbr.rel (%p452) target = $region48
      $region47: #{_lambda_.36} parent=43 // pred_region
        %s455 = smul.u32 4, %s25
        %p456 = scmp.lt.s32.totalorder %s24, 1
        %s457 = scalar_select %p456, %s24, 1
        %p458 = scmp.lt.s32.totalorder %s455, 3
        %s459 = scalar_select %p458, %s455, 3
        %p460 = scmp.lt.s32.totalorder %s26, 0
        %s461 = scalar_select %p460, %s26, 0
        %s462 = sadd.s32 %s461, %s459
        %s463 = smul.addr %s457, 4
        %s464 = sadd.s32 %s462, %s463
        %s465 = smul.addr %s464, 8
        %s466 = scalar_lea.vmem %s3, %s465
      $region48: #{_lambda_.36} parent=43 // pred_fallthru
        _
    $region44: #{_lambda_.36} parent=5 // pred_fallthru
      _
  $region6: #{_lambda_.36} parent=0 // loop_footer
    %s13 = sadd.s32 1, %s9
  $region7: #{_lambda_.36} parent=0 // loop_footer_branch
    %8 = sbr.rel target = $region3
  $region8: #{_lambda_.36} parent=0 // loop_exit
    _

// kernel: _lambda_.28
$region0: #{_lambda_.28}
  #allocation0 [shape = 'u32[]', space=smem, size = 0x4, offset = 0x4, fixed_abs, tag = 'smem constant byte address 0x4 - core index']
  #allocation1 [shape = 'u32[144,128]{1,0:T(1,128)}', space=vmem, size = 0x12000, scoped, tag = 'internal scratch']
  %s0 = inlined_call_operand.vmem [shape: f32[16,128], index: 0, kind: input, shape index: {}]
  %s1 = inlined_call_operand.vmem [shape: f32[16,16], index: 1, kind: input, shape index: {}]
  %s2 = inlined_call_operand.vmem [shape: f32[16,128], index: 2, kind: output, shape index: {0}]
  %s3 = inlined_call_operand.vmem [shape: f32[16,128], index: 3, kind: output, shape index: {1}]
  %4 = xla_tuple %s2, %s3
  %s5 = sld [smem:[#allocation0]]
  $region26: #{_lambda_.28} parent=0
    _
  %s7 = ssub.s32 1, %s5
  %s8 = scalar_select 0, %s7, %s5
  // Predicated region
  $region2: #{_lambda_.28} parent=0 // pred_check
    _
  $region3: #{_lambda_.28} parent=0 // pred_check_branch
    %10 = sbr.rel (0) target = $region5
  $region4: #{_lambda_.28} parent=0 // pred_region
    _
  $region5: #{_lambda_.28} parent=0 // pred_fallthru
    _
  // Predicated region
  $region6: #{_lambda_.28} parent=0 // pred_check
    _
  $region7: #{_lambda_.28} parent=0 // pred_check_branch
    %12 = sbr.rel (0) target = $region9
  $region8: #{_lambda_.28} parent=0 // pred_region
    _
  $region9: #{_lambda_.28} parent=0 // pred_fallthru
    _
  %v13 = vld [vmem:[%s0] sm:$0xff]
  %v14 = vld [vmem:[%s0 + $0x8] sm:$0xff]
  %v15 = vld [vmem:[%s1] sm:$0xff]
  %v16 = vld [vmem:[%s1 + $0x8] sm:$0xff]
  %vm17 = vcmask 130048
  %v19 = vsel %vm17, %v15, 0
  %v22 = vsel %vm17, %v16, 0
  %24 = vmatprep.subr.mxu0 0.0
  %25 = vmatpush1.msra.mxu0 %v13
  %26 = vmatprep.subr.mxu0 0.0
  %27 = vmatpush1.msra.mxu0 %v14
  %28 = vmatprep.subr.mxu0 0.0
  %29 = vmatpush1.msra.mxu0 0.0
  %30 = vmatprep.subr.mxu0 0.0
  %31 = vmatpush1.msra.mxu0 0.0
  %32 = vmatprep.subr.mxu0 0.0
  %33 = vmatpush1.msra.mxu0 0.0
  %34 = vmatprep.subr.mxu0 0.0
  %35 = vmatpush1.msra.mxu0 0.0
  %36 = vmatprep.subr.mxu0 0.0
  %37 = vmatpush1.msra.mxu0 0.0
  %38 = vmatprep.subr.mxu0 0.0
  %39 = vmatpush1.msra.mxu0 0.0
  %40 = vmatprep.subr.mxu0 0.0
  %41 = vmatpush1.msra.mxu0 0.0
  %42 = vmatprep.subr.mxu0 0.0
  %43 = vmatpush1.msra.mxu0 0.0
  %44 = vmatprep.subr.mxu0 0.0
  %45 = vmatpush1.msra.mxu0 0.0
  %46 = vmatprep.subr.mxu0 0.0
  %47 = vmatpush1.msra.mxu0 0.0
  %48 = vmatprep.subr.mxu0 0.0
  %49 = vmatpush1.msra.mxu0 0.0
  %50 = vmatprep.subr.mxu0 0.0
  %51 = vmatpush1.msra.mxu0 0.0
  %52 = vmatprep.subr.mxu0 0.0
  %53 = vmatpush1.msra.mxu0 0.0
  %54 = vmatprep.subr.mxu0 0.0
  %55 = vmatpush1.msra.mxu0 0.0
  %56 = vmatprep.subr.mxu0 0.0
  %57 = vmatpush1.msra.mxu0 0.0
  %58 = vmatprep.subr.mxu0 0.0
  %59 = vmatpush1.msra.mxu0 0.0
  %60 = vmatprep.subr.mxu0 0.0
  %61 = vmatpush1.msra.mxu0 0.0
  %62 = vmatprep.subr.mxu0 0.0
  %63 = vmatpush1.msra.mxu0 0.0
  %64 = vmatprep.subr.mxu0 0.0
  %65 = vmatpush1.msra.mxu0 0.0
  %66 = vmatprep.subr.mxu0 0.0
  %67 = vmatpush1.msra.mxu0 0.0
  %68 = vmatprep.subr.mxu0 0.0
  %69 = vmatpush1.msra.mxu0 0.0
  %70 = vmatprep.subr.mxu0 0.0
  %71 = vmatpush1.msra.mxu0 0.0
  %72 = vmatprep.subr.mxu0 0.0
  %73 = vmatpush1.msra.mxu0 0.0
  %74 = vmatprep.subr.mxu0 0.0
  %75 = vmatpush1.msra.mxu0 0.0
  %76 = vmatprep.subr.mxu0 0.0
  %77 = vmatpush1.msra.mxu0 0.0
  %78 = vmatprep.subr.mxu0 0.0
  %79 = vmatpush1.msra.mxu0 0.0
  %80 = vmatprep.subr.mxu0 0.0
  %81 = vmatpush1.msra.mxu0 0.0
  %82 = vmatprep.subr.mxu0 0.0
  %83 = vmatpush1.msra.mxu0 0.0
  %84 = vmatprep.subr.mxu0 0.0
  %85 = vmatpush1.msra.mxu0 0.0
  %86 = vmatprep.subr.mxu0 0.0
  %87 = vmatpush1.msra.mxu0 0.0
  %88 = vmatprep.mubr.f32.mxu0 0.0
  %89 = vmatmul.mubr.f32.gmra.mrb[0].mxu0 %v19
  %v90 = vpop.f32.mrb[0].mxu0
  %v91 = vadd.f32 0.0, %v90
  %v92 = vpop.f32.mrb[0].mxu0
  %93 = vmatprep.mubr.f32.mxu0 0.0
  %94 = vmatmul.mubr.f32.gmra.mrb[0].mxu0 %v22
  %v95 = vpop.f32.mrb[0].mxu0
  %v96 = vadd.f32 0.0, %v95
  %v97 = vpop.f32.mrb[0].mxu0
  %98 = vdwg.mxu0
  %99 = vst [vmem:[%s3] sm:$0xff] %v91
  %100 = vst [vmem:[%s3 + $0x8] sm:$0xff] %v96
  %v101 = vsub.f32 %v13, %v91
  %v102 = vsub.f32 %v14, %v96
  %103 = vst [vmem:[%s2] sm:$0xff] %v101
  %104 = vst [vmem:[%s2 + $0x8] sm:$0xff] %v102
  // Predicated region
  $region10: #{_lambda_.28} parent=0 // pred_check
    _
  $region11: #{_lambda_.28} parent=0 // pred_check_branch
    %106 = sbr.rel (0) target = $region13
  $region12: #{_lambda_.28} parent=0 // pred_region
    _
  $region13: #{_lambda_.28} parent=0 // pred_fallthru
    _
  // Predicated region
  $region14: #{_lambda_.28} parent=0 // pred_check
    _
  $region15: #{_lambda_.28} parent=0 // pred_check_branch
    %108 = sbr.rel (0) target = $region17
  $region16: #{_lambda_.28} parent=0 // pred_region
    _
  $region17: #{_lambda_.28} parent=0 // pred_fallthru
    _
  // Predicated region
  $region18: #{_lambda_.28} parent=0 // pred_check
    _
  $region19: #{_lambda_.28} parent=0 // pred_check_branch
    %110 = sbr.rel (0) target = $region21
  $region20: #{_lambda_.28} parent=0 // pred_region
    _
  $region21: #{_lambda_.28} parent=0 // pred_fallthru
    _
  // Predicated region
  $region22: #{_lambda_.28} parent=0 // pred_check
    _
  $region23: #{_lambda_.28} parent=0 // pred_check_branch
    %112 = sbr.rel (0) target = $region25
  $region24: #{_lambda_.28} parent=0 // pred_region
    _
  $region25: #{_lambda_.28} parent=0 // pred_fallthru
    _

// kernel: _lambda_.42
$region0: #{_lambda_.42}
  #allocation0 [shape = 'u32[]', space=smem, size = 0x4, offset = 0x4, fixed_abs, tag = 'smem constant byte address 0x4 - core index']
  #allocation1 [shape = 'u32[144,128]{1,0:T(1,128)}', space=vmem, size = 0x12000, scoped, tag = 'internal scratch']
  %s0 = inlined_call_operand.vmem [shape: bf16[2,32,96], index: 0, kind: input, shape index: {}]
  %s1 = inlined_call_operand.vmem [shape: bf16[2,96,4], index: 1, kind: input, shape index: {}]
  %s2 = inlined_call_operand.vmem [shape: f32[2,32,4], index: 2, kind: output, shape index: {}]
  %s3 = sld [smem:[#allocation0]]
  $region45: #{_lambda_.42} parent=0
    _
  %s5 = ssub.s32 1, %s3
  %s6 = scalar_select 0, %s5, %s3
  loop: start=0, step=1, limit=4
  $region2: #{_lambda_.42} parent=0 // loop_pre_header
    _
  $region3: #{_lambda_.42} parent=0 // loop_header
    %s8 = sphi 0, %s12
    %p9 = scmp.ge.s32.totalorder %s8, 4
    %s15 = sphi 0, %s41
    %s16 = sphi 0, %s37
    %s17 = sphi 0, %s33
    %s18 = sphi 0, %s29
    %s19 = sphi 0, %s15
    %s20 = sphi 0, %s16
    %s21 = sphi 0, %s17
    %s22 = sphi 0, %s18
    %s23 = sphi 0, %s19
    %s24 = sphi 0, %s20
    %s25 = sphi 0, %s21
    %s26 = sphi 0, %s22
    %s48 = sphi 0, %s50
    %s51 = sphi 0, %s48
    %s52 = sphi 0, %s51
    %s68 = sphi 0, %s52
    %s78 = sphi 0, %s80
    %s81 = sphi 0, %s78
    %s82 = sphi 0, %s81
    %s98 = sphi 0, %s82
    %s108 = sphi 0, %s110
    %s111 = sphi 0, %s108
    %s112 = sphi 0, %s111
    %s128 = sphi 0, %s112
  $region4: #{_lambda_.42} parent=0 // loop_header_branch
    %11 = sbr.rel (%p9) target = $region8
  $region5: #{_lambda_.42} parent=0 // loop_body
    %s13 = ssub.s32 %s8, 1
    %s14 = ssub.s32 %s8, 2
    %s27 = sadd.s32 1, %s18
    %p28 = scmp.ge.s32.totalorder %s27, 1
    %s29 = scalar_select %p28, 0, %s27
    %s30 = sadd.s32 1, %s17
    %s31 = scalar_select %p28, %s30, %s17
    %p32 = scmp.ge.s32.totalorder %s31, 1
    %s33 = scalar_select %p32, 0, %s31
    %s34 = sadd.s32 1, %s16
    %s35 = scalar_select %p32, %s34, %s16
    %p36 = scmp.ge.s32.totalorder %s35, 1
    %s37 = scalar_select %p36, 0, %s35
    %s38 = sadd.s32 1, %s15
    %s39 = scalar_select %p36, %s38, %s15
    %p40 = scmp.ge.s32.totalorder %s39, 2
    %s41 = scalar_select %p40, 0, %s39
    %s42 = ssub.s32 %s15, %s41
    %s43 = ssub.s32 %s16, %s37
    %s44 = sor.u32 %s42, %s43
    %s45 = ssub.s32 %s18, %s29
    %s46 = sor.u32 %s44, %s45
    %p47 = scmp.eq.s32.totalorder %s46, 0
    %s49 = sadd.s32 %s48, 1
    %s50 = scalar_select %p47, %s48, %s49
    %p53 = pneg %p47
    %p54 = scmp.eq.s32.totalorder %s8, 1
    %p55 = por %p53, %p54
    %p56 = scmp.ne.s32.totalorder %s48, %s51
    %p57 = scmp.eq.s32.totalorder %s8, 0
    %p58 = por %p56, %p57
    %p59 = scmp.ne.s32.totalorder %s48, %s51
    %p60 = scmp.eq.s32.totalorder %s13, 1
    %p61 = por %p59, %p60
    %p62 = scmp.ne.s32.totalorder %s51, %s52
    %p63 = scmp.eq.s32.totalorder %s13, 0
    %p64 = por %p62, %p63
    %p65 = scmp.ne.s32.totalorder %s51, %s52
    %p66 = scmp.eq.s32.totalorder %s14, 1
    %p67 = por %p65, %p66
    %p69 = scmp.ne.s32.totalorder %s52, %s68
    %p70 = scmp.eq.s32.totalorder %s14, 0
    %p71 = por %p69, %p70
    %s72 = ssub.s32 %s15, %s41
    %s73 = ssub.s32 %s18, %s29
    %s74 = sor.u32 %s72, %s73
    %s75 = ssub.s32 %s17, %s33
    %s76 = sor.u32 %s74, %s75
    %p77 = scmp.eq.s32.totalorder %s76, 0
    %s79 = sadd.s32 %s78, 1
    %s80 = scalar_select %p77, %s78, %s79
    %p83 = pneg %p77
    %p84 = scmp.eq.s32.totalorder %s8, 1
    %p85 = por %p83, %p84
    %p86 = scmp.ne.s32.totalorder %s78, %s81
    %p87 = scmp.eq.s32.totalorder %s8, 0
    %p88 = por %p86, %p87
    %p89 = scmp.ne.s32.totalorder %s78, %s81
    %p90 = scmp.eq.s32.totalorder %s13, 1
    %p91 = por %p89, %p90
    %p92 = scmp.ne.s32.totalorder %s81, %s82
    %p93 = scmp.eq.s32.totalorder %s13, 0
    %p94 = por %p92, %p93
    %p95 = scmp.ne.s32.totalorder %s81, %s82
    %p96 = scmp.eq.s32.totalorder %s14, 1
    %p97 = por %p95, %p96
    %p99 = scmp.ne.s32.totalorder %s82, %s98
    %p100 = scmp.eq.s32.totalorder %s14, 0
    %p101 = por %p99, %p100
    %s102 = ssub.s32 %s15, %s41
    %s103 = ssub.s32 %s16, %s37
    %s104 = sor.u32 %s102, %s103
    %s105 = ssub.s32 %s17, %s33
    %s106 = sor.u32 %s104, %s105
    %p107 = scmp.eq.s32.totalorder %s106, 0
    %s109 = sadd.s32 %s108, 1
    %s110 = scalar_select %p107, %s108, %s109
    %p113 = pneg %p107
    %p114 = scmp.eq.s32.totalorder %s8, 1
    %p115 = por %p113, %p114
    %p116 = scmp.ne.s32.totalorder %s108, %s111
    %p117 = scmp.eq.s32.totalorder %s8, 0
    %p118 = por %p116, %p117
    %p119 = scmp.ne.s32.totalorder %s108, %s111
    %p120 = scmp.eq.s32.totalorder %s13, 1
    %p121 = por %p119, %p120
    %p122 = scmp.ne.s32.totalorder %s111, %s112
    %p123 = scmp.eq.s32.totalorder %s13, 0
    %p124 = por %p122, %p123
    %p125 = scmp.ne.s32.totalorder %s111, %s112
    %p126 = scmp.eq.s32.totalorder %s14, 1
    %p127 = por %p125, %p126
    %p129 = scmp.ne.s32.totalorder %s112, %s128
    %p130 = scmp.eq.s32.totalorder %s14, 0
    %p131 = por %p129, %p130
    %p132 = scmp.le.s32.totalorder 1, %s8
    %p133 = scmp.lt.s32.totalorder %s8, 3
    %p134 = pnand %p132, %p133
    %p135 = pneg %p134
    // Predicated region
    $region9: #{_lambda_.42} parent=5 // pred_check
      _
    $region10: #{_lambda_.42} parent=5 // pred_check_branch
      %137 = sbr.rel (%p134) target = $region12
    $region11: #{_lambda_.42} parent=5 // pred_region
      %s138 = ssub.s32 %s8, 1
    $region12: #{_lambda_.42} parent=5 // pred_fallthru
      _
    %p139 = scmp.lt.s32.totalorder %s8, 2
    // Predicated region
    $region13: #{_lambda_.42} parent=5 // pred_check
      %p140 = pneg %p139
    $region14: #{_lambda_.42} parent=5 // pred_check_branch
      %142 = sbr.rel (%p140) target = $region16
    $region15: #{_lambda_.42} parent=5 // pred_region
      // Predicated region
      $region17: #{_lambda_.42} parent=15 // pred_check
        %p143 = pneg %p58
      $region18: #{_lambda_.42} parent=15 // pred_check_branch
        %145 = sbr.rel (%p143) target = $region20
      $region19: #{_lambda_.42} parent=15 // pred_region
        %s146 = smul.u32 4, %s16
        %p147 = scmp.lt.s32.totalorder %s15, 1
        %s148 = scalar_select %p147, %s15, 1
        %p149 = scmp.lt.s32.totalorder %s146, 3
        %s150 = scalar_select %p149, %s146, 3
        %p151 = scmp.lt.s32.totalorder %s18, 0
        %s152 = scalar_select %p151, %s18, 0
        %s153 = sadd.s32 %s152, %s150
        %s154 = smul.addr %s148, 4
        %s155 = sadd.s32 %s153, %s154
        %s156 = smul.addr %s155, 4
        %s157 = scalar_lea.vmem %s0, %s156
        %s158 = smul.u32 4, %s16
      $region20: #{_lambda_.42} parent=15 // pred_fallthru
        _
      // Predicated region
      $region21: #{_lambda_.42} parent=15 // pred_check
        %p159 = pneg %p88
      $region22: #{_lambda_.42} parent=15 // pred_check_branch
        %161 = sbr.rel (%p159) target = $region24
      $region23: #{_lambda_.42} parent=15 // pred_region
        %s162 = smul.u32 12, %s18
        %p163 = scmp.lt.s32.totalorder %s15, 1
        %s164 = scalar_select %p163, %s15, 1
        %p165 = scmp.lt.s32.totalorder %s162, 11
        %s166 = scalar_select %p165, %s162, 11
        %p167 = scmp.lt.s32.totalorder %s17, 0
        %s168 = scalar_select %p167, %s17, 0
        %s169 = sadd.s32 %s168, %s166
        %s170 = smul.addr %s164, 12
        %s171 = sadd.s32 %s169, %s170
        %s172 = smul.addr %s171, 4
        %s173 = scalar_lea.vmem %s1, %s172
        %s174 = smul.u32 12, %s18
      $region24: #{_lambda_.42} parent=15 // pred_fallthru
        _
    $region16: #{_lambda_.42} parent=5 // pred_fallthru
      _
    %p175 = scmp.le.s32.totalorder 1, %s8
    %p176 = scmp.lt.s32.totalorder %s8, 3
    %p177 = pnand %p175, %p176
    %p178 = pneg %p177
    // Predicated region
    $region25: #{_lambda_.42} parent=5 // pred_check
      _
    $region26: #{_lambda_.42} parent=5 // pred_check_branch
      %180 = sbr.rel (%p177) target = $region28
    $region27: #{_lambda_.42} parent=5 // pred_region
      %s181 = ssub.s32 %s8, 1
      %s182 = smul.u32 4, %s20
      %p183 = scmp.lt.s32.totalorder %s19, 1
      %s184 = scalar_select %p183, %s19, 1
      %p185 = scmp.lt.s32.totalorder %s182, 3
      %s186 = scalar_select %p185, %s182, 3
      %p187 = scmp.lt.s32.totalorder %s22, 0
      %s188 = scalar_select %p187, %s22, 0
      %s189 = sadd.s32 %s188, %s186
      %s190 = smul.addr %s184, 4
      %s191 = sadd.s32 %s189, %s190
      %s192 = smul.addr %s191, 4
      %s193 = scalar_lea.vmem %s0, %s192
      %p194 = pneg %p64
      %p195 = pneg %p61
      %s196 = smul.u32 12, %s22
      %p197 = scmp.lt.s32.totalorder %s19, 1
      %s198 = scalar_select %p197, %s19, 1
      %p199 = scmp.lt.s32.totalorder %s196, 11
      %s200 = scalar_select %p199, %s196, 11
      %p201 = scmp.lt.s32.totalorder %s21, 0
      %s202 = scalar_select %p201, %s21, 0
      %s203 = sadd.s32 %s202, %s200
      %s204 = smul.addr %s198, 12
      %s205 = sadd.s32 %s203, %s204
      %s206 = smul.addr %s205, 4
      %s207 = scalar_lea.vmem %s1, %s206
      %p208 = pneg %p94
      %p209 = pneg %p91
      %p210 = pneg %p124
      %p211 = pneg %p121
      %s212 = smul.u32 4, %s20
      %p213 = scmp.lt.s32.totalorder %s19, 1
      %s214 = scalar_select %p213, %s19, 1
      %p215 = scmp.lt.s32.totalorder %s212, 3
      %s216 = scalar_select %p215, %s212, 3
      %p217 = scmp.lt.s32.totalorder %s21, 0
      %s218 = scalar_select %p217, %s21, 0
      %s219 = sadd.s32 %s218, %s216
      %s220 = smul.addr %s214, 4
      %s221 = sadd.s32 %s219, %s220
      %s222 = smul.addr %s221, 8
      %s223 = scalar_lea.vmem %s2, %s222
      %s224 = smul.u32 4, %s20
      %p225 = scmp.lt.s32.totalorder %s19, 1
      %s226 = scalar_select %p225, %s19, 1
      %p227 = scmp.lt.s32.totalorder %s224, 3
      %s228 = scalar_select %p227, %s224, 3
      %p229 = scmp.lt.s32.totalorder %s22, 0
      %s230 = scalar_select %p229, %s22, 0
      %s231 = sadd.s32 %s230, %s228
      %s232 = smul.addr %s226, 4
      %s233 = sadd.s32 %s231, %s232
      %s234 = smul.addr %s233, 4
      %s235 = scalar_lea.vmem %s0, %s234
      %s236 = smul.u32 4, %s20
      %s237 = smul.u32 12, %s22
      %p238 = scmp.lt.s32.totalorder %s19, 1
      %s239 = scalar_select %p238, %s19, 1
      %p240 = scmp.lt.s32.totalorder %s237, 11
      %s241 = scalar_select %p240, %s237, 11
      %p242 = scmp.lt.s32.totalorder %s21, 0
      %s243 = scalar_select %p242, %s21, 0
      %s244 = sadd.s32 %s243, %s241
      %s245 = smul.addr %s239, 12
      %s246 = sadd.s32 %s244, %s245
      %s247 = smul.addr %s246, 4
      %s248 = scalar_lea.vmem %s1, %s247
      %s249 = smul.u32 12, %s22
      %s250 = smul.u32 4, %s20
      %p251 = scmp.lt.s32.totalorder %s19, 1
      %s252 = scalar_select %p251, %s19, 1
      %p253 = scmp.lt.s32.totalorder %s250, 3
      %s254 = scalar_select %p253, %s250, 3
      %p255 = scmp.lt.s32.totalorder %s21, 0
      %s256 = scalar_select %p255, %s21, 0
      %s257 = sadd.s32 %s256, %s254
      %s258 = smul.addr %s252, 4
      %s259 = sadd.s32 %s257, %s258
      %s260 = smul.addr %s259, 8
      %s261 = scalar_lea.vmem %s2, %s260
      %s262 = smul.u32 4, %s20
      %p264 = scmp.eq.s32.totalorder %s22, 0
      // Predicated region
      $region29: #{_lambda_.42} parent=27 // pred_check
        %p265 = pneg %p264
      $region30: #{_lambda_.42} parent=27 // pred_check_branch
        %267 = sbr.rel (%p265) target = $region32
      $region31: #{_lambda_.42} parent=27 // pred_region
        %vm268 = vcmask 31744
        %269 = vst.msk [vmem:[%s261] sm:$0xff] %vm268, 0.0
        %270 = vst.msk [vmem:[%s261 + $0x8] sm:$0xff] %vm268, 0.0
        %271 = vst.msk [vmem:[%s261 + $0x10] sm:$0xff] %vm268, 0.0
        %272 = vst.msk [vmem:[%s261 + $0x18] sm:$0xff] %vm268, 0.0
      $region32: #{_lambda_.42} parent=27 // pred_fallthru
        _
      %v273 = vld [vmem:[%s261] sm:$0xff]
      %v274 = vld [vmem:[%s261 + $0x8] sm:$0xff]
      %v275 = vld [vmem:[%s261 + $0x10] sm:$0xff]
      %v276 = vld [vmem:[%s261 + $0x18] sm:$0xff]
      %v277 = vld [vmem:[%s235] sm:$0xf]
      %v278 = vld [vmem:[%s235 + $0x4] sm:$0xf]
      %v279 = vld [vmem:[%s235 + $0x8] sm:$0xf]
      %v280 = vld [vmem:[%s235 + $0xc] sm:$0xf]
      %v281 = vld [vmem:[%s248] sm:$0xf]
      %v282 = vld [vmem:[%s248 + $0x4] sm:$0xf]
      %v283 = vld [vmem:[%s248 + $0x8] sm:$0xf]
      %v284 = vld [vmem:[%s248 + $0xc] sm:$0xf]
      %v285 = vld [vmem:[%s248 + $0x10] sm:$0xf]
      %v286 = vld [vmem:[%s248 + $0x14] sm:$0xf]
      %v287 = vld [vmem:[%s248 + $0x18] sm:$0xf]
      %v288 = vld [vmem:[%s248 + $0x1c] sm:$0xf]
      %v289 = vld [vmem:[%s248 + $0x20] sm:$0xf]
      %v290 = vld [vmem:[%s248 + $0x24] sm:$0xf]
      %v291 = vld [vmem:[%s248 + $0x28] sm:$0xf]
      %v292 = vld [vmem:[%s248 + $0x2c] sm:$0xf]
      %v297 = vunpack.c.l.b16 %v277
      %v298 = vunpack.c.l.b16 %v278
      %v299 = vunpack.c.l.b16 %v279
      %v300 = vunpack.c.l.b16 %v280
      %v301 = vpack.c.b16 %v298, %v297
      %v302 = vpack.c.b16 %v300, %v299
      %v315 = vunpack.c.l.b16 %v281
      %v316 = vunpack.c.l.b16 %v282
      %v317 = vunpack.c.l.b16 %v283
      %v318 = vunpack.c.l.b16 %v284
      %v319 = vunpack.c.l.b16 %v285
      %v320 = vunpack.c.l.b16 %v286
      %v321 = vunpack.c.l.b16 %v287
      %v322 = vunpack.c.l.b16 %v288
      %v323 = vunpack.c.l.b16 %v289
      %v324 = vunpack.c.l.b16 %v290
      %v325 = vunpack.c.l.b16 %v291
      %v326 = vunpack.c.l.b16 %v292
      %v327 = vpack.c.b16 %v316, %v315
      %v328 = vpack.c.b16 %v318, %v317
      %v329 = vpack.c.b16 %v320, %v319
      %v330 = vpack.c.b16 %v322, %v321
      %v331 = vpack.c.b16 %v324, %v323
      %v332 = vpack.c.b16 %v326, %v325
      %vm339 = vcmask 785408
      %v341 = vsel %vm339, %v301, 0
      %v344 = vsel %vm339, %v302, 0
      %346 = vmatprep.subr.bf16.mxu0 0
      %347 = vmatpush1.bf16.msra.mxu0 %v327
      %348 = vmatprep.subr.bf16.mxu0 0
      %349 = vmatpush1.bf16.msra.mxu0 %v328
      %350 = vmatprep.subr.bf16.mxu0 0
      %351 = vmatpush1.bf16.msra.mxu0 %v329
      %352 = vmatprep.subr.bf16.mxu0 0
      %353 = vmatpush1.bf16.msra.mxu0 %v330
      %354 = vmatprep.subr.bf16.mxu0 0
      %355 = vmatpush1.bf16.msra.mxu0 %v331
      %356 = vmatprep.subr.bf16.mxu0 0
      %357 = vmatpush1.bf16.msra.mxu0 %v332
      %358 = vmatprep.subr.bf16.mxu0 0
      %359 = vmatpush1.bf16.msra.mxu0 0
      %360 = vmatprep.subr.bf16.mxu0 0
      %361 = vmatpush1.bf16.msra.mxu0 0
      %362 = vmatprep.subr.bf16.mxu0 0
      %363 = vmatpush1.bf16.msra.mxu0 0
      %364 = vmatprep.subr.bf16.mxu0 0
      %365 = vmatpush1.bf16.msra.mxu0 0
      %366 = vmatprep.subr.bf16.mxu0 0
      %367 = vmatpush1.bf16.msra.mxu0 0
      %368 = vmatprep.subr.bf16.mxu0 0
      %369 = vmatpush1.bf16.msra.mxu0 0
      %370 = vmatprep.subr.bf16.mxu0 0
      %371 = vmatpush1.bf16.msra.mxu0 0
      %372 = vmatprep.subr.bf16.mxu0 0
      %373 = vmatpush1.bf16.msra.mxu0 0
      %374 = vmatprep.subr.bf16.mxu0 0
      %375 = vmatpush1.bf16.msra.mxu0 0
      %376 = vmatprep.subr.bf16.mxu0 0
      %377 = vmatpush1.bf16.msra.mxu0 0
      %378 = vmatprep.mubr.bf16.mxu0 0
      %379 = vmatmul.mubr.bf16.gmra.mrb[0].mxu0 %v341
      %v380 = vpop.f32.mrb[0].mxu0
      %v381 = vadd.f32 0.0, %v380
      %v382 = vpop.f32.mrb[0].mxu0
      %v383 = vpop.f32.mrb[0].mxu0
      %v384 = vadd.f32 0.0, %v383
      %v385 = vpop.f32.mrb[0].mxu0
      %386 = vmatprep.mubr.bf16.mxu0 0
      %387 = vmatmul.mubr.bf16.gmra.mrb[0].mxu0 %v344
      %v388 = vpop.f32.mrb[0].mxu0
      %v389 = vadd.f32 0.0, %v388
      %v390 = vpop.f32.mrb[0].mxu0
      %v391 = vpop.f32.mrb[0].mxu0
      %v392 = vadd.f32 0.0, %v391
      %v393 = vpop.f32.mrb[0].mxu0
      %394 = vdwg.mxu0
      %v395 = vadd.f32 %v273, %v381
      %v396 = vadd.f32 %v274, %v384
      %v397 = vadd.f32 %v275, %v389
      %v398 = vadd.f32 %v276, %v392
      %vm399 = vcmask 31744
      %400 = vst.msk [vmem:[%s261] sm:$0xff] %vm399, %v395
      %401 = vst.msk [vmem:[%s261 + $0x8] sm:$0xff] %vm399, %v396
      %402 = vst.msk [vmem:[%s261 + $0x10] sm:$0xff] %vm399, %v397
      %403 = vst.msk [vmem:[%s261 + $0x18] sm:$0xff] %vm399, %v398
      %s404 = smul.u32 4, %s20
      %p405 = scmp.lt.s32.totalorder %s19, 1
      %s406 = scalar_select %p405, %s19, 1
      %p407 = scmp.lt.s32.totalorder %s404, 3
      %s408 = scalar_select %p407, %s404, 3
      %p409 = scmp.lt.s32.totalorder %s21, 0
      %s410 = scalar_select %p409, %s21, 0
      %s411 = sadd.s32 %s410, %s408
      %s412 = smul.addr %s406, 4
      %s413 = sadd.s32 %s411, %s412
      %s414 = smul.addr %s413, 8
      %s415 = scalar_lea.vmem %s2, %s414
      // Predicated region
      $region33: #{_lambda_.42} parent=27 // pred_check
        %p416 = pneg %p121
      $region34: #{_lambda_.42} parent=27 // pred_check_branch
        %418 = sbr.rel (%p416) target = $region36
      $region35: #{_lambda_.42} parent=27 // pred_region
        %s419 = smul.u32 4, %s20
      $region36: #{_lambda_.42} parent=27 // pred_fallthru
        _
    $region28: #{_lambda_.42} parent=5 // pred_fallthru
      _
    %p420 = scmp.le.s32.totalorder 2, %s8
    // Predicated region
    $region37: #{_lambda_.42} parent=5 // pred_check
      %p421 = pneg %p420
    $region38: #{_lambda_.42} parent=5 // pred_check_branch
      %423 = sbr.rel (%p421) target = $region40
    $region39: #{_lambda_.42} parent=5 // pred_region
      %s424 = ssub.s32 %s8, 2
      // Predicated region
      $region41: #{_lambda_.42} parent=39 // pred_check
        %p425 = pneg %p127
      $region42: #{_lambda_.42} parent=39 // pred_check_branch
        %427 = sbr.rel (%p425) target = $region44
      $region43: #{_lambda_.42} parent=39 // pred_region
        %s428 = smul.u32 4, %s24
        %p429 = scmp.lt.s32.totalorder %s23, 1
        %s430 = scalar_select %p429, %s23, 1
        %p431 = scmp.lt.s32.totalorder %s428, 3
        %s432 = scalar_select %p431, %s428, 3
        %p433 = scmp.lt.s32.totalorder %s25, 0
        %s434 = scalar_select %p433, %s25, 0
        %s435 = sadd.s32 %s434, %s432
        %s436 = smul.addr %s430, 4
        %s437 = sadd.s32 %s435, %s436
        %s438 = smul.addr %s437, 8
        %s439 = scalar_lea.vmem %s2, %s438
      $region44: #{_lambda_.42} parent=39 // pred_fallthru
        _
    $region40: #{_lambda_.42} parent=5 // pred_fallthru
      _
  $region6: #{_lambda_.42} parent=0 // loop_footer
    %s12 = sadd.s32 1, %s8
  $region7: #{_lambda_.42} parent=0 // loop_footer_branch
    %7 = sbr.rel target = $region3
  $region8: #{_lambda_.42} parent=0 // loop_exit
    _

// kernel: _lambda_.44
$region0: #{_lambda_.44}
  #allocation0 [shape = 'u32[]', space=smem, size = 0x4, offset = 0x4, fixed_abs, tag = 'smem constant byte address 0x4 - core index']
  #allocation1 [shape = 'u32[144,128]{1,0:T(1,128)}', space=vmem, size = 0x12000, scoped, tag = 'internal scratch']
  %s0 = inlined_call_operand.vmem [shape: bf16[2,32,32], index: 0, kind: input, shape index: {}]
  %s1 = inlined_call_operand.vmem [shape: bf16[2,32,4], index: 1, kind: input, shape index: {}]
  %s2 = inlined_call_operand.vmem [shape: f32[2,1,4], index: 2, kind: input, shape index: {}]
  %s3 = inlined_call_operand.vmem [shape: f32[2,32,4], index: 3, kind: output, shape index: {}]
  %s4 = sld [smem:[#allocation0]]
  $region49: #{_lambda_.44} parent=0
    _
  %s6 = ssub.s32 1, %s4
  %s7 = scalar_select 0, %s6, %s4
  loop: start=0, step=1, limit=4
  $region2: #{_lambda_.44} parent=0 // loop_pre_header
    _
  $region3: #{_lambda_.44} parent=0 // loop_header
    %s9 = sphi 0, %s13
    %p10 = scmp.ge.s32.totalorder %s9, 4
    %s16 = sphi 0, %s42
    %s17 = sphi 0, %s38
    %s18 = sphi 0, %s34
    %s19 = sphi 0, %s30
    %s20 = sphi 0, %s16
    %s21 = sphi 0, %s17
    %s22 = sphi 0, %s18
    %s23 = sphi 0, %s19
    %s24 = sphi 0, %s20
    %s25 = sphi 0, %s21
    %s26 = sphi 0, %s22
    %s27 = sphi 0, %s23
    %s49 = sphi 0, %s51
    %s52 = sphi 0, %s49
    %s53 = sphi 0, %s52
    %s69 = sphi 0, %s53
    %s79 = sphi 0, %s81
    %s82 = sphi 0, %s79
    %s83 = sphi 0, %s82
    %s99 = sphi 0, %s83
    %s107 = sphi 0, %s109
    %s110 = sphi 0, %s107
    %s111 = sphi 0, %s110
    %s127 = sphi 0, %s111
    %s137 = sphi 0, %s139
    %s140 = sphi 0, %s137
    %s141 = sphi 0, %s140
    %s157 = sphi 0, %s141
  $region4: #{_lambda_.44} parent=0 // loop_header_branch
    %12 = sbr.rel (%p10) target = $region8
  $region5: #{_lambda_.44} parent=0 // loop_body
    %s14 = ssub.s32 %s9, 1
    %s15 = ssub.s32 %s9, 2
    %s28 = sadd.s32 1, %s19
    %p29 = scmp.ge.s32.totalorder %s28, 1
    %s30 = scalar_select %p29, 0, %s28
    %s31 = sadd.s32 1, %s18
    %s32 = scalar_select %p29, %s31, %s18
    %p33 = scmp.ge.s32.totalorder %s32, 1
    %s34 = scalar_select %p33, 0, %s32
    %s35 = sadd.s32 1, %s17
    %s36 = scalar_select %p33, %s35, %s17
    %p37 = scmp.ge.s32.totalorder %s36, 1
    %s38 = scalar_select %p37, 0, %s36
    %s39 = sadd.s32 1, %s16
    %s40 = scalar_select %p37, %s39, %s16
    %p41 = scmp.ge.s32.totalorder %s40, 2
    %s42 = scalar_select %p41, 0, %s40
    %s43 = ssub.s32 %s16, %s42
    %s44 = ssub.s32 %s17, %s38
    %s45 = sor.u32 %s43, %s44
    %s46 = ssub.s32 %s19, %s30
    %s47 = sor.u32 %s45, %s46
    %p48 = scmp.eq.s32.totalorder %s47, 0
    %s50 = sadd.s32 %s49, 1
    %s51 = scalar_select %p48, %s49, %s50
    %p54 = pneg %p48
    %p55 = scmp.eq.s32.totalorder %s9, 1
    %p56 = por %p54, %p55
    %p57 = scmp.ne.s32.totalorder %s49, %s52
    %p58 = scmp.eq.s32.totalorder %s9, 0
    %p59 = por %p57, %p58
    %p60 = scmp.ne.s32.totalorder %s49, %s52
    %p61 = scmp.eq.s32.totalorder %s14, 1
    %p62 = por %p60, %p61
    %p63 = scmp.ne.s32.totalorder %s52, %s53
    %p64 = scmp.eq.s32.totalorder %s14, 0
    %p65 = por %p63, %p64
    %p66 = scmp.ne.s32.totalorder %s52, %s53
    %p67 = scmp.eq.s32.totalorder %s15, 1
    %p68 = por %p66, %p67
    %p70 = scmp.ne.s32.totalorder %s53, %s69
    %p71 = scmp.eq.s32.totalorder %s15, 0
    %p72 = por %p70, %p71
    %s73 = ssub.s32 %s16, %s42
    %s74 = ssub.s32 %s19, %s30
    %s75 = sor.u32 %s73, %s74
    %s76 = ssub.s32 %s18, %s34
    %s77 = sor.u32 %s75, %s76
    %p78 = scmp.eq.s32.totalorder %s77, 0
    %s80 = sadd.s32 %s79, 1
    %s81 = scalar_select %p78, %s79, %s80
    %p84 = pneg %p78
    %p85 = scmp.eq.s32.totalorder %s9, 1
    %p86 = por %p84, %p85
    %p87 = scmp.ne.s32.totalorder %s79, %s82
    %p88 = scmp.eq.s32.totalorder %s9, 0
    %p89 = por %p87, %p88
    %p90 = scmp.ne.s32.totalorder %s79, %s82
    %p91 = scmp.eq.s32.totalorder %s14, 1
    %p92 = por %p90, %p91
    %p93 = scmp.ne.s32.totalorder %s82, %s83
    %p94 = scmp.eq.s32.totalorder %s14, 0
    %p95 = por %p93, %p94
    %p96 = scmp.ne.s32.totalorder %s82, %s83
    %p97 = scmp.eq.s32.totalorder %s15, 1
    %p98 = por %p96, %p97
    %p100 = scmp.ne.s32.totalorder %s83, %s99
    %p101 = scmp.eq.s32.totalorder %s15, 0
    %p102 = por %p100, %p101
    %s103 = ssub.s32 %s16, %s42
    %s104 = ssub.s32 %s18, %s34
    %s105 = sor.u32 %s103, %s104
    %p106 = scmp.eq.s32.totalorder %s105, 0
    %s108 = sadd.s32 %s107, 1
    %s109 = scalar_select %p106, %s107, %s108
    %p112 = pneg %p106
    %p113 = scmp.eq.s32.totalorder %s9, 1
    %p114 = por %p112, %p113
    %p115 = scmp.ne.s32.totalorder %s107, %s110
    %p116 = scmp.eq.s32.totalorder %s9, 0
    %p117 = por %p115, %p116
    %p118 = scmp.ne.s32.totalorder %s107, %s110
    %p119 = scmp.eq.s32.totalorder %s14, 1
    %p120 = por %p118, %p119
    %p121 = scmp.ne.s32.totalorder %s110, %s111
    %p122 = scmp.eq.s32.totalorder %s14, 0
    %p123 = por %p121, %p122
    %p124 = scmp.ne.s32.totalorder %s110, %s111
    %p125 = scmp.eq.s32.totalorder %s15, 1
    %p126 = por %p124, %p125
    %p128 = scmp.ne.s32.totalorder %s111, %s127
    %p129 = scmp.eq.s32.totalorder %s15, 0
    %p130 = por %p128, %p129
    %s131 = ssub.s32 %s16, %s42
    %s132 = ssub.s32 %s17, %s38
    %s133 = sor.u32 %s131, %s132
    %s134 = ssub.s32 %s18, %s34
    %s135 = sor.u32 %s133, %s134
    %p136 = scmp.eq.s32.totalorder %s135, 0
    %s138 = sadd.s32 %s137, 1
    %s139 = scalar_select %p136, %s137, %s138
    %p142 = pneg %p136
    %p143 = scmp.eq.s32.totalorder %s9, 1
    %p144 = por %p142, %p143
    %p145 = scmp.ne.s32.totalorder %s137, %s140
    %p146 = scmp.eq.s32.totalorder %s9, 0
    %p147 = por %p145, %p146
    %p148 = scmp.ne.s32.totalorder %s137, %s140
    %p149 = scmp.eq.s32.totalorder %s14, 1
    %p150 = por %p148, %p149
    %p151 = scmp.ne.s32.totalorder %s140, %s141
    %p152 = scmp.eq.s32.totalorder %s14, 0
    %p153 = por %p151, %p152
    %p154 = scmp.ne.s32.totalorder %s140, %s141
    %p155 = scmp.eq.s32.totalorder %s15, 1
    %p156 = por %p154, %p155
    %p158 = scmp.ne.s32.totalorder %s141, %s157
    %p159 = scmp.eq.s32.totalorder %s15, 0
    %p160 = por %p158, %p159
    %p161 = scmp.le.s32.totalorder 1, %s9
    %p162 = scmp.lt.s32.totalorder %s9, 3
    %p163 = pnand %p161, %p162
    %p164 = pneg %p163
    // Predicated region
    $region9: #{_lambda_.44} parent=5 // pred_check
      _
    $region10: #{_lambda_.44} parent=5 // pred_check_branch
      %166 = sbr.rel (%p163) target = $region12
    $region11: #{_lambda_.44} parent=5 // pred_region
      %s167 = ssub.s32 %s9, 1
    $region12: #{_lambda_.44} parent=5 // pred_fallthru
      _
    %p168 = scmp.lt.s32.totalorder %s9, 2
    // Predicated region
    $region13: #{_lambda_.44} parent=5 // pred_check
      %p169 = pneg %p168
    $region14: #{_lambda_.44} parent=5 // pred_check_branch
      %171 = sbr.rel (%p169) target = $region16
    $region15: #{_lambda_.44} parent=5 // pred_region
      // Predicated region
      $region17: #{_lambda_.44} parent=15 // pred_check
        %p172 = pneg %p59
      $region18: #{_lambda_.44} parent=15 // pred_check_branch
        %174 = sbr.rel (%p172) target = $region20
      $region19: #{_lambda_.44} parent=15 // pred_region
        %s175 = smul.u32 4, %s17
        %p176 = scmp.lt.s32.totalorder %s16, 1
        %s177 = scalar_select %p176, %s16, 1
        %p178 = scmp.lt.s32.totalorder %s175, 3
        %s179 = scalar_select %p178, %s175, 3
        %p180 = scmp.lt.s32.totalorder %s19, 0
        %s181 = scalar_select %p180, %s19, 0
        %s182 = sadd.s32 %s181, %s179
        %s183 = smul.addr %s177, 4
        %s184 = sadd.s32 %s182, %s183
        %s185 = smul.addr %s184, 4
        %s186 = scalar_lea.vmem %s0, %s185
        %s187 = smul.u32 4, %s17
      $region20: #{_lambda_.44} parent=15 // pred_fallthru
        _
      // Predicated region
      $region21: #{_lambda_.44} parent=15 // pred_check
        %p188 = pneg %p89
      $region22: #{_lambda_.44} parent=15 // pred_check_branch
        %190 = sbr.rel (%p188) target = $region24
      $region23: #{_lambda_.44} parent=15 // pred_region
        %s191 = smul.u32 4, %s19
        %p192 = scmp.lt.s32.totalorder %s16, 1
        %s193 = scalar_select %p192, %s16, 1
        %p194 = scmp.lt.s32.totalorder %s191, 3
        %s195 = scalar_select %p194, %s191, 3
        %p196 = scmp.lt.s32.totalorder %s18, 0
        %s197 = scalar_select %p196, %s18, 0
        %s198 = sadd.s32 %s197, %s195
        %s199 = smul.addr %s193, 4
        %s200 = sadd.s32 %s198, %s199
        %s201 = smul.addr %s200, 4
        %s202 = scalar_lea.vmem %s1, %s201
        %s203 = smul.u32 4, %s19
      $region24: #{_lambda_.44} parent=15 // pred_fallthru
        _
      // Predicated region
      $region25: #{_lambda_.44} parent=15 // pred_check
        %p204 = pneg %p117
      $region26: #{_lambda_.44} parent=15 // pred_check_branch
        %206 = sbr.rel (%p204) target = $region28
      $region27: #{_lambda_.44} parent=15 // pred_region
        %p207 = scmp.lt.s32.totalorder %s16, 1
        %s208 = scalar_select %p207, %s16, 1
        %p209 = scmp.lt.s32.totalorder %s18, 0
        %s210 = scalar_select %p209, %s18, 0
        %s211 = sadd.s32 %s210, %s208
        %s212 = scalar_lea.vmem %s2, %s211
      $region28: #{_lambda_.44} parent=15 // pred_fallthru
        _
    $region16: #{_lambda_.44} parent=5 // pred_fallthru
      _
    %p213 = scmp.le.s32.totalorder 1, %s9
    %p214 = scmp.lt.s32.totalorder %s9, 3
    %p215 = pnand %p213, %p214
    %p216 = pneg %p215
    // Predicated region
    $region29: #{_lambda_.44} parent=5 // pred_check
      _
    $region30: #{_lambda_.44} parent=5 // pred_check_branch
      %218 = sbr.rel (%p215) target = $region32
    $region31: #{_lambda_.44} parent=5 // pred_region
      %s219 = ssub.s32 %s9, 1
      %s220 = smul.u32 4, %s21
      %p221 = scmp.lt.s32.totalorder %s20, 1
      %s222 = scalar_select %p221, %s20, 1
      %p223 = scmp.lt.s32.totalorder %s220, 3
      %s224 = scalar_select %p223, %s220, 3
      %p225 = scmp.lt.s32.totalorder %s23, 0
      %s226 = scalar_select %p225, %s23, 0
      %s227 = sadd.s32 %s226, %s224
      %s228 = smul.addr %s222, 4
      %s229 = sadd.s32 %s227, %s228
      %s230 = smul.addr %s229, 4
      %s231 = scalar_lea.vmem %s0, %s230
      %p232 = pneg %p65
      %p233 = pneg %p62
      %s234 = smul.u32 4, %s23
      %p235 = scmp.lt.s32.totalorder %s20, 1
      %s236 = scalar_select %p235, %s20, 1
      %p237 = scmp.lt.s32.totalorder %s234, 3
      %s238 = scalar_select %p237, %s234, 3
      %p239 = scmp.lt.s32.totalorder %s22, 0
      %s240 = scalar_select %p239, %s22, 0
      %s241 = sadd.s32 %s240, %s238
      %s242 = smul.addr %s236, 4
      %s243 = sadd.s32 %s241, %s242
      %s244 = smul.addr %s243, 4
      %s245 = scalar_lea.vmem %s1, %s244
      %p246 = pneg %p95
      %p247 = pneg %p92
      %p248 = scmp.lt.s32.totalorder %s20, 1
      %s249 = scalar_select %p248, %s20, 1
      %p250 = scmp.lt.s32.totalorder %s22, 0
      %s251 = scalar_select %p250, %s22, 0
      %s252 = sadd.s32 %s251, %s249
      %s253 = scalar_lea.vmem %s2, %s252
      %p254 = pneg %p123
      %p255 = pneg %p120
      %p256 = pneg %p153
      %p257 = pneg %p150
      %s258 = smul.u32 4, %s21
      %p259 = scmp.lt.s32.totalorder %s20, 1
      %s260 = scalar_select %p259, %s20, 1
      %p261 = scmp.lt.s32.totalorder %s258, 3
      %s262 = scalar_select %p261, %s258, 3
      %p263 = scmp.lt.s32.totalorder %s22, 0
      %s264 = scalar_select %p263, %s22, 0
      %s265 = sadd.s32 %s264, %s262
      %s266 = smul.addr %s260, 4
      %s267 = sadd.s32 %s265, %s266
      %s268 = smul.addr %s267, 8
      %s269 = scalar_lea.vmem %s3, %s268
      %s270 = smul.u32 4, %s21
      %p271 = scmp.lt.s32.totalorder %s20, 1
      %s272 = scalar_select %p271, %s20, 1
      %p273 = scmp.lt.s32.totalorder %s270, 3
      %s274 = scalar_select %p273, %s270, 3
      %p275 = scmp.lt.s32.totalorder %s23, 0
      %s276 = scalar_select %p275, %s23, 0
      %s277 = sadd.s32 %s276, %s274
      %s278 = smul.addr %s272, 4
      %s279 = sadd.s32 %s277, %s278
      %s280 = smul.addr %s279, 4
      %s281 = scalar_lea.vmem %s0, %s280
      %s282 = smul.u32 4, %s21
      %s283 = smul.u32 4, %s23
      %p284 = scmp.lt.s32.totalorder %s20, 1
      %s285 = scalar_select %p284, %s20, 1
      %p286 = scmp.lt.s32.totalorder %s283, 3
      %s287 = scalar_select %p286, %s283, 3
      %p288 = scmp.lt.s32.totalorder %s22, 0
      %s289 = scalar_select %p288, %s22, 0
      %s290 = sadd.s32 %s289, %s287
      %s291 = smul.addr %s285, 4
      %s292 = sadd.s32 %s290, %s291
      %s293 = smul.addr %s292, 4
      %s294 = scalar_lea.vmem %s1, %s293
      %s295 = smul.u32 4, %s23
      %p296 = scmp.lt.s32.totalorder %s20, 1
      %s297 = scalar_select %p296, %s20, 1
      %p298 = scmp.lt.s32.totalorder %s22, 0
      %s299 = scalar_select %p298, %s22, 0
      %s300 = sadd.s32 %s299, %s297
      %s301 = scalar_lea.vmem %s2, %s300
      %s302 = smul.u32 4, %s21
      %p303 = scmp.lt.s32.totalorder %s20, 1
      %s304 = scalar_select %p303, %s20, 1
      %p305 = scmp.lt.s32.totalorder %s302, 3
      %s306 = scalar_select %p305, %s302, 3
      %p307 = scmp.lt.s32.totalorder %s22, 0
      %s308 = scalar_select %p307, %s22, 0
      %s309 = sadd.s32 %s308, %s306
      %s310 = smul.addr %s304, 4
      %s311 = sadd.s32 %s309, %s310
      %s312 = smul.addr %s311, 8
      %s313 = scalar_lea.vmem %s3, %s312
      %s314 = smul.u32 4, %s21
      %p316 = scmp.eq.s32.totalorder %s23, 0
      // Predicated region
      $region33: #{_lambda_.44} parent=31 // pred_check
        %p317 = pneg %p316
      $region34: #{_lambda_.44} parent=31 // pred_check_branch
        %319 = sbr.rel (%p317) target = $region36
      $region35: #{_lambda_.44} parent=31 // pred_region
        %v320 = vld [vmem:[%s301] sm:$0x1]
        %v322 = vlaneseq
        %v323 = vshrl.u32 %v322, 7
        %v324 = vsub.s32 0, %v323
        %v325 = vrot.slane %v320, %v324
        %vm327 = vcmask 31744
        %328 = vst.msk [vmem:[%s313] sm:$0xff] %vm327, %v325
        %329 = vst.msk [vmem:[%s313 + $0x8] sm:$0xff] %vm327, %v325
        %330 = vst.msk [vmem:[%s313 + $0x10] sm:$0xff] %vm327, %v325
        %331 = vst.msk [vmem:[%s313 + $0x18] sm:$0xff] %vm327, %v325
      $region36: #{_lambda_.44} parent=31 // pred_fallthru
        _
      %v332 = vld [vmem:[%s313] sm:$0xff]
      %v333 = vld [vmem:[%s313 + $0x8] sm:$0xff]
      %v334 = vld [vmem:[%s313 + $0x10] sm:$0xff]
      %v335 = vld [vmem:[%s313 + $0x18] sm:$0xff]
      %v336 = vld [vmem:[%s281] sm:$0xf]
      %v337 = vld [vmem:[%s281 + $0x4] sm:$0xf]
      %v338 = vld [vmem:[%s281 + $0x8] sm:$0xf]
      %v339 = vld [vmem:[%s281 + $0xc] sm:$0xf]
      %v340 = vld [vmem:[%s294] sm:$0xf]
      %v341 = vld [vmem:[%s294 + $0x4] sm:$0xf]
      %v342 = vld [vmem:[%s294 + $0x8] sm:$0xf]
      %v343 = vld [vmem:[%s294 + $0xc] sm:$0xf]
      %v348 = vunpack.c.l.b16 %v336
      %v349 = vunpack.c.l.b16 %v337
      %v350 = vunpack.c.l.b16 %v338
      %v351 = vunpack.c.l.b16 %v339
      %v352 = vpack.c.b16 %v349, %v348
      %v353 = vpack.c.b16 %v351, %v350
      %v358 = vunpack.c.l.b16 %v340
      %v359 = vunpack.c.l.b16 %v341
      %v360 = vunpack.c.l.b16 %v342
      %v361 = vunpack.c.l.b16 %v343
      %v362 = vpack.c.b16 %v359, %v358
      %v363 = vpack.c.b16 %v361, %v360
      %vm366 = vcmask 261120
      %v368 = vsel %vm366, %v352, 0
      %v371 = vsel %vm366, %v353, 0
      %373 = vmatprep.subr.bf16.mxu0 0
      %374 = vmatpush1.bf16.msra.mxu0 %v362
      %375 = vmatprep.subr.bf16.mxu0 0
      %376 = vmatpush1.bf16.msra.mxu0 %v363
      %377 = vmatprep.subr.bf16.mxu0 0
      %378 = vmatpush1.bf16.msra.mxu0 0
      %379 = vmatprep.subr.bf16.mxu0 0
      %380 = vmatpush1.bf16.msra.mxu0 0
      %381 = vmatprep.subr.bf16.mxu0 0
      %382 = vmatpush1.bf16.msra.mxu0 0
      %383 = vmatprep.subr.bf16.mxu0 0
      %384 = vmatpush1.bf16.msra.mxu0 0
      %385 = vmatprep.subr.bf16.mxu0 0
      %386 = vmatpush1.bf16.msra.mxu0 0
      %387 = vmatprep.subr.bf16.mxu0 0
      %388 = vmatpush1.bf16.msra.mxu0 0
      %389 = vmatprep.subr.bf16.mxu0 0
      %390 = vmatpush1.bf16.msra.mxu0 0
      %391 = vmatprep.subr.bf16.mxu0 0
      %392 = vmatpush1.bf16.msra.mxu0 0
      %393 = vmatprep.subr.bf16.mxu0 0
      %394 = vmatpush1.bf16.msra.mxu0 0
      %395 = vmatprep.subr.bf16.mxu0 0
      %396 = vmatpush1.bf16.msra.mxu0 0
      %397 = vmatprep.subr.bf16.mxu0 0
      %398 = vmatpush1.bf16.msra.mxu0 0
      %399 = vmatprep.subr.bf16.mxu0 0
      %400 = vmatpush1.bf16.msra.mxu0 0
      %401 = vmatprep.subr.bf16.mxu0 0
      %402 = vmatpush1.bf16.msra.mxu0 0
      %403 = vmatprep.subr.bf16.mxu0 0
      %404 = vmatpush1.bf16.msra.mxu0 0
      %405 = vmatprep.mubr.bf16.mxu0 0
      %406 = vmatmul.mubr.bf16.gmra.mrb[0].mxu0 %v368
      %v407 = vpop.f32.mrb[0].mxu0
      %v408 = vadd.f32 0.0, %v407
      %v409 = vpop.f32.mrb[0].mxu0
      %v410 = vpop.f32.mrb[0].mxu0
      %v411 = vadd.f32 0.0, %v410
      %v412 = vpop.f32.mrb[0].mxu0
      %413 = vmatprep.mubr.bf16.mxu0 0
      %414 = vmatmul.mubr.bf16.gmra.mrb[0].mxu0 %v371
      %v415 = vpop.f32.mrb[0].mxu0
      %v416 = vadd.f32 0.0, %v415
      %v417 = vpop.f32.mrb[0].mxu0
      %v418 = vpop.f32.mrb[0].mxu0
      %v419 = vadd.f32 0.0, %v418
      %v420 = vpop.f32.mrb[0].mxu0
      %421 = vdwg.mxu0
      %v422 = vadd.f32 %v332, %v408
      %v423 = vadd.f32 %v333, %v411
      %v424 = vadd.f32 %v334, %v416
      %v425 = vadd.f32 %v335, %v419
      %vm426 = vcmask 31744
      %427 = vst.msk [vmem:[%s313] sm:$0xff] %vm426, %v422
      %428 = vst.msk [vmem:[%s313 + $0x8] sm:$0xff] %vm426, %v423
      %429 = vst.msk [vmem:[%s313 + $0x10] sm:$0xff] %vm426, %v424
      %430 = vst.msk [vmem:[%s313 + $0x18] sm:$0xff] %vm426, %v425
      %s431 = smul.u32 4, %s21
      %p432 = scmp.lt.s32.totalorder %s20, 1
      %s433 = scalar_select %p432, %s20, 1
      %p434 = scmp.lt.s32.totalorder %s431, 3
      %s435 = scalar_select %p434, %s431, 3
      %p436 = scmp.lt.s32.totalorder %s22, 0
      %s437 = scalar_select %p436, %s22, 0
      %s438 = sadd.s32 %s437, %s435
      %s439 = smul.addr %s433, 4
      %s440 = sadd.s32 %s438, %s439
      %s441 = smul.addr %s440, 8
      %s442 = scalar_lea.vmem %s3, %s441
      // Predicated region
      $region37: #{_lambda_.44} parent=31 // pred_check
        %p443 = pneg %p150
      $region38: #{_lambda_.44} parent=31 // pred_check_branch
        %445 = sbr.rel (%p443) target = $region40
      $region39: #{_lambda_.44} parent=31 // pred_region
        %s446 = smul.u32 4, %s21
      $region40: #{_lambda_.44} parent=31 // pred_fallthru
        _
    $region32: #{_lambda_.44} parent=5 // pred_fallthru
      _
    %p447 = scmp.le.s32.totalorder 2, %s9
    // Predicated region
    $region41: #{_lambda_.44} parent=5 // pred_check
      %p448 = pneg %p447
    $region42: #{_lambda_.44} parent=5 // pred_check_branch
      %450 = sbr.rel (%p448) target = $region44
    $region43: #{_lambda_.44} parent=5 // pred_region
      %s451 = ssub.s32 %s9, 2
      // Predicated region
      $region45: #{_lambda_.44} parent=43 // pred_check
        %p452 = pneg %p156
      $region46: #{_lambda_.44} parent=43 // pred_check_branch
        %454 = sbr.rel (%p452) target = $region48
      $region47: #{_lambda_.44} parent=43 // pred_region
        %s455 = smul.u32 4, %s25
        %p456 = scmp.lt.s32.totalorder %s24, 1
        %s457 = scalar_select %p456, %s24, 1
        %p458 = scmp.lt.s32.totalorder %s455, 3
        %s459 = scalar_select %p458, %s455, 3
        %p460 = scmp.lt.s32.totalorder %s26, 0
        %s461 = scalar_select %p460, %s26, 0
        %s462 = sadd.s32 %s461, %s459
        %s463 = smul.addr %s457, 4
        %s464 = sadd.s32 %s462, %s463
        %s465 = smul.addr %s464, 8
        %s466 = scalar_lea.vmem %s3, %s465
      $region48: #{_lambda_.44} parent=43 // pred_fallthru
        _
    $region44: #{_lambda_.44} parent=5 // pred_fallthru
      _
  $region6: #{_lambda_.44} parent=0 // loop_footer
    %s13 = sadd.s32 1, %s9
  $region7: #{_lambda_.44} parent=0 // loop_footer_branch
    %8 = sbr.rel target = $region3
  $region8: #{_lambda_.44} parent=0 // loop_exit
    _

// kernel: _lambda_.45
$region0: #{_lambda_.45}
  #allocation0 [shape = 'u32[]', space=smem, size = 0x4, offset = 0x4, fixed_abs, tag = 'smem constant byte address 0x4 - core index']
  #allocation1 [shape = 'u32[144,128]{1,0:T(1,128)}', space=vmem, size = 0x12000, scoped, tag = 'internal scratch']
  %s0 = inlined_call_operand.vmem [shape: bf16[1,2,32], index: 0, kind: input, shape index: {}]
  %s1 = inlined_call_operand.vmem [shape: bf16[1,32,4096], index: 1, kind: input, shape index: {}]
  %s2 = inlined_call_operand.vmem [shape: f32[1,1,4096], index: 2, kind: input, shape index: {}]
  %s3 = inlined_call_operand.vmem [shape: f32[1,2,4096], index: 3, kind: output, shape index: {}]
  %s4 = sld [smem:[#allocation0]]
  $region26: #{_lambda_.45} parent=0
    _
  %s6 = ssub.s32 1, %s4
  %s7 = scalar_select 0, %s6, %s4
  // Predicated region
  $region2: #{_lambda_.45} parent=0 // pred_check
    _
  $region3: #{_lambda_.45} parent=0 // pred_check_branch
    %9 = sbr.rel (0) target = $region5
  $region4: #{_lambda_.45} parent=0 // pred_region
    _
  $region5: #{_lambda_.45} parent=0 // pred_fallthru
    _
  // Predicated region
  $region6: #{_lambda_.45} parent=0 // pred_check
    _
  $region7: #{_lambda_.45} parent=0 // pred_check_branch
    %11 = sbr.rel (0) target = $region9
  $region8: #{_lambda_.45} parent=0 // pred_region
    _
  $region9: #{_lambda_.45} parent=0 // pred_fallthru
    _
  // Predicated region
  $region10: #{_lambda_.45} parent=0 // pred_check
    _
  $region11: #{_lambda_.45} parent=0 // pred_check_branch
    %13 = sbr.rel (0) target = $region13
  $region12: #{_lambda_.45} parent=0 // pred_region
    _
  $region13: #{_lambda_.45} parent=0 // pred_fallthru
    _
  %p15 = scmp.eq.s32.totalorder 0, 0
  // Predicated region
  $region14: #{_lambda_.45} parent=0 // pred_check
    %p16 = pneg %p15
  $region15: #{_lambda_.45} parent=0 // pred_check_branch
    %18 = sbr.rel (%p16) target = $region17
  $region16: #{_lambda_.45} parent=0 // pred_region
    %v19 = vld [vmem:[%s2] sm:$0xff]
    %v20 = vld [vmem:[%s2 + $0x8] sm:$0xff]
    %v21 = vld [vmem:[%s2 + $0x10] sm:$0xff]
    %v22 = vld [vmem:[%s2 + $0x18] sm:$0xff]
    %v27 = vlaneseq
    %v28 = vshrl.u32 %v27, 7
    %v29 = vsub.s32 0, %v28
    %v30 = vrot.slane %v19, %v29
    %v31 = vlaneseq
    %v32 = vshrl.u32 %v31, 7
    %v33 = vsub.s32 1, %v32
    %v34 = vrot.slane %v19, %v33
    %v35 = vlaneseq
    %v36 = vshrl.u32 %v35, 7
    %v37 = vsub.s32 2, %v36
    %v38 = vrot.slane %v19, %v37
    %v39 = vlaneseq
    %v40 = vshrl.u32 %v39, 7
    %v41 = vsub.s32 3, %v40
    %v42 = vrot.slane %v19, %v41
    %v43 = vlaneseq
    %v44 = vshrl.u32 %v43, 7
    %v45 = vsub.s32 4, %v44
    %v46 = vrot.slane %v19, %v45
    %v47 = vlaneseq
    %v48 = vshrl.u32 %v47, 7
    %v49 = vsub.s32 5, %v48
    %v50 = vrot.slane %v19, %v49
    %v51 = vlaneseq
    %v52 = vshrl.u32 %v51, 7
    %v53 = vsub.s32 6, %v52
    %v54 = vrot.slane %v19, %v53
    %v55 = vlaneseq
    %v56 = vshrl.u32 %v55, 7
    %v57 = vsub.s32 7, %v56
    %v58 = vrot.slane %v19, %v57
    %v59 = vlaneseq
    %v60 = vshrl.u32 %v59, 7
    %v61 = vsub.s32 0, %v60
    %v62 = vrot.slane %v20, %v61
    %v63 = vlaneseq
    %v64 = vshrl.u32 %v63, 7
    %v65 = vsub.s32 1, %v64
    %v66 = vrot.slane %v20, %v65
    %v67 = vlaneseq
    %v68 = vshrl.u32 %v67, 7
    %v69 = vsub.s32 2, %v68
    %v70 = vrot.slane %v20, %v69
    %v71 = vlaneseq
    %v72 = vshrl.u32 %v71, 7
    %v73 = vsub.s32 3, %v72
    %v74 = vrot.slane %v20, %v73
    %v75 = vlaneseq
    %v76 = vshrl.u32 %v75, 7
    %v77 = vsub.s32 4, %v76
    %v78 = vrot.slane %v20, %v77
    %v79 = vlaneseq
    %v80 = vshrl.u32 %v79, 7
    %v81 = vsub.s32 5, %v80
    %v82 = vrot.slane %v20, %v81
    %v83 = vlaneseq
    %v84 = vshrl.u32 %v83, 7
    %v85 = vsub.s32 6, %v84
    %v86 = vrot.slane %v20, %v85
    %v87 = vlaneseq
    %v88 = vshrl.u32 %v87, 7
    %v89 = vsub.s32 7, %v88
    %v90 = vrot.slane %v20, %v89
    %v91 = vlaneseq
    %v92 = vshrl.u32 %v91, 7
    %v93 = vsub.s32 0, %v92
    %v94 = vrot.slane %v21, %v93
    %v95 = vlaneseq
    %v96 = vshrl.u32 %v95, 7
    %v97 = vsub.s32 1, %v96
    %v98 = vrot.slane %v21, %v97
    %v99 = vlaneseq
    %v100 = vshrl.u32 %v99, 7
    %v101 = vsub.s32 2, %v100
    %v102 = vrot.slane %v21, %v101
    %v103 = vlaneseq
    %v104 = vshrl.u32 %v103, 7
    %v105 = vsub.s32 3, %v104
    %v106 = vrot.slane %v21, %v105
    %v107 = vlaneseq
    %v108 = vshrl.u32 %v107, 7
    %v109 = vsub.s32 4, %v108
    %v110 = vrot.slane %v21, %v109
    %v111 = vlaneseq
    %v112 = vshrl.u32 %v111, 7
    %v113 = vsub.s32 5, %v112
    %v114 = vrot.slane %v21, %v113
    %v115 = vlaneseq
    %v116 = vshrl.u32 %v115, 7
    %v117 = vsub.s32 6, %v116
    %v118 = vrot.slane %v21, %v117
    %v119 = vlaneseq
    %v120 = vshrl.u32 %v119, 7
    %v121 = vsub.s32 7, %v120
    %v122 = vrot.slane %v21, %v121
    %v123 = vlaneseq
    %v124 = vshrl.u32 %v123, 7
    %v125 = vsub.s32 0, %v124
    %v126 = vrot.slane %v22, %v125
    %v127 = vlaneseq
    %v128 = vshrl.u32 %v127, 7
    %v129 = vsub.s32 1, %v128
    %v130 = vrot.slane %v22, %v129
    %v131 = vlaneseq
    %v132 = vshrl.u32 %v131, 7
    %v133 = vsub.s32 2, %v132
    %v134 = vrot.slane %v22, %v133
    %v135 = vlaneseq
    %v136 = vshrl.u32 %v135, 7
    %v137 = vsub.s32 3, %v136
    %v138 = vrot.slane %v22, %v137
    %v139 = vlaneseq
    %v140 = vshrl.u32 %v139, 7
    %v141 = vsub.s32 4, %v140
    %v142 = vrot.slane %v22, %v141
    %v143 = vlaneseq
    %v144 = vshrl.u32 %v143, 7
    %v145 = vsub.s32 5, %v144
    %v146 = vrot.slane %v22, %v145
    %v147 = vlaneseq
    %v148 = vshrl.u32 %v147, 7
    %v149 = vsub.s32 6, %v148
    %v150 = vrot.slane %v22, %v149
    %v151 = vlaneseq
    %v152 = vshrl.u32 %v151, 7
    %v153 = vsub.s32 7, %v152
    %v154 = vrot.slane %v22, %v153
    %v155 = vcombine.low %v30, %v34
    %v156 = vcombine.low %v38, %v42
    %v158 = vunpack.c.l.s4 1983009808
    %v159 = vunpack.c.0.s8 %v158
    %v160 = vlaneseq
    %v161 = vshrl.u32 %v160, 7
    %v162 = vsub.s32 %v159, %v161
    %v163 = vrot.slane %v155, %v162
    %v165 = vunpack.c.l.s4 1983009808
    %v166 = vunpack.c.0.s8 %v165
    %v167 = vlaneseq
    %v168 = vshrl.u32 %v167, 7
    %v169 = vsub.s32 %v166, %v168
    %v170 = vrot.slane %v156, %v169
    %v171 = vcombine.low %v163, %v170
    %v172 = vcombine.low %v46, %v50
    %v173 = vcombine.low %v54, %v58
    %v175 = vunpack.c.l.s4 1983009808
    %v176 = vunpack.c.0.s8 %v175
    %v177 = vlaneseq
    %v178 = vshrl.u32 %v177, 7
    %v179 = vsub.s32 %v176, %v178
    %v180 = vrot.slane %v172, %v179
    %v182 = vunpack.c.l.s4 1983009808
    %v183 = vunpack.c.0.s8 %v182
    %v184 = vlaneseq
    %v185 = vshrl.u32 %v184, 7
    %v186 = vsub.s32 %v183, %v185
    %v187 = vrot.slane %v173, %v186
    %v188 = vcombine.low %v180, %v187
    %v189 = vcombine.low %v62, %v66
    %v190 = vcombine.low %v70, %v74
    %v192 = vunpack.c.l.s4 1983009808
    %v193 = vunpack.c.0.s8 %v192
    %v194 = vlaneseq
    %v195 = vshrl.u32 %v194, 7
    %v196 = vsub.s32 %v193, %v195
    %v197 = vrot.slane %v189, %v196
    %v199 = vunpack.c.l.s4 1983009808
    %v200 = vunpack.c.0.s8 %v199
    %v201 = vlaneseq
    %v202 = vshrl.u32 %v201, 7
    %v203 = vsub.s32 %v200, %v202
    %v204 = vrot.slane %v190, %v203
    %v205 = vcombine.low %v197, %v204
    %v206 = vcombine.low %v78, %v82
    %v207 = vcombine.low %v86, %v90
    %v209 = vunpack.c.l.s4 1983009808
    %v210 = vunpack.c.0.s8 %v209
    %v211 = vlaneseq
    %v212 = vshrl.u32 %v211, 7
    %v213 = vsub.s32 %v210, %v212
    %v214 = vrot.slane %v206, %v213
    %v216 = vunpack.c.l.s4 1983009808
    %v217 = vunpack.c.0.s8 %v216
    %v218 = vlaneseq
    %v219 = vshrl.u32 %v218, 7
    %v220 = vsub.s32 %v217, %v219
    %v221 = vrot.slane %v207, %v220
    %v222 = vcombine.low %v214, %v221
    %v223 = vcombine.low %v94, %v98
    %v224 = vcombine.low %v102, %v106
    %v226 = vunpack.c.l.s4 1983009808
    %v227 = vunpack.c.0.s8 %v226
    %v228 = vlaneseq
    %v229 = vshrl.u32 %v228, 7
    %v230 = vsub.s32 %v227, %v229
    %v231 = vrot.slane %v223, %v230
    %v233 = vunpack.c.l.s4 1983009808
    %v234 = vunpack.c.0.s8 %v233
    %v235 = vlaneseq
    %v236 = vshrl.u32 %v235, 7
    %v237 = vsub.s32 %v234, %v236
    %v238 = vrot.slane %v224, %v237
    %v239 = vcombine.low %v231, %v238
    %v240 = vcombine.low %v110, %v114
    %v241 = vcombine.low %v118, %v122
    %v243 = vunpack.c.l.s4 1983009808
    %v244 = vunpack.c.0.s8 %v243
    %v245 = vlaneseq
    %v246 = vshrl.u32 %v245, 7
    %v247 = vsub.s32 %v244, %v246
    %v248 = vrot.slane %v240, %v247
    %v250 = vunpack.c.l.s4 1983009808
    %v251 = vunpack.c.0.s8 %v250
    %v252 = vlaneseq
    %v253 = vshrl.u32 %v252, 7
    %v254 = vsub.s32 %v251, %v253
    %v255 = vrot.slane %v241, %v254
    %v256 = vcombine.low %v248, %v255
    %v257 = vcombine.low %v126, %v130
    %v258 = vcombine.low %v134, %v138
    %v260 = vunpack.c.l.s4 1983009808
    %v261 = vunpack.c.0.s8 %v260
    %v262 = vlaneseq
    %v263 = vshrl.u32 %v262, 7
    %v264 = vsub.s32 %v261, %v263
    %v265 = vrot.slane %v257, %v264
    %v267 = vunpack.c.l.s4 1983009808
    %v268 = vunpack.c.0.s8 %v267
    %v269 = vlaneseq
    %v270 = vshrl.u32 %v269, 7
    %v271 = vsub.s32 %v268, %v270
    %v272 = vrot.slane %v258, %v271
    %v273 = vcombine.low %v265, %v272
    %v274 = vcombine.low %v142, %v146
    %v275 = vcombine.low %v150, %v154
    %v277 = vunpack.c.l.s4 1983009808
    %v278 = vunpack.c.0.s8 %v277
    %v279 = vlaneseq
    %v280 = vshrl.u32 %v279, 7
    %v281 = vsub.s32 %v278, %v280
    %v282 = vrot.slane %v274, %v281
    %v284 = vunpack.c.l.s4 1983009808
    %v285 = vunpack.c.0.s8 %v284
    %v286 = vlaneseq
    %v287 = vshrl.u32 %v286, 7
    %v288 = vsub.s32 %v285, %v287
    %v289 = vrot.slane %v275, %v288
    %v290 = vcombine.low %v282, %v289
    %299 = vst [vmem:[%s3] sm:$0xff] %v171
    %300 = vst [vmem:[%s3 + $0x8] sm:$0xff] %v188
    %301 = vst [vmem:[%s3 + $0x10] sm:$0xff] %v205
    %302 = vst [vmem:[%s3 + $0x18] sm:$0xff] %v222
    %303 = vst [vmem:[%s3 + $0x20] sm:$0xff] %v239
    %304 = vst [vmem:[%s3 + $0x28] sm:$0xff] %v256
    %305 = vst [vmem:[%s3 + $0x30] sm:$0xff] %v273
    %306 = vst [vmem:[%s3 + $0x38] sm:$0xff] %v290
  $region17: #{_lambda_.45} parent=0 // pred_fallthru
    _
  %v307 = vld [vmem:[%s3] sm:$0xff]
  %v308 = vld [vmem:[%s3 + $0x8] sm:$0xff]
  %v309 = vld [vmem:[%s3 + $0x10] sm:$0xff]
  %v310 = vld [vmem:[%s3 + $0x18] sm:$0xff]
  %v311 = vld [vmem:[%s3 + $0x20] sm:$0xff]
  %v312 = vld [vmem:[%s3 + $0x28] sm:$0xff]
  %v313 = vld [vmem:[%s3 + $0x30] sm:$0xff]
  %v314 = vld [vmem:[%s3 + $0x38] sm:$0xff]
  %v315 = vld [vmem:[%s0] sm:$0x1]
  %v316 = vld [vmem:[%s1] sm:$0xff]
  %v317 = vld [vmem:[%s1 + $0x8] sm:$0xff]
  %v318 = vld [vmem:[%s1 + $0x10] sm:$0xff]
  %v319 = vld [vmem:[%s1 + $0x18] sm:$0xff]
  %v320 = vld [vmem:[%s1 + $0x20] sm:$0xff]
  %v321 = vld [vmem:[%s1 + $0x28] sm:$0xff]
  %v322 = vld [vmem:[%s1 + $0x30] sm:$0xff]
  %v323 = vld [vmem:[%s1 + $0x38] sm:$0xff]
  %v324 = vld [vmem:[%s1 + $0x40] sm:$0xff]
  %v325 = vld [vmem:[%s1 + $0x48] sm:$0xff]
  %v326 = vld [vmem:[%s1 + $0x50] sm:$0xff]
  %v327 = vld [vmem:[%s1 + $0x58] sm:$0xff]
  %v328 = vld [vmem:[%s1 + $0x60] sm:$0xff]
  %v329 = vld [vmem:[%s1 + $0x68] sm:$0xff]
  %v330 = vld [vmem:[%s1 + $0x70] sm:$0xff]
  %v331 = vld [vmem:[%s1 + $0x78] sm:$0xff]
  %v332 = vld [vmem:[%s1 + $0x80] sm:$0xff]
  %v333 = vld [vmem:[%s1 + $0x88] sm:$0xff]
  %v334 = vld [vmem:[%s1 + $0x90] sm:$0xff]
  %v335 = vld [vmem:[%s1 + $0x98] sm:$0xff]
  %v336 = vld [vmem:[%s1 + $0xa0] sm:$0xff]
  %v337 = vld [vmem:[%s1 + $0xa8] sm:$0xff]
  %v338 = vld [vmem:[%s1 + $0xb0] sm:$0xff]
  %v339 = vld [vmem:[%s1 + $0xb8] sm:$0xff]
  %v340 = vld [vmem:[%s1 + $0xc0] sm:$0xff]
  %v341 = vld [vmem:[%s1 + $0xc8] sm:$0xff]
  %v342 = vld [vmem:[%s1 + $0xd0] sm:$0xff]
  %v343 = vld [vmem:[%s1 + $0xd8] sm:$0xff]
  %v344 = vld [vmem:[%s1 + $0xe0] sm:$0xff]
  %v345 = vld [vmem:[%s1 + $0xe8] sm:$0xff]
  %v346 = vld [vmem:[%s1 + $0xf0] sm:$0xff]
  %v347 = vld [vmem:[%s1 + $0xf8] sm:$0xff]
  %v348 = vld [vmem:[%s1 + $0x100] sm:$0xff]
  %v349 = vld [vmem:[%s1 + $0x108] sm:$0xff]
  %v350 = vld [vmem:[%s1 + $0x110] sm:$0xff]
  %v351 = vld [vmem:[%s1 + $0x118] sm:$0xff]
  %v352 = vld [vmem:[%s1 + $0x120] sm:$0xff]
  %v353 = vld [vmem:[%s1 + $0x128] sm:$0xff]
  %v354 = vld [vmem:[%s1 + $0x130] sm:$0xff]
  %v355 = vld [vmem:[%s1 + $0x138] sm:$0xff]
  %v356 = vld [vmem:[%s1 + $0x140] sm:$0xff]
  %v357 = vld [vmem:[%s1 + $0x148] sm:$0xff]
  %v358 = vld [vmem:[%s1 + $0x150] sm:$0xff]
  %v359 = vld [vmem:[%s1 + $0x158] sm:$0xff]
  %v360 = vld [vmem:[%s1 + $0x160] sm:$0xff]
  %v361 = vld [vmem:[%s1 + $0x168] sm:$0xff]
  %v362 = vld [vmem:[%s1 + $0x170] sm:$0xff]
  %v363 = vld [vmem:[%s1 + $0x178] sm:$0xff]
  %v364 = vld [vmem:[%s1 + $0x180] sm:$0xff]
  %v365 = vld [vmem:[%s1 + $0x188] sm:$0xff]
  %v366 = vld [vmem:[%s1 + $0x190] sm:$0xff]
  %v367 = vld [vmem:[%s1 + $0x198] sm:$0xff]
  %v368 = vld [vmem:[%s1 + $0x1a0] sm:$0xff]
  %v369 = vld [vmem:[%s1 + $0x1a8] sm:$0xff]
  %v370 = vld [vmem:[%s1 + $0x1b0] sm:$0xff]
  %v371 = vld [vmem:[%s1 + $0x1b8] sm:$0xff]
  %v372 = vld [vmem:[%s1 + $0x1c0] sm:$0xff]
  %v373 = vld [vmem:[%s1 + $0x1c8] sm:$0xff]
  %v374 = vld [vmem:[%s1 + $0x1d0] sm:$0xff]
  %v375 = vld [vmem:[%s1 + $0x1d8] sm:$0xff]
  %v376 = vld [vmem:[%s1 + $0x1e0] sm:$0xff]
  %v377 = vld [vmem:[%s1 + $0x1e8] sm:$0xff]
  %v378 = vld [vmem:[%s1 + $0x1f0] sm:$0xff]
  %v379 = vld [vmem:[%s1 + $0x1f8] sm:$0xff]
  %v444 = vunpack.c.l.b16 %v316
  %v445 = vunpack.c.h.b16 %v316
  %v446 = vunpack.c.l.b16 %v317
  %v447 = vunpack.c.h.b16 %v317
  %v448 = vunpack.c.l.b16 %v318
  %v449 = vunpack.c.h.b16 %v318
  %v450 = vunpack.c.l.b16 %v319
  %v451 = vunpack.c.h.b16 %v319
  %v452 = vunpack.c.l.b16 %v320
  %v453 = vunpack.c.h.b16 %v320
  %v454 = vunpack.c.l.b16 %v321
  %v455 = vunpack.c.h.b16 %v321
  %v456 = vunpack.c.l.b16 %v322
  %v457 = vunpack.c.h.b16 %v322
  %v458 = vunpack.c.l.b16 %v323
  %v459 = vunpack.c.h.b16 %v323
  %v460 = vunpack.c.l.b16 %v324
  %v461 = vunpack.c.h.b16 %v324
  %v462 = vunpack.c.l.b16 %v325
  %v463 = vunpack.c.h.b16 %v325
  %v464 = vunpack.c.l.b16 %v326
  %v465 = vunpack.c.h.b16 %v326
  %v466 = vunpack.c.l.b16 %v327
  %v467 = vunpack.c.h.b16 %v327
  %v468 = vunpack.c.l.b16 %v328
  %v469 = vunpack.c.h.b16 %v328
  %v470 = vunpack.c.l.b16 %v329
  %v471 = vunpack.c.h.b16 %v329
  %v472 = vunpack.c.l.b16 %v330
  %v473 = vunpack.c.h.b16 %v330
  %v474 = vunpack.c.l.b16 %v331
  %v475 = vunpack.c.h.b16 %v331
  %v476 = vunpack.c.l.b16 %v332
  %v477 = vunpack.c.h.b16 %v332
  %v478 = vunpack.c.l.b16 %v333
  %v479 = vunpack.c.h.b16 %v333
  %v480 = vunpack.c.l.b16 %v334
  %v481 = vunpack.c.h.b16 %v334
  %v482 = vunpack.c.l.b16 %v335
  %v483 = vunpack.c.h.b16 %v335
  %v484 = vunpack.c.l.b16 %v336
  %v485 = vunpack.c.h.b16 %v336
  %v486 = vunpack.c.l.b16 %v337
  %v487 = vunpack.c.h.b16 %v337
  %v488 = vunpack.c.l.b16 %v338
  %v489 = vunpack.c.h.b16 %v338
  %v490 = vunpack.c.l.b16 %v339
  %v491 = vunpack.c.h.b16 %v339
  %v492 = vunpack.c.l.b16 %v340
  %v493 = vunpack.c.h.b16 %v340
  %v494 = vunpack.c.l.b16 %v341
  %v495 = vunpack.c.h.b16 %v341
  %v496 = vunpack.c.l.b16 %v342
  %v497 = vunpack.c.h.b16 %v342
  %v498 = vunpack.c.l.b16 %v343
  %v499 = vunpack.c.h.b16 %v343
  %v500 = vunpack.c.l.b16 %v344
  %v501 = vunpack.c.h.b16 %v344
  %v502 = vunpack.c.l.b16 %v345
  %v503 = vunpack.c.h.b16 %v345
  %v504 = vunpack.c.l.b16 %v346
  %v505 = vunpack.c.h.b16 %v346
  %v506 = vunpack.c.l.b16 %v347
  %v507 = vunpack.c.h.b16 %v347
  %v508 = vunpack.c.l.b16 %v348
  %v509 = vunpack.c.h.b16 %v348
  %v510 = vunpack.c.l.b16 %v349
  %v511 = vunpack.c.h.b16 %v349
  %v512 = vunpack.c.l.b16 %v350
  %v513 = vunpack.c.h.b16 %v350
  %v514 = vunpack.c.l.b16 %v351
  %v515 = vunpack.c.h.b16 %v351
  %v516 = vunpack.c.l.b16 %v352
  %v517 = vunpack.c.h.b16 %v352
  %v518 = vunpack.c.l.b16 %v353
  %v519 = vunpack.c.h.b16 %v353
  %v520 = vunpack.c.l.b16 %v354
  %v521 = vunpack.c.h.b16 %v354
  %v522 = vunpack.c.l.b16 %v355
  %v523 = vunpack.c.h.b16 %v355
  %v524 = vunpack.c.l.b16 %v356
  %v525 = vunpack.c.h.b16 %v356
  %v526 = vunpack.c.l.b16 %v357
  %v527 = vunpack.c.h.b16 %v357
  %v528 = vunpack.c.l.b16 %v358
  %v529 = vunpack.c.h.b16 %v358
  %v530 = vunpack.c.l.b16 %v359
  %v531 = vunpack.c.h.b16 %v359
  %v532 = vunpack.c.l.b16 %v360
  %v533 = vunpack.c.h.b16 %v360
  %v534 = vunpack.c.l.b16 %v361
  %v535 = vunpack.c.h.b16 %v361
  %v536 = vunpack.c.l.b16 %v362
  %v537 = vunpack.c.h.b16 %v362
  %v538 = vunpack.c.l.b16 %v363
  %v539 = vunpack.c.h.b16 %v363
  %v540 = vunpack.c.l.b16 %v364
  %v541 = vunpack.c.h.b16 %v364
  %v542 = vunpack.c.l.b16 %v365
  %v543 = vunpack.c.h.b16 %v365
  %v544 = vunpack.c.l.b16 %v366
  %v545 = vunpack.c.h.b16 %v366
  %v546 = vunpack.c.l.b16 %v367
  %v547 = vunpack.c.h.b16 %v367
  %v548 = vunpack.c.l.b16 %v368
  %v549 = vunpack.c.h.b16 %v368
  %v550 = vunpack.c.l.b16 %v369
  %v551 = vunpack.c.h.b16 %v369
  %v552 = vunpack.c.l.b16 %v370
  %v553 = vunpack.c.h.b16 %v370
  %v554 = vunpack.c.l.b16 %v371
  %v555 = vunpack.c.h.b16 %v371
  %v556 = vunpack.c.l.b16 %v372
  %v557 = vunpack.c.h.b16 %v372
  %v558 = vunpack.c.l.b16 %v373
  %v559 = vunpack.c.h.b16 %v373
  %v560 = vunpack.c.l.b16 %v374
  %v561 = vunpack.c.h.b16 %v374
  %v562 = vunpack.c.l.b16 %v375
  %v563 = vunpack.c.h.b16 %v375
  %v564 = vunpack.c.l.b16 %v376
  %v565 = vunpack.c.h.b16 %v376
  %v566 = vunpack.c.l.b16 %v377
  %v567 = vunpack.c.h.b16 %v377
  %v568 = vunpack.c.l.b16 %v378
  %v569 = vunpack.c.h.b16 %v378
  %v570 = vunpack.c.l.b16 %v379
  %v571 = vunpack.c.h.b16 %v379
  %v572 = vpack.c.b16 %v476, %v444
  %v573 = vpack.c.b16 %v477, %v445
  %v574 = vpack.c.b16 %v478, %v446
  %v575 = vpack.c.b16 %v479, %v447
  %v576 = vpack.c.b16 %v480, %v448
  %v577 = vpack.c.b16 %v481, %v449
  %v578 = vpack.c.b16 %v482, %v450
  %v579 = vpack.c.b16 %v483, %v451
  %v580 = vpack.c.b16 %v484, %v452
  %v581 = vpack.c.b16 %v485, %v453
  %v582 = vpack.c.b16 %v486, %v454
  %v583 = vpack.c.b16 %v487, %v455
  %v584 = vpack.c.b16 %v488, %v456
  %v585 = vpack.c.b16 %v489, %v457
  %v586 = vpack.c.b16 %v490, %v458
  %v587 = vpack.c.b16 %v491, %v459
  %v588 = vpack.c.b16 %v492, %v460
  %v589 = vpack.c.b16 %v493, %v461
  %v590 = vpack.c.b16 %v494, %v462
  %v591 = vpack.c.b16 %v495, %v463
  %v592 = vpack.c.b16 %v496, %v464
  %v593 = vpack.c.b16 %v497, %v465
  %v594 = vpack.c.b16 %v498, %v466
  %v595 = vpack.c.b16 %v499, %v467
  %v596 = vpack.c.b16 %v500, %v468
  %v597 = vpack.c.b16 %v501, %v469
  %v598 = vpack.c.b16 %v502, %v470
  %v599 = vpack.c.b16 %v503, %v471
  %v600 = vpack.c.b16 %v504, %v472
  %v601 = vpack.c.b16 %v505, %v473
  %v602 = vpack.c.b16 %v506, %v474
  %v603 = vpack.c.b16 %v507, %v475
  %v604 = vpack.c.b16 %v540, %v508
  %v605 = vpack.c.b16 %v541, %v509
  %v606 = vpack.c.b16 %v542, %v510
  %v607 = vpack.c.b16 %v543, %v511
  %v608 = vpack.c.b16 %v544, %v512
  %v609 = vpack.c.b16 %v545, %v513
  %v610 = vpack.c.b16 %v546, %v514
  %v611 = vpack.c.b16 %v547, %v515
  %v612 = vpack.c.b16 %v548, %v516
  %v613 = vpack.c.b16 %v549, %v517
  %v614 = vpack.c.b16 %v550, %v518
  %v615 = vpack.c.b16 %v551, %v519
  %v616 = vpack.c.b16 %v552, %v520
  %v617 = vpack.c.b16 %v553, %v521
  %v618 = vpack.c.b16 %v554, %v522
  %v619 = vpack.c.b16 %v555, %v523
  %v620 = vpack.c.b16 %v556, %v524
  %v621 = vpack.c.b16 %v557, %v525
  %v622 = vpack.c.b16 %v558, %v526
  %v623 = vpack.c.b16 %v559, %v527
  %v624 = vpack.c.b16 %v560, %v528
  %v625 = vpack.c.b16 %v561, %v529
  %v626 = vpack.c.b16 %v562, %v530
  %v627 = vpack.c.b16 %v563, %v531
  %v628 = vpack.c.b16 %v564, %v532
  %v629 = vpack.c.b16 %v565, %v533
  %v630 = vpack.c.b16 %v566, %v534
  %v631 = vpack.c.b16 %v567, %v535
  %v632 = vpack.c.b16 %v568, %v536
  %v633 = vpack.c.b16 %v569, %v537
  %v634 = vpack.c.b16 %v570, %v538
  %v635 = vpack.c.b16 %v571, %v539
  %vm700 = vcmask 261120
  %v702 = vsel %vm700, %v315, 0
  %704 = vmatprep.subr.bf16.mxu0 %v573
  %705 = vmatpush1.bf16.msra.mxu0 %v572
  %706 = vmatprep.subr.bf16.mxu0 %v605
  %707 = vmatpush1.bf16.msra.mxu0 %v604
  %708 = vmatprep.subr.bf16.mxu0 0
  %709 = vmatpush1.bf16.msra.mxu0 0
  %710 = vmatprep.subr.bf16.mxu0 0
  %711 = vmatpush1.bf16.msra.mxu0 0
  %712 = vmatprep.subr.bf16.mxu0 0
  %713 = vmatpush1.bf16.msra.mxu0 0
  %714 = vmatprep.subr.bf16.mxu0 0
  %715 = vmatpush1.bf16.msra.mxu0 0
  %716 = vmatprep.subr.bf16.mxu0 0
  %717 = vmatpush1.bf16.msra.mxu0 0
  %718 = vmatprep.subr.bf16.mxu0 0
  %719 = vmatpush1.bf16.msra.mxu0 0
  %720 = vmatprep.subr.bf16.mxu0 0
  %721 = vmatpush1.bf16.msra.mxu0 0
  %722 = vmatprep.subr.bf16.mxu0 0
  %723 = vmatpush1.bf16.msra.mxu0 0
  %724 = vmatprep.subr.bf16.mxu0 0
  %725 = vmatpush1.bf16.msra.mxu0 0
  %726 = vmatprep.subr.bf16.mxu0 0
  %727 = vmatpush1.bf16.msra.mxu0 0
  %728 = vmatprep.subr.bf16.mxu0 0
  %729 = vmatpush1.bf16.msra.mxu0 0
  %730 = vmatprep.subr.bf16.mxu0 0
  %731 = vmatpush1.bf16.msra.mxu0 0
  %732 = vmatprep.subr.bf16.mxu0 0
  %733 = vmatpush1.bf16.msra.mxu0 0
  %734 = vmatprep.subr.bf16.mxu0 0
  %735 = vmatpush1.bf16.msra.mxu0 0
  %736 = vmatprep.mubr.bf16.mxu0 0
  %737 = vmatmul.mubr.bf16.gmra.mrb[0].mxu0 %v702
  %v738 = vpop.f32.mrb[0].mxu0
  %v739 = vadd.f32 0.0, %v738
  %v740 = vpop.f32.mrb[0].mxu0
  %v741 = vadd.f32 0.0, %v740
  %v742 = vpop.f32.mrb[0].mxu0
  %v743 = vpop.f32.mrb[0].mxu0
  %744 = vdwg.mxu0
  %745 = vmatprep.subr.bf16.mxu0 %v575
  %746 = vmatpush1.bf16.msra.mxu0 %v574
  %747 = vmatprep.subr.bf16.mxu0 %v607
  %748 = vmatpush1.bf16.msra.mxu0 %v606
  %749 = vmatprep.subr.bf16.mxu0 0
  %750 = vmatpush1.bf16.msra.mxu0 0
  %751 = vmatprep.subr.bf16.mxu0 0
  %752 = vmatpush1.bf16.msra.mxu0 0
  %753 = vmatprep.subr.bf16.mxu0 0
  %754 = vmatpush1.bf16.msra.mxu0 0
  %755 = vmatprep.subr.bf16.mxu0 0
  %756 = vmatpush1.bf16.msra.mxu0 0
  %757 = vmatprep.subr.bf16.mxu0 0
  %758 = vmatpush1.bf16.msra.mxu0 0
  %759 = vmatprep.subr.bf16.mxu0 0
  %760 = vmatpush1.bf16.msra.mxu0 0
  %761 = vmatprep.subr.bf16.mxu0 0
  %762 = vmatpush1.bf16.msra.mxu0 0
  %763 = vmatprep.subr.bf16.mxu0 0
  %764 = vmatpush1.bf16.msra.mxu0 0
  %765 = vmatprep.subr.bf16.mxu0 0
  %766 = vmatpush1.bf16.msra.mxu0 0
  %767 = vmatprep.subr.bf16.mxu0 0
  %768 = vmatpush1.bf16.msra.mxu0 0
  %769 = vmatprep.subr.bf16.mxu0 0
  %770 = vmatpush1.bf16.msra.mxu0 0
  %771 = vmatprep.subr.bf16.mxu0 0
  %772 = vmatpush1.bf16.msra.mxu0 0
  %773 = vmatprep.subr.bf16.mxu0 0
  %774 = vmatpush1.bf16.msra.mxu0 0
  %775 = vmatprep.subr.bf16.mxu0 0
  %776 = vmatpush1.bf16.msra.mxu0 0
  %777 = vmatprep.mubr.bf16.mxu0 0
  %778 = vmatmul.mubr.bf16.gmra.mrb[0].mxu0 %v702
  %v779 = vpop.f32.mrb[0].mxu0
  %v780 = vadd.f32 0.0, %v779
  %v781 = vpop.f32.mrb[0].mxu0
  %v782 = vadd.f32 0.0, %v781
  %v783 = vpop.f32.mrb[0].mxu0
  %v784 = vpop.f32.mrb[0].mxu0
  %785 = vdwg.mxu0
  %786 = vmatprep.subr.bf16.mxu0 %v577
  %787 = vmatpush1.bf16.msra.mxu0 %v576
  %788 = vmatprep.subr.bf16.mxu0 %v609
  %789 = vmatpush1.bf16.msra.mxu0 %v608
  %790 = vmatprep.subr.bf16.mxu0 0
  %791 = vmatpush1.bf16.msra.mxu0 0
  %792 = vmatprep.subr.bf16.mxu0 0
  %793 = vmatpush1.bf16.msra.mxu0 0
  %794 = vmatprep.subr.bf16.mxu0 0
  %795 = vmatpush1.bf16.msra.mxu0 0
  %796 = vmatprep.subr.bf16.mxu0 0
  %797 = vmatpush1.bf16.msra.mxu0 0
  %798 = vmatprep.subr.bf16.mxu0 0
  %799 = vmatpush1.bf16.msra.mxu0 0
  %800 = vmatprep.subr.bf16.mxu0 0
  %801 = vmatpush1.bf16.msra.mxu0 0
  %802 = vmatprep.subr.bf16.mxu0 0
  %803 = vmatpush1.bf16.msra.mxu0 0
  %804 = vmatprep.subr.bf16.mxu0 0
  %805 = vmatpush1.bf16.msra.mxu0 0
  %806 = vmatprep.subr.bf16.mxu0 0
  %807 = vmatpush1.bf16.msra.mxu0 0
  %808 = vmatprep.subr.bf16.mxu0 0
  %809 = vmatpush1.bf16.msra.mxu0 0
  %810 = vmatprep.subr.bf16.mxu0 0
  %811 = vmatpush1.bf16.msra.mxu0 0
  %812 = vmatprep.subr.bf16.mxu0 0
  %813 = vmatpush1.bf16.msra.mxu0 0
  %814 = vmatprep.subr.bf16.mxu0 0
  %815 = vmatpush1.bf16.msra.mxu0 0
  %816 = vmatprep.subr.bf16.mxu0 0
  %817 = vmatpush1.bf16.msra.mxu0 0
  %818 = vmatprep.mubr.bf16.mxu0 0
  %819 = vmatmul.mubr.bf16.gmra.mrb[0].mxu0 %v702
  %v820 = vpop.f32.mrb[0].mxu0
  %v821 = vadd.f32 0.0, %v820
  %v822 = vpop.f32.mrb[0].mxu0
  %v823 = vadd.f32 0.0, %v822
  %v824 = vpop.f32.mrb[0].mxu0
  %v825 = vpop.f32.mrb[0].mxu0
  %826 = vdwg.mxu0
  %827 = vmatprep.subr.bf16.mxu0 %v579
  %828 = vmatpush1.bf16.msra.mxu0 %v578
  %829 = vmatprep.subr.bf16.mxu0 %v611
  %830 = vmatpush1.bf16.msra.mxu0 %v610
  %831 = vmatprep.subr.bf16.mxu0 0
  %832 = vmatpush1.bf16.msra.mxu0 0
  %833 = vmatprep.subr.bf16.mxu0 0
  %834 = vmatpush1.bf16.msra.mxu0 0
  %835 = vmatprep.subr.bf16.mxu0 0
  %836 = vmatpush1.bf16.msra.mxu0 0
  %837 = vmatprep.subr.bf16.mxu0 0
  %838 = vmatpush1.bf16.msra.mxu0 0
  %839 = vmatprep.subr.bf16.mxu0 0
  %840 = vmatpush1.bf16.msra.mxu0 0
  %841 = vmatprep.subr.bf16.mxu0 0
  %842 = vmatpush1.bf16.msra.mxu0 0
  %843 = vmatprep.subr.bf16.mxu0 0
  %844 = vmatpush1.bf16.msra.mxu0 0
  %845 = vmatprep.subr.bf16.mxu0 0
  %846 = vmatpush1.bf16.msra.mxu0 0
  %847 = vmatprep.subr.bf16.mxu0 0
  %848 = vmatpush1.bf16.msra.mxu0 0
  %849 = vmatprep.subr.bf16.mxu0 0
  %850 = vmatpush1.bf16.msra.mxu0 0
  %851 = vmatprep.subr.bf16.mxu0 0
  %852 = vmatpush1.bf16.msra.mxu0 0
  %853 = vmatprep.subr.bf16.mxu0 0
  %854 = vmatpush1.bf16.msra.mxu0 0
  %855 = vmatprep.subr.bf16.mxu0 0
  %856 = vmatpush1.bf16.msra.mxu0 0
  %857 = vmatprep.subr.bf16.mxu0 0
  %858 = vmatpush1.bf16.msra.mxu0 0
  %859 = vmatprep.mubr.bf16.mxu0 0
  %860 = vmatmul.mubr.bf16.gmra.mrb[0].mxu0 %v702
  %v861 = vpop.f32.mrb[0].mxu0
  %v862 = vadd.f32 0.0, %v861
  %v863 = vpop.f32.mrb[0].mxu0
  %v864 = vadd.f32 0.0, %v863
  %v865 = vpop.f32.mrb[0].mxu0
  %v866 = vpop.f32.mrb[0].mxu0
  %867 = vdwg.mxu0
  %868 = vmatprep.subr.bf16.mxu0 %v581
  %869 = vmatpush1.bf16.msra.mxu0 %v580
  %870 = vmatprep.subr.bf16.mxu0 %v613
  %871 = vmatpush1.bf16.msra.mxu0 %v612
  %872 = vmatprep.subr.bf16.mxu0 0
  %873 = vmatpush1.bf16.msra.mxu0 0
  %874 = vmatprep.subr.bf16.mxu0 0
  %875 = vmatpush1.bf16.msra.mxu0 0
  %876 = vmatprep.subr.bf16.mxu0 0
  %877 = vmatpush1.bf16.msra.mxu0 0
  %878 = vmatprep.subr.bf16.mxu0 0
  %879 = vmatpush1.bf16.msra.mxu0 0
  %880 = vmatprep.subr.bf16.mxu0 0
  %881 = vmatpush1.bf16.msra.mxu0 0
  %882 = vmatprep.subr.bf16.mxu0 0
  %883 = vmatpush1.bf16.msra.mxu0 0
  %884 = vmatprep.subr.bf16.mxu0 0
  %885 = vmatpush1.bf16.msra.mxu0 0
  %886 = vmatprep.subr.bf16.mxu0 0
  %887 = vmatpush1.bf16.msra.mxu0 0
  %888 = vmatprep.subr.bf16.mxu0 0
  %889 = vmatpush1.bf16.msra.mxu0 0
  %890 = vmatprep.subr.bf16.mxu0 0
  %891 = vmatpush1.bf16.msra.mxu0 0
  %892 = vmatprep.subr.bf16.mxu0 0
  %893 = vmatpush1.bf16.msra.mxu0 0
  %894 = vmatprep.subr.bf16.mxu0 0
  %895 = vmatpush1.bf16.msra.mxu0 0
  %896 = vmatprep.subr.bf16.mxu0 0
  %897 = vmatpush1.bf16.msra.mxu0 0
  %898 = vmatprep.subr.bf16.mxu0 0
  %899 = vmatpush1.bf16.msra.mxu0 0
  %900 = vmatprep.mubr.bf16.mxu0 0
  %901 = vmatmul.mubr.bf16.gmra.mrb[0].mxu0 %v702
  %v902 = vpop.f32.mrb[0].mxu0
  %v903 = vadd.f32 0.0, %v902
  %v904 = vpop.f32.mrb[0].mxu0
  %v905 = vadd.f32 0.0, %v904
  %v906 = vpop.f32.mrb[0].mxu0
  %v907 = vpop.f32.mrb[0].mxu0
  %908 = vdwg.mxu0
  %909 = vmatprep.subr.bf16.mxu0 %v583
  %910 = vmatpush1.bf16.msra.mxu0 %v582
  %911 = vmatprep.subr.bf16.mxu0 %v615
  %912 = vmatpush1.bf16.msra.mxu0 %v614
  %913 = vmatprep.subr.bf16.mxu0 0
  %914 = vmatpush1.bf16.msra.mxu0 0
  %915 = vmatprep.subr.bf16.mxu0 0
  %916 = vmatpush1.bf16.msra.mxu0 0
  %917 = vmatprep.subr.bf16.mxu0 0
  %918 = vmatpush1.bf16.msra.mxu0 0
  %919 = vmatprep.subr.bf16.mxu0 0
  %920 = vmatpush1.bf16.msra.mxu0 0
  %921 = vmatprep.subr.bf16.mxu0 0
  %922 = vmatpush1.bf16.msra.mxu0 0
  %923 = vmatprep.subr.bf16.mxu0 0
  %924 = vmatpush1.bf16.msra.mxu0 0
  %925 = vmatprep.subr.bf16.mxu0 0
  %926 = vmatpush1.bf16.msra.mxu0 0
  %927 = vmatprep.subr.bf16.mxu0 0
  %928 = vmatpush1.bf16.msra.mxu0 0
  %929 = vmatprep.subr.bf16.mxu0 0
  %930 = vmatpush1.bf16.msra.mxu0 0
  %931 = vmatprep.subr.bf16.mxu0 0
  %932 = vmatpush1.bf16.msra.mxu0 0
  %933 = vmatprep.subr.bf16.mxu0 0
  %934 = vmatpush1.bf16.msra.mxu0 0
  %935 = vmatprep.subr.bf16.mxu0 0
  %936 = vmatpush1.bf16.msra.mxu0 0
  %937 = vmatprep.subr.bf16.mxu0 0
  %938 = vmatpush1.bf16.msra.mxu0 0
  %939 = vmatprep.subr.bf16.mxu0 0
  %940 = vmatpush1.bf16.msra.mxu0 0
  %941 = vmatprep.mubr.bf16.mxu0 0
  %942 = vmatmul.mubr.bf16.gmra.mrb[0].mxu0 %v702
  %v943 = vpop.f32.mrb[0].mxu0
  %v944 = vadd.f32 0.0, %v943
  %v945 = vpop.f32.mrb[0].mxu0
  %v946 = vadd.f32 0.0, %v945
  %v947 = vpop.f32.mrb[0].mxu0
  %v948 = vpop.f32.mrb[0].mxu0
  %949 = vdwg.mxu0
  %950 = vmatprep.subr.bf16.mxu0 %v585
  %951 = vmatpush1.bf16.msra.mxu0 %v584
  %952 = vmatprep.subr.bf16.mxu0 %v617
  %953 = vmatpush1.bf16.msra.mxu0 %v616
  %954 = vmatprep.subr.bf16.mxu0 0
  %955 = vmatpush1.bf16.msra.mxu0 0
  %956 = vmatprep.subr.bf16.mxu0 0
  %957 = vmatpush1.bf16.msra.mxu0 0
  %958 = vmatprep.subr.bf16.mxu0 0
  %959 = vmatpush1.bf16.msra.mxu0 0
  %960 = vmatprep.subr.bf16.mxu0 0
  %961 = vmatpush1.bf16.msra.mxu0 0
  %962 = vmatprep.subr.bf16.mxu0 0
  %963 = vmatpush1.bf16.msra.mxu0 0
  %964 = vmatprep.subr.bf16.mxu0 0
  %965 = vmatpush1.bf16.msra.mxu0 0
  %966 = vmatprep.subr.bf16.mxu0 0
  %967 = vmatpush1.bf16.msra.mxu0 0
  %968 = vmatprep.subr.bf16.mxu0 0
  %969 = vmatpush1.bf16.msra.mxu0 0
  %970 = vmatprep.subr.bf16.mxu0 0
  %971 = vmatpush1.bf16.msra.mxu0 0
  %972 = vmatprep.subr.bf16.mxu0 0
  %973 = vmatpush1.bf16.msra.mxu0 0
  %974 = vmatprep.subr.bf16.mxu0 0
  %975 = vmatpush1.bf16.msra.mxu0 0
  %976 = vmatprep.subr.bf16.mxu0 0
  %977 = vmatpush1.bf16.msra.mxu0 0
  %978 = vmatprep.subr.bf16.mxu0 0
  %979 = vmatpush1.bf16.msra.mxu0 0
  %980 = vmatprep.subr.bf16.mxu0 0
  %981 = vmatpush1.bf16.msra.mxu0 0
  %982 = vmatprep.mubr.bf16.mxu0 0
  %983 = vmatmul.mubr.bf16.gmra.mrb[0].mxu0 %v702
  %v984 = vpop.f32.mrb[0].mxu0
  %v985 = vadd.f32 0.0, %v984
  %v986 = vpop.f32.mrb[0].mxu0
  %v987 = vadd.f32 0.0, %v986
  %v988 = vpop.f32.mrb[0].mxu0
  %v989 = vpop.f32.mrb[0].mxu0
  %990 = vdwg.mxu0
  %991 = vmatprep.subr.bf16.mxu0 %v587
  %992 = vmatpush1.bf16.msra.mxu0 %v586
  %993 = vmatprep.subr.bf16.mxu0 %v619
  %994 = vmatpush1.bf16.msra.mxu0 %v618
  %995 = vmatprep.subr.bf16.mxu0 0
  %996 = vmatpush1.bf16.msra.mxu0 0
  %997 = vmatprep.subr.bf16.mxu0 0
  %998 = vmatpush1.bf16.msra.mxu0 0
  %999 = vmatprep.subr.bf16.mxu0 0
  %1000 = vmatpush1.bf16.msra.mxu0 0
  %1001 = vmatprep.subr.bf16.mxu0 0
  %1002 = vmatpush1.bf16.msra.mxu0 0
  %1003 = vmatprep.subr.bf16.mxu0 0
  %1004 = vmatpush1.bf16.msra.mxu0 0
  %1005 = vmatprep.subr.bf16.mxu0 0
  %1006 = vmatpush1.bf16.msra.mxu0 0
  %1007 = vmatprep.subr.bf16.mxu0 0
  %1008 = vmatpush1.bf16.msra.mxu0 0
  %1009 = vmatprep.subr.bf16.mxu0 0
  %1010 = vmatpush1.bf16.msra.mxu0 0
  %1011 = vmatprep.subr.bf16.mxu0 0
  %1012 = vmatpush1.bf16.msra.mxu0 0
  %1013 = vmatprep.subr.bf16.mxu0 0
  %1014 = vmatpush1.bf16.msra.mxu0 0
  %1015 = vmatprep.subr.bf16.mxu0 0
  %1016 = vmatpush1.bf16.msra.mxu0 0
  %1017 = vmatprep.subr.bf16.mxu0 0
  %1018 = vmatpush1.bf16.msra.mxu0 0
  %1019 = vmatprep.subr.bf16.mxu0 0
  %1020 = vmatpush1.bf16.msra.mxu0 0
  %1021 = vmatprep.subr.bf16.mxu0 0
  %1022 = vmatpush1.bf16.msra.mxu0 0
  %1023 = vmatprep.mubr.bf16.mxu0 0
  %1024 = vmatmul.mubr.bf16.gmra.mrb[0].mxu0 %v702
  %v1025 = vpop.f32.mrb[0].mxu0
  %v1026 = vadd.f32 0.0, %v1025
  %v1027 = vpop.f32.mrb[0].mxu0
  %v1028 = vadd.f32 0.0, %v1027
  %v1029 = vpop.f32.mrb[0].mxu0
  %v1030 = vpop.f32.mrb[0].mxu0
  %1031 = vdwg.mxu0
  %1032 = vmatprep.subr.bf16.mxu0 %v589
  %1033 = vmatpush1.bf16.msra.mxu0 %v588
  %1034 = vmatprep.subr.bf16.mxu0 %v621
  %1035 = vmatpush1.bf16.msra.mxu0 %v620
  %1036 = vmatprep.subr.bf16.mxu0 0
  %1037 = vmatpush1.bf16.msra.mxu0 0
  %1038 = vmatprep.subr.bf16.mxu0 0
  %1039 = vmatpush1.bf16.msra.mxu0 0
  %1040 = vmatprep.subr.bf16.mxu0 0
  %1041 = vmatpush1.bf16.msra.mxu0 0
  %1042 = vmatprep.subr.bf16.mxu0 0
  %1043 = vmatpush1.bf16.msra.mxu0 0
  %1044 = vmatprep.subr.bf16.mxu0 0
  %1045 = vmatpush1.bf16.msra.mxu0 0
  %1046 = vmatprep.subr.bf16.mxu0 0
  %1047 = vmatpush1.bf16.msra.mxu0 0
  %1048 = vmatprep.subr.bf16.mxu0 0
  %1049 = vmatpush1.bf16.msra.mxu0 0
  %1050 = vmatprep.subr.bf16.mxu0 0
  %1051 = vmatpush1.bf16.msra.mxu0 0
  %1052 = vmatprep.subr.bf16.mxu0 0
  %1053 = vmatpush1.bf16.msra.mxu0 0
  %1054 = vmatprep.subr.bf16.mxu0 0
  %1055 = vmatpush1.bf16.msra.mxu0 0
  %1056 = vmatprep.subr.bf16.mxu0 0
  %1057 = vmatpush1.bf16.msra.mxu0 0
  %1058 = vmatprep.subr.bf16.mxu0 0
  %1059 = vmatpush1.bf16.msra.mxu0 0
  %1060 = vmatprep.subr.bf16.mxu0 0
  %1061 = vmatpush1.bf16.msra.mxu0 0
  %1062 = vmatprep.subr.bf16.mxu0 0
  %1063 = vmatpush1.bf16.msra.mxu0 0
  %1064 = vmatprep.mubr.bf16.mxu0 0
  %1065 = vmatmul.mubr.bf16.gmra.mrb[0].mxu0 %v702
  %v1066 = vpop.f32.mrb[0].mxu0
  %v1067 = vadd.f32 0.0, %v1066
  %v1068 = vpop.f32.mrb[0].mxu0
  %v1069 = vadd.f32 0.0, %v1068
  %v1070 = vpop.f32.mrb[0].mxu0
  %v1071 = vpop.f32.mrb[0].mxu0
  %1072 = vdwg.mxu0
  %1073 = vmatprep.subr.bf16.mxu0 %v591
  %1074 = vmatpush1.bf16.msra.mxu0 %v590
  %1075 = vmatprep.subr.bf16.mxu0 %v623
  %1076 = vmatpush1.bf16.msra.mxu0 %v622
  %1077 = vmatprep.subr.bf16.mxu0 0
  %1078 = vmatpush1.bf16.msra.mxu0 0
  %1079 = vmatprep.subr.bf16.mxu0 0
  %1080 = vmatpush1.bf16.msra.mxu0 0
  %1081 = vmatprep.subr.bf16.mxu0 0
  %1082 = vmatpush1.bf16.msra.mxu0 0
  %1083 = vmatprep.subr.bf16.mxu0 0
  %1084 = vmatpush1.bf16.msra.mxu0 0
  %1085 = vmatprep.subr.bf16.mxu0 0
  %1086 = vmatpush1.bf16.msra.mxu0 0
  %1087 = vmatprep.subr.bf16.mxu0 0
  %1088 = vmatpush1.bf16.msra.mxu0 0
  %1089 = vmatprep.subr.bf16.mxu0 0
  %1090 = vmatpush1.bf16.msra.mxu0 0
  %1091 = vmatprep.subr.bf16.mxu0 0
  %1092 = vmatpush1.bf16.msra.mxu0 0
  %1093 = vmatprep.subr.bf16.mxu0 0
  %1094 = vmatpush1.bf16.msra.mxu0 0
  %1095 = vmatprep.subr.bf16.mxu0 0
  %1096 = vmatpush1.bf16.msra.mxu0 0
  %1097 = vmatprep.subr.bf16.mxu0 0
  %1098 = vmatpush1.bf16.msra.mxu0 0
  %1099 = vmatprep.subr.bf16.mxu0 0
  %1100 = vmatpush1.bf16.msra.mxu0 0
  %1101 = vmatprep.subr.bf16.mxu0 0
  %1102 = vmatpush1.bf16.msra.mxu0 0
  %1103 = vmatprep.subr.bf16.mxu0 0
  %1104 = vmatpush1.bf16.msra.mxu0 0
  %1105 = vmatprep.mubr.bf16.mxu0 0
  %1106 = vmatmul.mubr.bf16.gmra.mrb[0].mxu0 %v702
  %v1107 = vpop.f32.mrb[0].mxu0
  %v1108 = vadd.f32 0.0, %v1107
  %v1109 = vpop.f32.mrb[0].mxu0
  %v1110 = vadd.f32 0.0, %v1109
  %v1111 = vpop.f32.mrb[0].mxu0
  %v1112 = vpop.f32.mrb[0].mxu0
  %1113 = vdwg.mxu0
  %1114 = vmatprep.subr.bf16.mxu0 %v593
  %1115 = vmatpush1.bf16.msra.mxu0 %v592
  %1116 = vmatprep.subr.bf16.mxu0 %v625
  %1117 = vmatpush1.bf16.msra.mxu0 %v624
  %1118 = vmatprep.subr.bf16.mxu0 0
  %1119 = vmatpush1.bf16.msra.mxu0 0
  %1120 = vmatprep.subr.bf16.mxu0 0
  %1121 = vmatpush1.bf16.msra.mxu0 0
  %1122 = vmatprep.subr.bf16.mxu0 0
  %1123 = vmatpush1.bf16.msra.mxu0 0
  %1124 = vmatprep.subr.bf16.mxu0 0
  %1125 = vmatpush1.bf16.msra.mxu0 0
  %1126 = vmatprep.subr.bf16.mxu0 0
  %1127 = vmatpush1.bf16.msra.mxu0 0
  %1128 = vmatprep.subr.bf16.mxu0 0
  %1129 = vmatpush1.bf16.msra.mxu0 0
  %1130 = vmatprep.subr.bf16.mxu0 0
  %1131 = vmatpush1.bf16.msra.mxu0 0
  %1132 = vmatprep.subr.bf16.mxu0 0
  %1133 = vmatpush1.bf16.msra.mxu0 0
  %1134 = vmatprep.subr.bf16.mxu0 0
  %1135 = vmatpush1.bf16.msra.mxu0 0
  %1136 = vmatprep.subr.bf16.mxu0 0
  %1137 = vmatpush1.bf16.msra.mxu0 0
  %1138 = vmatprep.subr.bf16.mxu0 0
  %1139 = vmatpush1.bf16.msra.mxu0 0
  %1140 = vmatprep.subr.bf16.mxu0 0
  %1141 = vmatpush1.bf16.msra.mxu0 0
  %1142 = vmatprep.subr.bf16.mxu0 0
  %1143 = vmatpush1.bf16.msra.mxu0 0
  %1144 = vmatprep.subr.bf16.mxu0 0
  %1145 = vmatpush1.bf16.msra.mxu0 0
  %1146 = vmatprep.mubr.bf16.mxu0 0
  %1147 = vmatmul.mubr.bf16.gmra.mrb[0].mxu0 %v702
  %v1148 = vpop.f32.mrb[0].mxu0
  %v1149 = vadd.f32 0.0, %v1148
  %v1150 = vpop.f32.mrb[0].mxu0
  %v1151 = vadd.f32 0.0, %v1150
  %v1152 = vpop.f32.mrb[0].mxu0
  %v1153 = vpop.f32.mrb[0].mxu0
  %1154 = vdwg.mxu0
  %1155 = vmatprep.subr.bf16.mxu0 %v595
  %1156 = vmatpush1.bf16.msra.mxu0 %v594
  %1157 = vmatprep.subr.bf16.mxu0 %v627
  %1158 = vmatpush1.bf16.msra.mxu0 %v626
  %1159 = vmatprep.subr.bf16.mxu0 0
  %1160 = vmatpush1.bf16.msra.mxu0 0
  %1161 = vmatprep.subr.bf16.mxu0 0
  %1162 = vmatpush1.bf16.msra.mxu0 0
  %1163 = vmatprep.subr.bf16.mxu0 0
  %1164 = vmatpush1.bf16.msra.mxu0 0
  %1165 = vmatprep.subr.bf16.mxu0 0
  %1166 = vmatpush1.bf16.msra.mxu0 0
  %1167 = vmatprep.subr.bf16.mxu0 0
  %1168 = vmatpush1.bf16.msra.mxu0 0
  %1169 = vmatprep.subr.bf16.mxu0 0
  %1170 = vmatpush1.bf16.msra.mxu0 0
  %1171 = vmatprep.subr.bf16.mxu0 0
  %1172 = vmatpush1.bf16.msra.mxu0 0
  %1173 = vmatprep.subr.bf16.mxu0 0
  %1174 = vmatpush1.bf16.msra.mxu0 0
  %1175 = vmatprep.subr.bf16.mxu0 0
  %1176 = vmatpush1.bf16.msra.mxu0 0
  %1177 = vmatprep.subr.bf16.mxu0 0
  %1178 = vmatpush1.bf16.msra.mxu0 0
  %1179 = vmatprep.subr.bf16.mxu0 0
  %1180 = vmatpush1.bf16.msra.mxu0 0
  %1181 = vmatprep.subr.bf16.mxu0 0
  %1182 = vmatpush1.bf16.msra.mxu0 0
  %1183 = vmatprep.subr.bf16.mxu0 0
  %1184 = vmatpush1.bf16.msra.mxu0 0
  %1185 = vmatprep.subr.bf16.mxu0 0
  %1186 = vmatpush1.bf16.msra.mxu0 0
  %1187 = vmatprep.mubr.bf16.mxu0 0
  %1188 = vmatmul.mubr.bf16.gmra.mrb[0].mxu0 %v702
  %v1189 = vpop.f32.mrb[0].mxu0
  %v1190 = vadd.f32 0.0, %v1189
  %v1191 = vpop.f32.mrb[0].mxu0
  %v1192 = vadd.f32 0.0, %v1191
  %v1193 = vpop.f32.mrb[0].mxu0
  %v1194 = vpop.f32.mrb[0].mxu0
  %1195 = vdwg.mxu0
  %1196 = vmatprep.subr.bf16.mxu0 %v597
  %1197 = vmatpush1.bf16.msra.mxu0 %v596
  %1198 = vmatprep.subr.bf16.mxu0 %v629
  %1199 = vmatpush1.bf16.msra.mxu0 %v628
  %1200 = vmatprep.subr.bf16.mxu0 0
  %1201 = vmatpush1.bf16.msra.mxu0 0
  %1202 = vmatprep.subr.bf16.mxu0 0
  %1203 = vmatpush1.bf16.msra.mxu0 0
  %1204 = vmatprep.subr.bf16.mxu0 0
  %1205 = vmatpush1.bf16.msra.mxu0 0
  %1206 = vmatprep.subr.bf16.mxu0 0
  %1207 = vmatpush1.bf16.msra.mxu0 0
  %1208 = vmatprep.subr.bf16.mxu0 0
  %1209 = vmatpush1.bf16.msra.mxu0 0
  %1210 = vmatprep.subr.bf16.mxu0 0
  %1211 = vmatpush1.bf16.msra.mxu0 0
  %1212 = vmatprep.subr.bf16.mxu0 0
  %1213 = vmatpush1.bf16.msra.mxu0 0
  %1214 = vmatprep.subr.bf16.mxu0 0
  %1215 = vmatpush1.bf16.msra.mxu0 0
  %1216 = vmatprep.subr.bf16.mxu0 0
  %1217 = vmatpush1.bf16.msra.mxu0 0
  %1218 = vmatprep.subr.bf16.mxu0 0
  %1219 = vmatpush1.bf16.msra.mxu0 0
  %1220 = vmatprep.subr.bf16.mxu0 0
  %1221 = vmatpush1.bf16.msra.mxu0 0
  %1222 = vmatprep.subr.bf16.mxu0 0
  %1223 = vmatpush1.bf16.msra.mxu0 0
  %1224 = vmatprep.subr.bf16.mxu0 0
  %1225 = vmatpush1.bf16.msra.mxu0 0
  %1226 = vmatprep.subr.bf16.mxu0 0
  %1227 = vmatpush1.bf16.msra.mxu0 0
  %1228 = vmatprep.mubr.bf16.mxu0 0
  %1229 = vmatmul.mubr.bf16.gmra.mrb[0].mxu0 %v702
  %v1230 = vpop.f32.mrb[0].mxu0
  %v1231 = vadd.f32 0.0, %v1230
  %v1232 = vpop.f32.mrb[0].mxu0
  %v1233 = vadd.f32 0.0, %v1232
  %v1234 = vpop.f32.mrb[0].mxu0
  %v1235 = vpop.f32.mrb[0].mxu0
  %1236 = vdwg.mxu0
  %1237 = vmatprep.subr.bf16.mxu0 %v599
  %1238 = vmatpush1.bf16.msra.mxu0 %v598
  %1239 = vmatprep.subr.bf16.mxu0 %v631
  %1240 = vmatpush1.bf16.msra.mxu0 %v630
  %1241 = vmatprep.subr.bf16.mxu0 0
  %1242 = vmatpush1.bf16.msra.mxu0 0
  %1243 = vmatprep.subr.bf16.mxu0 0
  %1244 = vmatpush1.bf16.msra.mxu0 0
  %1245 = vmatprep.subr.bf16.mxu0 0
  %1246 = vmatpush1.bf16.msra.mxu0 0
  %1247 = vmatprep.subr.bf16.mxu0 0
  %1248 = vmatpush1.bf16.msra.mxu0 0
  %1249 = vmatprep.subr.bf16.mxu0 0
  %1250 = vmatpush1.bf16.msra.mxu0 0
  %1251 = vmatprep.subr.bf16.mxu0 0
  %1252 = vmatpush1.bf16.msra.mxu0 0
  %1253 = vmatprep.subr.bf16.mxu0 0
  %1254 = vmatpush1.bf16.msra.mxu0 0
  %1255 = vmatprep.subr.bf16.mxu0 0
  %1256 = vmatpush1.bf16.msra.mxu0 0
  %1257 = vmatprep.subr.bf16.mxu0 0
  %1258 = vmatpush1.bf16.msra.mxu0 0
  %1259 = vmatprep.subr.bf16.mxu0 0
  %1260 = vmatpush1.bf16.msra.mxu0 0
  %1261 = vmatprep.subr.bf16.mxu0 0
  %1262 = vmatpush1.bf16.msra.mxu0 0
  %1263 = vmatprep.subr.bf16.mxu0 0
  %1264 = vmatpush1.bf16.msra.mxu0 0
  %1265 = vmatprep.subr.bf16.mxu0 0
  %1266 = vmatpush1.bf16.msra.mxu0 0
  %1267 = vmatprep.subr.bf16.mxu0 0
  %1268 = vmatpush1.bf16.msra.mxu0 0
  %1269 = vmatprep.mubr.bf16.mxu0 0
  %1270 = vmatmul.mubr.bf16.gmra.mrb[0].mxu0 %v702
  %v1271 = vpop.f32.mrb[0].mxu0
  %v1272 = vadd.f32 0.0, %v1271
  %v1273 = vpop.f32.mrb[0].mxu0
  %v1274 = vadd.f32 0.0, %v1273
  %v1275 = vpop.f32.mrb[0].mxu0
  %v1276 = vpop.f32.mrb[0].mxu0
  %1277 = vdwg.mxu0
  %1278 = vmatprep.subr.bf16.mxu0 %v601
  %1279 = vmatpush1.bf16.msra.mxu0 %v600
  %1280 = vmatprep.subr.bf16.mxu0 %v633
  %1281 = vmatpush1.bf16.msra.mxu0 %v632
  %1282 = vmatprep.subr.bf16.mxu0 0
  %1283 = vmatpush1.bf16.msra.mxu0 0
  %1284 = vmatprep.subr.bf16.mxu0 0
  %1285 = vmatpush1.bf16.msra.mxu0 0
  %1286 = vmatprep.subr.bf16.mxu0 0
  %1287 = vmatpush1.bf16.msra.mxu0 0
  %1288 = vmatprep.subr.bf16.mxu0 0
  %1289 = vmatpush1.bf16.msra.mxu0 0
  %1290 = vmatprep.subr.bf16.mxu0 0
  %1291 = vmatpush1.bf16.msra.mxu0 0
  %1292 = vmatprep.subr.bf16.mxu0 0
  %1293 = vmatpush1.bf16.msra.mxu0 0
  %1294 = vmatprep.subr.bf16.mxu0 0
  %1295 = vmatpush1.bf16.msra.mxu0 0
  %1296 = vmatprep.subr.bf16.mxu0 0
  %1297 = vmatpush1.bf16.msra.mxu0 0
  %1298 = vmatprep.subr.bf16.mxu0 0
  %1299 = vmatpush1.bf16.msra.mxu0 0
  %1300 = vmatprep.subr.bf16.mxu0 0
  %1301 = vmatpush1.bf16.msra.mxu0 0
  %1302 = vmatprep.subr.bf16.mxu0 0
  %1303 = vmatpush1.bf16.msra.mxu0 0
  %1304 = vmatprep.subr.bf16.mxu0 0
  %1305 = vmatpush1.bf16.msra.mxu0 0
  %1306 = vmatprep.subr.bf16.mxu0 0
  %1307 = vmatpush1.bf16.msra.mxu0 0
  %1308 = vmatprep.subr.bf16.mxu0 0
  %1309 = vmatpush1.bf16.msra.mxu0 0
  %1310 = vmatprep.mubr.bf16.mxu0 0
  %1311 = vmatmul.mubr.bf16.gmra.mrb[0].mxu0 %v702
  %v1312 = vpop.f32.mrb[0].mxu0
  %v1313 = vadd.f32 0.0, %v1312
  %v1314 = vpop.f32.mrb[0].mxu0
  %v1315 = vadd.f32 0.0, %v1314
  %v1316 = vpop.f32.mrb[0].mxu0
  %v1317 = vpop.f32.mrb[0].mxu0
  %1318 = vdwg.mxu0
  %1319 = vmatprep.subr.bf16.mxu0 %v603
  %1320 = vmatpush1.bf16.msra.mxu0 %v602
  %1321 = vmatprep.subr.bf16.mxu0 %v635
  %1322 = vmatpush1.bf16.msra.mxu0 %v634
  %1323 = vmatprep.subr.bf16.mxu0 0
  %1324 = vmatpush1.bf16.msra.mxu0 0
  %1325 = vmatprep.subr.bf16.mxu0 0
  %1326 = vmatpush1.bf16.msra.mxu0 0
  %1327 = vmatprep.subr.bf16.mxu0 0
  %1328 = vmatpush1.bf16.msra.mxu0 0
  %1329 = vmatprep.subr.bf16.mxu0 0
  %1330 = vmatpush1.bf16.msra.mxu0 0
  %1331 = vmatprep.subr.bf16.mxu0 0
  %1332 = vmatpush1.bf16.msra.mxu0 0
  %1333 = vmatprep.subr.bf16.mxu0 0
  %1334 = vmatpush1.bf16.msra.mxu0 0
  %1335 = vmatprep.subr.bf16.mxu0 0
  %1336 = vmatpush1.bf16.msra.mxu0 0
  %1337 = vmatprep.subr.bf16.mxu0 0
  %1338 = vmatpush1.bf16.msra.mxu0 0
  %1339 = vmatprep.subr.bf16.mxu0 0
  %1340 = vmatpush1.bf16.msra.mxu0 0
  %1341 = vmatprep.subr.bf16.mxu0 0
  %1342 = vmatpush1.bf16.msra.mxu0 0
  %1343 = vmatprep.subr.bf16.mxu0 0
  %1344 = vmatpush1.bf16.msra.mxu0 0
  %1345 = vmatprep.subr.bf16.mxu0 0
  %1346 = vmatpush1.bf16.msra.mxu0 0
  %1347 = vmatprep.subr.bf16.mxu0 0
  %1348 = vmatpush1.bf16.msra.mxu0 0
  %1349 = vmatprep.subr.bf16.mxu0 0
  %1350 = vmatpush1.bf16.msra.mxu0 0
  %1351 = vmatprep.mubr.bf16.mxu0 0
  %1352 = vmatmul.mubr.bf16.gmra.mrb[0].mxu0 %v702
  %v1353 = vpop.f32.mrb[0].mxu0
  %v1354 = vadd.f32 0.0, %v1353
  %v1355 = vpop.f32.mrb[0].mxu0
  %v1356 = vadd.f32 0.0, %v1355
  %v1357 = vpop.f32.mrb[0].mxu0
  %v1358 = vpop.f32.mrb[0].mxu0
  %1359 = vdwg.mxu0
  %v1392 = vcombine.low %v739, %v741
  %v1393 = vcombine.low %v780, %v782
  %v1395 = vunpack.c.l.s4 1983009808
  %v1396 = vunpack.c.0.s8 %v1395
  %v1397 = vlaneseq
  %v1398 = vshrl.u32 %v1397, 7
  %v1399 = vsub.s32 %v1396, %v1398
  %v1400 = vrot.slane %v1392, %v1399
  %v1402 = vunpack.c.l.s4 1983009808
  %v1403 = vunpack.c.0.s8 %v1402
  %v1404 = vlaneseq
  %v1405 = vshrl.u32 %v1404, 7
  %v1406 = vsub.s32 %v1403, %v1405
  %v1407 = vrot.slane %v1393, %v1406
  %v1408 = vcombine.low %v1400, %v1407
  %v1409 = vcombine.low %v821, %v823
  %v1410 = vcombine.low %v862, %v864
  %v1412 = vunpack.c.l.s4 1983009808
  %v1413 = vunpack.c.0.s8 %v1412
  %v1414 = vlaneseq
  %v1415 = vshrl.u32 %v1414, 7
  %v1416 = vsub.s32 %v1413, %v1415
  %v1417 = vrot.slane %v1409, %v1416
  %v1419 = vunpack.c.l.s4 1983009808
  %v1420 = vunpack.c.0.s8 %v1419
  %v1421 = vlaneseq
  %v1422 = vshrl.u32 %v1421, 7
  %v1423 = vsub.s32 %v1420, %v1422
  %v1424 = vrot.slane %v1410, %v1423
  %v1425 = vcombine.low %v1417, %v1424
  %v1426 = vcombine.low %v903, %v905
  %v1427 = vcombine.low %v944, %v946
  %v1429 = vunpack.c.l.s4 1983009808
  %v1430 = vunpack.c.0.s8 %v1429
  %v1431 = vlaneseq
  %v1432 = vshrl.u32 %v1431, 7
  %v1433 = vsub.s32 %v1430, %v1432
  %v1434 = vrot.slane %v1426, %v1433
  %v1436 = vunpack.c.l.s4 1983009808
  %v1437 = vunpack.c.0.s8 %v1436
  %v1438 = vlaneseq
  %v1439 = vshrl.u32 %v1438, 7
  %v1440 = vsub.s32 %v1437, %v1439
  %v1441 = vrot.slane %v1427, %v1440
  %v1442 = vcombine.low %v1434, %v1441
  %v1443 = vcombine.low %v985, %v987
  %v1444 = vcombine.low %v1026, %v1028
  %v1446 = vunpack.c.l.s4 1983009808
  %v1447 = vunpack.c.0.s8 %v1446
  %v1448 = vlaneseq
  %v1449 = vshrl.u32 %v1448, 7
  %v1450 = vsub.s32 %v1447, %v1449
  %v1451 = vrot.slane %v1443, %v1450
  %v1453 = vunpack.c.l.s4 1983009808
  %v1454 = vunpack.c.0.s8 %v1453
  %v1455 = vlaneseq
  %v1456 = vshrl.u32 %v1455, 7
  %v1457 = vsub.s32 %v1454, %v1456
  %v1458 = vrot.slane %v1444, %v1457
  %v1459 = vcombine.low %v1451, %v1458
  %v1460 = vcombine.low %v1067, %v1069
  %v1461 = vcombine.low %v1108, %v1110
  %v1463 = vunpack.c.l.s4 1983009808
  %v1464 = vunpack.c.0.s8 %v1463
  %v1465 = vlaneseq
  %v1466 = vshrl.u32 %v1465, 7
  %v1467 = vsub.s32 %v1464, %v1466
  %v1468 = vrot.slane %v1460, %v1467
  %v1470 = vunpack.c.l.s4 1983009808
  %v1471 = vunpack.c.0.s8 %v1470
  %v1472 = vlaneseq
  %v1473 = vshrl.u32 %v1472, 7
  %v1474 = vsub.s32 %v1471, %v1473
  %v1475 = vrot.slane %v1461, %v1474
  %v1476 = vcombine.low %v1468, %v1475
  %v1477 = vcombine.low %v1149, %v1151
  %v1478 = vcombine.low %v1190, %v1192
  %v1480 = vunpack.c.l.s4 1983009808
  %v1481 = vunpack.c.0.s8 %v1480
  %v1482 = vlaneseq
  %v1483 = vshrl.u32 %v1482, 7
  %v1484 = vsub.s32 %v1481, %v1483
  %v1485 = vrot.slane %v1477, %v1484
  %v1487 = vunpack.c.l.s4 1983009808
  %v1488 = vunpack.c.0.s8 %v1487
  %v1489 = vlaneseq
  %v1490 = vshrl.u32 %v1489, 7
  %v1491 = vsub.s32 %v1488, %v1490
  %v1492 = vrot.slane %v1478, %v1491
  %v1493 = vcombine.low %v1485, %v1492
  %v1494 = vcombine.low %v1231, %v1233
  %v1495 = vcombine.low %v1272, %v1274
  %v1497 = vunpack.c.l.s4 1983009808
  %v1498 = vunpack.c.0.s8 %v1497
  %v1499 = vlaneseq
  %v1500 = vshrl.u32 %v1499, 7
  %v1501 = vsub.s32 %v1498, %v1500
  %v1502 = vrot.slane %v1494, %v1501
  %v1504 = vunpack.c.l.s4 1983009808
  %v1505 = vunpack.c.0.s8 %v1504
  %v1506 = vlaneseq
  %v1507 = vshrl.u32 %v1506, 7
  %v1508 = vsub.s32 %v1505, %v1507
  %v1509 = vrot.slane %v1495, %v1508
  %v1510 = vcombine.low %v1502, %v1509
  %v1511 = vcombine.low %v1313, %v1315
  %v1512 = vcombine.low %v1354, %v1356
  %v1514 = vunpack.c.l.s4 1983009808
  %v1515 = vunpack.c.0.s8 %v1514
  %v1516 = vlaneseq
  %v1517 = vshrl.u32 %v1516, 7
  %v1518 = vsub.s32 %v1515, %v1517
  %v1519 = vrot.slane %v1511, %v1518
  %v1521 = vunpack.c.l.s4 1983009808
  %v1522 = vunpack.c.0.s8 %v1521
  %v1523 = vlaneseq
  %v1524 = vshrl.u32 %v1523, 7
  %v1525 = vsub.s32 %v1522, %v1524
  %v1526 = vrot.slane %v1512, %v1525
  %v1527 = vcombine.low %v1519, %v1526
  %v1536 = vadd.f32 %v307, %v1408
  %v1537 = vadd.f32 %v308, %v1425
  %v1538 = vadd.f32 %v309, %v1442
  %v1539 = vadd.f32 %v310, %v1459
  %v1540 = vadd.f32 %v311, %v1476
  %v1541 = vadd.f32 %v312, %v1493
  %v1542 = vadd.f32 %v313, %v1510
  %v1543 = vadd.f32 %v314, %v1527
  %1544 = vst [vmem:[%s3] sm:$0xff] %v1536
  %1545 = vst [vmem:[%s3 + $0x8] sm:$0xff] %v1537
  %1546 = vst [vmem:[%s3 + $0x10] sm:$0xff] %v1538
  %1547 = vst [vmem:[%s3 + $0x18] sm:$0xff] %v1539
  %1548 = vst [vmem:[%s3 + $0x20] sm:$0xff] %v1540
  %1549 = vst [vmem:[%s3 + $0x28] sm:$0xff] %v1541
  %1550 = vst [vmem:[%s3 + $0x30] sm:$0xff] %v1542
  %1551 = vst [vmem:[%s3 + $0x38] sm:$0xff] %v1543
  // Predicated region
  $region18: #{_lambda_.45} parent=0 // pred_check
    _
  $region19: #{_lambda_.45} parent=0 // pred_check_branch
    %1553 = sbr.rel (0) target = $region21
  $region20: #{_lambda_.45} parent=0 // pred_region
    _
  $region21: #{_lambda_.45} parent=0 // pred_fallthru
    _
  // Predicated region
  $region22: #{_lambda_.45} parent=0 // pred_check
    _
  $region23: #{_lambda_.45} parent=0 // pred_check_branch
    %1555 = sbr.rel (0) target = $region25
  $region24: #{_lambda_.45} parent=0 // pred_region
    _
  $region25: #{_lambda_.45} parent=0 // pred_fallthru
    _

// kernel: _lambda_.47
$region0: #{_lambda_.47}
  #allocation0 [shape = 'u32[]', space=smem, size = 0x4, offset = 0x4, fixed_abs, tag = 'smem constant byte address 0x4 - core index']
  #allocation1 [shape = 'u32[144,128]{1,0:T(1,128)}', space=vmem, size = 0x12000, scoped, tag = 'internal scratch']
  %s0 = inlined_call_operand.vmem [shape: f32[2,32,4], index: 0, kind: input, shape index: {}]
  %s1 = inlined_call_operand.vmem [shape: f32[2,1,4], index: 1, kind: input, shape index: {}]
  %s2 = inlined_call_operand.vmem [shape: f32[32,4], index: 2, kind: output, shape index: {}]
  %s3 = sld [smem:[#allocation0]]
  $region18: #{_lambda_.47} parent=0
    _
  %s5 = ssub.s32 1, %s3
  %s6 = scalar_select 0, %s5, %s3
  // Predicated region
  $region2: #{_lambda_.47} parent=0 // pred_check
    _
  $region3: #{_lambda_.47} parent=0 // pred_check_branch
    %8 = sbr.rel (0) target = $region5
  $region4: #{_lambda_.47} parent=0 // pred_region
    _
  $region5: #{_lambda_.47} parent=0 // pred_fallthru
    _
  // Predicated region
  $region6: #{_lambda_.47} parent=0 // pred_check
    _
  $region7: #{_lambda_.47} parent=0 // pred_check_branch
    %10 = sbr.rel (0) target = $region9
  $region8: #{_lambda_.47} parent=0 // pred_region
    _
  $region9: #{_lambda_.47} parent=0 // pred_fallthru
    _
  %v11 = vld [vmem:[%s0] sm:$0xff]
  %v12 = vld [vmem:[%s0 + $0x8] sm:$0xff]
  %v13 = vld [vmem:[%s0 + $0x10] sm:$0xff]
  %v14 = vld [vmem:[%s0 + $0x18] sm:$0xff]
  %v15 = vld [vmem:[%s1] sm:$0x1]
  %v17 = vlaneseq
  %v18 = vshrl.u32 %v17, 7
  %v19 = vsub.s32 0, %v18
  %v20 = vrot.slane %v15, %v19
  %v22 = vmul.f32 %v11, %v20
  %v23 = vmul.f32 %v12, %v20
  %v24 = vmul.f32 %v13, %v20
  %v25 = vmul.f32 %v14, %v20
  %s26 = scalar_lea.vmem %s0, 32
  %v27 = vld [vmem:[%s26] sm:$0xff]
  %v28 = vld [vmem:[%s26 + $0x8] sm:$0xff]
  %v29 = vld [vmem:[%s26 + $0x10] sm:$0xff]
  %v30 = vld [vmem:[%s26 + $0x18] sm:$0xff]
  %s31 = scalar_lea.vmem %s1, 1
  %v32 = vld [vmem:[%s31] sm:$0x1]
  %v34 = vlaneseq
  %v35 = vshrl.u32 %v34, 7
  %v36 = vsub.s32 0, %v35
  %v37 = vrot.slane %v32, %v36
  %v39 = vmul.f32 %v27, %v37
  %v40 = vmul.f32 %v28, %v37
  %v41 = vmul.f32 %v29, %v37
  %v42 = vmul.f32 %v30, %v37
  %v43 = vadd.f32 %v22, %v39
  %v44 = vadd.f32 %v23, %v40
  %v45 = vadd.f32 %v24, %v41
  %v46 = vadd.f32 %v25, %v42
  %vm47 = vcmask 31744
  %48 = vst.msk [vmem:[%s2] sm:$0xff] %vm47, %v43
  %49 = vst.msk [vmem:[%s2 + $0x8] sm:$0xff] %vm47, %v44
  %50 = vst.msk [vmem:[%s2 + $0x10] sm:$0xff] %vm47, %v45
  %51 = vst.msk [vmem:[%s2 + $0x18] sm:$0xff] %vm47, %v46
  // Predicated region
  $region10: #{_lambda_.47} parent=0 // pred_check
    _
  $region11: #{_lambda_.47} parent=0 // pred_check_branch
    %53 = sbr.rel (0) target = $region13
  $region12: #{_lambda_.47} parent=0 // pred_region
    _
  $region13: #{_lambda_.47} parent=0 // pred_fallthru
    _
  // Predicated region
  $region14: #{_lambda_.47} parent=0 // pred_check
    _
  $region15: #{_lambda_.47} parent=0 // pred_check_branch
    %55 = sbr.rel (0) target = $region17
  $region16: #{_lambda_.47} parent=0 // pred_region
    _
  $region17: #{_lambda_.47} parent=0 // pred_fallthru
    _

// kernel: _lambda_.46
$region0: #{_lambda_.46}
  #allocation0 [shape = 'u32[]', space=smem, size = 0x4, offset = 0x4, fixed_abs, tag = 'smem constant byte address 0x4 - core index']
  #allocation1 [shape = 'u32[144,128]{1,0:T(1,128)}', space=vmem, size = 0x12000, scoped, tag = 'internal scratch']
  %s0 = inlined_call_operand.vmem [shape: bf16[1,8,8], index: 0, kind: input, shape index: {}]
  %s1 = inlined_call_operand.vmem [shape: bf16[1,8,4096], index: 1, kind: input, shape index: {}]
  %s2 = inlined_call_operand.vmem [shape: f32[1,1,4096], index: 2, kind: input, shape index: {}]
  %s3 = inlined_call_operand.vmem [shape: f32[1,8,4096], index: 3, kind: output, shape index: {}]
  %s4 = sld [smem:[#allocation0]]
  $region26: #{_lambda_.46} parent=0
    _
  %s6 = ssub.s32 1, %s4
  %s7 = scalar_select 0, %s6, %s4
  // Predicated region
  $region2: #{_lambda_.46} parent=0 // pred_check
    _
  $region3: #{_lambda_.46} parent=0 // pred_check_branch
    %9 = sbr.rel (0) target = $region5
  $region4: #{_lambda_.46} parent=0 // pred_region
    _
  $region5: #{_lambda_.46} parent=0 // pred_fallthru
    _
  // Predicated region
  $region6: #{_lambda_.46} parent=0 // pred_check
    _
  $region7: #{_lambda_.46} parent=0 // pred_check_branch
    %11 = sbr.rel (0) target = $region9
  $region8: #{_lambda_.46} parent=0 // pred_region
    _
  $region9: #{_lambda_.46} parent=0 // pred_fallthru
    _
  // Predicated region
  $region10: #{_lambda_.46} parent=0 // pred_check
    _
  $region11: #{_lambda_.46} parent=0 // pred_check_branch
    %13 = sbr.rel (0) target = $region13
  $region12: #{_lambda_.46} parent=0 // pred_region
    _
  $region13: #{_lambda_.46} parent=0 // pred_fallthru
    _
  %p15 = scmp.eq.s32.totalorder 0, 0
  // Predicated region
  $region14: #{_lambda_.46} parent=0 // pred_check
    %p16 = pneg %p15
  $region15: #{_lambda_.46} parent=0 // pred_check_branch
    %18 = sbr.rel (%p16) target = $region17
  $region16: #{_lambda_.46} parent=0 // pred_region
    %v19 = vld [vmem:[%s2] sm:$0xff]
    %v20 = vld [vmem:[%s2 + $0x8] sm:$0xff]
    %v21 = vld [vmem:[%s2 + $0x10] sm:$0xff]
    %v22 = vld [vmem:[%s2 + $0x18] sm:$0xff]
    %v27 = vlaneseq
    %v28 = vshrl.u32 %v27, 7
    %v29 = vsub.s32 0, %v28
    %v30 = vrot.slane %v19, %v29
    %v31 = vlaneseq
    %v32 = vshrl.u32 %v31, 7
    %v33 = vsub.s32 1, %v32
    %v34 = vrot.slane %v19, %v33
    %v35 = vlaneseq
    %v36 = vshrl.u32 %v35, 7
    %v37 = vsub.s32 2, %v36
    %v38 = vrot.slane %v19, %v37
    %v39 = vlaneseq
    %v40 = vshrl.u32 %v39, 7
    %v41 = vsub.s32 3, %v40
    %v42 = vrot.slane %v19, %v41
    %v43 = vlaneseq
    %v44 = vshrl.u32 %v43, 7
    %v45 = vsub.s32 4, %v44
    %v46 = vrot.slane %v19, %v45
    %v47 = vlaneseq
    %v48 = vshrl.u32 %v47, 7
    %v49 = vsub.s32 5, %v48
    %v50 = vrot.slane %v19, %v49
    %v51 = vlaneseq
    %v52 = vshrl.u32 %v51, 7
    %v53 = vsub.s32 6, %v52
    %v54 = vrot.slane %v19, %v53
    %v55 = vlaneseq
    %v56 = vshrl.u32 %v55, 7
    %v57 = vsub.s32 7, %v56
    %v58 = vrot.slane %v19, %v57
    %v59 = vlaneseq
    %v60 = vshrl.u32 %v59, 7
    %v61 = vsub.s32 0, %v60
    %v62 = vrot.slane %v20, %v61
    %v63 = vlaneseq
    %v64 = vshrl.u32 %v63, 7
    %v65 = vsub.s32 1, %v64
    %v66 = vrot.slane %v20, %v65
    %v67 = vlaneseq
    %v68 = vshrl.u32 %v67, 7
    %v69 = vsub.s32 2, %v68
    %v70 = vrot.slane %v20, %v69
    %v71 = vlaneseq
    %v72 = vshrl.u32 %v71, 7
    %v73 = vsub.s32 3, %v72
    %v74 = vrot.slane %v20, %v73
    %v75 = vlaneseq
    %v76 = vshrl.u32 %v75, 7
    %v77 = vsub.s32 4, %v76
    %v78 = vrot.slane %v20, %v77
    %v79 = vlaneseq
    %v80 = vshrl.u32 %v79, 7
    %v81 = vsub.s32 5, %v80
    %v82 = vrot.slane %v20, %v81
    %v83 = vlaneseq
    %v84 = vshrl.u32 %v83, 7
    %v85 = vsub.s32 6, %v84
    %v86 = vrot.slane %v20, %v85
    %v87 = vlaneseq
    %v88 = vshrl.u32 %v87, 7
    %v89 = vsub.s32 7, %v88
    %v90 = vrot.slane %v20, %v89
    %v91 = vlaneseq
    %v92 = vshrl.u32 %v91, 7
    %v93 = vsub.s32 0, %v92
    %v94 = vrot.slane %v21, %v93
    %v95 = vlaneseq
    %v96 = vshrl.u32 %v95, 7
    %v97 = vsub.s32 1, %v96
    %v98 = vrot.slane %v21, %v97
    %v99 = vlaneseq
    %v100 = vshrl.u32 %v99, 7
    %v101 = vsub.s32 2, %v100
    %v102 = vrot.slane %v21, %v101
    %v103 = vlaneseq
    %v104 = vshrl.u32 %v103, 7
    %v105 = vsub.s32 3, %v104
    %v106 = vrot.slane %v21, %v105
    %v107 = vlaneseq
    %v108 = vshrl.u32 %v107, 7
    %v109 = vsub.s32 4, %v108
    %v110 = vrot.slane %v21, %v109
    %v111 = vlaneseq
    %v112 = vshrl.u32 %v111, 7
    %v113 = vsub.s32 5, %v112
    %v114 = vrot.slane %v21, %v113
    %v115 = vlaneseq
    %v116 = vshrl.u32 %v115, 7
    %v117 = vsub.s32 6, %v116
    %v118 = vrot.slane %v21, %v117
    %v119 = vlaneseq
    %v120 = vshrl.u32 %v119, 7
    %v121 = vsub.s32 7, %v120
    %v122 = vrot.slane %v21, %v121
    %v123 = vlaneseq
    %v124 = vshrl.u32 %v123, 7
    %v125 = vsub.s32 0, %v124
    %v126 = vrot.slane %v22, %v125
    %v127 = vlaneseq
    %v128 = vshrl.u32 %v127, 7
    %v129 = vsub.s32 1, %v128
    %v130 = vrot.slane %v22, %v129
    %v131 = vlaneseq
    %v132 = vshrl.u32 %v131, 7
    %v133 = vsub.s32 2, %v132
    %v134 = vrot.slane %v22, %v133
    %v135 = vlaneseq
    %v136 = vshrl.u32 %v135, 7
    %v137 = vsub.s32 3, %v136
    %v138 = vrot.slane %v22, %v137
    %v139 = vlaneseq
    %v140 = vshrl.u32 %v139, 7
    %v141 = vsub.s32 4, %v140
    %v142 = vrot.slane %v22, %v141
    %v143 = vlaneseq
    %v144 = vshrl.u32 %v143, 7
    %v145 = vsub.s32 5, %v144
    %v146 = vrot.slane %v22, %v145
    %v147 = vlaneseq
    %v148 = vshrl.u32 %v147, 7
    %v149 = vsub.s32 6, %v148
    %v150 = vrot.slane %v22, %v149
    %v151 = vlaneseq
    %v152 = vshrl.u32 %v151, 7
    %v153 = vsub.s32 7, %v152
    %v154 = vrot.slane %v22, %v153
    %187 = vst [vmem:[%s3] sm:$0xff] %v30
    %188 = vst [vmem:[%s3 + $0x8] sm:$0xff] %v34
    %189 = vst [vmem:[%s3 + $0x10] sm:$0xff] %v38
    %190 = vst [vmem:[%s3 + $0x18] sm:$0xff] %v42
    %191 = vst [vmem:[%s3 + $0x20] sm:$0xff] %v46
    %192 = vst [vmem:[%s3 + $0x28] sm:$0xff] %v50
    %193 = vst [vmem:[%s3 + $0x30] sm:$0xff] %v54
    %194 = vst [vmem:[%s3 + $0x38] sm:$0xff] %v58
    %195 = vst [vmem:[%s3 + $0x40] sm:$0xff] %v62
    %196 = vst [vmem:[%s3 + $0x48] sm:$0xff] %v66
    %197 = vst [vmem:[%s3 + $0x50] sm:$0xff] %v70
    %198 = vst [vmem:[%s3 + $0x58] sm:$0xff] %v74
    %199 = vst [vmem:[%s3 + $0x60] sm:$0xff] %v78
    %200 = vst [vmem:[%s3 + $0x68] sm:$0xff] %v82
    %201 = vst [vmem:[%s3 + $0x70] sm:$0xff] %v86
    %202 = vst [vmem:[%s3 + $0x78] sm:$0xff] %v90
    %203 = vst [vmem:[%s3 + $0x80] sm:$0xff] %v94
    %204 = vst [vmem:[%s3 + $0x88] sm:$0xff] %v98
    %205 = vst [vmem:[%s3 + $0x90] sm:$0xff] %v102
    %206 = vst [vmem:[%s3 + $0x98] sm:$0xff] %v106
    %207 = vst [vmem:[%s3 + $0xa0] sm:$0xff] %v110
    %208 = vst [vmem:[%s3 + $0xa8] sm:$0xff] %v114
    %209 = vst [vmem:[%s3 + $0xb0] sm:$0xff] %v118
    %210 = vst [vmem:[%s3 + $0xb8] sm:$0xff] %v122
    %211 = vst [vmem:[%s3 + $0xc0] sm:$0xff] %v126
    %212 = vst [vmem:[%s3 + $0xc8] sm:$0xff] %v130
    %213 = vst [vmem:[%s3 + $0xd0] sm:$0xff] %v134
    %214 = vst [vmem:[%s3 + $0xd8] sm:$0xff] %v138
    %215 = vst [vmem:[%s3 + $0xe0] sm:$0xff] %v142
    %216 = vst [vmem:[%s3 + $0xe8] sm:$0xff] %v146
    %217 = vst [vmem:[%s3 + $0xf0] sm:$0xff] %v150
    %218 = vst [vmem:[%s3 + $0xf8] sm:$0xff] %v154
  $region17: #{_lambda_.46} parent=0 // pred_fallthru
    _
  %v219 = vld [vmem:[%s3] sm:$0xff]
  %v220 = vld [vmem:[%s3 + $0x8] sm:$0xff]
  %v221 = vld [vmem:[%s3 + $0x10] sm:$0xff]
  %v222 = vld [vmem:[%s3 + $0x18] sm:$0xff]
  %v223 = vld [vmem:[%s3 + $0x20] sm:$0xff]
  %v224 = vld [vmem:[%s3 + $0x28] sm:$0xff]
  %v225 = vld [vmem:[%s3 + $0x30] sm:$0xff]
  %v226 = vld [vmem:[%s3 + $0x38] sm:$0xff]
  %v227 = vld [vmem:[%s3 + $0x40] sm:$0xff]
  %v228 = vld [vmem:[%s3 + $0x48] sm:$0xff]
  %v229 = vld [vmem:[%s3 + $0x50] sm:$0xff]
  %v230 = vld [vmem:[%s3 + $0x58] sm:$0xff]
  %v231 = vld [vmem:[%s3 + $0x60] sm:$0xff]
  %v232 = vld [vmem:[%s3 + $0x68] sm:$0xff]
  %v233 = vld [vmem:[%s3 + $0x70] sm:$0xff]
  %v234 = vld [vmem:[%s3 + $0x78] sm:$0xff]
  %v235 = vld [vmem:[%s3 + $0x80] sm:$0xff]
  %v236 = vld [vmem:[%s3 + $0x88] sm:$0xff]
  %v237 = vld [vmem:[%s3 + $0x90] sm:$0xff]
  %v238 = vld [vmem:[%s3 + $0x98] sm:$0xff]
  %v239 = vld [vmem:[%s3 + $0xa0] sm:$0xff]
  %v240 = vld [vmem:[%s3 + $0xa8] sm:$0xff]
  %v241 = vld [vmem:[%s3 + $0xb0] sm:$0xff]
  %v242 = vld [vmem:[%s3 + $0xb8] sm:$0xff]
  %v243 = vld [vmem:[%s3 + $0xc0] sm:$0xff]
  %v244 = vld [vmem:[%s3 + $0xc8] sm:$0xff]
  %v245 = vld [vmem:[%s3 + $0xd0] sm:$0xff]
  %v246 = vld [vmem:[%s3 + $0xd8] sm:$0xff]
  %v247 = vld [vmem:[%s3 + $0xe0] sm:$0xff]
  %v248 = vld [vmem:[%s3 + $0xe8] sm:$0xff]
  %v249 = vld [vmem:[%s3 + $0xf0] sm:$0xff]
  %v250 = vld [vmem:[%s3 + $0xf8] sm:$0xff]
  %v251 = vld [vmem:[%s0] sm:$0xf]
  %v252 = vld [vmem:[%s1] sm:$0xff]
  %v253 = vld [vmem:[%s1 + $0x8] sm:$0xff]
  %v254 = vld [vmem:[%s1 + $0x10] sm:$0xff]
  %v255 = vld [vmem:[%s1 + $0x18] sm:$0xff]
  %v256 = vld [vmem:[%s1 + $0x20] sm:$0xff]
  %v257 = vld [vmem:[%s1 + $0x28] sm:$0xff]
  %v258 = vld [vmem:[%s1 + $0x30] sm:$0xff]
  %v259 = vld [vmem:[%s1 + $0x38] sm:$0xff]
  %v260 = vld [vmem:[%s1 + $0x40] sm:$0xff]
  %v261 = vld [vmem:[%s1 + $0x48] sm:$0xff]
  %v262 = vld [vmem:[%s1 + $0x50] sm:$0xff]
  %v263 = vld [vmem:[%s1 + $0x58] sm:$0xff]
  %v264 = vld [vmem:[%s1 + $0x60] sm:$0xff]
  %v265 = vld [vmem:[%s1 + $0x68] sm:$0xff]
  %v266 = vld [vmem:[%s1 + $0x70] sm:$0xff]
  %v267 = vld [vmem:[%s1 + $0x78] sm:$0xff]
  %v284 = vunpack.c.l.b16 %v252
  %v285 = vunpack.c.h.b16 %v252
  %v286 = vunpack.c.l.b16 %v253
  %v287 = vunpack.c.h.b16 %v253
  %v288 = vunpack.c.l.b16 %v254
  %v289 = vunpack.c.h.b16 %v254
  %v290 = vunpack.c.l.b16 %v255
  %v291 = vunpack.c.h.b16 %v255
  %v292 = vunpack.c.l.b16 %v256
  %v293 = vunpack.c.h.b16 %v256
  %v294 = vunpack.c.l.b16 %v257
  %v295 = vunpack.c.h.b16 %v257
  %v296 = vunpack.c.l.b16 %v258
  %v297 = vunpack.c.h.b16 %v258
  %v298 = vunpack.c.l.b16 %v259
  %v299 = vunpack.c.h.b16 %v259
  %v300 = vunpack.c.l.b16 %v260
  %v301 = vunpack.c.h.b16 %v260
  %v302 = vunpack.c.l.b16 %v261
  %v303 = vunpack.c.h.b16 %v261
  %v304 = vunpack.c.l.b16 %v262
  %v305 = vunpack.c.h.b16 %v262
  %v306 = vunpack.c.l.b16 %v263
  %v307 = vunpack.c.h.b16 %v263
  %v308 = vunpack.c.l.b16 %v264
  %v309 = vunpack.c.h.b16 %v264
  %v310 = vunpack.c.l.b16 %v265
  %v311 = vunpack.c.h.b16 %v265
  %v312 = vunpack.c.l.b16 %v266
  %v313 = vunpack.c.h.b16 %v266
  %v314 = vunpack.c.l.b16 %v267
  %v315 = vunpack.c.h.b16 %v267
  %v316 = vpack.c.b16 %v284, %v284
  %v317 = vpack.c.b16 %v285, %v285
  %v318 = vpack.c.b16 %v286, %v286
  %v319 = vpack.c.b16 %v287, %v287
  %v320 = vpack.c.b16 %v288, %v288
  %v321 = vpack.c.b16 %v289, %v289
  %v322 = vpack.c.b16 %v290, %v290
  %v323 = vpack.c.b16 %v291, %v291
  %v324 = vpack.c.b16 %v292, %v292
  %v325 = vpack.c.b16 %v293, %v293
  %v326 = vpack.c.b16 %v294, %v294
  %v327 = vpack.c.b16 %v295, %v295
  %v328 = vpack.c.b16 %v296, %v296
  %v329 = vpack.c.b16 %v297, %v297
  %v330 = vpack.c.b16 %v298, %v298
  %v331 = vpack.c.b16 %v299, %v299
  %v332 = vpack.c.b16 %v300, %v300
  %v333 = vpack.c.b16 %v301, %v301
  %v334 = vpack.c.b16 %v302, %v302
  %v335 = vpack.c.b16 %v303, %v303
  %v336 = vpack.c.b16 %v304, %v304
  %v337 = vpack.c.b16 %v305, %v305
  %v338 = vpack.c.b16 %v306, %v306
  %v339 = vpack.c.b16 %v307, %v307
  %v340 = vpack.c.b16 %v308, %v308
  %v341 = vpack.c.b16 %v309, %v309
  %v342 = vpack.c.b16 %v310, %v310
  %v343 = vpack.c.b16 %v311, %v311
  %v344 = vpack.c.b16 %v312, %v312
  %v345 = vpack.c.b16 %v313, %v313
  %v346 = vpack.c.b16 %v314, %v314
  %v347 = vpack.c.b16 %v315, %v315
  %vm348 = vcmask 64512
  %v350 = vsel %vm348, %v251, 0
  %vm352 = vcmask 1043456
  %v354 = vsel %vm352, %v316, 0
  %v357 = vsel %vm352, %v317, 0
  %v360 = vsel %vm352, %v318, 0
  %v363 = vsel %vm352, %v319, 0
  %v366 = vsel %vm352, %v320, 0
  %v369 = vsel %vm352, %v321, 0
  %v372 = vsel %vm352, %v322, 0
  %v375 = vsel %vm352, %v323, 0
  %v378 = vsel %vm352, %v324, 0
  %v381 = vsel %vm352, %v325, 0
  %v384 = vsel %vm352, %v326, 0
  %v387 = vsel %vm352, %v327, 0
  %v390 = vsel %vm352, %v328, 0
  %v393 = vsel %vm352, %v329, 0
  %v396 = vsel %vm352, %v330, 0
  %v399 = vsel %vm352, %v331, 0
  %v402 = vsel %vm352, %v332, 0
  %v405 = vsel %vm352, %v333, 0
  %v408 = vsel %vm352, %v334, 0
  %v411 = vsel %vm352, %v335, 0
  %v414 = vsel %vm352, %v336, 0
  %v417 = vsel %vm352, %v337, 0
  %v420 = vsel %vm352, %v338, 0
  %v423 = vsel %vm352, %v339, 0
  %v426 = vsel %vm352, %v340, 0
  %v429 = vsel %vm352, %v341, 0
  %v432 = vsel %vm352, %v342, 0
  %v435 = vsel %vm352, %v343, 0
  %v438 = vsel %vm352, %v344, 0
  %v441 = vsel %vm352, %v345, 0
  %v444 = vsel %vm352, %v346, 0
  %v447 = vsel %vm352, %v347, 0
  %449 = vmatprep.subr.bf16.mxu0 %v357
  %450 = vmatpush1.bf16.msra.mxu0 %v354
  %451 = vmatprep.subr.bf16.mxu0 0
  %452 = vmatpush1.bf16.msra.mxu0 0
  %453 = vmatprep.subr.bf16.mxu0 0
  %454 = vmatpush1.bf16.msra.mxu0 0
  %455 = vmatprep.subr.bf16.mxu0 0
  %456 = vmatpush1.bf16.msra.mxu0 0
  %457 = vmatprep.subr.bf16.mxu0 0
  %458 = vmatpush1.bf16.msra.mxu0 0
  %459 = vmatprep.subr.bf16.mxu0 0
  %460 = vmatpush1.bf16.msra.mxu0 0
  %461 = vmatprep.subr.bf16.mxu0 0
  %462 = vmatpush1.bf16.msra.mxu0 0
  %463 = vmatprep.subr.bf16.mxu0 0
  %464 = vmatpush1.bf16.msra.mxu0 0
  %465 = vmatprep.subr.bf16.mxu0 0
  %466 = vmatpush1.bf16.msra.mxu0 0
  %467 = vmatprep.subr.bf16.mxu0 0
  %468 = vmatpush1.bf16.msra.mxu0 0
  %469 = vmatprep.subr.bf16.mxu0 0
  %470 = vmatpush1.bf16.msra.mxu0 0
  %471 = vmatprep.subr.bf16.mxu0 0
  %472 = vmatpush1.bf16.msra.mxu0 0
  %473 = vmatprep.subr.bf16.mxu0 0
  %474 = vmatpush1.bf16.msra.mxu0 0
  %475 = vmatprep.subr.bf16.mxu0 0
  %476 = vmatpush1.bf16.msra.mxu0 0
  %477 = vmatprep.subr.bf16.mxu0 0
  %478 = vmatpush1.bf16.msra.mxu0 0
  %479 = vmatprep.subr.bf16.mxu0 0
  %480 = vmatpush1.bf16.msra.mxu0 0
  %481 = vmatprep.mubr.bf16.mxu0 0
  %482 = vmatmul.mubr.bf16.gmra.mrb[0].mxu0 %v350
  %v483 = vpop.f32.mrb[0].mxu0
  %v484 = vadd.f32 0.0, %v483
  %v485 = vpop.f32.mrb[0].mxu0
  %v486 = vadd.f32 0.0, %v485
  %v487 = vpop.f32.mrb[0].mxu0
  %v488 = vpop.f32.mrb[0].mxu0
  %489 = vdwg.mxu0
  %490 = vmatprep.subr.bf16.mxu0 %v363
  %491 = vmatpush1.bf16.msra.mxu0 %v360
  %492 = vmatprep.subr.bf16.mxu0 0
  %493 = vmatpush1.bf16.msra.mxu0 0
  %494 = vmatprep.subr.bf16.mxu0 0
  %495 = vmatpush1.bf16.msra.mxu0 0
  %496 = vmatprep.subr.bf16.mxu0 0
  %497 = vmatpush1.bf16.msra.mxu0 0
  %498 = vmatprep.subr.bf16.mxu0 0
  %499 = vmatpush1.bf16.msra.mxu0 0
  %500 = vmatprep.subr.bf16.mxu0 0
  %501 = vmatpush1.bf16.msra.mxu0 0
  %502 = vmatprep.subr.bf16.mxu0 0
  %503 = vmatpush1.bf16.msra.mxu0 0
  %504 = vmatprep.subr.bf16.mxu0 0
  %505 = vmatpush1.bf16.msra.mxu0 0
  %506 = vmatprep.subr.bf16.mxu0 0
  %507 = vmatpush1.bf16.msra.mxu0 0
  %508 = vmatprep.subr.bf16.mxu0 0
  %509 = vmatpush1.bf16.msra.mxu0 0
  %510 = vmatprep.subr.bf16.mxu0 0
  %511 = vmatpush1.bf16.msra.mxu0 0
  %512 = vmatprep.subr.bf16.mxu0 0
  %513 = vmatpush1.bf16.msra.mxu0 0
  %514 = vmatprep.subr.bf16.mxu0 0
  %515 = vmatpush1.bf16.msra.mxu0 0
  %516 = vmatprep.subr.bf16.mxu0 0
  %517 = vmatpush1.bf16.msra.mxu0 0
  %518 = vmatprep.subr.bf16.mxu0 0
  %519 = vmatpush1.bf16.msra.mxu0 0
  %520 = vmatprep.subr.bf16.mxu0 0
  %521 = vmatpush1.bf16.msra.mxu0 0
  %522 = vmatprep.mubr.bf16.mxu0 0
  %523 = vmatmul.mubr.bf16.gmra.mrb[0].mxu0 %v350
  %v524 = vpop.f32.mrb[0].mxu0
  %v525 = vadd.f32 0.0, %v524
  %v526 = vpop.f32.mrb[0].mxu0
  %v527 = vadd.f32 0.0, %v526
  %v528 = vpop.f32.mrb[0].mxu0
  %v529 = vpop.f32.mrb[0].mxu0
  %530 = vdwg.mxu0
  %531 = vmatprep.subr.bf16.mxu0 %v369
  %532 = vmatpush1.bf16.msra.mxu0 %v366
  %533 = vmatprep.subr.bf16.mxu0 0
  %534 = vmatpush1.bf16.msra.mxu0 0
  %535 = vmatprep.subr.bf16.mxu0 0
  %536 = vmatpush1.bf16.msra.mxu0 0
  %537 = vmatprep.subr.bf16.mxu0 0
  %538 = vmatpush1.bf16.msra.mxu0 0
  %539 = vmatprep.subr.bf16.mxu0 0
  %540 = vmatpush1.bf16.msra.mxu0 0
  %541 = vmatprep.subr.bf16.mxu0 0
  %542 = vmatpush1.bf16.msra.mxu0 0
  %543 = vmatprep.subr.bf16.mxu0 0
  %544 = vmatpush1.bf16.msra.mxu0 0
  %545 = vmatprep.subr.bf16.mxu0 0
  %546 = vmatpush1.bf16.msra.mxu0 0
  %547 = vmatprep.subr.bf16.mxu0 0
  %548 = vmatpush1.bf16.msra.mxu0 0
  %549 = vmatprep.subr.bf16.mxu0 0
  %550 = vmatpush1.bf16.msra.mxu0 0
  %551 = vmatprep.subr.bf16.mxu0 0
  %552 = vmatpush1.bf16.msra.mxu0 0
  %553 = vmatprep.subr.bf16.mxu0 0
  %554 = vmatpush1.bf16.msra.mxu0 0
  %555 = vmatprep.subr.bf16.mxu0 0
  %556 = vmatpush1.bf16.msra.mxu0 0
  %557 = vmatprep.subr.bf16.mxu0 0
  %558 = vmatpush1.bf16.msra.mxu0 0
  %559 = vmatprep.subr.bf16.mxu0 0
  %560 = vmatpush1.bf16.msra.mxu0 0
  %561 = vmatprep.subr.bf16.mxu0 0
  %562 = vmatpush1.bf16.msra.mxu0 0
  %563 = vmatprep.mubr.bf16.mxu0 0
  %564 = vmatmul.mubr.bf16.gmra.mrb[0].mxu0 %v350
  %v565 = vpop.f32.mrb[0].mxu0
  %v566 = vadd.f32 0.0, %v565
  %v567 = vpop.f32.mrb[0].mxu0
  %v568 = vadd.f32 0.0, %v567
  %v569 = vpop.f32.mrb[0].mxu0
  %v570 = vpop.f32.mrb[0].mxu0
  %571 = vdwg.mxu0
  %572 = vmatprep.subr.bf16.mxu0 %v375
  %573 = vmatpush1.bf16.msra.mxu0 %v372
  %574 = vmatprep.subr.bf16.mxu0 0
  %575 = vmatpush1.bf16.msra.mxu0 0
  %576 = vmatprep.subr.bf16.mxu0 0
  %577 = vmatpush1.bf16.msra.mxu0 0
  %578 = vmatprep.subr.bf16.mxu0 0
  %579 = vmatpush1.bf16.msra.mxu0 0
  %580 = vmatprep.subr.bf16.mxu0 0
  %581 = vmatpush1.bf16.msra.mxu0 0
  %582 = vmatprep.subr.bf16.mxu0 0
  %583 = vmatpush1.bf16.msra.mxu0 0
  %584 = vmatprep.subr.bf16.mxu0 0
  %585 = vmatpush1.bf16.msra.mxu0 0
  %586 = vmatprep.subr.bf16.mxu0 0
  %587 = vmatpush1.bf16.msra.mxu0 0
  %588 = vmatprep.subr.bf16.mxu0 0
  %589 = vmatpush1.bf16.msra.mxu0 0
  %590 = vmatprep.subr.bf16.mxu0 0
  %591 = vmatpush1.bf16.msra.mxu0 0
  %592 = vmatprep.subr.bf16.mxu0 0
  %593 = vmatpush1.bf16.msra.mxu0 0
  %594 = vmatprep.subr.bf16.mxu0 0
  %595 = vmatpush1.bf16.msra.mxu0 0
  %596 = vmatprep.subr.bf16.mxu0 0
  %597 = vmatpush1.bf16.msra.mxu0 0
  %598 = vmatprep.subr.bf16.mxu0 0
  %599 = vmatpush1.bf16.msra.mxu0 0
  %600 = vmatprep.subr.bf16.mxu0 0
  %601 = vmatpush1.bf16.msra.mxu0 0
  %602 = vmatprep.subr.bf16.mxu0 0
  %603 = vmatpush1.bf16.msra.mxu0 0
  %604 = vmatprep.mubr.bf16.mxu0 0
  %605 = vmatmul.mubr.bf16.gmra.mrb[0].mxu0 %v350
  %v606 = vpop.f32.mrb[0].mxu0
  %v607 = vadd.f32 0.0, %v606
  %v608 = vpop.f32.mrb[0].mxu0
  %v609 = vadd.f32 0.0, %v608
  %v610 = vpop.f32.mrb[0].mxu0
  %v611 = vpop.f32.mrb[0].mxu0
  %612 = vdwg.mxu0
  %613 = vmatprep.subr.bf16.mxu0 %v381
  %614 = vmatpush1.bf16.msra.mxu0 %v378
  %615 = vmatprep.subr.bf16.mxu0 0
  %616 = vmatpush1.bf16.msra.mxu0 0
  %617 = vmatprep.subr.bf16.mxu0 0
  %618 = vmatpush1.bf16.msra.mxu0 0
  %619 = vmatprep.subr.bf16.mxu0 0
  %620 = vmatpush1.bf16.msra.mxu0 0
  %621 = vmatprep.subr.bf16.mxu0 0
  %622 = vmatpush1.bf16.msra.mxu0 0
  %623 = vmatprep.subr.bf16.mxu0 0
  %624 = vmatpush1.bf16.msra.mxu0 0
  %625 = vmatprep.subr.bf16.mxu0 0
  %626 = vmatpush1.bf16.msra.mxu0 0
  %627 = vmatprep.subr.bf16.mxu0 0
  %628 = vmatpush1.bf16.msra.mxu0 0
  %629 = vmatprep.subr.bf16.mxu0 0
  %630 = vmatpush1.bf16.msra.mxu0 0
  %631 = vmatprep.subr.bf16.mxu0 0
  %632 = vmatpush1.bf16.msra.mxu0 0
  %633 = vmatprep.subr.bf16.mxu0 0
  %634 = vmatpush1.bf16.msra.mxu0 0
  %635 = vmatprep.subr.bf16.mxu0 0
  %636 = vmatpush1.bf16.msra.mxu0 0
  %637 = vmatprep.subr.bf16.mxu0 0
  %638 = vmatpush1.bf16.msra.mxu0 0
  %639 = vmatprep.subr.bf16.mxu0 0
  %640 = vmatpush1.bf16.msra.mxu0 0
  %641 = vmatprep.subr.bf16.mxu0 0
  %642 = vmatpush1.bf16.msra.mxu0 0
  %643 = vmatprep.subr.bf16.mxu0 0
  %644 = vmatpush1.bf16.msra.mxu0 0
  %645 = vmatprep.mubr.bf16.mxu0 0
  %646 = vmatmul.mubr.bf16.gmra.mrb[0].mxu0 %v350
  %v647 = vpop.f32.mrb[0].mxu0
  %v648 = vadd.f32 0.0, %v647
  %v649 = vpop.f32.mrb[0].mxu0
  %v650 = vadd.f32 0.0, %v649
  %v651 = vpop.f32.mrb[0].mxu0
  %v652 = vpop.f32.mrb[0].mxu0
  %653 = vdwg.mxu0
  %654 = vmatprep.subr.bf16.mxu0 %v387
  %655 = vmatpush1.bf16.msra.mxu0 %v384
  %656 = vmatprep.subr.bf16.mxu0 0
  %657 = vmatpush1.bf16.msra.mxu0 0
  %658 = vmatprep.subr.bf16.mxu0 0
  %659 = vmatpush1.bf16.msra.mxu0 0
  %660 = vmatprep.subr.bf16.mxu0 0
  %661 = vmatpush1.bf16.msra.mxu0 0
  %662 = vmatprep.subr.bf16.mxu0 0
  %663 = vmatpush1.bf16.msra.mxu0 0
  %664 = vmatprep.subr.bf16.mxu0 0
  %665 = vmatpush1.bf16.msra.mxu0 0
  %666 = vmatprep.subr.bf16.mxu0 0
  %667 = vmatpush1.bf16.msra.mxu0 0
  %668 = vmatprep.subr.bf16.mxu0 0
  %669 = vmatpush1.bf16.msra.mxu0 0
  %670 = vmatprep.subr.bf16.mxu0 0
  %671 = vmatpush1.bf16.msra.mxu0 0
  %672 = vmatprep.subr.bf16.mxu0 0
  %673 = vmatpush1.bf16.msra.mxu0 0
  %674 = vmatprep.subr.bf16.mxu0 0
  %675 = vmatpush1.bf16.msra.mxu0 0
  %676 = vmatprep.subr.bf16.mxu0 0
  %677 = vmatpush1.bf16.msra.mxu0 0
  %678 = vmatprep.subr.bf16.mxu0 0
  %679 = vmatpush1.bf16.msra.mxu0 0
  %680 = vmatprep.subr.bf16.mxu0 0
  %681 = vmatpush1.bf16.msra.mxu0 0
  %682 = vmatprep.subr.bf16.mxu0 0
  %683 = vmatpush1.bf16.msra.mxu0 0
  %684 = vmatprep.subr.bf16.mxu0 0
  %685 = vmatpush1.bf16.msra.mxu0 0
  %686 = vmatprep.mubr.bf16.mxu0 0
  %687 = vmatmul.mubr.bf16.gmra.mrb[0].mxu0 %v350
  %v688 = vpop.f32.mrb[0].mxu0
  %v689 = vadd.f32 0.0, %v688
  %v690 = vpop.f32.mrb[0].mxu0
  %v691 = vadd.f32 0.0, %v690
  %v692 = vpop.f32.mrb[0].mxu0
  %v693 = vpop.f32.mrb[0].mxu0
  %694 = vdwg.mxu0
  %695 = vmatprep.subr.bf16.mxu0 %v393
  %696 = vmatpush1.bf16.msra.mxu0 %v390
  %697 = vmatprep.subr.bf16.mxu0 0
  %698 = vmatpush1.bf16.msra.mxu0 0
  %699 = vmatprep.subr.bf16.mxu0 0
  %700 = vmatpush1.bf16.msra.mxu0 0
  %701 = vmatprep.subr.bf16.mxu0 0
  %702 = vmatpush1.bf16.msra.mxu0 0
  %703 = vmatprep.subr.bf16.mxu0 0
  %704 = vmatpush1.bf16.msra.mxu0 0
  %705 = vmatprep.subr.bf16.mxu0 0
  %706 = vmatpush1.bf16.msra.mxu0 0
  %707 = vmatprep.subr.bf16.mxu0 0
  %708 = vmatpush1.bf16.msra.mxu0 0
  %709 = vmatprep.subr.bf16.mxu0 0
  %710 = vmatpush1.bf16.msra.mxu0 0
  %711 = vmatprep.subr.bf16.mxu0 0
  %712 = vmatpush1.bf16.msra.mxu0 0
  %713 = vmatprep.subr.bf16.mxu0 0
  %714 = vmatpush1.bf16.msra.mxu0 0
  %715 = vmatprep.subr.bf16.mxu0 0
  %716 = vmatpush1.bf16.msra.mxu0 0
  %717 = vmatprep.subr.bf16.mxu0 0
  %718 = vmatpush1.bf16.msra.mxu0 0
  %719 = vmatprep.subr.bf16.mxu0 0
  %720 = vmatpush1.bf16.msra.mxu0 0
  %721 = vmatprep.subr.bf16.mxu0 0
  %722 = vmatpush1.bf16.msra.mxu0 0
  %723 = vmatprep.subr.bf16.mxu0 0
  %724 = vmatpush1.bf16.msra.mxu0 0
  %725 = vmatprep.subr.bf16.mxu0 0
  %726 = vmatpush1.bf16.msra.mxu0 0
  %727 = vmatprep.mubr.bf16.mxu0 0
  %728 = vmatmul.mubr.bf16.gmra.mrb[0].mxu0 %v350
  %v729 = vpop.f32.mrb[0].mxu0
  %v730 = vadd.f32 0.0, %v729
  %v731 = vpop.f32.mrb[0].mxu0
  %v732 = vadd.f32 0.0, %v731
  %v733 = vpop.f32.mrb[0].mxu0
  %v734 = vpop.f32.mrb[0].mxu0
  %735 = vdwg.mxu0
  %736 = vmatprep.subr.bf16.mxu0 %v399
  %737 = vmatpush1.bf16.msra.mxu0 %v396
  %738 = vmatprep.subr.bf16.mxu0 0
  %739 = vmatpush1.bf16.msra.mxu0 0
  %740 = vmatprep.subr.bf16.mxu0 0
  %741 = vmatpush1.bf16.msra.mxu0 0
  %742 = vmatprep.subr.bf16.mxu0 0
  %743 = vmatpush1.bf16.msra.mxu0 0
  %744 = vmatprep.subr.bf16.mxu0 0
  %745 = vmatpush1.bf16.msra.mxu0 0
  %746 = vmatprep.subr.bf16.mxu0 0
  %747 = vmatpush1.bf16.msra.mxu0 0
  %748 = vmatprep.subr.bf16.mxu0 0
  %749 = vmatpush1.bf16.msra.mxu0 0
  %750 = vmatprep.subr.bf16.mxu0 0
  %751 = vmatpush1.bf16.msra.mxu0 0
  %752 = vmatprep.subr.bf16.mxu0 0
  %753 = vmatpush1.bf16.msra.mxu0 0
  %754 = vmatprep.subr.bf16.mxu0 0
  %755 = vmatpush1.bf16.msra.mxu0 0
  %756 = vmatprep.subr.bf16.mxu0 0
  %757 = vmatpush1.bf16.msra.mxu0 0
  %758 = vmatprep.subr.bf16.mxu0 0
  %759 = vmatpush1.bf16.msra.mxu0 0
  %760 = vmatprep.subr.bf16.mxu0 0
  %761 = vmatpush1.bf16.msra.mxu0 0
  %762 = vmatprep.subr.bf16.mxu0 0
  %763 = vmatpush1.bf16.msra.mxu0 0
  %764 = vmatprep.subr.bf16.mxu0 0
  %765 = vmatpush1.bf16.msra.mxu0 0
  %766 = vmatprep.subr.bf16.mxu0 0
  %767 = vmatpush1.bf16.msra.mxu0 0
  %768 = vmatprep.mubr.bf16.mxu0 0
  %769 = vmatmul.mubr.bf16.gmra.mrb[0].mxu0 %v350
  %v770 = vpop.f32.mrb[0].mxu0
  %v771 = vadd.f32 0.0, %v770
  %v772 = vpop.f32.mrb[0].mxu0
  %v773 = vadd.f32 0.0, %v772
  %v774 = vpop.f32.mrb[0].mxu0
  %v775 = vpop.f32.mrb[0].mxu0
  %776 = vdwg.mxu0
  %777 = vmatprep.subr.bf16.mxu0 %v405
  %778 = vmatpush1.bf16.msra.mxu0 %v402
  %779 = vmatprep.subr.bf16.mxu0 0
  %780 = vmatpush1.bf16.msra.mxu0 0
  %781 = vmatprep.subr.bf16.mxu0 0
  %782 = vmatpush1.bf16.msra.mxu0 0
  %783 = vmatprep.subr.bf16.mxu0 0
  %784 = vmatpush1.bf16.msra.mxu0 0
  %785 = vmatprep.subr.bf16.mxu0 0
  %786 = vmatpush1.bf16.msra.mxu0 0
  %787 = vmatprep.subr.bf16.mxu0 0
  %788 = vmatpush1.bf16.msra.mxu0 0
  %789 = vmatprep.subr.bf16.mxu0 0
  %790 = vmatpush1.bf16.msra.mxu0 0
  %791 = vmatprep.subr.bf16.mxu0 0
  %792 = vmatpush1.bf16.msra.mxu0 0
  %793 = vmatprep.subr.bf16.mxu0 0
  %794 = vmatpush1.bf16.msra.mxu0 0
  %795 = vmatprep.subr.bf16.mxu0 0
  %796 = vmatpush1.bf16.msra.mxu0 0
  %797 = vmatprep.subr.bf16.mxu0 0
  %798 = vmatpush1.bf16.msra.mxu0 0
  %799 = vmatprep.subr.bf16.mxu0 0
  %800 = vmatpush1.bf16.msra.mxu0 0
  %801 = vmatprep.subr.bf16.mxu0 0
  %802 = vmatpush1.bf16.msra.mxu0 0
  %803 = vmatprep.subr.bf16.mxu0 0
  %804 = vmatpush1.bf16.msra.mxu0 0
  %805 = vmatprep.subr.bf16.mxu0 0
  %806 = vmatpush1.bf16.msra.mxu0 0
  %807 = vmatprep.subr.bf16.mxu0 0
  %808 = vmatpush1.bf16.msra.mxu0 0
  %809 = vmatprep.mubr.bf16.mxu0 0
  %810 = vmatmul.mubr.bf16.gmra.mrb[0].mxu0 %v350
  %v811 = vpop.f32.mrb[0].mxu0
  %v812 = vadd.f32 0.0, %v811
  %v813 = vpop.f32.mrb[0].mxu0
  %v814 = vadd.f32 0.0, %v813
  %v815 = vpop.f32.mrb[0].mxu0
  %v816 = vpop.f32.mrb[0].mxu0
  %817 = vdwg.mxu0
  %818 = vmatprep.subr.bf16.mxu0 %v411
  %819 = vmatpush1.bf16.msra.mxu0 %v408
  %820 = vmatprep.subr.bf16.mxu0 0
  %821 = vmatpush1.bf16.msra.mxu0 0
  %822 = vmatprep.subr.bf16.mxu0 0
  %823 = vmatpush1.bf16.msra.mxu0 0
  %824 = vmatprep.subr.bf16.mxu0 0
  %825 = vmatpush1.bf16.msra.mxu0 0
  %826 = vmatprep.subr.bf16.mxu0 0
  %827 = vmatpush1.bf16.msra.mxu0 0
  %828 = vmatprep.subr.bf16.mxu0 0
  %829 = vmatpush1.bf16.msra.mxu0 0
  %830 = vmatprep.subr.bf16.mxu0 0
  %831 = vmatpush1.bf16.msra.mxu0 0
  %832 = vmatprep.subr.bf16.mxu0 0
  %833 = vmatpush1.bf16.msra.mxu0 0
  %834 = vmatprep.subr.bf16.mxu0 0
  %835 = vmatpush1.bf16.msra.mxu0 0
  %836 = vmatprep.subr.bf16.mxu0 0
  %837 = vmatpush1.bf16.msra.mxu0 0
  %838 = vmatprep.subr.bf16.mxu0 0
  %839 = vmatpush1.bf16.msra.mxu0 0
  %840 = vmatprep.subr.bf16.mxu0 0
  %841 = vmatpush1.bf16.msra.mxu0 0
  %842 = vmatprep.subr.bf16.mxu0 0
  %843 = vmatpush1.bf16.msra.mxu0 0
  %844 = vmatprep.subr.bf16.mxu0 0
  %845 = vmatpush1.bf16.msra.mxu0 0
  %846 = vmatprep.subr.bf16.mxu0 0
  %847 = vmatpush1.bf16.msra.mxu0 0
  %848 = vmatprep.subr.bf16.mxu0 0
  %849 = vmatpush1.bf16.msra.mxu0 0
  %850 = vmatprep.mubr.bf16.mxu0 0
  %851 = vmatmul.mubr.bf16.gmra.mrb[0].mxu0 %v350
  %v852 = vpop.f32.mrb[0].mxu0
  %v853 = vadd.f32 0.0, %v852
  %v854 = vpop.f32.mrb[0].mxu0
  %v855 = vadd.f32 0.0, %v854
  %v856 = vpop.f32.mrb[0].mxu0
  %v857 = vpop.f32.mrb[0].mxu0
  %858 = vdwg.mxu0
  %859 = vmatprep.subr.bf16.mxu0 %v417
  %860 = vmatpush1.bf16.msra.mxu0 %v414
  %861 = vmatprep.subr.bf16.mxu0 0
  %862 = vmatpush1.bf16.msra.mxu0 0
  %863 = vmatprep.subr.bf16.mxu0 0
  %864 = vmatpush1.bf16.msra.mxu0 0
  %865 = vmatprep.subr.bf16.mxu0 0
  %866 = vmatpush1.bf16.msra.mxu0 0
  %867 = vmatprep.subr.bf16.mxu0 0
  %868 = vmatpush1.bf16.msra.mxu0 0
  %869 = vmatprep.subr.bf16.mxu0 0
  %870 = vmatpush1.bf16.msra.mxu0 0
  %871 = vmatprep.subr.bf16.mxu0 0
  %872 = vmatpush1.bf16.msra.mxu0 0
  %873 = vmatprep.subr.bf16.mxu0 0
  %874 = vmatpush1.bf16.msra.mxu0 0
  %875 = vmatprep.subr.bf16.mxu0 0
  %876 = vmatpush1.bf16.msra.mxu0 0
  %877 = vmatprep.subr.bf16.mxu0 0
  %878 = vmatpush1.bf16.msra.mxu0 0
  %879 = vmatprep.subr.bf16.mxu0 0
  %880 = vmatpush1.bf16.msra.mxu0 0
  %881 = vmatprep.subr.bf16.mxu0 0
  %882 = vmatpush1.bf16.msra.mxu0 0
  %883 = vmatprep.subr.bf16.mxu0 0
  %884 = vmatpush1.bf16.msra.mxu0 0
  %885 = vmatprep.subr.bf16.mxu0 0
  %886 = vmatpush1.bf16.msra.mxu0 0
  %887 = vmatprep.subr.bf16.mxu0 0
  %888 = vmatpush1.bf16.msra.mxu0 0
  %889 = vmatprep.subr.bf16.mxu0 0
  %890 = vmatpush1.bf16.msra.mxu0 0
  %891 = vmatprep.mubr.bf16.mxu0 0
  %892 = vmatmul.mubr.bf16.gmra.mrb[0].mxu0 %v350
  %v893 = vpop.f32.mrb[0].mxu0
  %v894 = vadd.f32 0.0, %v893
  %v895 = vpop.f32.mrb[0].mxu0
  %v896 = vadd.f32 0.0, %v895
  %v897 = vpop.f32.mrb[0].mxu0
  %v898 = vpop.f32.mrb[0].mxu0
  %899 = vdwg.mxu0
  %900 = vmatprep.subr.bf16.mxu0 %v423
  %901 = vmatpush1.bf16.msra.mxu0 %v420
  %902 = vmatprep.subr.bf16.mxu0 0
  %903 = vmatpush1.bf16.msra.mxu0 0
  %904 = vmatprep.subr.bf16.mxu0 0
  %905 = vmatpush1.bf16.msra.mxu0 0
  %906 = vmatprep.subr.bf16.mxu0 0
  %907 = vmatpush1.bf16.msra.mxu0 0
  %908 = vmatprep.subr.bf16.mxu0 0
  %909 = vmatpush1.bf16.msra.mxu0 0
  %910 = vmatprep.subr.bf16.mxu0 0
  %911 = vmatpush1.bf16.msra.mxu0 0
  %912 = vmatprep.subr.bf16.mxu0 0
  %913 = vmatpush1.bf16.msra.mxu0 0
  %914 = vmatprep.subr.bf16.mxu0 0
  %915 = vmatpush1.bf16.msra.mxu0 0
  %916 = vmatprep.subr.bf16.mxu0 0
  %917 = vmatpush1.bf16.msra.mxu0 0
  %918 = vmatprep.subr.bf16.mxu0 0
  %919 = vmatpush1.bf16.msra.mxu0 0
  %920 = vmatprep.subr.bf16.mxu0 0
  %921 = vmatpush1.bf16.msra.mxu0 0
  %922 = vmatprep.subr.bf16.mxu0 0
  %923 = vmatpush1.bf16.msra.mxu0 0
  %924 = vmatprep.subr.bf16.mxu0 0
  %925 = vmatpush1.bf16.msra.mxu0 0
  %926 = vmatprep.subr.bf16.mxu0 0
  %927 = vmatpush1.bf16.msra.mxu0 0
  %928 = vmatprep.subr.bf16.mxu0 0
  %929 = vmatpush1.bf16.msra.mxu0 0
  %930 = vmatprep.subr.bf16.mxu0 0
  %931 = vmatpush1.bf16.msra.mxu0 0
  %932 = vmatprep.mubr.bf16.mxu0 0
  %933 = vmatmul.mubr.bf16.gmra.mrb[0].mxu0 %v350
  %v934 = vpop.f32.mrb[0].mxu0
  %v935 = vadd.f32 0.0, %v934
  %v936 = vpop.f32.mrb[0].mxu0
  %v937 = vadd.f32 0.0, %v936
  %v938 = vpop.f32.mrb[0].mxu0
  %v939 = vpop.f32.mrb[0].mxu0
  %940 = vdwg.mxu0
  %941 = vmatprep.subr.bf16.mxu0 %v429
  %942 = vmatpush1.bf16.msra.mxu0 %v426
  %943 = vmatprep.subr.bf16.mxu0 0
  %944 = vmatpush1.bf16.msra.mxu0 0
  %945 = vmatprep.subr.bf16.mxu0 0
  %946 = vmatpush1.bf16.msra.mxu0 0
  %947 = vmatprep.subr.bf16.mxu0 0
  %948 = vmatpush1.bf16.msra.mxu0 0
  %949 = vmatprep.subr.bf16.mxu0 0
  %950 = vmatpush1.bf16.msra.mxu0 0
  %951 = vmatprep.subr.bf16.mxu0 0
  %952 = vmatpush1.bf16.msra.mxu0 0
  %953 = vmatprep.subr.bf16.mxu0 0
  %954 = vmatpush1.bf16.msra.mxu0 0
  %955 = vmatprep.subr.bf16.mxu0 0
  %956 = vmatpush1.bf16.msra.mxu0 0
  %957 = vmatprep.subr.bf16.mxu0 0
  %958 = vmatpush1.bf16.msra.mxu0 0
  %959 = vmatprep.subr.bf16.mxu0 0
  %960 = vmatpush1.bf16.msra.mxu0 0
  %961 = vmatprep.subr.bf16.mxu0 0
  %962 = vmatpush1.bf16.msra.mxu0 0
  %963 = vmatprep.subr.bf16.mxu0 0
  %964 = vmatpush1.bf16.msra.mxu0 0
  %965 = vmatprep.subr.bf16.mxu0 0
  %966 = vmatpush1.bf16.msra.mxu0 0
  %967 = vmatprep.subr.bf16.mxu0 0
  %968 = vmatpush1.bf16.msra.mxu0 0
  %969 = vmatprep.subr.bf16.mxu0 0
  %970 = vmatpush1.bf16.msra.mxu0 0
  %971 = vmatprep.subr.bf16.mxu0 0
  %972 = vmatpush1.bf16.msra.mxu0 0
  %973 = vmatprep.mubr.bf16.mxu0 0
  %974 = vmatmul.mubr.bf16.gmra.mrb[0].mxu0 %v350
  %v975 = vpop.f32.mrb[0].mxu0
  %v976 = vadd.f32 0.0, %v975
  %v977 = vpop.f32.mrb[0].mxu0
  %v978 = vadd.f32 0.0, %v977
  %v979 = vpop.f32.mrb[0].mxu0
  %v980 = vpop.f32.mrb[0].mxu0
  %981 = vdwg.mxu0
  %982 = vmatprep.subr.bf16.mxu0 %v435
  %983 = vmatpush1.bf16.msra.mxu0 %v432
  %984 = vmatprep.subr.bf16.mxu0 0
  %985 = vmatpush1.bf16.msra.mxu0 0
  %986 = vmatprep.subr.bf16.mxu0 0
  %987 = vmatpush1.bf16.msra.mxu0 0
  %988 = vmatprep.subr.bf16.mxu0 0
  %989 = vmatpush1.bf16.msra.mxu0 0
  %990 = vmatprep.subr.bf16.mxu0 0
  %991 = vmatpush1.bf16.msra.mxu0 0
  %992 = vmatprep.subr.bf16.mxu0 0
  %993 = vmatpush1.bf16.msra.mxu0 0
  %994 = vmatprep.subr.bf16.mxu0 0
  %995 = vmatpush1.bf16.msra.mxu0 0
  %996 = vmatprep.subr.bf16.mxu0 0
  %997 = vmatpush1.bf16.msra.mxu0 0
  %998 = vmatprep.subr.bf16.mxu0 0
  %999 = vmatpush1.bf16.msra.mxu0 0
  %1000 = vmatprep.subr.bf16.mxu0 0
  %1001 = vmatpush1.bf16.msra.mxu0 0
  %1002 = vmatprep.subr.bf16.mxu0 0
  %1003 = vmatpush1.bf16.msra.mxu0 0
  %1004 = vmatprep.subr.bf16.mxu0 0
  %1005 = vmatpush1.bf16.msra.mxu0 0
  %1006 = vmatprep.subr.bf16.mxu0 0
  %1007 = vmatpush1.bf16.msra.mxu0 0
  %1008 = vmatprep.subr.bf16.mxu0 0
  %1009 = vmatpush1.bf16.msra.mxu0 0
  %1010 = vmatprep.subr.bf16.mxu0 0
  %1011 = vmatpush1.bf16.msra.mxu0 0
  %1012 = vmatprep.subr.bf16.mxu0 0
  %1013 = vmatpush1.bf16.msra.mxu0 0
  %1014 = vmatprep.mubr.bf16.mxu0 0
  %1015 = vmatmul.mubr.bf16.gmra.mrb[0].mxu0 %v350
  %v1016 = vpop.f32.mrb[0].mxu0
  %v1017 = vadd.f32 0.0, %v1016
  %v1018 = vpop.f32.mrb[0].mxu0
  %v1019 = vadd.f32 0.0, %v1018
  %v1020 = vpop.f32.mrb[0].mxu0
  %v1021 = vpop.f32.mrb[0].mxu0
  %1022 = vdwg.mxu0
  %1023 = vmatprep.subr.bf16.mxu0 %v441
  %1024 = vmatpush1.bf16.msra.mxu0 %v438
  %1025 = vmatprep.subr.bf16.mxu0 0
  %1026 = vmatpush1.bf16.msra.mxu0 0
  %1027 = vmatprep.subr.bf16.mxu0 0
  %1028 = vmatpush1.bf16.msra.mxu0 0
  %1029 = vmatprep.subr.bf16.mxu0 0
  %1030 = vmatpush1.bf16.msra.mxu0 0
  %1031 = vmatprep.subr.bf16.mxu0 0
  %1032 = vmatpush1.bf16.msra.mxu0 0
  %1033 = vmatprep.subr.bf16.mxu0 0
  %1034 = vmatpush1.bf16.msra.mxu0 0
  %1035 = vmatprep.subr.bf16.mxu0 0
  %1036 = vmatpush1.bf16.msra.mxu0 0
  %1037 = vmatprep.subr.bf16.mxu0 0
  %1038 = vmatpush1.bf16.msra.mxu0 0
  %1039 = vmatprep.subr.bf16.mxu0 0
  %1040 = vmatpush1.bf16.msra.mxu0 0
  %1041 = vmatprep.subr.bf16.mxu0 0
  %1042 = vmatpush1.bf16.msra.mxu0 0
  %1043 = vmatprep.subr.bf16.mxu0 0
  %1044 = vmatpush1.bf16.msra.mxu0 0
  %1045 = vmatprep.subr.bf16.mxu0 0
  %1046 = vmatpush1.bf16.msra.mxu0 0
  %1047 = vmatprep.subr.bf16.mxu0 0
  %1048 = vmatpush1.bf16.msra.mxu0 0
  %1049 = vmatprep.subr.bf16.mxu0 0
  %1050 = vmatpush1.bf16.msra.mxu0 0
  %1051 = vmatprep.subr.bf16.mxu0 0
  %1052 = vmatpush1.bf16.msra.mxu0 0
  %1053 = vmatprep.subr.bf16.mxu0 0
  %1054 = vmatpush1.bf16.msra.mxu0 0
  %1055 = vmatprep.mubr.bf16.mxu0 0
  %1056 = vmatmul.mubr.bf16.gmra.mrb[0].mxu0 %v350
  %v1057 = vpop.f32.mrb[0].mxu0
  %v1058 = vadd.f32 0.0, %v1057
  %v1059 = vpop.f32.mrb[0].mxu0
  %v1060 = vadd.f32 0.0, %v1059
  %v1061 = vpop.f32.mrb[0].mxu0
  %v1062 = vpop.f32.mrb[0].mxu0
  %1063 = vdwg.mxu0
  %1064 = vmatprep.subr.bf16.mxu0 %v447
  %1065 = vmatpush1.bf16.msra.mxu0 %v444
  %1066 = vmatprep.subr.bf16.mxu0 0
  %1067 = vmatpush1.bf16.msra.mxu0 0
  %1068 = vmatprep.subr.bf16.mxu0 0
  %1069 = vmatpush1.bf16.msra.mxu0 0
  %1070 = vmatprep.subr.bf16.mxu0 0
  %1071 = vmatpush1.bf16.msra.mxu0 0
  %1072 = vmatprep.subr.bf16.mxu0 0
  %1073 = vmatpush1.bf16.msra.mxu0 0
  %1074 = vmatprep.subr.bf16.mxu0 0
  %1075 = vmatpush1.bf16.msra.mxu0 0
  %1076 = vmatprep.subr.bf16.mxu0 0
  %1077 = vmatpush1.bf16.msra.mxu0 0
  %1078 = vmatprep.subr.bf16.mxu0 0
  %1079 = vmatpush1.bf16.msra.mxu0 0
  %1080 = vmatprep.subr.bf16.mxu0 0
  %1081 = vmatpush1.bf16.msra.mxu0 0
  %1082 = vmatprep.subr.bf16.mxu0 0
  %1083 = vmatpush1.bf16.msra.mxu0 0
  %1084 = vmatprep.subr.bf16.mxu0 0
  %1085 = vmatpush1.bf16.msra.mxu0 0
  %1086 = vmatprep.subr.bf16.mxu0 0
  %1087 = vmatpush1.bf16.msra.mxu0 0
  %1088 = vmatprep.subr.bf16.mxu0 0
  %1089 = vmatpush1.bf16.msra.mxu0 0
  %1090 = vmatprep.subr.bf16.mxu0 0
  %1091 = vmatpush1.bf16.msra.mxu0 0
  %1092 = vmatprep.subr.bf16.mxu0 0
  %1093 = vmatpush1.bf16.msra.mxu0 0
  %1094 = vmatprep.subr.bf16.mxu0 0
  %1095 = vmatpush1.bf16.msra.mxu0 0
  %1096 = vmatprep.mubr.bf16.mxu0 0
  %1097 = vmatmul.mubr.bf16.gmra.mrb[0].mxu0 %v350
  %v1098 = vpop.f32.mrb[0].mxu0
  %v1099 = vadd.f32 0.0, %v1098
  %v1100 = vpop.f32.mrb[0].mxu0
  %v1101 = vadd.f32 0.0, %v1100
  %v1102 = vpop.f32.mrb[0].mxu0
  %v1103 = vpop.f32.mrb[0].mxu0
  %1104 = vdwg.mxu0
  %v1105 = vadd.f32 %v219, %v484
  %v1106 = vadd.f32 %v220, %v486
  %v1107 = vadd.f32 %v221, %v525
  %v1108 = vadd.f32 %v222, %v527
  %v1109 = vadd.f32 %v223, %v566
  %v1110 = vadd.f32 %v224, %v568
  %v1111 = vadd.f32 %v225, %v607
  %v1112 = vadd.f32 %v226, %v609
  %v1113 = vadd.f32 %v227, %v648
  %v1114 = vadd.f32 %v228, %v650
  %v1115 = vadd.f32 %v229, %v689
  %v1116 = vadd.f32 %v230, %v691
  %v1117 = vadd.f32 %v231, %v730
  %v1118 = vadd.f32 %v232, %v732
  %v1119 = vadd.f32 %v233, %v771
  %v1120 = vadd.f32 %v234, %v773
  %v1121 = vadd.f32 %v235, %v812
  %v1122 = vadd.f32 %v236, %v814
  %v1123 = vadd.f32 %v237, %v853
  %v1124 = vadd.f32 %v238, %v855
  %v1125 = vadd.f32 %v239, %v894
  %v1126 = vadd.f32 %v240, %v896
  %v1127 = vadd.f32 %v241, %v935
  %v1128 = vadd.f32 %v242, %v937
  %v1129 = vadd.f32 %v243, %v976
  %v1130 = vadd.f32 %v244, %v978
  %v1131 = vadd.f32 %v245, %v1017
  %v1132 = vadd.f32 %v246, %v1019
  %v1133 = vadd.f32 %v247, %v1058
  %v1134 = vadd.f32 %v248, %v1060
  %v1135 = vadd.f32 %v249, %v1099
  %v1136 = vadd.f32 %v250, %v1101
  %1137 = vst [vmem:[%s3] sm:$0xff] %v1105
  %1138 = vst [vmem:[%s3 + $0x8] sm:$0xff] %v1106
  %1139 = vst [vmem:[%s3 + $0x10] sm:$0xff] %v1107
  %1140 = vst [vmem:[%s3 + $0x18] sm:$0xff] %v1108
  %1141 = vst [vmem:[%s3 + $0x20] sm:$0xff] %v1109
  %1142 = vst [vmem:[%s3 + $0x28] sm:$0xff] %v1110
  %1143 = vst [vmem:[%s3 + $0x30] sm:$0xff] %v1111
  %1144 = vst [vmem:[%s3 + $0x38] sm:$0xff] %v1112
  %1145 = vst [vmem:[%s3 + $0x40] sm:$0xff] %v1113
  %1146 = vst [vmem:[%s3 + $0x48] sm:$0xff] %v1114
  %1147 = vst [vmem:[%s3 + $0x50] sm:$0xff] %v1115
  %1148 = vst [vmem:[%s3 + $0x58] sm:$0xff] %v1116
  %1149 = vst [vmem:[%s3 + $0x60] sm:$0xff] %v1117
  %1150 = vst [vmem:[%s3 + $0x68] sm:$0xff] %v1118
  %1151 = vst [vmem:[%s3 + $0x70] sm:$0xff] %v1119
  %1152 = vst [vmem:[%s3 + $0x78] sm:$0xff] %v1120
  %1153 = vst [vmem:[%s3 + $0x80] sm:$0xff] %v1121
  %1154 = vst [vmem:[%s3 + $0x88] sm:$0xff] %v1122
  %1155 = vst [vmem:[%s3 + $0x90] sm:$0xff] %v1123
  %1156 = vst [vmem:[%s3 + $0x98] sm:$0xff] %v1124
  %1157 = vst [vmem:[%s3 + $0xa0] sm:$0xff] %v1125
  %1158 = vst [vmem:[%s3 + $0xa8] sm:$0xff] %v1126
  %1159 = vst [vmem:[%s3 + $0xb0] sm:$0xff] %v1127
  %1160 = vst [vmem:[%s3 + $0xb8] sm:$0xff] %v1128
  %1161 = vst [vmem:[%s3 + $0xc0] sm:$0xff] %v1129
  %1162 = vst [vmem:[%s3 + $0xc8] sm:$0xff] %v1130
  %1163 = vst [vmem:[%s3 + $0xd0] sm:$0xff] %v1131
  %1164 = vst [vmem:[%s3 + $0xd8] sm:$0xff] %v1132
  %1165 = vst [vmem:[%s3 + $0xe0] sm:$0xff] %v1133
  %1166 = vst [vmem:[%s3 + $0xe8] sm:$0xff] %v1134
  %1167 = vst [vmem:[%s3 + $0xf0] sm:$0xff] %v1135
  %1168 = vst [vmem:[%s3 + $0xf8] sm:$0xff] %v1136
  // Predicated region
  $region18: #{_lambda_.46} parent=0 // pred_check
    _
  $region19: #{_lambda_.46} parent=0 // pred_check_branch
    %1170 = sbr.rel (0) target = $region21
  $region20: #{_lambda_.46} parent=0 // pred_region
    _
  $region21: #{_lambda_.46} parent=0 // pred_fallthru
    _
  // Predicated region
  $region22: #{_lambda_.46} parent=0 // pred_check
    _
  $region23: #{_lambda_.46} parent=0 // pred_check_branch
    %1172 = sbr.rel (0) target = $region25
  $region24: #{_lambda_.46} parent=0 // pred_region
    _
  $region25: #{_lambda_.46} parent=0 // pred_fallthru
    _

</llo_original>
